<compile_context>
chip_gen: v5e
topology: v5e:2x2
jax: 0.10.0
libtpu: 0.0.40
codegen_flags: <defaults>
</compile_context>

<pallas_src>
import jax
import jax.numpy as jnp
from jax import lax
from jax.experimental import pallas as pl
from jax.experimental.pallas import tpu as pltpu

_LANES = 128
_MAX_BLOCK_ROWS = 4096   # 4096 rows x 128 lanes x 4 B = 2 MiB of logits per step


def _round_up(x, m):
    return ((x + m - 1) // m) * m


def _rpn_cls_loss_kernel(logits_ref, labels_ref, out_ref, acc_ref):
    """Per-tile masked 2-class CE reduced into two SMEM scalar accumulators."""
    i = pl.program_id(0)

    @pl.when(i == 0)
    def _init():
        acc_ref[0] = jnp.float32(0.0)
        acc_ref[1] = jnp.float32(0.0)

    x = logits_ref[...].astype(jnp.float32)   # (bR, 128) lane-interleaved [l0, l1, ...]
    y = labels_ref[...].astype(jnp.int32)     # (bR, 128) label per (anchor, class) lane

    lane = lax.broadcasted_iota(jnp.int32, x.shape, 1)
    cls = lane & 1                            # class of this lane: even -> 0, odd -> 1

    # Partner logit x[lane ^ 1] (the other class of the same anchor).  Roll the
    # lane iota the same way as the data so the per-lane selection of the
    # correct neighbour is independent of the roll-direction convention.
    r_lane = pltpu.roll(lane, 1, axis=1)
    x_a = pltpu.roll(x, 1, axis=1)
    x_b = pltpu.roll(x, _LANES - 1, axis=1)
    partner = jnp.where(r_lane == (lane ^ 1), x_a, x_b)

    # -log_softmax at the label for 2 classes == softplus(l_other - l_label).
    d = partner - x
    ce = jnp.maximum(d, 0.0) + jnp.log1p(jnp.exp(-jnp.abs(d)))

    # This lane is the label lane of a valid anchor.  Ignored (-1) and padded
    # anchors never match a lane class in {0, 1}, so they contribute nothing.
    sel = y == cls
    acc_ref[0] += jnp.sum(jnp.where(sel, ce, 0.0))
    acc_ref[1] += jnp.sum(sel.astype(jnp.float32))

    @pl.when(i == pl.num_programs(0) - 1)
    def _finalize():
        s = acc_ref[0]
        c = acc_ref[1]
        mean = jnp.where(c > 0.0, s / jnp.maximum(c, 1.0), jnp.float32(0.0))
        out_ref[0] = jnp.clip(mean, 0.0, 10.0)


@jax.jit
def rpn_cls_loss(cls_input, cls_target):
    """cls_input: (B, N, 2) logits; cls_target: (B, 1, N) labels in {-1, 0, 1}."""
    logits = cls_input[0]                     # (N, 2), native dtype (f32/bf16/...)
    labels = cls_target[0, 0]                 # (N,)
    n = logits.shape[0]
    two_n = 2 * n

    rows_needed = pl.cdiv(two_n, _LANES)
    if rows_needed <= _MAX_BLOCK_ROWS:
        # Single block: pad (cheap, array is small) so the block exactly covers it.
        block_rows = _round_up(rows_needed, 32)   # 32 keeps int8/bf16/f32 tilings happy
        num_blocks = 1
        flat_len = block_rows * _LANES
    else:
        # Multi block: only the sub-row tail is padded; the last block's row
        # overhang reads unspecified values that the -1 labels mask out.
        block_rows = _MAX_BLOCK_ROWS
        num_blocks = pl.cdiv(rows_needed, block_rows)
        flat_len = rows_needed * _LANES
    total_rows = num_blocks * block_rows

    # Logits: free view of the contiguous (N, 2) buffer -- no transpose/relayout.
    flat = logits.reshape(-1)
    if flat_len != two_n:                     # zero-copy whenever N fills whole rows
        flat = jnp.pad(flat, (0, flat_len - two_n))
    logit_mat = flat.reshape(flat_len // _LANES, _LANES)

    # Labels: one small fused pass -> int8, expanded to the (anchor, class) lane
    # order of the flat logits, padded with -1 ("ignore") out to the block multiple.
    lab = jnp.repeat(labels.astype(jnp.int8), 2)
    lab_pad = total_rows * _LANES - two_n
    if lab_pad:
        lab = jnp.pad(lab, (0, lab_pad), constant_values=-1)
    lab_mat = lab.reshape(total_rows, _LANES)

    bytes_accessed = logit_mat.size * logit_mat.dtype.itemsize + lab_mat.size + 4
    out = pl.pallas_call(
        _rpn_cls_loss_kernel,
        out_shape=jax.ShapeDtypeStruct((1,), jnp.float32),
        grid_spec=pltpu.PrefetchScalarGridSpec(
            num_scalar_prefetch=0,
            grid=(num_blocks,),
            in_specs=[
                pl.BlockSpec((block_rows, _LANES), lambda i: (i, 0)),
                pl.BlockSpec((block_rows, _LANES), lambda i: (i, 0)),
            ],
            out_specs=pl.BlockSpec(memory_space=pltpu.MemorySpace.SMEM),
            scratch_shapes=[pltpu.SMEM((2,), jnp.float32)],
        ),
        compiler_params=pltpu.CompilerParams(
            dimension_semantics=("arbitrary",)),
        cost_estimate=pl.CostEstimate(
            flops=24 * two_n,
            transcendentals=2 * two_n,
            bytes_accessed=int(bytes_accessed)),
    )(logit_mat, lab_mat)
    return out[0]


def _reference(cls_input, cls_target):
    """Pure-JAX reference (mirrors the PyTorch non-OHEM branch)."""
    logits = cls_input[0].astype(jnp.float32)
    y = cls_target[0][0]
    valid = y != -1
    logp = jax.nn.log_softmax(logits, axis=-1)
    lbl = jnp.where(valid, y, 0).astype(jnp.int32)
    per = -jnp.take_along_axis(logp, lbl[:, None], axis=-1)[:, 0]
    per = jnp.where(valid, per, 0.0)
    cnt = jnp.sum(valid.astype(jnp.float32))
    mean = jnp.where(cnt > 0, jnp.sum(per) / jnp.maximum(cnt, 1.0), 0.0)
    return jnp.clip(mean, 0.0, 10.0)


if __name__ == "__main__":
    key = jax.random.PRNGKey(0)
    k1, k2, k3, k4 = jax.random.split(key, 4)

    # Case 1: anchor count that maps onto whole 128-lane rows (zero-copy path).
    B, N = 1, 2048
    cls_input = jax.random.normal(k1, (B, N, 2), dtype=jnp.float32)
    cls_target = jax.random.choice(
        k2, jnp.array([-1, 0, 1], dtype=jnp.int32), shape=(B, 1, N),
        p=jnp.array([0.3, 0.6, 0.1], dtype=jnp.float32))
    out = rpn_cls_loss(cls_input, cls_target)
    jax.block_until_ready(out)
    ref = _reference(cls_input, cls_target)
    assert jnp.allclose(out, ref, atol=1e-5, rtol=1e-5), (out, ref)

    # Case 2: ragged anchor count (exercises the padded-tail path).
    N2 = 1000
    cls_input2 = jax.random.normal(k3, (1, N2, 2), dtype=jnp.float32)
    cls_target2 = jax.random.choice(
        k4, jnp.array([-1, 0, 1], dtype=jnp.int32), shape=(1, 1, N2),
        p=jnp.array([0.25, 0.65, 0.10], dtype=jnp.float32))
    out2 = rpn_cls_loss(cls_input2, cls_target2)
    jax.block_until_ready(out2)
    ref2 = _reference(cls_input2, cls_target2)
    assert jnp.allclose(out2, ref2, atol=1e-5, rtol=1e-5), (out2, ref2)

    # Case 3: every anchor ignored -> loss must be exactly 0.
    cls_target3 = jnp.full((1, 1, N2), -1, dtype=jnp.int32)
    out3 = rpn_cls_loss(cls_input2, cls_target3)
    jax.block_until_ready(out3)
    assert jnp.allclose(out3, 0.0), out3

    print("KERNEL_OK")
</pallas_src>

<mosaic_0001>
module attributes {stable_mosaic.version = 11 : i64} {
  func.func @_rpn_cls_loss_kernel(%arg0: i32, %arg1: memref<32x128xf32, #tpu.memory_space<vmem>>, %arg2: memref<32x128xi8, #tpu.memory_space<vmem>>, %arg3: memref<1xf32, #tpu.memory_space<smem>>, %arg4: memref<2xf32, #tpu.memory_space<smem>>) attributes {dimension_semantics = [#tpu.dimension_semantics<arbitrary>], iteration_bounds = array<i64: 1>, scalar_prefetch = 0 : i64, scratch_operands = 1 : i64, tpu.core_type = #tpu.core_type<tc>, window_params = [{transform_indices = @transform_0, window_bounds = array<i64: 32, 128>}, {transform_indices = @transform_1, window_bounds = array<i64: 32, 128>}, {transform_indices = @transform_2, window_bounds = array<i64: 1>}]} {
    %c0_i32 = arith.constant 0 : i32
    %0 = arith.cmpi eq, %arg0, %c0_i32 : i32
    %1 = arith.extui %0 : i1 to i32
    %c0_i32_0 = arith.constant 0 : i32
    %2 = arith.cmpi ne, %1, %c0_i32_0 : i32
    scf.if %2 {
      %cst_16 = arith.constant 0.000000e+00 : f32
      %c0_17 = arith.constant 0 : index
      %47 = memref.load %arg4[%c0_17] : memref<2xf32, #tpu.memory_space<smem>>
      memref.store %cst_16, %arg4[%c0_17] : memref<2xf32, #tpu.memory_space<smem>>
      %cst_18 = arith.constant 0.000000e+00 : f32
      %c1_19 = arith.constant 1 : index
      %48 = memref.load %arg4[%c1_19] : memref<2xf32, #tpu.memory_space<smem>>
      memref.store %cst_18, %arg4[%c1_19] : memref<2xf32, #tpu.memory_space<smem>>
    } else {
    }
    %c0 = arith.constant 0 : index
    %c0_1 = arith.constant 0 : index
    %3 = vector.load %arg1[%c0, %c0_1] : memref<32x128xf32, #tpu.memory_space<vmem>>, vector<32x128xf32>
    %c0_2 = arith.constant 0 : index
    %c0_3 = arith.constant 0 : index
    %4 = vector.load %arg2[%c0_2, %c0_3] : memref<32x128xi8, #tpu.memory_space<vmem>>, vector<32x128xi8>
    %5 = arith.extsi %4 : vector<32x128xi8> to vector<32x128xi32>
    %6 = tpu.iota {dimensions = array<i32: 1>} : vector<32x128xi32>
    %c1_i32 = arith.constant 1 : i32
    %7 = vector.broadcast %c1_i32 : i32 to vector<32x128xi32>
    %8 = arith.andi %6, %7 : vector<32x128xi32>
    %c1_i32_4 = arith.constant 1 : i32
    %9 = tpu.dynamic_rotate %6 by %c1_i32_4 dim 1 : vector<32x128xi32>, i32 -> vector<32x128xi32>
    %c1_i32_5 = arith.constant 1 : i32
    %10 = tpu.dynamic_rotate %3 by %c1_i32_5 dim 1 : vector<32x128xf32>, i32 -> vector<32x128xf32>
    %c127_i32 = arith.constant 127 : i32
    %11 = tpu.dynamic_rotate %3 by %c127_i32 dim 1 : vector<32x128xf32>, i32 -> vector<32x128xf32>
    %c1_i32_6 = arith.constant 1 : i32
    %12 = vector.broadcast %c1_i32_6 : i32 to vector<32x128xi32>
    %13 = arith.xori %6, %12 : vector<32x128xi32>
    %14 = arith.cmpi eq, %9, %13 : vector<32x128xi32>
    %15 = arith.select %14, %10, %11 : vector<32x128xi1>, vector<32x128xf32>
    %16 = arith.subf %15, %3 : vector<32x128xf32>
    %cst = arith.constant 0.000000e+00 : f32
    %17 = vector.broadcast %cst : f32 to vector<32x128xf32>
    %18 = arith.maximumf %16, %17 : vector<32x128xf32>
    %19 = math.absf %16 : vector<32x128xf32>
    %cst_7 = arith.constant 0.000000e+00 : f32
    %20 = vector.broadcast %cst_7 : f32 to vector<32x128xf32>
    %21 = arith.subf %20, %19 : vector<32x128xf32>
    %22 = math.exp %21 : vector<32x128xf32>
    %23 = math.log1p %22 : vector<32x128xf32>
    %24 = arith.addf %18, %23 : vector<32x128xf32>
    %25 = arith.cmpi eq, %5, %8 : vector<32x128xi32>
    %c0_8 = arith.constant 0 : index
    %26 = memref.load %arg4[%c0_8] : memref<2xf32, #tpu.memory_space<smem>>
    %cst_9 = arith.constant 0.000000e+00 : f32
    %27 = vector.broadcast %cst_9 : f32 to vector<32x128xf32>
    %28 = arith.select %25, %24, %27 : vector<32x128xi1>, vector<32x128xf32>
    %29 = vector.shape_cast %28 : vector<32x128xf32> to vector<1x32x128xf32>
    %cst_10 = arith.constant dense<0.000000e+00> : vector<1xf32>
    %30 = vector.multi_reduction <add>, %29, %cst_10 [1, 2] : vector<1x32x128xf32> to vector<1xf32>
    %31 = vector.shape_cast %30 : vector<1xf32> to vector<1x1x1xf32>
    %32 = vector.extract %31[0, 0, 0] : f32 from vector<1x1x1xf32>
    %33 = arith.addf %26, %32 : f32
    %c0_11 = arith.constant 0 : index
    %34 = memref.load %arg4[%c0_11] : memref<2xf32, #tpu.memory_space<smem>>
    memref.store %33, %arg4[%c0_11] : memref<2xf32, #tpu.memory_space<smem>>
    %c1 = arith.constant 1 : index
    %35 = memref.load %arg4[%c1] : memref<2xf32, #tpu.memory_space<smem>>
    %36 = arith.extui %25 : vector<32x128xi1> to vector<32x128xi32>
    %37 = arith.sitofp %36 : vector<32x128xi32> to vector<32x128xf32>
    %38 = vector.shape_cast %37 : vector<32x128xf32> to vector<1x32x128xf32>
    %cst_12 = arith.constant dense<0.000000e+00> : vector<1xf32>
    %39 = vector.multi_reduction <add>, %38, %cst_12 [1, 2] : vector<1x32x128xf32> to vector<1xf32>
    %40 = vector.shape_cast %39 : vector<1xf32> to vector<1x1x1xf32>
    %41 = vector.extract %40[0, 0, 0] : f32 from vector<1x1x1xf32>
    %42 = arith.addf %35, %41 : f32
    %c1_13 = arith.constant 1 : index
    %43 = memref.load %arg4[%c1_13] : memref<2xf32, #tpu.memory_space<smem>>
    memref.store %42, %arg4[%c1_13] : memref<2xf32, #tpu.memory_space<smem>>
    %c0_i32_14 = arith.constant 0 : i32
    %44 = arith.cmpi eq, %arg0, %c0_i32_14 : i32
    %45 = arith.extui %44 : i1 to i32
    %c0_i32_15 = arith.constant 0 : i32
    %46 = arith.cmpi ne, %45, %c0_i32_15 : i32
    scf.if %46 {
      %c0_16 = arith.constant 0 : index
      %47 = memref.load %arg4[%c0_16] : memref<2xf32, #tpu.memory_space<smem>>
      %c1_17 = arith.constant 1 : index
      %48 = memref.load %arg4[%c1_17] : memref<2xf32, #tpu.memory_space<smem>>
      %cst_18 = arith.constant 0.000000e+00 : f32
      %49 = arith.cmpf ogt, %48, %cst_18 : f32
      %cst_19 = arith.constant 1.000000e+00 : f32
      %50 = arith.maximumf %48, %cst_19 : f32
      %51 = arith.divf %47, %50 : f32
      %cst_20 = arith.constant 0.000000e+00 : f32
      %52 = arith.select %49, %51, %cst_20 : f32
      %cst_21 = arith.constant 0.000000e+00 : f32
      %cst_22 = arith.constant 1.000000e+01 : f32
      %53 = arith.maximumf %cst_21, %52 : f32
      %54 = arith.minimumf %cst_22, %53 : f32
      %c0_23 = arith.constant 0 : index
      %55 = memref.load %arg3[%c0_23] : memref<1xf32, #tpu.memory_space<smem>>
      memref.store %54, %arg3[%c0_23] : memref<1xf32, #tpu.memory_space<smem>>
    } else {
    }
    return
  }
  func.func @transform_0(%arg0: i32) -> (i32, i32) {
    %c0_i32 = arith.constant 0 : i32
    %c0_i32_0 = arith.constant 0 : i32
    return %arg0, %c0_i32 : i32, i32
  }
  func.func @transform_1(%arg0: i32) -> (i32, i32) {
    %c0_i32 = arith.constant 0 : i32
    %c0_i32_0 = arith.constant 0 : i32
    return %arg0, %c0_i32 : i32, i32
  }
  func.func @transform_2(%arg0: i32) -> i32 {
    %c0_i32 = arith.constant 0 : i32
    %c0_i32_0 = arith.constant 0 : i32
    return %c0_i32 : i32
  }
}

</mosaic_0001>

<llo_original>
// kernel: squeeze.4
$region0: #{squeeze.4}
  %s0 = inlined_call_operand.vmem [shape: f32[1,2048,2], index: 0, kind: input, shape index: {}]
  %s1 = inlined_call_operand.vmem [shape: f32[32,128], index: 1, kind: output, shape index: {}]
  %v2 = vld [vmem:[%s0] sm:$0x1]
  %s3 = scalar_lea.vmem %s0, 63
  %v4 = vld [vmem:[%s3] sm:$0x2]
  %vm5 = vcmask 1041409
  %v6 = vsel %vm5, %v4, %v2
  %s7 = scalar_lea.vmem %s0, 126
  %v8 = vld [vmem:[%s7] sm:$0x4]
  %vm9 = vcmask 1042434
  %v10 = vsel %vm9, %v8, %v6
  %s11 = scalar_lea.vmem %s0, 189
  %v12 = vld [vmem:[%s11] sm:$0x8]
  %vm13 = vcmask 1043459
  %v14 = vsel %vm13, %v12, %v10
  %s15 = scalar_lea.vmem %s0, 252
  %v16 = vld [vmem:[%s15] sm:$0x10]
  %vm17 = vcmask 1044484
  %v18 = vsel %vm17, %v16, %v14
  %s19 = scalar_lea.vmem %s0, 315
  %v20 = vld [vmem:[%s19] sm:$0x20]
  %vm21 = vcmask 1045509
  %v22 = vsel %vm21, %v20, %v18
  %s23 = scalar_lea.vmem %s0, 378
  %v24 = vld [vmem:[%s23] sm:$0x40]
  %vm25 = vcmask 1046534
  %v26 = vsel %vm25, %v24, %v22
  %s27 = scalar_lea.vmem %s0, 441
  %v28 = vld [vmem:[%s27] sm:$0x80]
  %vm29 = vcmask 1047559
  %v30 = vsel %vm29, %v28, %v26
  %vm31 = vcmask 15360
  %32 = vst.msk [vmem:[%s1] sm:$0xff] %vm31, %v30
  %s33 = scalar_lea.vmem %s0, 512
  %v34 = vld [vmem:[%s33] sm:$0x1]
  %s35 = scalar_lea.vmem %s0, 575
  %v36 = vld [vmem:[%s35] sm:$0x2]
  %vm37 = vcmask 1041409
  %v38 = vsel %vm37, %v36, %v34
  %s39 = scalar_lea.vmem %s0, 638
  %v40 = vld [vmem:[%s39] sm:$0x4]
  %vm41 = vcmask 1042434
  %v42 = vsel %vm41, %v40, %v38
  %s43 = scalar_lea.vmem %s0, 701
  %v44 = vld [vmem:[%s43] sm:$0x8]
  %vm45 = vcmask 1043459
  %v46 = vsel %vm45, %v44, %v42
  %s47 = scalar_lea.vmem %s0, 764
  %v48 = vld [vmem:[%s47] sm:$0x10]
  %vm49 = vcmask 1044484
  %v50 = vsel %vm49, %v48, %v46
  %s51 = scalar_lea.vmem %s0, 827
  %v52 = vld [vmem:[%s51] sm:$0x20]
  %vm53 = vcmask 1045509
  %v54 = vsel %vm53, %v52, %v50
  %s55 = scalar_lea.vmem %s0, 890
  %v56 = vld [vmem:[%s55] sm:$0x40]
  %vm57 = vcmask 1046534
  %v58 = vsel %vm57, %v56, %v54
  %s59 = scalar_lea.vmem %s0, 953
  %v60 = vld [vmem:[%s59] sm:$0x80]
  %vm61 = vcmask 1047559
  %v62 = vsel %vm61, %v60, %v58
  %vm63 = vcmask 15360
  %s64 = scalar_lea.vmem %s1, 8
  %65 = vst.msk [vmem:[%s64] sm:$0xff] %vm63, %v62
  %s66 = scalar_lea.vmem %s0, 1024
  %v67 = vld [vmem:[%s66] sm:$0x1]
  %s68 = scalar_lea.vmem %s0, 1087
  %v69 = vld [vmem:[%s68] sm:$0x2]
  %vm70 = vcmask 1041409
  %v71 = vsel %vm70, %v69, %v67
  %s72 = scalar_lea.vmem %s0, 1150
  %v73 = vld [vmem:[%s72] sm:$0x4]
  %vm74 = vcmask 1042434
  %v75 = vsel %vm74, %v73, %v71
  %s76 = scalar_lea.vmem %s0, 1213
  %v77 = vld [vmem:[%s76] sm:$0x8]
  %vm78 = vcmask 1043459
  %v79 = vsel %vm78, %v77, %v75
  %s80 = scalar_lea.vmem %s0, 1276
  %v81 = vld [vmem:[%s80] sm:$0x10]
  %vm82 = vcmask 1044484
  %v83 = vsel %vm82, %v81, %v79
  %s84 = scalar_lea.vmem %s0, 1339
  %v85 = vld [vmem:[%s84] sm:$0x20]
  %vm86 = vcmask 1045509
  %v87 = vsel %vm86, %v85, %v83
  %s88 = scalar_lea.vmem %s0, 1402
  %v89 = vld [vmem:[%s88] sm:$0x40]
  %vm90 = vcmask 1046534
  %v91 = vsel %vm90, %v89, %v87
  %s92 = scalar_lea.vmem %s0, 1465
  %v93 = vld [vmem:[%s92] sm:$0x80]
  %vm94 = vcmask 1047559
  %v95 = vsel %vm94, %v93, %v91
  %vm96 = vcmask 15360
  %s97 = scalar_lea.vmem %s1, 16
  %98 = vst.msk [vmem:[%s97] sm:$0xff] %vm96, %v95
  %s99 = scalar_lea.vmem %s0, 1536
  %v100 = vld [vmem:[%s99] sm:$0x1]
  %s101 = scalar_lea.vmem %s0, 1599
  %v102 = vld [vmem:[%s101] sm:$0x2]
  %vm103 = vcmask 1041409
  %v104 = vsel %vm103, %v102, %v100
  %s105 = scalar_lea.vmem %s0, 1662
  %v106 = vld [vmem:[%s105] sm:$0x4]
  %vm107 = vcmask 1042434
  %v108 = vsel %vm107, %v106, %v104
  %s109 = scalar_lea.vmem %s0, 1725
  %v110 = vld [vmem:[%s109] sm:$0x8]
  %vm111 = vcmask 1043459
  %v112 = vsel %vm111, %v110, %v108
  %s113 = scalar_lea.vmem %s0, 1788
  %v114 = vld [vmem:[%s113] sm:$0x10]
  %vm115 = vcmask 1044484
  %v116 = vsel %vm115, %v114, %v112
  %s117 = scalar_lea.vmem %s0, 1851
  %v118 = vld [vmem:[%s117] sm:$0x20]
  %vm119 = vcmask 1045509
  %v120 = vsel %vm119, %v118, %v116
  %s121 = scalar_lea.vmem %s0, 1914
  %v122 = vld [vmem:[%s121] sm:$0x40]
  %vm123 = vcmask 1046534
  %v124 = vsel %vm123, %v122, %v120
  %s125 = scalar_lea.vmem %s0, 1977
  %v126 = vld [vmem:[%s125] sm:$0x80]
  %vm127 = vcmask 1047559
  %v128 = vsel %vm127, %v126, %v124
  %vm129 = vcmask 15360
  %s130 = scalar_lea.vmem %s1, 24
  %131 = vst.msk [vmem:[%s130] sm:$0xff] %vm129, %v128
  %s132 = scalar_lea.vmem %s0, 63
  %v133 = vld [vmem:[%s132] sm:$0x1]
  %s134 = scalar_lea.vmem %s0, 126
  %v135 = vld [vmem:[%s134] sm:$0x2]
  %vm136 = vcmask 1041409
  %v137 = vsel %vm136, %v135, %v133
  %s138 = scalar_lea.vmem %s0, 189
  %v139 = vld [vmem:[%s138] sm:$0x4]
  %vm140 = vcmask 1042434
  %v141 = vsel %vm140, %v139, %v137
  %s142 = scalar_lea.vmem %s0, 252
  %v143 = vld [vmem:[%s142] sm:$0x8]
  %vm144 = vcmask 1043459
  %v145 = vsel %vm144, %v143, %v141
  %s146 = scalar_lea.vmem %s0, 315
  %v147 = vld [vmem:[%s146] sm:$0x10]
  %vm148 = vcmask 1044484
  %v149 = vsel %vm148, %v147, %v145
  %s150 = scalar_lea.vmem %s0, 378
  %v151 = vld [vmem:[%s150] sm:$0x20]
  %vm152 = vcmask 1045509
  %v153 = vsel %vm152, %v151, %v149
  %s154 = scalar_lea.vmem %s0, 441
  %v155 = vld [vmem:[%s154] sm:$0x40]
  %vm156 = vcmask 1046534
  %v157 = vsel %vm156, %v155, %v153
  %s158 = scalar_lea.vmem %s0, 504
  %v159 = vld [vmem:[%s158] sm:$0x80]
  %vm160 = vcmask 1047559
  %v161 = vsel %vm160, %v159, %v157
  %162 = vrot.lane.b32.xlu0 %v161, 126
  %v163 = vpop.permute.xlu0 %162
  %vm164 = vcmask 1048560
  %165 = vst.msk [vmem:[%s1] sm:$0xff] %vm164, %v163
  %s166 = scalar_lea.vmem %s0, 575
  %v167 = vld [vmem:[%s166] sm:$0x1]
  %s168 = scalar_lea.vmem %s0, 638
  %v169 = vld [vmem:[%s168] sm:$0x2]
  %vm170 = vcmask 1041409
  %v171 = vsel %vm170, %v169, %v167
  %s172 = scalar_lea.vmem %s0, 701
  %v173 = vld [vmem:[%s172] sm:$0x4]
  %vm174 = vcmask 1042434
  %v175 = vsel %vm174, %v173, %v171
  %s176 = scalar_lea.vmem %s0, 764
  %v177 = vld [vmem:[%s176] sm:$0x8]
  %vm178 = vcmask 1043459
  %v179 = vsel %vm178, %v177, %v175
  %s180 = scalar_lea.vmem %s0, 827
  %v181 = vld [vmem:[%s180] sm:$0x10]
  %vm182 = vcmask 1044484
  %v183 = vsel %vm182, %v181, %v179
  %s184 = scalar_lea.vmem %s0, 890
  %v185 = vld [vmem:[%s184] sm:$0x20]
  %vm186 = vcmask 1045509
  %v187 = vsel %vm186, %v185, %v183
  %s188 = scalar_lea.vmem %s0, 953
  %v189 = vld [vmem:[%s188] sm:$0x40]
  %vm190 = vcmask 1046534
  %v191 = vsel %vm190, %v189, %v187
  %s192 = scalar_lea.vmem %s0, 1016
  %v193 = vld [vmem:[%s192] sm:$0x80]
  %vm194 = vcmask 1047559
  %v195 = vsel %vm194, %v193, %v191
  %196 = vrot.lane.b32.xlu0 %v195, 126
  %v197 = vpop.permute.xlu0 %196
  %vm198 = vcmask 1048560
  %s199 = scalar_lea.vmem %s1, 8
  %200 = vst.msk [vmem:[%s199] sm:$0xff] %vm198, %v197
  %s201 = scalar_lea.vmem %s0, 1087
  %v202 = vld [vmem:[%s201] sm:$0x1]
  %s203 = scalar_lea.vmem %s0, 1150
  %v204 = vld [vmem:[%s203] sm:$0x2]
  %vm205 = vcmask 1041409
  %v206 = vsel %vm205, %v204, %v202
  %s207 = scalar_lea.vmem %s0, 1213
  %v208 = vld [vmem:[%s207] sm:$0x4]
  %vm209 = vcmask 1042434
  %v210 = vsel %vm209, %v208, %v206
  %s211 = scalar_lea.vmem %s0, 1276
  %v212 = vld [vmem:[%s211] sm:$0x8]
  %vm213 = vcmask 1043459
  %v214 = vsel %vm213, %v212, %v210
  %s215 = scalar_lea.vmem %s0, 1339
  %v216 = vld [vmem:[%s215] sm:$0x10]
  %vm217 = vcmask 1044484
  %v218 = vsel %vm217, %v216, %v214
  %s219 = scalar_lea.vmem %s0, 1402
  %v220 = vld [vmem:[%s219] sm:$0x20]
  %vm221 = vcmask 1045509
  %v222 = vsel %vm221, %v220, %v218
  %s223 = scalar_lea.vmem %s0, 1465
  %v224 = vld [vmem:[%s223] sm:$0x40]
  %vm225 = vcmask 1046534
  %v226 = vsel %vm225, %v224, %v222
  %s227 = scalar_lea.vmem %s0, 1528
  %v228 = vld [vmem:[%s227] sm:$0x80]
  %vm229 = vcmask 1047559
  %v230 = vsel %vm229, %v228, %v226
  %231 = vrot.lane.b32.xlu0 %v230, 126
  %v232 = vpop.permute.xlu0 %231
  %vm233 = vcmask 1048560
  %s234 = scalar_lea.vmem %s1, 16
  %235 = vst.msk [vmem:[%s234] sm:$0xff] %vm233, %v232
  %s236 = scalar_lea.vmem %s0, 1599
  %v237 = vld [vmem:[%s236] sm:$0x1]
  %s238 = scalar_lea.vmem %s0, 1662
  %v239 = vld [vmem:[%s238] sm:$0x2]
  %vm240 = vcmask 1041409
  %v241 = vsel %vm240, %v239, %v237
  %s242 = scalar_lea.vmem %s0, 1725
  %v243 = vld [vmem:[%s242] sm:$0x4]
  %vm244 = vcmask 1042434
  %v245 = vsel %vm244, %v243, %v241
  %s246 = scalar_lea.vmem %s0, 1788
  %v247 = vld [vmem:[%s246] sm:$0x8]
  %vm248 = vcmask 1043459
  %v249 = vsel %vm248, %v247, %v245
  %s250 = scalar_lea.vmem %s0, 1851
  %v251 = vld [vmem:[%s250] sm:$0x10]
  %vm252 = vcmask 1044484
  %v253 = vsel %vm252, %v251, %v249
  %s254 = scalar_lea.vmem %s0, 1914
  %v255 = vld [vmem:[%s254] sm:$0x20]
  %vm256 = vcmask 1045509
  %v257 = vsel %vm256, %v255, %v253
  %s258 = scalar_lea.vmem %s0, 1977
  %v259 = vld [vmem:[%s258] sm:$0x40]
  %vm260 = vcmask 1046534
  %v261 = vsel %vm260, %v259, %v257
  %s262 = scalar_lea.vmem %s0, 2040
  %v263 = vld [vmem:[%s262] sm:$0x80]
  %vm264 = vcmask 1047559
  %v265 = vsel %vm264, %v263, %v261
  %266 = vrot.lane.b32.xlu0 %v265, 126
  %v267 = vpop.permute.xlu0 %266
  %vm268 = vcmask 1048560
  %s269 = scalar_lea.vmem %s1, 24
  %270 = vst.msk [vmem:[%s269] sm:$0xff] %vm268, %v267
  %s271 = scalar_lea.vmem %s0, 62
  %v272 = vld [vmem:[%s271] sm:$0x1]
  %s273 = scalar_lea.vmem %s0, 125
  %v274 = vld [vmem:[%s273] sm:$0x2]
  %vm275 = vcmask 1041409
  %v276 = vsel %vm275, %v274, %v272
  %s277 = scalar_lea.vmem %s0, 188
  %v278 = vld [vmem:[%s277] sm:$0x4]
  %vm279 = vcmask 1042434
  %v280 = vsel %vm279, %v278, %v276
  %s281 = scalar_lea.vmem %s0, 251
  %v282 = vld [vmem:[%s281] sm:$0x8]
  %vm283 = vcmask 1043459
  %v284 = vsel %vm283, %v282, %v280
  %s285 = scalar_lea.vmem %s0, 314
  %v286 = vld [vmem:[%s285] sm:$0x10]
  %vm287 = vcmask 1044484
  %v288 = vsel %vm287, %v286, %v284
  %s289 = scalar_lea.vmem %s0, 377
  %v290 = vld [vmem:[%s289] sm:$0x20]
  %vm291 = vcmask 1045509
  %v292 = vsel %vm291, %v290, %v288
  %s293 = scalar_lea.vmem %s0, 440
  %v294 = vld [vmem:[%s293] sm:$0x40]
  %vm295 = vcmask 1046534
  %v296 = vsel %vm295, %v294, %v292
  %s297 = scalar_lea.vmem %s0, 503
  %v298 = vld [vmem:[%s297] sm:$0x80]
  %vm299 = vcmask 1047559
  %v300 = vsel %vm299, %v298, %v296
  %301 = vrot.lane.b32.xlu0 %v300, 124
  %v302 = vpop.permute.xlu0 %301
  %vm303 = vcmask 1032160
  %304 = vst.msk [vmem:[%s1] sm:$0xff] %vm303, %v302
  %s305 = scalar_lea.vmem %s0, 574
  %v306 = vld [vmem:[%s305] sm:$0x1]
  %s307 = scalar_lea.vmem %s0, 637
  %v308 = vld [vmem:[%s307] sm:$0x2]
  %vm309 = vcmask 1041409
  %v310 = vsel %vm309, %v308, %v306
  %s311 = scalar_lea.vmem %s0, 700
  %v312 = vld [vmem:[%s311] sm:$0x4]
  %vm313 = vcmask 1042434
  %v314 = vsel %vm313, %v312, %v310
  %s315 = scalar_lea.vmem %s0, 763
  %v316 = vld [vmem:[%s315] sm:$0x8]
  %vm317 = vcmask 1043459
  %v318 = vsel %vm317, %v316, %v314
  %s319 = scalar_lea.vmem %s0, 826
  %v320 = vld [vmem:[%s319] sm:$0x10]
  %vm321 = vcmask 1044484
  %v322 = vsel %vm321, %v320, %v318
  %s323 = scalar_lea.vmem %s0, 889
  %v324 = vld [vmem:[%s323] sm:$0x20]
  %vm325 = vcmask 1045509
  %v326 = vsel %vm325, %v324, %v322
  %s327 = scalar_lea.vmem %s0, 952
  %v328 = vld [vmem:[%s327] sm:$0x40]
  %vm329 = vcmask 1046534
  %v330 = vsel %vm329, %v328, %v326
  %s331 = scalar_lea.vmem %s0, 1015
  %v332 = vld [vmem:[%s331] sm:$0x80]
  %vm333 = vcmask 1047559
  %v334 = vsel %vm333, %v332, %v330
  %335 = vrot.lane.b32.xlu0 %v334, 124
  %v336 = vpop.permute.xlu0 %335
  %vm337 = vcmask 1032160
  %s338 = scalar_lea.vmem %s1, 8
  %339 = vst.msk [vmem:[%s338] sm:$0xff] %vm337, %v336
  %s340 = scalar_lea.vmem %s0, 1086
  %v341 = vld [vmem:[%s340] sm:$0x1]
  %s342 = scalar_lea.vmem %s0, 1149
  %v343 = vld [vmem:[%s342] sm:$0x2]
  %vm344 = vcmask 1041409
  %v345 = vsel %vm344, %v343, %v341
  %s346 = scalar_lea.vmem %s0, 1212
  %v347 = vld [vmem:[%s346] sm:$0x4]
  %vm348 = vcmask 1042434
  %v349 = vsel %vm348, %v347, %v345
  %s350 = scalar_lea.vmem %s0, 1275
  %v351 = vld [vmem:[%s350] sm:$0x8]
  %vm352 = vcmask 1043459
  %v353 = vsel %vm352, %v351, %v349
  %s354 = scalar_lea.vmem %s0, 1338
  %v355 = vld [vmem:[%s354] sm:$0x10]
  %vm356 = vcmask 1044484
  %v357 = vsel %vm356, %v355, %v353
  %s358 = scalar_lea.vmem %s0, 1401
  %v359 = vld [vmem:[%s358] sm:$0x20]
  %vm360 = vcmask 1045509
  %v361 = vsel %vm360, %v359, %v357
  %s362 = scalar_lea.vmem %s0, 1464
  %v363 = vld [vmem:[%s362] sm:$0x40]
  %vm364 = vcmask 1046534
  %v365 = vsel %vm364, %v363, %v361
  %s366 = scalar_lea.vmem %s0, 1527
  %v367 = vld [vmem:[%s366] sm:$0x80]
  %vm368 = vcmask 1047559
  %v369 = vsel %vm368, %v367, %v365
  %370 = vrot.lane.b32.xlu0 %v369, 124
  %v371 = vpop.permute.xlu0 %370
  %vm372 = vcmask 1032160
  %s373 = scalar_lea.vmem %s1, 16
  %374 = vst.msk [vmem:[%s373] sm:$0xff] %vm372, %v371
  %s375 = scalar_lea.vmem %s0, 1598
  %v376 = vld [vmem:[%s375] sm:$0x1]
  %s377 = scalar_lea.vmem %s0, 1661
  %v378 = vld [vmem:[%s377] sm:$0x2]
  %vm379 = vcmask 1041409
  %v380 = vsel %vm379, %v378, %v376
  %s381 = scalar_lea.vmem %s0, 1724
  %v382 = vld [vmem:[%s381] sm:$0x4]
  %vm383 = vcmask 1042434
  %v384 = vsel %vm383, %v382, %v380
  %s385 = scalar_lea.vmem %s0, 1787
  %v386 = vld [vmem:[%s385] sm:$0x8]
  %vm387 = vcmask 1043459
  %v388 = vsel %vm387, %v386, %v384
  %s389 = scalar_lea.vmem %s0, 1850
  %v390 = vld [vmem:[%s389] sm:$0x10]
  %vm391 = vcmask 1044484
  %v392 = vsel %vm391, %v390, %v388
  %s393 = scalar_lea.vmem %s0, 1913
  %v394 = vld [vmem:[%s393] sm:$0x20]
  %vm395 = vcmask 1045509
  %v396 = vsel %vm395, %v394, %v392
  %s397 = scalar_lea.vmem %s0, 1976
  %v398 = vld [vmem:[%s397] sm:$0x40]
  %vm399 = vcmask 1046534
  %v400 = vsel %vm399, %v398, %v396
  %s401 = scalar_lea.vmem %s0, 2039
  %v402 = vld [vmem:[%s401] sm:$0x80]
  %vm403 = vcmask 1047559
  %v404 = vsel %vm403, %v402, %v400
  %405 = vrot.lane.b32.xlu0 %v404, 124
  %v406 = vpop.permute.xlu0 %405
  %vm407 = vcmask 1032160
  %s408 = scalar_lea.vmem %s1, 24
  %409 = vst.msk [vmem:[%s408] sm:$0xff] %vm407, %v406
  %s410 = scalar_lea.vmem %s0, 61
  %v411 = vld [vmem:[%s410] sm:$0x1]
  %s412 = scalar_lea.vmem %s0, 124
  %v413 = vld [vmem:[%s412] sm:$0x2]
  %vm414 = vcmask 1041409
  %v415 = vsel %vm414, %v413, %v411
  %s416 = scalar_lea.vmem %s0, 187
  %v417 = vld [vmem:[%s416] sm:$0x4]
  %vm418 = vcmask 1042434
  %v419 = vsel %vm418, %v417, %v415
  %s420 = scalar_lea.vmem %s0, 250
  %v421 = vld [vmem:[%s420] sm:$0x8]
  %vm422 = vcmask 1043459
  %v423 = vsel %vm422, %v421, %v419
  %s424 = scalar_lea.vmem %s0, 313
  %v425 = vld [vmem:[%s424] sm:$0x10]
  %vm426 = vcmask 1044484
  %v427 = vsel %vm426, %v425, %v423
  %s428 = scalar_lea.vmem %s0, 376
  %v429 = vld [vmem:[%s428] sm:$0x20]
  %vm430 = vcmask 1045509
  %v431 = vsel %vm430, %v429, %v427
  %s432 = scalar_lea.vmem %s0, 439
  %v433 = vld [vmem:[%s432] sm:$0x40]
  %vm434 = vcmask 1046534
  %v435 = vsel %vm434, %v433, %v431
  %s436 = scalar_lea.vmem %s0, 502
  %v437 = vld [vmem:[%s436] sm:$0x80]
  %vm438 = vcmask 1047559
  %v439 = vsel %vm438, %v437, %v435
  %440 = vrot.lane.b32.xlu0 %v439, 122
  %v441 = vpop.permute.xlu0 %440
  %vm442 = vcmask 1015760
  %443 = vst.msk [vmem:[%s1] sm:$0xff] %vm442, %v441
  %s444 = scalar_lea.vmem %s0, 573
  %v445 = vld [vmem:[%s444] sm:$0x1]
  %s446 = scalar_lea.vmem %s0, 636
  %v447 = vld [vmem:[%s446] sm:$0x2]
  %vm448 = vcmask 1041409
  %v449 = vsel %vm448, %v447, %v445
  %s450 = scalar_lea.vmem %s0, 699
  %v451 = vld [vmem:[%s450] sm:$0x4]
  %vm452 = vcmask 1042434
  %v453 = vsel %vm452, %v451, %v449
  %s454 = scalar_lea.vmem %s0, 762
  %v455 = vld [vmem:[%s454] sm:$0x8]
  %vm456 = vcmask 1043459
  %v457 = vsel %vm456, %v455, %v453
  %s458 = scalar_lea.vmem %s0, 825
  %v459 = vld [vmem:[%s458] sm:$0x10]
  %vm460 = vcmask 1044484
  %v461 = vsel %vm460, %v459, %v457
  %s462 = scalar_lea.vmem %s0, 888
  %v463 = vld [vmem:[%s462] sm:$0x20]
  %vm464 = vcmask 1045509
  %v465 = vsel %vm464, %v463, %v461
  %s466 = scalar_lea.vmem %s0, 951
  %v467 = vld [vmem:[%s466] sm:$0x40]
  %vm468 = vcmask 1046534
  %v469 = vsel %vm468, %v467, %v465
  %s470 = scalar_lea.vmem %s0, 1014
  %v471 = vld [vmem:[%s470] sm:$0x80]
  %vm472 = vcmask 1047559
  %v473 = vsel %vm472, %v471, %v469
  %474 = vrot.lane.b32.xlu0 %v473, 122
  %v475 = vpop.permute.xlu0 %474
  %vm476 = vcmask 1015760
  %s477 = scalar_lea.vmem %s1, 8
  %478 = vst.msk [vmem:[%s477] sm:$0xff] %vm476, %v475
  %s479 = scalar_lea.vmem %s0, 1085
  %v480 = vld [vmem:[%s479] sm:$0x1]
  %s481 = scalar_lea.vmem %s0, 1148
  %v482 = vld [vmem:[%s481] sm:$0x2]
  %vm483 = vcmask 1041409
  %v484 = vsel %vm483, %v482, %v480
  %s485 = scalar_lea.vmem %s0, 1211
  %v486 = vld [vmem:[%s485] sm:$0x4]
  %vm487 = vcmask 1042434
  %v488 = vsel %vm487, %v486, %v484
  %s489 = scalar_lea.vmem %s0, 1274
  %v490 = vld [vmem:[%s489] sm:$0x8]
  %vm491 = vcmask 1043459
  %v492 = vsel %vm491, %v490, %v488
  %s493 = scalar_lea.vmem %s0, 1337
  %v494 = vld [vmem:[%s493] sm:$0x10]
  %vm495 = vcmask 1044484
  %v496 = vsel %vm495, %v494, %v492
  %s497 = scalar_lea.vmem %s0, 1400
  %v498 = vld [vmem:[%s497] sm:$0x20]
  %vm499 = vcmask 1045509
  %v500 = vsel %vm499, %v498, %v496
  %s501 = scalar_lea.vmem %s0, 1463
  %v502 = vld [vmem:[%s501] sm:$0x40]
  %vm503 = vcmask 1046534
  %v504 = vsel %vm503, %v502, %v500
  %s505 = scalar_lea.vmem %s0, 1526
  %v506 = vld [vmem:[%s505] sm:$0x80]
  %vm507 = vcmask 1047559
  %v508 = vsel %vm507, %v506, %v504
  %509 = vrot.lane.b32.xlu0 %v508, 122
  %v510 = vpop.permute.xlu0 %509
  %vm511 = vcmask 1015760
  %s512 = scalar_lea.vmem %s1, 16
  %513 = vst.msk [vmem:[%s512] sm:$0xff] %vm511, %v510
  %s514 = scalar_lea.vmem %s0, 1597
  %v515 = vld [vmem:[%s514] sm:$0x1]
  %s516 = scalar_lea.vmem %s0, 1660
  %v517 = vld [vmem:[%s516] sm:$0x2]
  %vm518 = vcmask 1041409
  %v519 = vsel %vm518, %v517, %v515
  %s520 = scalar_lea.vmem %s0, 1723
  %v521 = vld [vmem:[%s520] sm:$0x4]
  %vm522 = vcmask 1042434
  %v523 = vsel %vm522, %v521, %v519
  %s524 = scalar_lea.vmem %s0, 1786
  %v525 = vld [vmem:[%s524] sm:$0x8]
  %vm526 = vcmask 1043459
  %v527 = vsel %vm526, %v525, %v523
  %s528 = scalar_lea.vmem %s0, 1849
  %v529 = vld [vmem:[%s528] sm:$0x10]
  %vm530 = vcmask 1044484
  %v531 = vsel %vm530, %v529, %v527
  %s532 = scalar_lea.vmem %s0, 1912
  %v533 = vld [vmem:[%s532] sm:$0x20]
  %vm534 = vcmask 1045509
  %v535 = vsel %vm534, %v533, %v531
  %s536 = scalar_lea.vmem %s0, 1975
  %v537 = vld [vmem:[%s536] sm:$0x40]
  %vm538 = vcmask 1046534
  %v539 = vsel %vm538, %v537, %v535
  %s540 = scalar_lea.vmem %s0, 2038
  %v541 = vld [vmem:[%s540] sm:$0x80]
  %vm542 = vcmask 1047559
  %v543 = vsel %vm542, %v541, %v539
  %544 = vrot.lane.b32.xlu0 %v543, 122
  %v545 = vpop.permute.xlu0 %544
  %vm546 = vcmask 1015760
  %s547 = scalar_lea.vmem %s1, 24
  %548 = vst.msk [vmem:[%s547] sm:$0xff] %vm546, %v545
  %s549 = scalar_lea.vmem %s0, 60
  %v550 = vld [vmem:[%s549] sm:$0x1]
  %s551 = scalar_lea.vmem %s0, 123
  %v552 = vld [vmem:[%s551] sm:$0x2]
  %vm553 = vcmask 1041409
  %v554 = vsel %vm553, %v552, %v550
  %s555 = scalar_lea.vmem %s0, 186
  %v556 = vld [vmem:[%s555] sm:$0x4]
  %vm557 = vcmask 1042434
  %v558 = vsel %vm557, %v556, %v554
  %s559 = scalar_lea.vmem %s0, 249
  %v560 = vld [vmem:[%s559] sm:$0x8]
  %vm561 = vcmask 1043459
  %v562 = vsel %vm561, %v560, %v558
  %s563 = scalar_lea.vmem %s0, 312
  %v564 = vld [vmem:[%s563] sm:$0x10]
  %vm565 = vcmask 1044484
  %v566 = vsel %vm565, %v564, %v562
  %s567 = scalar_lea.vmem %s0, 375
  %v568 = vld [vmem:[%s567] sm:$0x20]
  %vm569 = vcmask 1045509
  %v570 = vsel %vm569, %v568, %v566
  %s571 = scalar_lea.vmem %s0, 438
  %v572 = vld [vmem:[%s571] sm:$0x40]
  %vm573 = vcmask 1046534
  %v574 = vsel %vm573, %v572, %v570
  %s575 = scalar_lea.vmem %s0, 501
  %v576 = vld [vmem:[%s575] sm:$0x80]
  %vm577 = vcmask 1047559
  %v578 = vsel %vm577, %v576, %v574
  %579 = vrot.lane.b32.xlu0 %v578, 120
  %v580 = vpop.permute.xlu0 %579
  %vm581 = vcmask 999360
  %582 = vst.msk [vmem:[%s1] sm:$0xff] %vm581, %v580
  %s583 = scalar_lea.vmem %s0, 572
  %v584 = vld [vmem:[%s583] sm:$0x1]
  %s585 = scalar_lea.vmem %s0, 635
  %v586 = vld [vmem:[%s585] sm:$0x2]
  %vm587 = vcmask 1041409
  %v588 = vsel %vm587, %v586, %v584
  %s589 = scalar_lea.vmem %s0, 698
  %v590 = vld [vmem:[%s589] sm:$0x4]
  %vm591 = vcmask 1042434
  %v592 = vsel %vm591, %v590, %v588
  %s593 = scalar_lea.vmem %s0, 761
  %v594 = vld [vmem:[%s593] sm:$0x8]
  %vm595 = vcmask 1043459
  %v596 = vsel %vm595, %v594, %v592
  %s597 = scalar_lea.vmem %s0, 824
  %v598 = vld [vmem:[%s597] sm:$0x10]
  %vm599 = vcmask 1044484
  %v600 = vsel %vm599, %v598, %v596
  %s601 = scalar_lea.vmem %s0, 887
  %v602 = vld [vmem:[%s601] sm:$0x20]
  %vm603 = vcmask 1045509
  %v604 = vsel %vm603, %v602, %v600
  %s605 = scalar_lea.vmem %s0, 950
  %v606 = vld [vmem:[%s605] sm:$0x40]
  %vm607 = vcmask 1046534
  %v608 = vsel %vm607, %v606, %v604
  %s609 = scalar_lea.vmem %s0, 1013
  %v610 = vld [vmem:[%s609] sm:$0x80]
  %vm611 = vcmask 1047559
  %v612 = vsel %vm611, %v610, %v608
  %613 = vrot.lane.b32.xlu0 %v612, 120
  %v614 = vpop.permute.xlu0 %613
  %vm615 = vcmask 999360
  %s616 = scalar_lea.vmem %s1, 8
  %617 = vst.msk [vmem:[%s616] sm:$0xff] %vm615, %v614
  %s618 = scalar_lea.vmem %s0, 1084
  %v619 = vld [vmem:[%s618] sm:$0x1]
  %s620 = scalar_lea.vmem %s0, 1147
  %v621 = vld [vmem:[%s620] sm:$0x2]
  %vm622 = vcmask 1041409
  %v623 = vsel %vm622, %v621, %v619
  %s624 = scalar_lea.vmem %s0, 1210
  %v625 = vld [vmem:[%s624] sm:$0x4]
  %vm626 = vcmask 1042434
  %v627 = vsel %vm626, %v625, %v623
  %s628 = scalar_lea.vmem %s0, 1273
  %v629 = vld [vmem:[%s628] sm:$0x8]
  %vm630 = vcmask 1043459
  %v631 = vsel %vm630, %v629, %v627
  %s632 = scalar_lea.vmem %s0, 1336
  %v633 = vld [vmem:[%s632] sm:$0x10]
  %vm634 = vcmask 1044484
  %v635 = vsel %vm634, %v633, %v631
  %s636 = scalar_lea.vmem %s0, 1399
  %v637 = vld [vmem:[%s636] sm:$0x20]
  %vm638 = vcmask 1045509
  %v639 = vsel %vm638, %v637, %v635
  %s640 = scalar_lea.vmem %s0, 1462
  %v641 = vld [vmem:[%s640] sm:$0x40]
  %vm642 = vcmask 1046534
  %v643 = vsel %vm642, %v641, %v639
  %s644 = scalar_lea.vmem %s0, 1525
  %v645 = vld [vmem:[%s644] sm:$0x80]
  %vm646 = vcmask 1047559
  %v647 = vsel %vm646, %v645, %v643
  %648 = vrot.lane.b32.xlu0 %v647, 120
  %v649 = vpop.permute.xlu0 %648
  %vm650 = vcmask 999360
  %s651 = scalar_lea.vmem %s1, 16
  %652 = vst.msk [vmem:[%s651] sm:$0xff] %vm650, %v649
  %s653 = scalar_lea.vmem %s0, 1596
  %v654 = vld [vmem:[%s653] sm:$0x1]
  %s655 = scalar_lea.vmem %s0, 1659
  %v656 = vld [vmem:[%s655] sm:$0x2]
  %vm657 = vcmask 1041409
  %v658 = vsel %vm657, %v656, %v654
  %s659 = scalar_lea.vmem %s0, 1722
  %v660 = vld [vmem:[%s659] sm:$0x4]
  %vm661 = vcmask 1042434
  %v662 = vsel %vm661, %v660, %v658
  %s663 = scalar_lea.vmem %s0, 1785
  %v664 = vld [vmem:[%s663] sm:$0x8]
  %vm665 = vcmask 1043459
  %v666 = vsel %vm665, %v664, %v662
  %s667 = scalar_lea.vmem %s0, 1848
  %v668 = vld [vmem:[%s667] sm:$0x10]
  %vm669 = vcmask 1044484
  %v670 = vsel %vm669, %v668, %v666
  %s671 = scalar_lea.vmem %s0, 1911
  %v672 = vld [vmem:[%s671] sm:$0x20]
  %vm673 = vcmask 1045509
  %v674 = vsel %vm673, %v672, %v670
  %s675 = scalar_lea.vmem %s0, 1974
  %v676 = vld [vmem:[%s675] sm:$0x40]
  %vm677 = vcmask 1046534
  %v678 = vsel %vm677, %v676, %v674
  %s679 = scalar_lea.vmem %s0, 2037
  %v680 = vld [vmem:[%s679] sm:$0x80]
  %vm681 = vcmask 1047559
  %v682 = vsel %vm681, %v680, %v678
  %683 = vrot.lane.b32.xlu0 %v682, 120
  %v684 = vpop.permute.xlu0 %683
  %vm685 = vcmask 999360
  %s686 = scalar_lea.vmem %s1, 24
  %687 = vst.msk [vmem:[%s686] sm:$0xff] %vm685, %v684
  %s688 = scalar_lea.vmem %s0, 59
  %v689 = vld [vmem:[%s688] sm:$0x1]
  %s690 = scalar_lea.vmem %s0, 122
  %v691 = vld [vmem:[%s690] sm:$0x2]
  %vm692 = vcmask 1041409
  %v693 = vsel %vm692, %v691, %v689
  %s694 = scalar_lea.vmem %s0, 185
  %v695 = vld [vmem:[%s694] sm:$0x4]
  %vm696 = vcmask 1042434
  %v697 = vsel %vm696, %v695, %v693
  %s698 = scalar_lea.vmem %s0, 248
  %v699 = vld [vmem:[%s698] sm:$0x8]
  %vm700 = vcmask 1043459
  %v701 = vsel %vm700, %v699, %v697
  %s702 = scalar_lea.vmem %s0, 311
  %v703 = vld [vmem:[%s702] sm:$0x10]
  %vm704 = vcmask 1044484
  %v705 = vsel %vm704, %v703, %v701
  %s706 = scalar_lea.vmem %s0, 374
  %v707 = vld [vmem:[%s706] sm:$0x20]
  %vm708 = vcmask 1045509
  %v709 = vsel %vm708, %v707, %v705
  %s710 = scalar_lea.vmem %s0, 437
  %v711 = vld [vmem:[%s710] sm:$0x40]
  %vm712 = vcmask 1046534
  %v713 = vsel %vm712, %v711, %v709
  %s714 = scalar_lea.vmem %s0, 500
  %v715 = vld [vmem:[%s714] sm:$0x80]
  %vm716 = vcmask 1047559
  %v717 = vsel %vm716, %v715, %v713
  %718 = vrot.lane.b32.xlu0 %v717, 118
  %v719 = vpop.permute.xlu0 %718
  %vm720 = vcmask 982960
  %721 = vst.msk [vmem:[%s1] sm:$0xff] %vm720, %v719
  %s722 = scalar_lea.vmem %s0, 571
  %v723 = vld [vmem:[%s722] sm:$0x1]
  %s724 = scalar_lea.vmem %s0, 634
  %v725 = vld [vmem:[%s724] sm:$0x2]
  %vm726 = vcmask 1041409
  %v727 = vsel %vm726, %v725, %v723
  %s728 = scalar_lea.vmem %s0, 697
  %v729 = vld [vmem:[%s728] sm:$0x4]
  %vm730 = vcmask 1042434
  %v731 = vsel %vm730, %v729, %v727
  %s732 = scalar_lea.vmem %s0, 760
  %v733 = vld [vmem:[%s732] sm:$0x8]
  %vm734 = vcmask 1043459
  %v735 = vsel %vm734, %v733, %v731
  %s736 = scalar_lea.vmem %s0, 823
  %v737 = vld [vmem:[%s736] sm:$0x10]
  %vm738 = vcmask 1044484
  %v739 = vsel %vm738, %v737, %v735
  %s740 = scalar_lea.vmem %s0, 886
  %v741 = vld [vmem:[%s740] sm:$0x20]
  %vm742 = vcmask 1045509
  %v743 = vsel %vm742, %v741, %v739
  %s744 = scalar_lea.vmem %s0, 949
  %v745 = vld [vmem:[%s744] sm:$0x40]
  %vm746 = vcmask 1046534
  %v747 = vsel %vm746, %v745, %v743
  %s748 = scalar_lea.vmem %s0, 1012
  %v749 = vld [vmem:[%s748] sm:$0x80]
  %vm750 = vcmask 1047559
  %v751 = vsel %vm750, %v749, %v747
  %752 = vrot.lane.b32.xlu0 %v751, 118
  %v753 = vpop.permute.xlu0 %752
  %vm754 = vcmask 982960
  %s755 = scalar_lea.vmem %s1, 8
  %756 = vst.msk [vmem:[%s755] sm:$0xff] %vm754, %v753
  %s757 = scalar_lea.vmem %s0, 1083
  %v758 = vld [vmem:[%s757] sm:$0x1]
  %s759 = scalar_lea.vmem %s0, 1146
  %v760 = vld [vmem:[%s759] sm:$0x2]
  %vm761 = vcmask 1041409
  %v762 = vsel %vm761, %v760, %v758
  %s763 = scalar_lea.vmem %s0, 1209
  %v764 = vld [vmem:[%s763] sm:$0x4]
  %vm765 = vcmask 1042434
  %v766 = vsel %vm765, %v764, %v762
  %s767 = scalar_lea.vmem %s0, 1272
  %v768 = vld [vmem:[%s767] sm:$0x8]
  %vm769 = vcmask 1043459
  %v770 = vsel %vm769, %v768, %v766
  %s771 = scalar_lea.vmem %s0, 1335
  %v772 = vld [vmem:[%s771] sm:$0x10]
  %vm773 = vcmask 1044484
  %v774 = vsel %vm773, %v772, %v770
  %s775 = scalar_lea.vmem %s0, 1398
  %v776 = vld [vmem:[%s775] sm:$0x20]
  %vm777 = vcmask 1045509
  %v778 = vsel %vm777, %v776, %v774
  %s779 = scalar_lea.vmem %s0, 1461
  %v780 = vld [vmem:[%s779] sm:$0x40]
  %vm781 = vcmask 1046534
  %v782 = vsel %vm781, %v780, %v778
  %s783 = scalar_lea.vmem %s0, 1524
  %v784 = vld [vmem:[%s783] sm:$0x80]
  %vm785 = vcmask 1047559
  %v786 = vsel %vm785, %v784, %v782
  %787 = vrot.lane.b32.xlu0 %v786, 118
  %v788 = vpop.permute.xlu0 %787
  %vm789 = vcmask 982960
  %s790 = scalar_lea.vmem %s1, 16
  %791 = vst.msk [vmem:[%s790] sm:$0xff] %vm789, %v788
  %s792 = scalar_lea.vmem %s0, 1595
  %v793 = vld [vmem:[%s792] sm:$0x1]
  %s794 = scalar_lea.vmem %s0, 1658
  %v795 = vld [vmem:[%s794] sm:$0x2]
  %vm796 = vcmask 1041409
  %v797 = vsel %vm796, %v795, %v793
  %s798 = scalar_lea.vmem %s0, 1721
  %v799 = vld [vmem:[%s798] sm:$0x4]
  %vm800 = vcmask 1042434
  %v801 = vsel %vm800, %v799, %v797
  %s802 = scalar_lea.vmem %s0, 1784
  %v803 = vld [vmem:[%s802] sm:$0x8]
  %vm804 = vcmask 1043459
  %v805 = vsel %vm804, %v803, %v801
  %s806 = scalar_lea.vmem %s0, 1847
  %v807 = vld [vmem:[%s806] sm:$0x10]
  %vm808 = vcmask 1044484
  %v809 = vsel %vm808, %v807, %v805
  %s810 = scalar_lea.vmem %s0, 1910
  %v811 = vld [vmem:[%s810] sm:$0x20]
  %vm812 = vcmask 1045509
  %v813 = vsel %vm812, %v811, %v809
  %s814 = scalar_lea.vmem %s0, 1973
  %v815 = vld [vmem:[%s814] sm:$0x40]
  %vm816 = vcmask 1046534
  %v817 = vsel %vm816, %v815, %v813
  %s818 = scalar_lea.vmem %s0, 2036
  %v819 = vld [vmem:[%s818] sm:$0x80]
  %vm820 = vcmask 1047559
  %v821 = vsel %vm820, %v819, %v817
  %822 = vrot.lane.b32.xlu0 %v821, 118
  %v823 = vpop.permute.xlu0 %822
  %vm824 = vcmask 982960
  %s825 = scalar_lea.vmem %s1, 24
  %826 = vst.msk [vmem:[%s825] sm:$0xff] %vm824, %v823
  %s827 = scalar_lea.vmem %s0, 58
  %v828 = vld [vmem:[%s827] sm:$0x1]
  %s829 = scalar_lea.vmem %s0, 121
  %v830 = vld [vmem:[%s829] sm:$0x2]
  %vm831 = vcmask 1041409
  %v832 = vsel %vm831, %v830, %v828
  %s833 = scalar_lea.vmem %s0, 184
  %v834 = vld [vmem:[%s833] sm:$0x4]
  %vm835 = vcmask 1042434
  %v836 = vsel %vm835, %v834, %v832
  %s837 = scalar_lea.vmem %s0, 247
  %v838 = vld [vmem:[%s837] sm:$0x8]
  %vm839 = vcmask 1043459
  %v840 = vsel %vm839, %v838, %v836
  %s841 = scalar_lea.vmem %s0, 310
  %v842 = vld [vmem:[%s841] sm:$0x10]
  %vm843 = vcmask 1044484
  %v844 = vsel %vm843, %v842, %v840
  %s845 = scalar_lea.vmem %s0, 373
  %v846 = vld [vmem:[%s845] sm:$0x20]
  %vm847 = vcmask 1045509
  %v848 = vsel %vm847, %v846, %v844
  %s849 = scalar_lea.vmem %s0, 436
  %v850 = vld [vmem:[%s849] sm:$0x40]
  %vm851 = vcmask 1046534
  %v852 = vsel %vm851, %v850, %v848
  %s853 = scalar_lea.vmem %s0, 499
  %v854 = vld [vmem:[%s853] sm:$0x80]
  %vm855 = vcmask 1047559
  %v856 = vsel %vm855, %v854, %v852
  %857 = vrot.lane.b32.xlu0 %v856, 116
  %v858 = vpop.permute.xlu0 %857
  %vm859 = vcmask 966560
  %860 = vst.msk [vmem:[%s1] sm:$0xff] %vm859, %v858
  %s861 = scalar_lea.vmem %s0, 570
  %v862 = vld [vmem:[%s861] sm:$0x1]
  %s863 = scalar_lea.vmem %s0, 633
  %v864 = vld [vmem:[%s863] sm:$0x2]
  %vm865 = vcmask 1041409
  %v866 = vsel %vm865, %v864, %v862
  %s867 = scalar_lea.vmem %s0, 696
  %v868 = vld [vmem:[%s867] sm:$0x4]
  %vm869 = vcmask 1042434
  %v870 = vsel %vm869, %v868, %v866
  %s871 = scalar_lea.vmem %s0, 759
  %v872 = vld [vmem:[%s871] sm:$0x8]
  %vm873 = vcmask 1043459
  %v874 = vsel %vm873, %v872, %v870
  %s875 = scalar_lea.vmem %s0, 822
  %v876 = vld [vmem:[%s875] sm:$0x10]
  %vm877 = vcmask 1044484
  %v878 = vsel %vm877, %v876, %v874
  %s879 = scalar_lea.vmem %s0, 885
  %v880 = vld [vmem:[%s879] sm:$0x20]
  %vm881 = vcmask 1045509
  %v882 = vsel %vm881, %v880, %v878
  %s883 = scalar_lea.vmem %s0, 948
  %v884 = vld [vmem:[%s883] sm:$0x40]
  %vm885 = vcmask 1046534
  %v886 = vsel %vm885, %v884, %v882
  %s887 = scalar_lea.vmem %s0, 1011
  %v888 = vld [vmem:[%s887] sm:$0x80]
  %vm889 = vcmask 1047559
  %v890 = vsel %vm889, %v888, %v886
  %891 = vrot.lane.b32.xlu0 %v890, 116
  %v892 = vpop.permute.xlu0 %891
  %vm893 = vcmask 966560
  %s894 = scalar_lea.vmem %s1, 8
  %895 = vst.msk [vmem:[%s894] sm:$0xff] %vm893, %v892
  %s896 = scalar_lea.vmem %s0, 1082
  %v897 = vld [vmem:[%s896] sm:$0x1]
  %s898 = scalar_lea.vmem %s0, 1145
  %v899 = vld [vmem:[%s898] sm:$0x2]
  %vm900 = vcmask 1041409
  %v901 = vsel %vm900, %v899, %v897
  %s902 = scalar_lea.vmem %s0, 1208
  %v903 = vld [vmem:[%s902] sm:$0x4]
  %vm904 = vcmask 1042434
  %v905 = vsel %vm904, %v903, %v901
  %s906 = scalar_lea.vmem %s0, 1271
  %v907 = vld [vmem:[%s906] sm:$0x8]
  %vm908 = vcmask 1043459
  %v909 = vsel %vm908, %v907, %v905
  %s910 = scalar_lea.vmem %s0, 1334
  %v911 = vld [vmem:[%s910] sm:$0x10]
  %vm912 = vcmask 1044484
  %v913 = vsel %vm912, %v911, %v909
  %s914 = scalar_lea.vmem %s0, 1397
  %v915 = vld [vmem:[%s914] sm:$0x20]
  %vm916 = vcmask 1045509
  %v917 = vsel %vm916, %v915, %v913
  %s918 = scalar_lea.vmem %s0, 1460
  %v919 = vld [vmem:[%s918] sm:$0x40]
  %vm920 = vcmask 1046534
  %v921 = vsel %vm920, %v919, %v917
  %s922 = scalar_lea.vmem %s0, 1523
  %v923 = vld [vmem:[%s922] sm:$0x80]
  %vm924 = vcmask 1047559
  %v925 = vsel %vm924, %v923, %v921
  %926 = vrot.lane.b32.xlu0 %v925, 116
  %v927 = vpop.permute.xlu0 %926
  %vm928 = vcmask 966560
  %s929 = scalar_lea.vmem %s1, 16
  %930 = vst.msk [vmem:[%s929] sm:$0xff] %vm928, %v927
  %s931 = scalar_lea.vmem %s0, 1594
  %v932 = vld [vmem:[%s931] sm:$0x1]
  %s933 = scalar_lea.vmem %s0, 1657
  %v934 = vld [vmem:[%s933] sm:$0x2]
  %vm935 = vcmask 1041409
  %v936 = vsel %vm935, %v934, %v932
  %s937 = scalar_lea.vmem %s0, 1720
  %v938 = vld [vmem:[%s937] sm:$0x4]
  %vm939 = vcmask 1042434
  %v940 = vsel %vm939, %v938, %v936
  %s941 = scalar_lea.vmem %s0, 1783
  %v942 = vld [vmem:[%s941] sm:$0x8]
  %vm943 = vcmask 1043459
  %v944 = vsel %vm943, %v942, %v940
  %s945 = scalar_lea.vmem %s0, 1846
  %v946 = vld [vmem:[%s945] sm:$0x10]
  %vm947 = vcmask 1044484
  %v948 = vsel %vm947, %v946, %v944
  %s949 = scalar_lea.vmem %s0, 1909
  %v950 = vld [vmem:[%s949] sm:$0x20]
  %vm951 = vcmask 1045509
  %v952 = vsel %vm951, %v950, %v948
  %s953 = scalar_lea.vmem %s0, 1972
  %v954 = vld [vmem:[%s953] sm:$0x40]
  %vm955 = vcmask 1046534
  %v956 = vsel %vm955, %v954, %v952
  %s957 = scalar_lea.vmem %s0, 2035
  %v958 = vld [vmem:[%s957] sm:$0x80]
  %vm959 = vcmask 1047559
  %v960 = vsel %vm959, %v958, %v956
  %961 = vrot.lane.b32.xlu0 %v960, 116
  %v962 = vpop.permute.xlu0 %961
  %vm963 = vcmask 966560
  %s964 = scalar_lea.vmem %s1, 24
  %965 = vst.msk [vmem:[%s964] sm:$0xff] %vm963, %v962
  %s966 = scalar_lea.vmem %s0, 57
  %v967 = vld [vmem:[%s966] sm:$0x1]
  %s968 = scalar_lea.vmem %s0, 120
  %v969 = vld [vmem:[%s968] sm:$0x2]
  %vm970 = vcmask 1041409
  %v971 = vsel %vm970, %v969, %v967
  %s972 = scalar_lea.vmem %s0, 183
  %v973 = vld [vmem:[%s972] sm:$0x4]
  %vm974 = vcmask 1042434
  %v975 = vsel %vm974, %v973, %v971
  %s976 = scalar_lea.vmem %s0, 246
  %v977 = vld [vmem:[%s976] sm:$0x8]
  %vm978 = vcmask 1043459
  %v979 = vsel %vm978, %v977, %v975
  %s980 = scalar_lea.vmem %s0, 309
  %v981 = vld [vmem:[%s980] sm:$0x10]
  %vm982 = vcmask 1044484
  %v983 = vsel %vm982, %v981, %v979
  %s984 = scalar_lea.vmem %s0, 372
  %v985 = vld [vmem:[%s984] sm:$0x20]
  %vm986 = vcmask 1045509
  %v987 = vsel %vm986, %v985, %v983
  %s988 = scalar_lea.vmem %s0, 435
  %v989 = vld [vmem:[%s988] sm:$0x40]
  %vm990 = vcmask 1046534
  %v991 = vsel %vm990, %v989, %v987
  %s992 = scalar_lea.vmem %s0, 498
  %v993 = vld [vmem:[%s992] sm:$0x80]
  %vm994 = vcmask 1047559
  %v995 = vsel %vm994, %v993, %v991
  %996 = vrot.lane.b32.xlu0 %v995, 114
  %v997 = vpop.permute.xlu0 %996
  %vm998 = vcmask 950160
  %999 = vst.msk [vmem:[%s1] sm:$0xff] %vm998, %v997
  %s1000 = scalar_lea.vmem %s0, 569
  %v1001 = vld [vmem:[%s1000] sm:$0x1]
  %s1002 = scalar_lea.vmem %s0, 632
  %v1003 = vld [vmem:[%s1002] sm:$0x2]
  %vm1004 = vcmask 1041409
  %v1005 = vsel %vm1004, %v1003, %v1001
  %s1006 = scalar_lea.vmem %s0, 695
  %v1007 = vld [vmem:[%s1006] sm:$0x4]
  %vm1008 = vcmask 1042434
  %v1009 = vsel %vm1008, %v1007, %v1005
  %s1010 = scalar_lea.vmem %s0, 758
  %v1011 = vld [vmem:[%s1010] sm:$0x8]
  %vm1012 = vcmask 1043459
  %v1013 = vsel %vm1012, %v1011, %v1009
  %s1014 = scalar_lea.vmem %s0, 821
  %v1015 = vld [vmem:[%s1014] sm:$0x10]
  %vm1016 = vcmask 1044484
  %v1017 = vsel %vm1016, %v1015, %v1013
  %s1018 = scalar_lea.vmem %s0, 884
  %v1019 = vld [vmem:[%s1018] sm:$0x20]
  %vm1020 = vcmask 1045509
  %v1021 = vsel %vm1020, %v1019, %v1017
  %s1022 = scalar_lea.vmem %s0, 947
  %v1023 = vld [vmem:[%s1022] sm:$0x40]
  %vm1024 = vcmask 1046534
  %v1025 = vsel %vm1024, %v1023, %v1021
  %s1026 = scalar_lea.vmem %s0, 1010
  %v1027 = vld [vmem:[%s1026] sm:$0x80]
  %vm1028 = vcmask 1047559
  %v1029 = vsel %vm1028, %v1027, %v1025
  %1030 = vrot.lane.b32.xlu0 %v1029, 114
  %v1031 = vpop.permute.xlu0 %1030
  %vm1032 = vcmask 950160
  %s1033 = scalar_lea.vmem %s1, 8
  %1034 = vst.msk [vmem:[%s1033] sm:$0xff] %vm1032, %v1031
  %s1035 = scalar_lea.vmem %s0, 1081
  %v1036 = vld [vmem:[%s1035] sm:$0x1]
  %s1037 = scalar_lea.vmem %s0, 1144
  %v1038 = vld [vmem:[%s1037] sm:$0x2]
  %vm1039 = vcmask 1041409
  %v1040 = vsel %vm1039, %v1038, %v1036
  %s1041 = scalar_lea.vmem %s0, 1207
  %v1042 = vld [vmem:[%s1041] sm:$0x4]
  %vm1043 = vcmask 1042434
  %v1044 = vsel %vm1043, %v1042, %v1040
  %s1045 = scalar_lea.vmem %s0, 1270
  %v1046 = vld [vmem:[%s1045] sm:$0x8]
  %vm1047 = vcmask 1043459
  %v1048 = vsel %vm1047, %v1046, %v1044
  %s1049 = scalar_lea.vmem %s0, 1333
  %v1050 = vld [vmem:[%s1049] sm:$0x10]
  %vm1051 = vcmask 1044484
  %v1052 = vsel %vm1051, %v1050, %v1048
  %s1053 = scalar_lea.vmem %s0, 1396
  %v1054 = vld [vmem:[%s1053] sm:$0x20]
  %vm1055 = vcmask 1045509
  %v1056 = vsel %vm1055, %v1054, %v1052
  %s1057 = scalar_lea.vmem %s0, 1459
  %v1058 = vld [vmem:[%s1057] sm:$0x40]
  %vm1059 = vcmask 1046534
  %v1060 = vsel %vm1059, %v1058, %v1056
  %s1061 = scalar_lea.vmem %s0, 1522
  %v1062 = vld [vmem:[%s1061] sm:$0x80]
  %vm1063 = vcmask 1047559
  %v1064 = vsel %vm1063, %v1062, %v1060
  %1065 = vrot.lane.b32.xlu0 %v1064, 114
  %v1066 = vpop.permute.xlu0 %1065
  %vm1067 = vcmask 950160
  %s1068 = scalar_lea.vmem %s1, 16
  %1069 = vst.msk [vmem:[%s1068] sm:$0xff] %vm1067, %v1066
  %s1070 = scalar_lea.vmem %s0, 1593
  %v1071 = vld [vmem:[%s1070] sm:$0x1]
  %s1072 = scalar_lea.vmem %s0, 1656
  %v1073 = vld [vmem:[%s1072] sm:$0x2]
  %vm1074 = vcmask 1041409
  %v1075 = vsel %vm1074, %v1073, %v1071
  %s1076 = scalar_lea.vmem %s0, 1719
  %v1077 = vld [vmem:[%s1076] sm:$0x4]
  %vm1078 = vcmask 1042434
  %v1079 = vsel %vm1078, %v1077, %v1075
  %s1080 = scalar_lea.vmem %s0, 1782
  %v1081 = vld [vmem:[%s1080] sm:$0x8]
  %vm1082 = vcmask 1043459
  %v1083 = vsel %vm1082, %v1081, %v1079
  %s1084 = scalar_lea.vmem %s0, 1845
  %v1085 = vld [vmem:[%s1084] sm:$0x10]
  %vm1086 = vcmask 1044484
  %v1087 = vsel %vm1086, %v1085, %v1083
  %s1088 = scalar_lea.vmem %s0, 1908
  %v1089 = vld [vmem:[%s1088] sm:$0x20]
  %vm1090 = vcmask 1045509
  %v1091 = vsel %vm1090, %v1089, %v1087
  %s1092 = scalar_lea.vmem %s0, 1971
  %v1093 = vld [vmem:[%s1092] sm:$0x40]
  %vm1094 = vcmask 1046534
  %v1095 = vsel %vm1094, %v1093, %v1091
  %s1096 = scalar_lea.vmem %s0, 2034
  %v1097 = vld [vmem:[%s1096] sm:$0x80]
  %vm1098 = vcmask 1047559
  %v1099 = vsel %vm1098, %v1097, %v1095
  %1100 = vrot.lane.b32.xlu0 %v1099, 114
  %v1101 = vpop.permute.xlu0 %1100
  %vm1102 = vcmask 950160
  %s1103 = scalar_lea.vmem %s1, 24
  %1104 = vst.msk [vmem:[%s1103] sm:$0xff] %vm1102, %v1101
  %s1105 = scalar_lea.vmem %s0, 56
  %v1106 = vld [vmem:[%s1105] sm:$0x1]
  %s1107 = scalar_lea.vmem %s0, 119
  %v1108 = vld [vmem:[%s1107] sm:$0x2]
  %vm1109 = vcmask 1041409
  %v1110 = vsel %vm1109, %v1108, %v1106
  %s1111 = scalar_lea.vmem %s0, 182
  %v1112 = vld [vmem:[%s1111] sm:$0x4]
  %vm1113 = vcmask 1042434
  %v1114 = vsel %vm1113, %v1112, %v1110
  %s1115 = scalar_lea.vmem %s0, 245
  %v1116 = vld [vmem:[%s1115] sm:$0x8]
  %vm1117 = vcmask 1043459
  %v1118 = vsel %vm1117, %v1116, %v1114
  %s1119 = scalar_lea.vmem %s0, 308
  %v1120 = vld [vmem:[%s1119] sm:$0x10]
  %vm1121 = vcmask 1044484
  %v1122 = vsel %vm1121, %v1120, %v1118
  %s1123 = scalar_lea.vmem %s0, 371
  %v1124 = vld [vmem:[%s1123] sm:$0x20]
  %vm1125 = vcmask 1045509
  %v1126 = vsel %vm1125, %v1124, %v1122
  %s1127 = scalar_lea.vmem %s0, 434
  %v1128 = vld [vmem:[%s1127] sm:$0x40]
  %vm1129 = vcmask 1046534
  %v1130 = vsel %vm1129, %v1128, %v1126
  %s1131 = scalar_lea.vmem %s0, 497
  %v1132 = vld [vmem:[%s1131] sm:$0x80]
  %vm1133 = vcmask 1047559
  %v1134 = vsel %vm1133, %v1132, %v1130
  %1135 = vrot.lane.b32.xlu0 %v1134, 112
  %v1136 = vpop.permute.xlu0 %1135
  %vm1137 = vcmask 933760
  %1138 = vst.msk [vmem:[%s1] sm:$0xff] %vm1137, %v1136
  %s1139 = scalar_lea.vmem %s0, 568
  %v1140 = vld [vmem:[%s1139] sm:$0x1]
  %s1141 = scalar_lea.vmem %s0, 631
  %v1142 = vld [vmem:[%s1141] sm:$0x2]
  %vm1143 = vcmask 1041409
  %v1144 = vsel %vm1143, %v1142, %v1140
  %s1145 = scalar_lea.vmem %s0, 694
  %v1146 = vld [vmem:[%s1145] sm:$0x4]
  %vm1147 = vcmask 1042434
  %v1148 = vsel %vm1147, %v1146, %v1144
  %s1149 = scalar_lea.vmem %s0, 757
  %v1150 = vld [vmem:[%s1149] sm:$0x8]
  %vm1151 = vcmask 1043459
  %v1152 = vsel %vm1151, %v1150, %v1148
  %s1153 = scalar_lea.vmem %s0, 820
  %v1154 = vld [vmem:[%s1153] sm:$0x10]
  %vm1155 = vcmask 1044484
  %v1156 = vsel %vm1155, %v1154, %v1152
  %s1157 = scalar_lea.vmem %s0, 883
  %v1158 = vld [vmem:[%s1157] sm:$0x20]
  %vm1159 = vcmask 1045509
  %v1160 = vsel %vm1159, %v1158, %v1156
  %s1161 = scalar_lea.vmem %s0, 946
  %v1162 = vld [vmem:[%s1161] sm:$0x40]
  %vm1163 = vcmask 1046534
  %v1164 = vsel %vm1163, %v1162, %v1160
  %s1165 = scalar_lea.vmem %s0, 1009
  %v1166 = vld [vmem:[%s1165] sm:$0x80]
  %vm1167 = vcmask 1047559
  %v1168 = vsel %vm1167, %v1166, %v1164
  %1169 = vrot.lane.b32.xlu0 %v1168, 112
  %v1170 = vpop.permute.xlu0 %1169
  %vm1171 = vcmask 933760
  %s1172 = scalar_lea.vmem %s1, 8
  %1173 = vst.msk [vmem:[%s1172] sm:$0xff] %vm1171, %v1170
  %s1174 = scalar_lea.vmem %s0, 1080
  %v1175 = vld [vmem:[%s1174] sm:$0x1]
  %s1176 = scalar_lea.vmem %s0, 1143
  %v1177 = vld [vmem:[%s1176] sm:$0x2]
  %vm1178 = vcmask 1041409
  %v1179 = vsel %vm1178, %v1177, %v1175
  %s1180 = scalar_lea.vmem %s0, 1206
  %v1181 = vld [vmem:[%s1180] sm:$0x4]
  %vm1182 = vcmask 1042434
  %v1183 = vsel %vm1182, %v1181, %v1179
  %s1184 = scalar_lea.vmem %s0, 1269
  %v1185 = vld [vmem:[%s1184] sm:$0x8]
  %vm1186 = vcmask 1043459
  %v1187 = vsel %vm1186, %v1185, %v1183
  %s1188 = scalar_lea.vmem %s0, 1332
  %v1189 = vld [vmem:[%s1188] sm:$0x10]
  %vm1190 = vcmask 1044484
  %v1191 = vsel %vm1190, %v1189, %v1187
  %s1192 = scalar_lea.vmem %s0, 1395
  %v1193 = vld [vmem:[%s1192] sm:$0x20]
  %vm1194 = vcmask 1045509
  %v1195 = vsel %vm1194, %v1193, %v1191
  %s1196 = scalar_lea.vmem %s0, 1458
  %v1197 = vld [vmem:[%s1196] sm:$0x40]
  %vm1198 = vcmask 1046534
  %v1199 = vsel %vm1198, %v1197, %v1195
  %s1200 = scalar_lea.vmem %s0, 1521
  %v1201 = vld [vmem:[%s1200] sm:$0x80]
  %vm1202 = vcmask 1047559
  %v1203 = vsel %vm1202, %v1201, %v1199
  %1204 = vrot.lane.b32.xlu0 %v1203, 112
  %v1205 = vpop.permute.xlu0 %1204
  %vm1206 = vcmask 933760
  %s1207 = scalar_lea.vmem %s1, 16
  %1208 = vst.msk [vmem:[%s1207] sm:$0xff] %vm1206, %v1205
  %s1209 = scalar_lea.vmem %s0, 1592
  %v1210 = vld [vmem:[%s1209] sm:$0x1]
  %s1211 = scalar_lea.vmem %s0, 1655
  %v1212 = vld [vmem:[%s1211] sm:$0x2]
  %vm1213 = vcmask 1041409
  %v1214 = vsel %vm1213, %v1212, %v1210
  %s1215 = scalar_lea.vmem %s0, 1718
  %v1216 = vld [vmem:[%s1215] sm:$0x4]
  %vm1217 = vcmask 1042434
  %v1218 = vsel %vm1217, %v1216, %v1214
  %s1219 = scalar_lea.vmem %s0, 1781
  %v1220 = vld [vmem:[%s1219] sm:$0x8]
  %vm1221 = vcmask 1043459
  %v1222 = vsel %vm1221, %v1220, %v1218
  %s1223 = scalar_lea.vmem %s0, 1844
  %v1224 = vld [vmem:[%s1223] sm:$0x10]
  %vm1225 = vcmask 1044484
  %v1226 = vsel %vm1225, %v1224, %v1222
  %s1227 = scalar_lea.vmem %s0, 1907
  %v1228 = vld [vmem:[%s1227] sm:$0x20]
  %vm1229 = vcmask 1045509
  %v1230 = vsel %vm1229, %v1228, %v1226
  %s1231 = scalar_lea.vmem %s0, 1970
  %v1232 = vld [vmem:[%s1231] sm:$0x40]
  %vm1233 = vcmask 1046534
  %v1234 = vsel %vm1233, %v1232, %v1230
  %s1235 = scalar_lea.vmem %s0, 2033
  %v1236 = vld [vmem:[%s1235] sm:$0x80]
  %vm1237 = vcmask 1047559
  %v1238 = vsel %vm1237, %v1236, %v1234
  %1239 = vrot.lane.b32.xlu0 %v1238, 112
  %v1240 = vpop.permute.xlu0 %1239
  %vm1241 = vcmask 933760
  %s1242 = scalar_lea.vmem %s1, 24
  %1243 = vst.msk [vmem:[%s1242] sm:$0xff] %vm1241, %v1240
  %s1244 = scalar_lea.vmem %s0, 55
  %v1245 = vld [vmem:[%s1244] sm:$0x1]
  %s1246 = scalar_lea.vmem %s0, 118
  %v1247 = vld [vmem:[%s1246] sm:$0x2]
  %vm1248 = vcmask 1041409
  %v1249 = vsel %vm1248, %v1247, %v1245
  %s1250 = scalar_lea.vmem %s0, 181
  %v1251 = vld [vmem:[%s1250] sm:$0x4]
  %vm1252 = vcmask 1042434
  %v1253 = vsel %vm1252, %v1251, %v1249
  %s1254 = scalar_lea.vmem %s0, 244
  %v1255 = vld [vmem:[%s1254] sm:$0x8]
  %vm1256 = vcmask 1043459
  %v1257 = vsel %vm1256, %v1255, %v1253
  %s1258 = scalar_lea.vmem %s0, 307
  %v1259 = vld [vmem:[%s1258] sm:$0x10]
  %vm1260 = vcmask 1044484
  %v1261 = vsel %vm1260, %v1259, %v1257
  %s1262 = scalar_lea.vmem %s0, 370
  %v1263 = vld [vmem:[%s1262] sm:$0x20]
  %vm1264 = vcmask 1045509
  %v1265 = vsel %vm1264, %v1263, %v1261
  %s1266 = scalar_lea.vmem %s0, 433
  %v1267 = vld [vmem:[%s1266] sm:$0x40]
  %vm1268 = vcmask 1046534
  %v1269 = vsel %vm1268, %v1267, %v1265
  %s1270 = scalar_lea.vmem %s0, 496
  %v1271 = vld [vmem:[%s1270] sm:$0x80]
  %vm1272 = vcmask 1047559
  %v1273 = vsel %vm1272, %v1271, %v1269
  %1274 = vrot.lane.b32.xlu0 %v1273, 110
  %v1275 = vpop.permute.xlu0 %1274
  %vm1276 = vcmask 917360
  %1277 = vst.msk [vmem:[%s1] sm:$0xff] %vm1276, %v1275
  %s1278 = scalar_lea.vmem %s0, 567
  %v1279 = vld [vmem:[%s1278] sm:$0x1]
  %s1280 = scalar_lea.vmem %s0, 630
  %v1281 = vld [vmem:[%s1280] sm:$0x2]
  %vm1282 = vcmask 1041409
  %v1283 = vsel %vm1282, %v1281, %v1279
  %s1284 = scalar_lea.vmem %s0, 693
  %v1285 = vld [vmem:[%s1284] sm:$0x4]
  %vm1286 = vcmask 1042434
  %v1287 = vsel %vm1286, %v1285, %v1283
  %s1288 = scalar_lea.vmem %s0, 756
  %v1289 = vld [vmem:[%s1288] sm:$0x8]
  %vm1290 = vcmask 1043459
  %v1291 = vsel %vm1290, %v1289, %v1287
  %s1292 = scalar_lea.vmem %s0, 819
  %v1293 = vld [vmem:[%s1292] sm:$0x10]
  %vm1294 = vcmask 1044484
  %v1295 = vsel %vm1294, %v1293, %v1291
  %s1296 = scalar_lea.vmem %s0, 882
  %v1297 = vld [vmem:[%s1296] sm:$0x20]
  %vm1298 = vcmask 1045509
  %v1299 = vsel %vm1298, %v1297, %v1295
  %s1300 = scalar_lea.vmem %s0, 945
  %v1301 = vld [vmem:[%s1300] sm:$0x40]
  %vm1302 = vcmask 1046534
  %v1303 = vsel %vm1302, %v1301, %v1299
  %s1304 = scalar_lea.vmem %s0, 1008
  %v1305 = vld [vmem:[%s1304] sm:$0x80]
  %vm1306 = vcmask 1047559
  %v1307 = vsel %vm1306, %v1305, %v1303
  %1308 = vrot.lane.b32.xlu0 %v1307, 110
  %v1309 = vpop.permute.xlu0 %1308
  %vm1310 = vcmask 917360
  %s1311 = scalar_lea.vmem %s1, 8
  %1312 = vst.msk [vmem:[%s1311] sm:$0xff] %vm1310, %v1309
  %s1313 = scalar_lea.vmem %s0, 1079
  %v1314 = vld [vmem:[%s1313] sm:$0x1]
  %s1315 = scalar_lea.vmem %s0, 1142
  %v1316 = vld [vmem:[%s1315] sm:$0x2]
  %vm1317 = vcmask 1041409
  %v1318 = vsel %vm1317, %v1316, %v1314
  %s1319 = scalar_lea.vmem %s0, 1205
  %v1320 = vld [vmem:[%s1319] sm:$0x4]
  %vm1321 = vcmask 1042434
  %v1322 = vsel %vm1321, %v1320, %v1318
  %s1323 = scalar_lea.vmem %s0, 1268
  %v1324 = vld [vmem:[%s1323] sm:$0x8]
  %vm1325 = vcmask 1043459
  %v1326 = vsel %vm1325, %v1324, %v1322
  %s1327 = scalar_lea.vmem %s0, 1331
  %v1328 = vld [vmem:[%s1327] sm:$0x10]
  %vm1329 = vcmask 1044484
  %v1330 = vsel %vm1329, %v1328, %v1326
  %s1331 = scalar_lea.vmem %s0, 1394
  %v1332 = vld [vmem:[%s1331] sm:$0x20]
  %vm1333 = vcmask 1045509
  %v1334 = vsel %vm1333, %v1332, %v1330
  %s1335 = scalar_lea.vmem %s0, 1457
  %v1336 = vld [vmem:[%s1335] sm:$0x40]
  %vm1337 = vcmask 1046534
  %v1338 = vsel %vm1337, %v1336, %v1334
  %s1339 = scalar_lea.vmem %s0, 1520
  %v1340 = vld [vmem:[%s1339] sm:$0x80]
  %vm1341 = vcmask 1047559
  %v1342 = vsel %vm1341, %v1340, %v1338
  %1343 = vrot.lane.b32.xlu0 %v1342, 110
  %v1344 = vpop.permute.xlu0 %1343
  %vm1345 = vcmask 917360
  %s1346 = scalar_lea.vmem %s1, 16
  %1347 = vst.msk [vmem:[%s1346] sm:$0xff] %vm1345, %v1344
  %s1348 = scalar_lea.vmem %s0, 1591
  %v1349 = vld [vmem:[%s1348] sm:$0x1]
  %s1350 = scalar_lea.vmem %s0, 1654
  %v1351 = vld [vmem:[%s1350] sm:$0x2]
  %vm1352 = vcmask 1041409
  %v1353 = vsel %vm1352, %v1351, %v1349
  %s1354 = scalar_lea.vmem %s0, 1717
  %v1355 = vld [vmem:[%s1354] sm:$0x4]
  %vm1356 = vcmask 1042434
  %v1357 = vsel %vm1356, %v1355, %v1353
  %s1358 = scalar_lea.vmem %s0, 1780
  %v1359 = vld [vmem:[%s1358] sm:$0x8]
  %vm1360 = vcmask 1043459
  %v1361 = vsel %vm1360, %v1359, %v1357
  %s1362 = scalar_lea.vmem %s0, 1843
  %v1363 = vld [vmem:[%s1362] sm:$0x10]
  %vm1364 = vcmask 1044484
  %v1365 = vsel %vm1364, %v1363, %v1361
  %s1366 = scalar_lea.vmem %s0, 1906
  %v1367 = vld [vmem:[%s1366] sm:$0x20]
  %vm1368 = vcmask 1045509
  %v1369 = vsel %vm1368, %v1367, %v1365
  %s1370 = scalar_lea.vmem %s0, 1969
  %v1371 = vld [vmem:[%s1370] sm:$0x40]
  %vm1372 = vcmask 1046534
  %v1373 = vsel %vm1372, %v1371, %v1369
  %s1374 = scalar_lea.vmem %s0, 2032
  %v1375 = vld [vmem:[%s1374] sm:$0x80]
  %vm1376 = vcmask 1047559
  %v1377 = vsel %vm1376, %v1375, %v1373
  %1378 = vrot.lane.b32.xlu0 %v1377, 110
  %v1379 = vpop.permute.xlu0 %1378
  %vm1380 = vcmask 917360
  %s1381 = scalar_lea.vmem %s1, 24
  %1382 = vst.msk [vmem:[%s1381] sm:$0xff] %vm1380, %v1379
  %s1383 = scalar_lea.vmem %s0, 54
  %v1384 = vld [vmem:[%s1383] sm:$0x1]
  %s1385 = scalar_lea.vmem %s0, 117
  %v1386 = vld [vmem:[%s1385] sm:$0x2]
  %vm1387 = vcmask 1041409
  %v1388 = vsel %vm1387, %v1386, %v1384
  %s1389 = scalar_lea.vmem %s0, 180
  %v1390 = vld [vmem:[%s1389] sm:$0x4]
  %vm1391 = vcmask 1042434
  %v1392 = vsel %vm1391, %v1390, %v1388
  %s1393 = scalar_lea.vmem %s0, 243
  %v1394 = vld [vmem:[%s1393] sm:$0x8]
  %vm1395 = vcmask 1043459
  %v1396 = vsel %vm1395, %v1394, %v1392
  %s1397 = scalar_lea.vmem %s0, 306
  %v1398 = vld [vmem:[%s1397] sm:$0x10]
  %vm1399 = vcmask 1044484
  %v1400 = vsel %vm1399, %v1398, %v1396
  %s1401 = scalar_lea.vmem %s0, 369
  %v1402 = vld [vmem:[%s1401] sm:$0x20]
  %vm1403 = vcmask 1045509
  %v1404 = vsel %vm1403, %v1402, %v1400
  %s1405 = scalar_lea.vmem %s0, 432
  %v1406 = vld [vmem:[%s1405] sm:$0x40]
  %vm1407 = vcmask 1046534
  %v1408 = vsel %vm1407, %v1406, %v1404
  %s1409 = scalar_lea.vmem %s0, 495
  %v1410 = vld [vmem:[%s1409] sm:$0x80]
  %vm1411 = vcmask 1047559
  %v1412 = vsel %vm1411, %v1410, %v1408
  %1413 = vrot.lane.b32.xlu0 %v1412, 108
  %v1414 = vpop.permute.xlu0 %1413
  %vm1415 = vcmask 900960
  %1416 = vst.msk [vmem:[%s1] sm:$0xff] %vm1415, %v1414
  %s1417 = scalar_lea.vmem %s0, 566
  %v1418 = vld [vmem:[%s1417] sm:$0x1]
  %s1419 = scalar_lea.vmem %s0, 629
  %v1420 = vld [vmem:[%s1419] sm:$0x2]
  %vm1421 = vcmask 1041409
  %v1422 = vsel %vm1421, %v1420, %v1418
  %s1423 = scalar_lea.vmem %s0, 692
  %v1424 = vld [vmem:[%s1423] sm:$0x4]
  %vm1425 = vcmask 1042434
  %v1426 = vsel %vm1425, %v1424, %v1422
  %s1427 = scalar_lea.vmem %s0, 755
  %v1428 = vld [vmem:[%s1427] sm:$0x8]
  %vm1429 = vcmask 1043459
  %v1430 = vsel %vm1429, %v1428, %v1426
  %s1431 = scalar_lea.vmem %s0, 818
  %v1432 = vld [vmem:[%s1431] sm:$0x10]
  %vm1433 = vcmask 1044484
  %v1434 = vsel %vm1433, %v1432, %v1430
  %s1435 = scalar_lea.vmem %s0, 881
  %v1436 = vld [vmem:[%s1435] sm:$0x20]
  %vm1437 = vcmask 1045509
  %v1438 = vsel %vm1437, %v1436, %v1434
  %s1439 = scalar_lea.vmem %s0, 944
  %v1440 = vld [vmem:[%s1439] sm:$0x40]
  %vm1441 = vcmask 1046534
  %v1442 = vsel %vm1441, %v1440, %v1438
  %s1443 = scalar_lea.vmem %s0, 1007
  %v1444 = vld [vmem:[%s1443] sm:$0x80]
  %vm1445 = vcmask 1047559
  %v1446 = vsel %vm1445, %v1444, %v1442
  %1447 = vrot.lane.b32.xlu0 %v1446, 108
  %v1448 = vpop.permute.xlu0 %1447
  %vm1449 = vcmask 900960
  %s1450 = scalar_lea.vmem %s1, 8
  %1451 = vst.msk [vmem:[%s1450] sm:$0xff] %vm1449, %v1448
  %s1452 = scalar_lea.vmem %s0, 1078
  %v1453 = vld [vmem:[%s1452] sm:$0x1]
  %s1454 = scalar_lea.vmem %s0, 1141
  %v1455 = vld [vmem:[%s1454] sm:$0x2]
  %vm1456 = vcmask 1041409
  %v1457 = vsel %vm1456, %v1455, %v1453
  %s1458 = scalar_lea.vmem %s0, 1204
  %v1459 = vld [vmem:[%s1458] sm:$0x4]
  %vm1460 = vcmask 1042434
  %v1461 = vsel %vm1460, %v1459, %v1457
  %s1462 = scalar_lea.vmem %s0, 1267
  %v1463 = vld [vmem:[%s1462] sm:$0x8]
  %vm1464 = vcmask 1043459
  %v1465 = vsel %vm1464, %v1463, %v1461
  %s1466 = scalar_lea.vmem %s0, 1330
  %v1467 = vld [vmem:[%s1466] sm:$0x10]
  %vm1468 = vcmask 1044484
  %v1469 = vsel %vm1468, %v1467, %v1465
  %s1470 = scalar_lea.vmem %s0, 1393
  %v1471 = vld [vmem:[%s1470] sm:$0x20]
  %vm1472 = vcmask 1045509
  %v1473 = vsel %vm1472, %v1471, %v1469
  %s1474 = scalar_lea.vmem %s0, 1456
  %v1475 = vld [vmem:[%s1474] sm:$0x40]
  %vm1476 = vcmask 1046534
  %v1477 = vsel %vm1476, %v1475, %v1473
  %s1478 = scalar_lea.vmem %s0, 1519
  %v1479 = vld [vmem:[%s1478] sm:$0x80]
  %vm1480 = vcmask 1047559
  %v1481 = vsel %vm1480, %v1479, %v1477
  %1482 = vrot.lane.b32.xlu0 %v1481, 108
  %v1483 = vpop.permute.xlu0 %1482
  %vm1484 = vcmask 900960
  %s1485 = scalar_lea.vmem %s1, 16
  %1486 = vst.msk [vmem:[%s1485] sm:$0xff] %vm1484, %v1483
  %s1487 = scalar_lea.vmem %s0, 1590
  %v1488 = vld [vmem:[%s1487] sm:$0x1]
  %s1489 = scalar_lea.vmem %s0, 1653
  %v1490 = vld [vmem:[%s1489] sm:$0x2]
  %vm1491 = vcmask 1041409
  %v1492 = vsel %vm1491, %v1490, %v1488
  %s1493 = scalar_lea.vmem %s0, 1716
  %v1494 = vld [vmem:[%s1493] sm:$0x4]
  %vm1495 = vcmask 1042434
  %v1496 = vsel %vm1495, %v1494, %v1492
  %s1497 = scalar_lea.vmem %s0, 1779
  %v1498 = vld [vmem:[%s1497] sm:$0x8]
  %vm1499 = vcmask 1043459
  %v1500 = vsel %vm1499, %v1498, %v1496
  %s1501 = scalar_lea.vmem %s0, 1842
  %v1502 = vld [vmem:[%s1501] sm:$0x10]
  %vm1503 = vcmask 1044484
  %v1504 = vsel %vm1503, %v1502, %v1500
  %s1505 = scalar_lea.vmem %s0, 1905
  %v1506 = vld [vmem:[%s1505] sm:$0x20]
  %vm1507 = vcmask 1045509
  %v1508 = vsel %vm1507, %v1506, %v1504
  %s1509 = scalar_lea.vmem %s0, 1968
  %v1510 = vld [vmem:[%s1509] sm:$0x40]
  %vm1511 = vcmask 1046534
  %v1512 = vsel %vm1511, %v1510, %v1508
  %s1513 = scalar_lea.vmem %s0, 2031
  %v1514 = vld [vmem:[%s1513] sm:$0x80]
  %vm1515 = vcmask 1047559
  %v1516 = vsel %vm1515, %v1514, %v1512
  %1517 = vrot.lane.b32.xlu0 %v1516, 108
  %v1518 = vpop.permute.xlu0 %1517
  %vm1519 = vcmask 900960
  %s1520 = scalar_lea.vmem %s1, 24
  %1521 = vst.msk [vmem:[%s1520] sm:$0xff] %vm1519, %v1518
  %s1522 = scalar_lea.vmem %s0, 53
  %v1523 = vld [vmem:[%s1522] sm:$0x1]
  %s1524 = scalar_lea.vmem %s0, 116
  %v1525 = vld [vmem:[%s1524] sm:$0x2]
  %vm1526 = vcmask 1041409
  %v1527 = vsel %vm1526, %v1525, %v1523
  %s1528 = scalar_lea.vmem %s0, 179
  %v1529 = vld [vmem:[%s1528] sm:$0x4]
  %vm1530 = vcmask 1042434
  %v1531 = vsel %vm1530, %v1529, %v1527
  %s1532 = scalar_lea.vmem %s0, 242
  %v1533 = vld [vmem:[%s1532] sm:$0x8]
  %vm1534 = vcmask 1043459
  %v1535 = vsel %vm1534, %v1533, %v1531
  %s1536 = scalar_lea.vmem %s0, 305
  %v1537 = vld [vmem:[%s1536] sm:$0x10]
  %vm1538 = vcmask 1044484
  %v1539 = vsel %vm1538, %v1537, %v1535
  %s1540 = scalar_lea.vmem %s0, 368
  %v1541 = vld [vmem:[%s1540] sm:$0x20]
  %vm1542 = vcmask 1045509
  %v1543 = vsel %vm1542, %v1541, %v1539
  %s1544 = scalar_lea.vmem %s0, 431
  %v1545 = vld [vmem:[%s1544] sm:$0x40]
  %vm1546 = vcmask 1046534
  %v1547 = vsel %vm1546, %v1545, %v1543
  %s1548 = scalar_lea.vmem %s0, 494
  %v1549 = vld [vmem:[%s1548] sm:$0x80]
  %vm1550 = vcmask 1047559
  %v1551 = vsel %vm1550, %v1549, %v1547
  %1552 = vrot.lane.b32.xlu0 %v1551, 106
  %v1553 = vpop.permute.xlu0 %1552
  %vm1554 = vcmask 884560
  %1555 = vst.msk [vmem:[%s1] sm:$0xff] %vm1554, %v1553
  %s1556 = scalar_lea.vmem %s0, 565
  %v1557 = vld [vmem:[%s1556] sm:$0x1]
  %s1558 = scalar_lea.vmem %s0, 628
  %v1559 = vld [vmem:[%s1558] sm:$0x2]
  %vm1560 = vcmask 1041409
  %v1561 = vsel %vm1560, %v1559, %v1557
  %s1562 = scalar_lea.vmem %s0, 691
  %v1563 = vld [vmem:[%s1562] sm:$0x4]
  %vm1564 = vcmask 1042434
  %v1565 = vsel %vm1564, %v1563, %v1561
  %s1566 = scalar_lea.vmem %s0, 754
  %v1567 = vld [vmem:[%s1566] sm:$0x8]
  %vm1568 = vcmask 1043459
  %v1569 = vsel %vm1568, %v1567, %v1565
  %s1570 = scalar_lea.vmem %s0, 817
  %v1571 = vld [vmem:[%s1570] sm:$0x10]
  %vm1572 = vcmask 1044484
  %v1573 = vsel %vm1572, %v1571, %v1569
  %s1574 = scalar_lea.vmem %s0, 880
  %v1575 = vld [vmem:[%s1574] sm:$0x20]
  %vm1576 = vcmask 1045509
  %v1577 = vsel %vm1576, %v1575, %v1573
  %s1578 = scalar_lea.vmem %s0, 943
  %v1579 = vld [vmem:[%s1578] sm:$0x40]
  %vm1580 = vcmask 1046534
  %v1581 = vsel %vm1580, %v1579, %v1577
  %s1582 = scalar_lea.vmem %s0, 1006
  %v1583 = vld [vmem:[%s1582] sm:$0x80]
  %vm1584 = vcmask 1047559
  %v1585 = vsel %vm1584, %v1583, %v1581
  %1586 = vrot.lane.b32.xlu0 %v1585, 106
  %v1587 = vpop.permute.xlu0 %1586
  %vm1588 = vcmask 884560
  %s1589 = scalar_lea.vmem %s1, 8
  %1590 = vst.msk [vmem:[%s1589] sm:$0xff] %vm1588, %v1587
  %s1591 = scalar_lea.vmem %s0, 1077
  %v1592 = vld [vmem:[%s1591] sm:$0x1]
  %s1593 = scalar_lea.vmem %s0, 1140
  %v1594 = vld [vmem:[%s1593] sm:$0x2]
  %vm1595 = vcmask 1041409
  %v1596 = vsel %vm1595, %v1594, %v1592
  %s1597 = scalar_lea.vmem %s0, 1203
  %v1598 = vld [vmem:[%s1597] sm:$0x4]
  %vm1599 = vcmask 1042434
  %v1600 = vsel %vm1599, %v1598, %v1596
  %s1601 = scalar_lea.vmem %s0, 1266
  %v1602 = vld [vmem:[%s1601] sm:$0x8]
  %vm1603 = vcmask 1043459
  %v1604 = vsel %vm1603, %v1602, %v1600
  %s1605 = scalar_lea.vmem %s0, 1329
  %v1606 = vld [vmem:[%s1605] sm:$0x10]
  %vm1607 = vcmask 1044484
  %v1608 = vsel %vm1607, %v1606, %v1604
  %s1609 = scalar_lea.vmem %s0, 1392
  %v1610 = vld [vmem:[%s1609] sm:$0x20]
  %vm1611 = vcmask 1045509
  %v1612 = vsel %vm1611, %v1610, %v1608
  %s1613 = scalar_lea.vmem %s0, 1455
  %v1614 = vld [vmem:[%s1613] sm:$0x40]
  %vm1615 = vcmask 1046534
  %v1616 = vsel %vm1615, %v1614, %v1612
  %s1617 = scalar_lea.vmem %s0, 1518
  %v1618 = vld [vmem:[%s1617] sm:$0x80]
  %vm1619 = vcmask 1047559
  %v1620 = vsel %vm1619, %v1618, %v1616
  %1621 = vrot.lane.b32.xlu0 %v1620, 106
  %v1622 = vpop.permute.xlu0 %1621
  %vm1623 = vcmask 884560
  %s1624 = scalar_lea.vmem %s1, 16
  %1625 = vst.msk [vmem:[%s1624] sm:$0xff] %vm1623, %v1622
  %s1626 = scalar_lea.vmem %s0, 1589
  %v1627 = vld [vmem:[%s1626] sm:$0x1]
  %s1628 = scalar_lea.vmem %s0, 1652
  %v1629 = vld [vmem:[%s1628] sm:$0x2]
  %vm1630 = vcmask 1041409
  %v1631 = vsel %vm1630, %v1629, %v1627
  %s1632 = scalar_lea.vmem %s0, 1715
  %v1633 = vld [vmem:[%s1632] sm:$0x4]
  %vm1634 = vcmask 1042434
  %v1635 = vsel %vm1634, %v1633, %v1631
  %s1636 = scalar_lea.vmem %s0, 1778
  %v1637 = vld [vmem:[%s1636] sm:$0x8]
  %vm1638 = vcmask 1043459
  %v1639 = vsel %vm1638, %v1637, %v1635
  %s1640 = scalar_lea.vmem %s0, 1841
  %v1641 = vld [vmem:[%s1640] sm:$0x10]
  %vm1642 = vcmask 1044484
  %v1643 = vsel %vm1642, %v1641, %v1639
  %s1644 = scalar_lea.vmem %s0, 1904
  %v1645 = vld [vmem:[%s1644] sm:$0x20]
  %vm1646 = vcmask 1045509
  %v1647 = vsel %vm1646, %v1645, %v1643
  %s1648 = scalar_lea.vmem %s0, 1967
  %v1649 = vld [vmem:[%s1648] sm:$0x40]
  %vm1650 = vcmask 1046534
  %v1651 = vsel %vm1650, %v1649, %v1647
  %s1652 = scalar_lea.vmem %s0, 2030
  %v1653 = vld [vmem:[%s1652] sm:$0x80]
  %vm1654 = vcmask 1047559
  %v1655 = vsel %vm1654, %v1653, %v1651
  %1656 = vrot.lane.b32.xlu0 %v1655, 106
  %v1657 = vpop.permute.xlu0 %1656
  %vm1658 = vcmask 884560
  %s1659 = scalar_lea.vmem %s1, 24
  %1660 = vst.msk [vmem:[%s1659] sm:$0xff] %vm1658, %v1657
  %s1661 = scalar_lea.vmem %s0, 52
  %v1662 = vld [vmem:[%s1661] sm:$0x1]
  %s1663 = scalar_lea.vmem %s0, 115
  %v1664 = vld [vmem:[%s1663] sm:$0x2]
  %vm1665 = vcmask 1041409
  %v1666 = vsel %vm1665, %v1664, %v1662
  %s1667 = scalar_lea.vmem %s0, 178
  %v1668 = vld [vmem:[%s1667] sm:$0x4]
  %vm1669 = vcmask 1042434
  %v1670 = vsel %vm1669, %v1668, %v1666
  %s1671 = scalar_lea.vmem %s0, 241
  %v1672 = vld [vmem:[%s1671] sm:$0x8]
  %vm1673 = vcmask 1043459
  %v1674 = vsel %vm1673, %v1672, %v1670
  %s1675 = scalar_lea.vmem %s0, 304
  %v1676 = vld [vmem:[%s1675] sm:$0x10]
  %vm1677 = vcmask 1044484
  %v1678 = vsel %vm1677, %v1676, %v1674
  %s1679 = scalar_lea.vmem %s0, 367
  %v1680 = vld [vmem:[%s1679] sm:$0x20]
  %vm1681 = vcmask 1045509
  %v1682 = vsel %vm1681, %v1680, %v1678
  %s1683 = scalar_lea.vmem %s0, 430
  %v1684 = vld [vmem:[%s1683] sm:$0x40]
  %vm1685 = vcmask 1046534
  %v1686 = vsel %vm1685, %v1684, %v1682
  %s1687 = scalar_lea.vmem %s0, 493
  %v1688 = vld [vmem:[%s1687] sm:$0x80]
  %vm1689 = vcmask 1047559
  %v1690 = vsel %vm1689, %v1688, %v1686
  %1691 = vrot.lane.b32.xlu0 %v1690, 104
  %v1692 = vpop.permute.xlu0 %1691
  %vm1693 = vcmask 868160
  %1694 = vst.msk [vmem:[%s1] sm:$0xff] %vm1693, %v1692
  %s1695 = scalar_lea.vmem %s0, 564
  %v1696 = vld [vmem:[%s1695] sm:$0x1]
  %s1697 = scalar_lea.vmem %s0, 627
  %v1698 = vld [vmem:[%s1697] sm:$0x2]
  %vm1699 = vcmask 1041409
  %v1700 = vsel %vm1699, %v1698, %v1696
  %s1701 = scalar_lea.vmem %s0, 690
  %v1702 = vld [vmem:[%s1701] sm:$0x4]
  %vm1703 = vcmask 1042434
  %v1704 = vsel %vm1703, %v1702, %v1700
  %s1705 = scalar_lea.vmem %s0, 753
  %v1706 = vld [vmem:[%s1705] sm:$0x8]
  %vm1707 = vcmask 1043459
  %v1708 = vsel %vm1707, %v1706, %v1704
  %s1709 = scalar_lea.vmem %s0, 816
  %v1710 = vld [vmem:[%s1709] sm:$0x10]
  %vm1711 = vcmask 1044484
  %v1712 = vsel %vm1711, %v1710, %v1708
  %s1713 = scalar_lea.vmem %s0, 879
  %v1714 = vld [vmem:[%s1713] sm:$0x20]
  %vm1715 = vcmask 1045509
  %v1716 = vsel %vm1715, %v1714, %v1712
  %s1717 = scalar_lea.vmem %s0, 942
  %v1718 = vld [vmem:[%s1717] sm:$0x40]
  %vm1719 = vcmask 1046534
  %v1720 = vsel %vm1719, %v1718, %v1716
  %s1721 = scalar_lea.vmem %s0, 1005
  %v1722 = vld [vmem:[%s1721] sm:$0x80]
  %vm1723 = vcmask 1047559
  %v1724 = vsel %vm1723, %v1722, %v1720
  %1725 = vrot.lane.b32.xlu0 %v1724, 104
  %v1726 = vpop.permute.xlu0 %1725
  %vm1727 = vcmask 868160
  %s1728 = scalar_lea.vmem %s1, 8
  %1729 = vst.msk [vmem:[%s1728] sm:$0xff] %vm1727, %v1726
  %s1730 = scalar_lea.vmem %s0, 1076
  %v1731 = vld [vmem:[%s1730] sm:$0x1]
  %s1732 = scalar_lea.vmem %s0, 1139
  %v1733 = vld [vmem:[%s1732] sm:$0x2]
  %vm1734 = vcmask 1041409
  %v1735 = vsel %vm1734, %v1733, %v1731
  %s1736 = scalar_lea.vmem %s0, 1202
  %v1737 = vld [vmem:[%s1736] sm:$0x4]
  %vm1738 = vcmask 1042434
  %v1739 = vsel %vm1738, %v1737, %v1735
  %s1740 = scalar_lea.vmem %s0, 1265
  %v1741 = vld [vmem:[%s1740] sm:$0x8]
  %vm1742 = vcmask 1043459
  %v1743 = vsel %vm1742, %v1741, %v1739
  %s1744 = scalar_lea.vmem %s0, 1328
  %v1745 = vld [vmem:[%s1744] sm:$0x10]
  %vm1746 = vcmask 1044484
  %v1747 = vsel %vm1746, %v1745, %v1743
  %s1748 = scalar_lea.vmem %s0, 1391
  %v1749 = vld [vmem:[%s1748] sm:$0x20]
  %vm1750 = vcmask 1045509
  %v1751 = vsel %vm1750, %v1749, %v1747
  %s1752 = scalar_lea.vmem %s0, 1454
  %v1753 = vld [vmem:[%s1752] sm:$0x40]
  %vm1754 = vcmask 1046534
  %v1755 = vsel %vm1754, %v1753, %v1751
  %s1756 = scalar_lea.vmem %s0, 1517
  %v1757 = vld [vmem:[%s1756] sm:$0x80]
  %vm1758 = vcmask 1047559
  %v1759 = vsel %vm1758, %v1757, %v1755
  %1760 = vrot.lane.b32.xlu0 %v1759, 104
  %v1761 = vpop.permute.xlu0 %1760
  %vm1762 = vcmask 868160
  %s1763 = scalar_lea.vmem %s1, 16
  %1764 = vst.msk [vmem:[%s1763] sm:$0xff] %vm1762, %v1761
  %s1765 = scalar_lea.vmem %s0, 1588
  %v1766 = vld [vmem:[%s1765] sm:$0x1]
  %s1767 = scalar_lea.vmem %s0, 1651
  %v1768 = vld [vmem:[%s1767] sm:$0x2]
  %vm1769 = vcmask 1041409
  %v1770 = vsel %vm1769, %v1768, %v1766
  %s1771 = scalar_lea.vmem %s0, 1714
  %v1772 = vld [vmem:[%s1771] sm:$0x4]
  %vm1773 = vcmask 1042434
  %v1774 = vsel %vm1773, %v1772, %v1770
  %s1775 = scalar_lea.vmem %s0, 1777
  %v1776 = vld [vmem:[%s1775] sm:$0x8]
  %vm1777 = vcmask 1043459
  %v1778 = vsel %vm1777, %v1776, %v1774
  %s1779 = scalar_lea.vmem %s0, 1840
  %v1780 = vld [vmem:[%s1779] sm:$0x10]
  %vm1781 = vcmask 1044484
  %v1782 = vsel %vm1781, %v1780, %v1778
  %s1783 = scalar_lea.vmem %s0, 1903
  %v1784 = vld [vmem:[%s1783] sm:$0x20]
  %vm1785 = vcmask 1045509
  %v1786 = vsel %vm1785, %v1784, %v1782
  %s1787 = scalar_lea.vmem %s0, 1966
  %v1788 = vld [vmem:[%s1787] sm:$0x40]
  %vm1789 = vcmask 1046534
  %v1790 = vsel %vm1789, %v1788, %v1786
  %s1791 = scalar_lea.vmem %s0, 2029
  %v1792 = vld [vmem:[%s1791] sm:$0x80]
  %vm1793 = vcmask 1047559
  %v1794 = vsel %vm1793, %v1792, %v1790
  %1795 = vrot.lane.b32.xlu0 %v1794, 104
  %v1796 = vpop.permute.xlu0 %1795
  %vm1797 = vcmask 868160
  %s1798 = scalar_lea.vmem %s1, 24
  %1799 = vst.msk [vmem:[%s1798] sm:$0xff] %vm1797, %v1796
  %s1800 = scalar_lea.vmem %s0, 51
  %v1801 = vld [vmem:[%s1800] sm:$0x1]
  %s1802 = scalar_lea.vmem %s0, 114
  %v1803 = vld [vmem:[%s1802] sm:$0x2]
  %vm1804 = vcmask 1041409
  %v1805 = vsel %vm1804, %v1803, %v1801
  %s1806 = scalar_lea.vmem %s0, 177
  %v1807 = vld [vmem:[%s1806] sm:$0x4]
  %vm1808 = vcmask 1042434
  %v1809 = vsel %vm1808, %v1807, %v1805
  %s1810 = scalar_lea.vmem %s0, 240
  %v1811 = vld [vmem:[%s1810] sm:$0x8]
  %vm1812 = vcmask 1043459
  %v1813 = vsel %vm1812, %v1811, %v1809
  %s1814 = scalar_lea.vmem %s0, 303
  %v1815 = vld [vmem:[%s1814] sm:$0x10]
  %vm1816 = vcmask 1044484
  %v1817 = vsel %vm1816, %v1815, %v1813
  %s1818 = scalar_lea.vmem %s0, 366
  %v1819 = vld [vmem:[%s1818] sm:$0x20]
  %vm1820 = vcmask 1045509
  %v1821 = vsel %vm1820, %v1819, %v1817
  %s1822 = scalar_lea.vmem %s0, 429
  %v1823 = vld [vmem:[%s1822] sm:$0x40]
  %vm1824 = vcmask 1046534
  %v1825 = vsel %vm1824, %v1823, %v1821
  %s1826 = scalar_lea.vmem %s0, 492
  %v1827 = vld [vmem:[%s1826] sm:$0x80]
  %vm1828 = vcmask 1047559
  %v1829 = vsel %vm1828, %v1827, %v1825
  %1830 = vrot.lane.b32.xlu0 %v1829, 102
  %v1831 = vpop.permute.xlu0 %1830
  %vm1832 = vcmask 851760
  %1833 = vst.msk [vmem:[%s1] sm:$0xff] %vm1832, %v1831
  %s1834 = scalar_lea.vmem %s0, 563
  %v1835 = vld [vmem:[%s1834] sm:$0x1]
  %s1836 = scalar_lea.vmem %s0, 626
  %v1837 = vld [vmem:[%s1836] sm:$0x2]
  %vm1838 = vcmask 1041409
  %v1839 = vsel %vm1838, %v1837, %v1835
  %s1840 = scalar_lea.vmem %s0, 689
  %v1841 = vld [vmem:[%s1840] sm:$0x4]
  %vm1842 = vcmask 1042434
  %v1843 = vsel %vm1842, %v1841, %v1839
  %s1844 = scalar_lea.vmem %s0, 752
  %v1845 = vld [vmem:[%s1844] sm:$0x8]
  %vm1846 = vcmask 1043459
  %v1847 = vsel %vm1846, %v1845, %v1843
  %s1848 = scalar_lea.vmem %s0, 815
  %v1849 = vld [vmem:[%s1848] sm:$0x10]
  %vm1850 = vcmask 1044484
  %v1851 = vsel %vm1850, %v1849, %v1847
  %s1852 = scalar_lea.vmem %s0, 878
  %v1853 = vld [vmem:[%s1852] sm:$0x20]
  %vm1854 = vcmask 1045509
  %v1855 = vsel %vm1854, %v1853, %v1851
  %s1856 = scalar_lea.vmem %s0, 941
  %v1857 = vld [vmem:[%s1856] sm:$0x40]
  %vm1858 = vcmask 1046534
  %v1859 = vsel %vm1858, %v1857, %v1855
  %s1860 = scalar_lea.vmem %s0, 1004
  %v1861 = vld [vmem:[%s1860] sm:$0x80]
  %vm1862 = vcmask 1047559
  %v1863 = vsel %vm1862, %v1861, %v1859
  %1864 = vrot.lane.b32.xlu0 %v1863, 102
  %v1865 = vpop.permute.xlu0 %1864
  %vm1866 = vcmask 851760
  %s1867 = scalar_lea.vmem %s1, 8
  %1868 = vst.msk [vmem:[%s1867] sm:$0xff] %vm1866, %v1865
  %s1869 = scalar_lea.vmem %s0, 1075
  %v1870 = vld [vmem:[%s1869] sm:$0x1]
  %s1871 = scalar_lea.vmem %s0, 1138
  %v1872 = vld [vmem:[%s1871] sm:$0x2]
  %vm1873 = vcmask 1041409
  %v1874 = vsel %vm1873, %v1872, %v1870
  %s1875 = scalar_lea.vmem %s0, 1201
  %v1876 = vld [vmem:[%s1875] sm:$0x4]
  %vm1877 = vcmask 1042434
  %v1878 = vsel %vm1877, %v1876, %v1874
  %s1879 = scalar_lea.vmem %s0, 1264
  %v1880 = vld [vmem:[%s1879] sm:$0x8]
  %vm1881 = vcmask 1043459
  %v1882 = vsel %vm1881, %v1880, %v1878
  %s1883 = scalar_lea.vmem %s0, 1327
  %v1884 = vld [vmem:[%s1883] sm:$0x10]
  %vm1885 = vcmask 1044484
  %v1886 = vsel %vm1885, %v1884, %v1882
  %s1887 = scalar_lea.vmem %s0, 1390
  %v1888 = vld [vmem:[%s1887] sm:$0x20]
  %vm1889 = vcmask 1045509
  %v1890 = vsel %vm1889, %v1888, %v1886
  %s1891 = scalar_lea.vmem %s0, 1453
  %v1892 = vld [vmem:[%s1891] sm:$0x40]
  %vm1893 = vcmask 1046534
  %v1894 = vsel %vm1893, %v1892, %v1890
  %s1895 = scalar_lea.vmem %s0, 1516
  %v1896 = vld [vmem:[%s1895] sm:$0x80]
  %vm1897 = vcmask 1047559
  %v1898 = vsel %vm1897, %v1896, %v1894
  %1899 = vrot.lane.b32.xlu0 %v1898, 102
  %v1900 = vpop.permute.xlu0 %1899
  %vm1901 = vcmask 851760
  %s1902 = scalar_lea.vmem %s1, 16
  %1903 = vst.msk [vmem:[%s1902] sm:$0xff] %vm1901, %v1900
  %s1904 = scalar_lea.vmem %s0, 1587
  %v1905 = vld [vmem:[%s1904] sm:$0x1]
  %s1906 = scalar_lea.vmem %s0, 1650
  %v1907 = vld [vmem:[%s1906] sm:$0x2]
  %vm1908 = vcmask 1041409
  %v1909 = vsel %vm1908, %v1907, %v1905
  %s1910 = scalar_lea.vmem %s0, 1713
  %v1911 = vld [vmem:[%s1910] sm:$0x4]
  %vm1912 = vcmask 1042434
  %v1913 = vsel %vm1912, %v1911, %v1909
  %s1914 = scalar_lea.vmem %s0, 1776
  %v1915 = vld [vmem:[%s1914] sm:$0x8]
  %vm1916 = vcmask 1043459
  %v1917 = vsel %vm1916, %v1915, %v1913
  %s1918 = scalar_lea.vmem %s0, 1839
  %v1919 = vld [vmem:[%s1918] sm:$0x10]
  %vm1920 = vcmask 1044484
  %v1921 = vsel %vm1920, %v1919, %v1917
  %s1922 = scalar_lea.vmem %s0, 1902
  %v1923 = vld [vmem:[%s1922] sm:$0x20]
  %vm1924 = vcmask 1045509
  %v1925 = vsel %vm1924, %v1923, %v1921
  %s1926 = scalar_lea.vmem %s0, 1965
  %v1927 = vld [vmem:[%s1926] sm:$0x40]
  %vm1928 = vcmask 1046534
  %v1929 = vsel %vm1928, %v1927, %v1925
  %s1930 = scalar_lea.vmem %s0, 2028
  %v1931 = vld [vmem:[%s1930] sm:$0x80]
  %vm1932 = vcmask 1047559
  %v1933 = vsel %vm1932, %v1931, %v1929
  %1934 = vrot.lane.b32.xlu0 %v1933, 102
  %v1935 = vpop.permute.xlu0 %1934
  %vm1936 = vcmask 851760
  %s1937 = scalar_lea.vmem %s1, 24
  %1938 = vst.msk [vmem:[%s1937] sm:$0xff] %vm1936, %v1935
  %s1939 = scalar_lea.vmem %s0, 50
  %v1940 = vld [vmem:[%s1939] sm:$0x1]
  %s1941 = scalar_lea.vmem %s0, 113
  %v1942 = vld [vmem:[%s1941] sm:$0x2]
  %vm1943 = vcmask 1041409
  %v1944 = vsel %vm1943, %v1942, %v1940
  %s1945 = scalar_lea.vmem %s0, 176
  %v1946 = vld [vmem:[%s1945] sm:$0x4]
  %vm1947 = vcmask 1042434
  %v1948 = vsel %vm1947, %v1946, %v1944
  %s1949 = scalar_lea.vmem %s0, 239
  %v1950 = vld [vmem:[%s1949] sm:$0x8]
  %vm1951 = vcmask 1043459
  %v1952 = vsel %vm1951, %v1950, %v1948
  %s1953 = scalar_lea.vmem %s0, 302
  %v1954 = vld [vmem:[%s1953] sm:$0x10]
  %vm1955 = vcmask 1044484
  %v1956 = vsel %vm1955, %v1954, %v1952
  %s1957 = scalar_lea.vmem %s0, 365
  %v1958 = vld [vmem:[%s1957] sm:$0x20]
  %vm1959 = vcmask 1045509
  %v1960 = vsel %vm1959, %v1958, %v1956
  %s1961 = scalar_lea.vmem %s0, 428
  %v1962 = vld [vmem:[%s1961] sm:$0x40]
  %vm1963 = vcmask 1046534
  %v1964 = vsel %vm1963, %v1962, %v1960
  %s1965 = scalar_lea.vmem %s0, 491
  %v1966 = vld [vmem:[%s1965] sm:$0x80]
  %vm1967 = vcmask 1047559
  %v1968 = vsel %vm1967, %v1966, %v1964
  %1969 = vrot.lane.b32.xlu0 %v1968, 100
  %v1970 = vpop.permute.xlu0 %1969
  %vm1971 = vcmask 835360
  %1972 = vst.msk [vmem:[%s1] sm:$0xff] %vm1971, %v1970
  %s1973 = scalar_lea.vmem %s0, 562
  %v1974 = vld [vmem:[%s1973] sm:$0x1]
  %s1975 = scalar_lea.vmem %s0, 625
  %v1976 = vld [vmem:[%s1975] sm:$0x2]
  %vm1977 = vcmask 1041409
  %v1978 = vsel %vm1977, %v1976, %v1974
  %s1979 = scalar_lea.vmem %s0, 688
  %v1980 = vld [vmem:[%s1979] sm:$0x4]
  %vm1981 = vcmask 1042434
  %v1982 = vsel %vm1981, %v1980, %v1978
  %s1983 = scalar_lea.vmem %s0, 751
  %v1984 = vld [vmem:[%s1983] sm:$0x8]
  %vm1985 = vcmask 1043459
  %v1986 = vsel %vm1985, %v1984, %v1982
  %s1987 = scalar_lea.vmem %s0, 814
  %v1988 = vld [vmem:[%s1987] sm:$0x10]
  %vm1989 = vcmask 1044484
  %v1990 = vsel %vm1989, %v1988, %v1986
  %s1991 = scalar_lea.vmem %s0, 877
  %v1992 = vld [vmem:[%s1991] sm:$0x20]
  %vm1993 = vcmask 1045509
  %v1994 = vsel %vm1993, %v1992, %v1990
  %s1995 = scalar_lea.vmem %s0, 940
  %v1996 = vld [vmem:[%s1995] sm:$0x40]
  %vm1997 = vcmask 1046534
  %v1998 = vsel %vm1997, %v1996, %v1994
  %s1999 = scalar_lea.vmem %s0, 1003
  %v2000 = vld [vmem:[%s1999] sm:$0x80]
  %vm2001 = vcmask 1047559
  %v2002 = vsel %vm2001, %v2000, %v1998
  %2003 = vrot.lane.b32.xlu0 %v2002, 100
  %v2004 = vpop.permute.xlu0 %2003
  %vm2005 = vcmask 835360
  %s2006 = scalar_lea.vmem %s1, 8
  %2007 = vst.msk [vmem:[%s2006] sm:$0xff] %vm2005, %v2004
  %s2008 = scalar_lea.vmem %s0, 1074
  %v2009 = vld [vmem:[%s2008] sm:$0x1]
  %s2010 = scalar_lea.vmem %s0, 1137
  %v2011 = vld [vmem:[%s2010] sm:$0x2]
  %vm2012 = vcmask 1041409
  %v2013 = vsel %vm2012, %v2011, %v2009
  %s2014 = scalar_lea.vmem %s0, 1200
  %v2015 = vld [vmem:[%s2014] sm:$0x4]
  %vm2016 = vcmask 1042434
  %v2017 = vsel %vm2016, %v2015, %v2013
  %s2018 = scalar_lea.vmem %s0, 1263
  %v2019 = vld [vmem:[%s2018] sm:$0x8]
  %vm2020 = vcmask 1043459
  %v2021 = vsel %vm2020, %v2019, %v2017
  %s2022 = scalar_lea.vmem %s0, 1326
  %v2023 = vld [vmem:[%s2022] sm:$0x10]
  %vm2024 = vcmask 1044484
  %v2025 = vsel %vm2024, %v2023, %v2021
  %s2026 = scalar_lea.vmem %s0, 1389
  %v2027 = vld [vmem:[%s2026] sm:$0x20]
  %vm2028 = vcmask 1045509
  %v2029 = vsel %vm2028, %v2027, %v2025
  %s2030 = scalar_lea.vmem %s0, 1452
  %v2031 = vld [vmem:[%s2030] sm:$0x40]
  %vm2032 = vcmask 1046534
  %v2033 = vsel %vm2032, %v2031, %v2029
  %s2034 = scalar_lea.vmem %s0, 1515
  %v2035 = vld [vmem:[%s2034] sm:$0x80]
  %vm2036 = vcmask 1047559
  %v2037 = vsel %vm2036, %v2035, %v2033
  %2038 = vrot.lane.b32.xlu0 %v2037, 100
  %v2039 = vpop.permute.xlu0 %2038
  %vm2040 = vcmask 835360
  %s2041 = scalar_lea.vmem %s1, 16
  %2042 = vst.msk [vmem:[%s2041] sm:$0xff] %vm2040, %v2039
  %s2043 = scalar_lea.vmem %s0, 1586
  %v2044 = vld [vmem:[%s2043] sm:$0x1]
  %s2045 = scalar_lea.vmem %s0, 1649
  %v2046 = vld [vmem:[%s2045] sm:$0x2]
  %vm2047 = vcmask 1041409
  %v2048 = vsel %vm2047, %v2046, %v2044
  %s2049 = scalar_lea.vmem %s0, 1712
  %v2050 = vld [vmem:[%s2049] sm:$0x4]
  %vm2051 = vcmask 1042434
  %v2052 = vsel %vm2051, %v2050, %v2048
  %s2053 = scalar_lea.vmem %s0, 1775
  %v2054 = vld [vmem:[%s2053] sm:$0x8]
  %vm2055 = vcmask 1043459
  %v2056 = vsel %vm2055, %v2054, %v2052
  %s2057 = scalar_lea.vmem %s0, 1838
  %v2058 = vld [vmem:[%s2057] sm:$0x10]
  %vm2059 = vcmask 1044484
  %v2060 = vsel %vm2059, %v2058, %v2056
  %s2061 = scalar_lea.vmem %s0, 1901
  %v2062 = vld [vmem:[%s2061] sm:$0x20]
  %vm2063 = vcmask 1045509
  %v2064 = vsel %vm2063, %v2062, %v2060
  %s2065 = scalar_lea.vmem %s0, 1964
  %v2066 = vld [vmem:[%s2065] sm:$0x40]
  %vm2067 = vcmask 1046534
  %v2068 = vsel %vm2067, %v2066, %v2064
  %s2069 = scalar_lea.vmem %s0, 2027
  %v2070 = vld [vmem:[%s2069] sm:$0x80]
  %vm2071 = vcmask 1047559
  %v2072 = vsel %vm2071, %v2070, %v2068
  %2073 = vrot.lane.b32.xlu0 %v2072, 100
  %v2074 = vpop.permute.xlu0 %2073
  %vm2075 = vcmask 835360
  %s2076 = scalar_lea.vmem %s1, 24
  %2077 = vst.msk [vmem:[%s2076] sm:$0xff] %vm2075, %v2074
  %s2078 = scalar_lea.vmem %s0, 49
  %v2079 = vld [vmem:[%s2078] sm:$0x1]
  %s2080 = scalar_lea.vmem %s0, 112
  %v2081 = vld [vmem:[%s2080] sm:$0x2]
  %vm2082 = vcmask 1041409
  %v2083 = vsel %vm2082, %v2081, %v2079
  %s2084 = scalar_lea.vmem %s0, 175
  %v2085 = vld [vmem:[%s2084] sm:$0x4]
  %vm2086 = vcmask 1042434
  %v2087 = vsel %vm2086, %v2085, %v2083
  %s2088 = scalar_lea.vmem %s0, 238
  %v2089 = vld [vmem:[%s2088] sm:$0x8]
  %vm2090 = vcmask 1043459
  %v2091 = vsel %vm2090, %v2089, %v2087
  %s2092 = scalar_lea.vmem %s0, 301
  %v2093 = vld [vmem:[%s2092] sm:$0x10]
  %vm2094 = vcmask 1044484
  %v2095 = vsel %vm2094, %v2093, %v2091
  %s2096 = scalar_lea.vmem %s0, 364
  %v2097 = vld [vmem:[%s2096] sm:$0x20]
  %vm2098 = vcmask 1045509
  %v2099 = vsel %vm2098, %v2097, %v2095
  %s2100 = scalar_lea.vmem %s0, 427
  %v2101 = vld [vmem:[%s2100] sm:$0x40]
  %vm2102 = vcmask 1046534
  %v2103 = vsel %vm2102, %v2101, %v2099
  %s2104 = scalar_lea.vmem %s0, 490
  %v2105 = vld [vmem:[%s2104] sm:$0x80]
  %vm2106 = vcmask 1047559
  %v2107 = vsel %vm2106, %v2105, %v2103
  %2108 = vrot.lane.b32.xlu0 %v2107, 98
  %v2109 = vpop.permute.xlu0 %2108
  %vm2110 = vcmask 818960
  %2111 = vst.msk [vmem:[%s1] sm:$0xff] %vm2110, %v2109
  %s2112 = scalar_lea.vmem %s0, 561
  %v2113 = vld [vmem:[%s2112] sm:$0x1]
  %s2114 = scalar_lea.vmem %s0, 624
  %v2115 = vld [vmem:[%s2114] sm:$0x2]
  %vm2116 = vcmask 1041409
  %v2117 = vsel %vm2116, %v2115, %v2113
  %s2118 = scalar_lea.vmem %s0, 687
  %v2119 = vld [vmem:[%s2118] sm:$0x4]
  %vm2120 = vcmask 1042434
  %v2121 = vsel %vm2120, %v2119, %v2117
  %s2122 = scalar_lea.vmem %s0, 750
  %v2123 = vld [vmem:[%s2122] sm:$0x8]
  %vm2124 = vcmask 1043459
  %v2125 = vsel %vm2124, %v2123, %v2121
  %s2126 = scalar_lea.vmem %s0, 813
  %v2127 = vld [vmem:[%s2126] sm:$0x10]
  %vm2128 = vcmask 1044484
  %v2129 = vsel %vm2128, %v2127, %v2125
  %s2130 = scalar_lea.vmem %s0, 876
  %v2131 = vld [vmem:[%s2130] sm:$0x20]
  %vm2132 = vcmask 1045509
  %v2133 = vsel %vm2132, %v2131, %v2129
  %s2134 = scalar_lea.vmem %s0, 939
  %v2135 = vld [vmem:[%s2134] sm:$0x40]
  %vm2136 = vcmask 1046534
  %v2137 = vsel %vm2136, %v2135, %v2133
  %s2138 = scalar_lea.vmem %s0, 1002
  %v2139 = vld [vmem:[%s2138] sm:$0x80]
  %vm2140 = vcmask 1047559
  %v2141 = vsel %vm2140, %v2139, %v2137
  %2142 = vrot.lane.b32.xlu0 %v2141, 98
  %v2143 = vpop.permute.xlu0 %2142
  %vm2144 = vcmask 818960
  %s2145 = scalar_lea.vmem %s1, 8
  %2146 = vst.msk [vmem:[%s2145] sm:$0xff] %vm2144, %v2143
  %s2147 = scalar_lea.vmem %s0, 1073
  %v2148 = vld [vmem:[%s2147] sm:$0x1]
  %s2149 = scalar_lea.vmem %s0, 1136
  %v2150 = vld [vmem:[%s2149] sm:$0x2]
  %vm2151 = vcmask 1041409
  %v2152 = vsel %vm2151, %v2150, %v2148
  %s2153 = scalar_lea.vmem %s0, 1199
  %v2154 = vld [vmem:[%s2153] sm:$0x4]
  %vm2155 = vcmask 1042434
  %v2156 = vsel %vm2155, %v2154, %v2152
  %s2157 = scalar_lea.vmem %s0, 1262
  %v2158 = vld [vmem:[%s2157] sm:$0x8]
  %vm2159 = vcmask 1043459
  %v2160 = vsel %vm2159, %v2158, %v2156
  %s2161 = scalar_lea.vmem %s0, 1325
  %v2162 = vld [vmem:[%s2161] sm:$0x10]
  %vm2163 = vcmask 1044484
  %v2164 = vsel %vm2163, %v2162, %v2160
  %s2165 = scalar_lea.vmem %s0, 1388
  %v2166 = vld [vmem:[%s2165] sm:$0x20]
  %vm2167 = vcmask 1045509
  %v2168 = vsel %vm2167, %v2166, %v2164
  %s2169 = scalar_lea.vmem %s0, 1451
  %v2170 = vld [vmem:[%s2169] sm:$0x40]
  %vm2171 = vcmask 1046534
  %v2172 = vsel %vm2171, %v2170, %v2168
  %s2173 = scalar_lea.vmem %s0, 1514
  %v2174 = vld [vmem:[%s2173] sm:$0x80]
  %vm2175 = vcmask 1047559
  %v2176 = vsel %vm2175, %v2174, %v2172
  %2177 = vrot.lane.b32.xlu0 %v2176, 98
  %v2178 = vpop.permute.xlu0 %2177
  %vm2179 = vcmask 818960
  %s2180 = scalar_lea.vmem %s1, 16
  %2181 = vst.msk [vmem:[%s2180] sm:$0xff] %vm2179, %v2178
  %s2182 = scalar_lea.vmem %s0, 1585
  %v2183 = vld [vmem:[%s2182] sm:$0x1]
  %s2184 = scalar_lea.vmem %s0, 1648
  %v2185 = vld [vmem:[%s2184] sm:$0x2]
  %vm2186 = vcmask 1041409
  %v2187 = vsel %vm2186, %v2185, %v2183
  %s2188 = scalar_lea.vmem %s0, 1711
  %v2189 = vld [vmem:[%s2188] sm:$0x4]
  %vm2190 = vcmask 1042434
  %v2191 = vsel %vm2190, %v2189, %v2187
  %s2192 = scalar_lea.vmem %s0, 1774
  %v2193 = vld [vmem:[%s2192] sm:$0x8]
  %vm2194 = vcmask 1043459
  %v2195 = vsel %vm2194, %v2193, %v2191
  %s2196 = scalar_lea.vmem %s0, 1837
  %v2197 = vld [vmem:[%s2196] sm:$0x10]
  %vm2198 = vcmask 1044484
  %v2199 = vsel %vm2198, %v2197, %v2195
  %s2200 = scalar_lea.vmem %s0, 1900
  %v2201 = vld [vmem:[%s2200] sm:$0x20]
  %vm2202 = vcmask 1045509
  %v2203 = vsel %vm2202, %v2201, %v2199
  %s2204 = scalar_lea.vmem %s0, 1963
  %v2205 = vld [vmem:[%s2204] sm:$0x40]
  %vm2206 = vcmask 1046534
  %v2207 = vsel %vm2206, %v2205, %v2203
  %s2208 = scalar_lea.vmem %s0, 2026
  %v2209 = vld [vmem:[%s2208] sm:$0x80]
  %vm2210 = vcmask 1047559
  %v2211 = vsel %vm2210, %v2209, %v2207
  %2212 = vrot.lane.b32.xlu0 %v2211, 98
  %v2213 = vpop.permute.xlu0 %2212
  %vm2214 = vcmask 818960
  %s2215 = scalar_lea.vmem %s1, 24
  %2216 = vst.msk [vmem:[%s2215] sm:$0xff] %vm2214, %v2213
  %s2217 = scalar_lea.vmem %s0, 48
  %v2218 = vld [vmem:[%s2217] sm:$0x1]
  %s2219 = scalar_lea.vmem %s0, 111
  %v2220 = vld [vmem:[%s2219] sm:$0x2]
  %vm2221 = vcmask 1041409
  %v2222 = vsel %vm2221, %v2220, %v2218
  %s2223 = scalar_lea.vmem %s0, 174
  %v2224 = vld [vmem:[%s2223] sm:$0x4]
  %vm2225 = vcmask 1042434
  %v2226 = vsel %vm2225, %v2224, %v2222
  %s2227 = scalar_lea.vmem %s0, 237
  %v2228 = vld [vmem:[%s2227] sm:$0x8]
  %vm2229 = vcmask 1043459
  %v2230 = vsel %vm2229, %v2228, %v2226
  %s2231 = scalar_lea.vmem %s0, 300
  %v2232 = vld [vmem:[%s2231] sm:$0x10]
  %vm2233 = vcmask 1044484
  %v2234 = vsel %vm2233, %v2232, %v2230
  %s2235 = scalar_lea.vmem %s0, 363
  %v2236 = vld [vmem:[%s2235] sm:$0x20]
  %vm2237 = vcmask 1045509
  %v2238 = vsel %vm2237, %v2236, %v2234
  %s2239 = scalar_lea.vmem %s0, 426
  %v2240 = vld [vmem:[%s2239] sm:$0x40]
  %vm2241 = vcmask 1046534
  %v2242 = vsel %vm2241, %v2240, %v2238
  %s2243 = scalar_lea.vmem %s0, 489
  %v2244 = vld [vmem:[%s2243] sm:$0x80]
  %vm2245 = vcmask 1047559
  %v2246 = vsel %vm2245, %v2244, %v2242
  %2247 = vrot.lane.b32.xlu0 %v2246, 96
  %v2248 = vpop.permute.xlu0 %2247
  %vm2249 = vcmask 802560
  %2250 = vst.msk [vmem:[%s1] sm:$0xff] %vm2249, %v2248
  %s2251 = scalar_lea.vmem %s0, 560
  %v2252 = vld [vmem:[%s2251] sm:$0x1]
  %s2253 = scalar_lea.vmem %s0, 623
  %v2254 = vld [vmem:[%s2253] sm:$0x2]
  %vm2255 = vcmask 1041409
  %v2256 = vsel %vm2255, %v2254, %v2252
  %s2257 = scalar_lea.vmem %s0, 686
  %v2258 = vld [vmem:[%s2257] sm:$0x4]
  %vm2259 = vcmask 1042434
  %v2260 = vsel %vm2259, %v2258, %v2256
  %s2261 = scalar_lea.vmem %s0, 749
  %v2262 = vld [vmem:[%s2261] sm:$0x8]
  %vm2263 = vcmask 1043459
  %v2264 = vsel %vm2263, %v2262, %v2260
  %s2265 = scalar_lea.vmem %s0, 812
  %v2266 = vld [vmem:[%s2265] sm:$0x10]
  %vm2267 = vcmask 1044484
  %v2268 = vsel %vm2267, %v2266, %v2264
  %s2269 = scalar_lea.vmem %s0, 875
  %v2270 = vld [vmem:[%s2269] sm:$0x20]
  %vm2271 = vcmask 1045509
  %v2272 = vsel %vm2271, %v2270, %v2268
  %s2273 = scalar_lea.vmem %s0, 938
  %v2274 = vld [vmem:[%s2273] sm:$0x40]
  %vm2275 = vcmask 1046534
  %v2276 = vsel %vm2275, %v2274, %v2272
  %s2277 = scalar_lea.vmem %s0, 1001
  %v2278 = vld [vmem:[%s2277] sm:$0x80]
  %vm2279 = vcmask 1047559
  %v2280 = vsel %vm2279, %v2278, %v2276
  %2281 = vrot.lane.b32.xlu0 %v2280, 96
  %v2282 = vpop.permute.xlu0 %2281
  %vm2283 = vcmask 802560
  %s2284 = scalar_lea.vmem %s1, 8
  %2285 = vst.msk [vmem:[%s2284] sm:$0xff] %vm2283, %v2282
  %s2286 = scalar_lea.vmem %s0, 1072
  %v2287 = vld [vmem:[%s2286] sm:$0x1]
  %s2288 = scalar_lea.vmem %s0, 1135
  %v2289 = vld [vmem:[%s2288] sm:$0x2]
  %vm2290 = vcmask 1041409
  %v2291 = vsel %vm2290, %v2289, %v2287
  %s2292 = scalar_lea.vmem %s0, 1198
  %v2293 = vld [vmem:[%s2292] sm:$0x4]
  %vm2294 = vcmask 1042434
  %v2295 = vsel %vm2294, %v2293, %v2291
  %s2296 = scalar_lea.vmem %s0, 1261
  %v2297 = vld [vmem:[%s2296] sm:$0x8]
  %vm2298 = vcmask 1043459
  %v2299 = vsel %vm2298, %v2297, %v2295
  %s2300 = scalar_lea.vmem %s0, 1324
  %v2301 = vld [vmem:[%s2300] sm:$0x10]
  %vm2302 = vcmask 1044484
  %v2303 = vsel %vm2302, %v2301, %v2299
  %s2304 = scalar_lea.vmem %s0, 1387
  %v2305 = vld [vmem:[%s2304] sm:$0x20]
  %vm2306 = vcmask 1045509
  %v2307 = vsel %vm2306, %v2305, %v2303
  %s2308 = scalar_lea.vmem %s0, 1450
  %v2309 = vld [vmem:[%s2308] sm:$0x40]
  %vm2310 = vcmask 1046534
  %v2311 = vsel %vm2310, %v2309, %v2307
  %s2312 = scalar_lea.vmem %s0, 1513
  %v2313 = vld [vmem:[%s2312] sm:$0x80]
  %vm2314 = vcmask 1047559
  %v2315 = vsel %vm2314, %v2313, %v2311
  %2316 = vrot.lane.b32.xlu0 %v2315, 96
  %v2317 = vpop.permute.xlu0 %2316
  %vm2318 = vcmask 802560
  %s2319 = scalar_lea.vmem %s1, 16
  %2320 = vst.msk [vmem:[%s2319] sm:$0xff] %vm2318, %v2317
  %s2321 = scalar_lea.vmem %s0, 1584
  %v2322 = vld [vmem:[%s2321] sm:$0x1]
  %s2323 = scalar_lea.vmem %s0, 1647
  %v2324 = vld [vmem:[%s2323] sm:$0x2]
  %vm2325 = vcmask 1041409
  %v2326 = vsel %vm2325, %v2324, %v2322
  %s2327 = scalar_lea.vmem %s0, 1710
  %v2328 = vld [vmem:[%s2327] sm:$0x4]
  %vm2329 = vcmask 1042434
  %v2330 = vsel %vm2329, %v2328, %v2326
  %s2331 = scalar_lea.vmem %s0, 1773
  %v2332 = vld [vmem:[%s2331] sm:$0x8]
  %vm2333 = vcmask 1043459
  %v2334 = vsel %vm2333, %v2332, %v2330
  %s2335 = scalar_lea.vmem %s0, 1836
  %v2336 = vld [vmem:[%s2335] sm:$0x10]
  %vm2337 = vcmask 1044484
  %v2338 = vsel %vm2337, %v2336, %v2334
  %s2339 = scalar_lea.vmem %s0, 1899
  %v2340 = vld [vmem:[%s2339] sm:$0x20]
  %vm2341 = vcmask 1045509
  %v2342 = vsel %vm2341, %v2340, %v2338
  %s2343 = scalar_lea.vmem %s0, 1962
  %v2344 = vld [vmem:[%s2343] sm:$0x40]
  %vm2345 = vcmask 1046534
  %v2346 = vsel %vm2345, %v2344, %v2342
  %s2347 = scalar_lea.vmem %s0, 2025
  %v2348 = vld [vmem:[%s2347] sm:$0x80]
  %vm2349 = vcmask 1047559
  %v2350 = vsel %vm2349, %v2348, %v2346
  %2351 = vrot.lane.b32.xlu0 %v2350, 96
  %v2352 = vpop.permute.xlu0 %2351
  %vm2353 = vcmask 802560
  %s2354 = scalar_lea.vmem %s1, 24
  %2355 = vst.msk [vmem:[%s2354] sm:$0xff] %vm2353, %v2352
  %s2356 = scalar_lea.vmem %s0, 47
  %v2357 = vld [vmem:[%s2356] sm:$0x1]
  %s2358 = scalar_lea.vmem %s0, 110
  %v2359 = vld [vmem:[%s2358] sm:$0x2]
  %vm2360 = vcmask 1041409
  %v2361 = vsel %vm2360, %v2359, %v2357
  %s2362 = scalar_lea.vmem %s0, 173
  %v2363 = vld [vmem:[%s2362] sm:$0x4]
  %vm2364 = vcmask 1042434
  %v2365 = vsel %vm2364, %v2363, %v2361
  %s2366 = scalar_lea.vmem %s0, 236
  %v2367 = vld [vmem:[%s2366] sm:$0x8]
  %vm2368 = vcmask 1043459
  %v2369 = vsel %vm2368, %v2367, %v2365
  %s2370 = scalar_lea.vmem %s0, 299
  %v2371 = vld [vmem:[%s2370] sm:$0x10]
  %vm2372 = vcmask 1044484
  %v2373 = vsel %vm2372, %v2371, %v2369
  %s2374 = scalar_lea.vmem %s0, 362
  %v2375 = vld [vmem:[%s2374] sm:$0x20]
  %vm2376 = vcmask 1045509
  %v2377 = vsel %vm2376, %v2375, %v2373
  %s2378 = scalar_lea.vmem %s0, 425
  %v2379 = vld [vmem:[%s2378] sm:$0x40]
  %vm2380 = vcmask 1046534
  %v2381 = vsel %vm2380, %v2379, %v2377
  %s2382 = scalar_lea.vmem %s0, 488
  %v2383 = vld [vmem:[%s2382] sm:$0x80]
  %vm2384 = vcmask 1047559
  %v2385 = vsel %vm2384, %v2383, %v2381
  %2386 = vrot.lane.b32.xlu0 %v2385, 94
  %v2387 = vpop.permute.xlu0 %2386
  %vm2388 = vcmask 786160
  %2389 = vst.msk [vmem:[%s1] sm:$0xff] %vm2388, %v2387
  %s2390 = scalar_lea.vmem %s0, 559
  %v2391 = vld [vmem:[%s2390] sm:$0x1]
  %s2392 = scalar_lea.vmem %s0, 622
  %v2393 = vld [vmem:[%s2392] sm:$0x2]
  %vm2394 = vcmask 1041409
  %v2395 = vsel %vm2394, %v2393, %v2391
  %s2396 = scalar_lea.vmem %s0, 685
  %v2397 = vld [vmem:[%s2396] sm:$0x4]
  %vm2398 = vcmask 1042434
  %v2399 = vsel %vm2398, %v2397, %v2395
  %s2400 = scalar_lea.vmem %s0, 748
  %v2401 = vld [vmem:[%s2400] sm:$0x8]
  %vm2402 = vcmask 1043459
  %v2403 = vsel %vm2402, %v2401, %v2399
  %s2404 = scalar_lea.vmem %s0, 811
  %v2405 = vld [vmem:[%s2404] sm:$0x10]
  %vm2406 = vcmask 1044484
  %v2407 = vsel %vm2406, %v2405, %v2403
  %s2408 = scalar_lea.vmem %s0, 874
  %v2409 = vld [vmem:[%s2408] sm:$0x20]
  %vm2410 = vcmask 1045509
  %v2411 = vsel %vm2410, %v2409, %v2407
  %s2412 = scalar_lea.vmem %s0, 937
  %v2413 = vld [vmem:[%s2412] sm:$0x40]
  %vm2414 = vcmask 1046534
  %v2415 = vsel %vm2414, %v2413, %v2411
  %s2416 = scalar_lea.vmem %s0, 1000
  %v2417 = vld [vmem:[%s2416] sm:$0x80]
  %vm2418 = vcmask 1047559
  %v2419 = vsel %vm2418, %v2417, %v2415
  %2420 = vrot.lane.b32.xlu0 %v2419, 94
  %v2421 = vpop.permute.xlu0 %2420
  %vm2422 = vcmask 786160
  %s2423 = scalar_lea.vmem %s1, 8
  %2424 = vst.msk [vmem:[%s2423] sm:$0xff] %vm2422, %v2421
  %s2425 = scalar_lea.vmem %s0, 1071
  %v2426 = vld [vmem:[%s2425] sm:$0x1]
  %s2427 = scalar_lea.vmem %s0, 1134
  %v2428 = vld [vmem:[%s2427] sm:$0x2]
  %vm2429 = vcmask 1041409
  %v2430 = vsel %vm2429, %v2428, %v2426
  %s2431 = scalar_lea.vmem %s0, 1197
  %v2432 = vld [vmem:[%s2431] sm:$0x4]
  %vm2433 = vcmask 1042434
  %v2434 = vsel %vm2433, %v2432, %v2430
  %s2435 = scalar_lea.vmem %s0, 1260
  %v2436 = vld [vmem:[%s2435] sm:$0x8]
  %vm2437 = vcmask 1043459
  %v2438 = vsel %vm2437, %v2436, %v2434
  %s2439 = scalar_lea.vmem %s0, 1323
  %v2440 = vld [vmem:[%s2439] sm:$0x10]
  %vm2441 = vcmask 1044484
  %v2442 = vsel %vm2441, %v2440, %v2438
  %s2443 = scalar_lea.vmem %s0, 1386
  %v2444 = vld [vmem:[%s2443] sm:$0x20]
  %vm2445 = vcmask 1045509
  %v2446 = vsel %vm2445, %v2444, %v2442
  %s2447 = scalar_lea.vmem %s0, 1449
  %v2448 = vld [vmem:[%s2447] sm:$0x40]
  %vm2449 = vcmask 1046534
  %v2450 = vsel %vm2449, %v2448, %v2446
  %s2451 = scalar_lea.vmem %s0, 1512
  %v2452 = vld [vmem:[%s2451] sm:$0x80]
  %vm2453 = vcmask 1047559
  %v2454 = vsel %vm2453, %v2452, %v2450
  %2455 = vrot.lane.b32.xlu0 %v2454, 94
  %v2456 = vpop.permute.xlu0 %2455
  %vm2457 = vcmask 786160
  %s2458 = scalar_lea.vmem %s1, 16
  %2459 = vst.msk [vmem:[%s2458] sm:$0xff] %vm2457, %v2456
  %s2460 = scalar_lea.vmem %s0, 1583
  %v2461 = vld [vmem:[%s2460] sm:$0x1]
  %s2462 = scalar_lea.vmem %s0, 1646
  %v2463 = vld [vmem:[%s2462] sm:$0x2]
  %vm2464 = vcmask 1041409
  %v2465 = vsel %vm2464, %v2463, %v2461
  %s2466 = scalar_lea.vmem %s0, 1709
  %v2467 = vld [vmem:[%s2466] sm:$0x4]
  %vm2468 = vcmask 1042434
  %v2469 = vsel %vm2468, %v2467, %v2465
  %s2470 = scalar_lea.vmem %s0, 1772
  %v2471 = vld [vmem:[%s2470] sm:$0x8]
  %vm2472 = vcmask 1043459
  %v2473 = vsel %vm2472, %v2471, %v2469
  %s2474 = scalar_lea.vmem %s0, 1835
  %v2475 = vld [vmem:[%s2474] sm:$0x10]
  %vm2476 = vcmask 1044484
  %v2477 = vsel %vm2476, %v2475, %v2473
  %s2478 = scalar_lea.vmem %s0, 1898
  %v2479 = vld [vmem:[%s2478] sm:$0x20]
  %vm2480 = vcmask 1045509
  %v2481 = vsel %vm2480, %v2479, %v2477
  %s2482 = scalar_lea.vmem %s0, 1961
  %v2483 = vld [vmem:[%s2482] sm:$0x40]
  %vm2484 = vcmask 1046534
  %v2485 = vsel %vm2484, %v2483, %v2481
  %s2486 = scalar_lea.vmem %s0, 2024
  %v2487 = vld [vmem:[%s2486] sm:$0x80]
  %vm2488 = vcmask 1047559
  %v2489 = vsel %vm2488, %v2487, %v2485
  %2490 = vrot.lane.b32.xlu0 %v2489, 94
  %v2491 = vpop.permute.xlu0 %2490
  %vm2492 = vcmask 786160
  %s2493 = scalar_lea.vmem %s1, 24
  %2494 = vst.msk [vmem:[%s2493] sm:$0xff] %vm2492, %v2491
  %s2495 = scalar_lea.vmem %s0, 46
  %v2496 = vld [vmem:[%s2495] sm:$0x1]
  %s2497 = scalar_lea.vmem %s0, 109
  %v2498 = vld [vmem:[%s2497] sm:$0x2]
  %vm2499 = vcmask 1041409
  %v2500 = vsel %vm2499, %v2498, %v2496
  %s2501 = scalar_lea.vmem %s0, 172
  %v2502 = vld [vmem:[%s2501] sm:$0x4]
  %vm2503 = vcmask 1042434
  %v2504 = vsel %vm2503, %v2502, %v2500
  %s2505 = scalar_lea.vmem %s0, 235
  %v2506 = vld [vmem:[%s2505] sm:$0x8]
  %vm2507 = vcmask 1043459
  %v2508 = vsel %vm2507, %v2506, %v2504
  %s2509 = scalar_lea.vmem %s0, 298
  %v2510 = vld [vmem:[%s2509] sm:$0x10]
  %vm2511 = vcmask 1044484
  %v2512 = vsel %vm2511, %v2510, %v2508
  %s2513 = scalar_lea.vmem %s0, 361
  %v2514 = vld [vmem:[%s2513] sm:$0x20]
  %vm2515 = vcmask 1045509
  %v2516 = vsel %vm2515, %v2514, %v2512
  %s2517 = scalar_lea.vmem %s0, 424
  %v2518 = vld [vmem:[%s2517] sm:$0x40]
  %vm2519 = vcmask 1046534
  %v2520 = vsel %vm2519, %v2518, %v2516
  %s2521 = scalar_lea.vmem %s0, 487
  %v2522 = vld [vmem:[%s2521] sm:$0x80]
  %vm2523 = vcmask 1047559
  %v2524 = vsel %vm2523, %v2522, %v2520
  %2525 = vrot.lane.b32.xlu0 %v2524, 92
  %v2526 = vpop.permute.xlu0 %2525
  %vm2527 = vcmask 769760
  %2528 = vst.msk [vmem:[%s1] sm:$0xff] %vm2527, %v2526
  %s2529 = scalar_lea.vmem %s0, 558
  %v2530 = vld [vmem:[%s2529] sm:$0x1]
  %s2531 = scalar_lea.vmem %s0, 621
  %v2532 = vld [vmem:[%s2531] sm:$0x2]
  %vm2533 = vcmask 1041409
  %v2534 = vsel %vm2533, %v2532, %v2530
  %s2535 = scalar_lea.vmem %s0, 684
  %v2536 = vld [vmem:[%s2535] sm:$0x4]
  %vm2537 = vcmask 1042434
  %v2538 = vsel %vm2537, %v2536, %v2534
  %s2539 = scalar_lea.vmem %s0, 747
  %v2540 = vld [vmem:[%s2539] sm:$0x8]
  %vm2541 = vcmask 1043459
  %v2542 = vsel %vm2541, %v2540, %v2538
  %s2543 = scalar_lea.vmem %s0, 810
  %v2544 = vld [vmem:[%s2543] sm:$0x10]
  %vm2545 = vcmask 1044484
  %v2546 = vsel %vm2545, %v2544, %v2542
  %s2547 = scalar_lea.vmem %s0, 873
  %v2548 = vld [vmem:[%s2547] sm:$0x20]
  %vm2549 = vcmask 1045509
  %v2550 = vsel %vm2549, %v2548, %v2546
  %s2551 = scalar_lea.vmem %s0, 936
  %v2552 = vld [vmem:[%s2551] sm:$0x40]
  %vm2553 = vcmask 1046534
  %v2554 = vsel %vm2553, %v2552, %v2550
  %s2555 = scalar_lea.vmem %s0, 999
  %v2556 = vld [vmem:[%s2555] sm:$0x80]
  %vm2557 = vcmask 1047559
  %v2558 = vsel %vm2557, %v2556, %v2554
  %2559 = vrot.lane.b32.xlu0 %v2558, 92
  %v2560 = vpop.permute.xlu0 %2559
  %vm2561 = vcmask 769760
  %s2562 = scalar_lea.vmem %s1, 8
  %2563 = vst.msk [vmem:[%s2562] sm:$0xff] %vm2561, %v2560
  %s2564 = scalar_lea.vmem %s0, 1070
  %v2565 = vld [vmem:[%s2564] sm:$0x1]
  %s2566 = scalar_lea.vmem %s0, 1133
  %v2567 = vld [vmem:[%s2566] sm:$0x2]
  %vm2568 = vcmask 1041409
  %v2569 = vsel %vm2568, %v2567, %v2565
  %s2570 = scalar_lea.vmem %s0, 1196
  %v2571 = vld [vmem:[%s2570] sm:$0x4]
  %vm2572 = vcmask 1042434
  %v2573 = vsel %vm2572, %v2571, %v2569
  %s2574 = scalar_lea.vmem %s0, 1259
  %v2575 = vld [vmem:[%s2574] sm:$0x8]
  %vm2576 = vcmask 1043459
  %v2577 = vsel %vm2576, %v2575, %v2573
  %s2578 = scalar_lea.vmem %s0, 1322
  %v2579 = vld [vmem:[%s2578] sm:$0x10]
  %vm2580 = vcmask 1044484
  %v2581 = vsel %vm2580, %v2579, %v2577
  %s2582 = scalar_lea.vmem %s0, 1385
  %v2583 = vld [vmem:[%s2582] sm:$0x20]
  %vm2584 = vcmask 1045509
  %v2585 = vsel %vm2584, %v2583, %v2581
  %s2586 = scalar_lea.vmem %s0, 1448
  %v2587 = vld [vmem:[%s2586] sm:$0x40]
  %vm2588 = vcmask 1046534
  %v2589 = vsel %vm2588, %v2587, %v2585
  %s2590 = scalar_lea.vmem %s0, 1511
  %v2591 = vld [vmem:[%s2590] sm:$0x80]
  %vm2592 = vcmask 1047559
  %v2593 = vsel %vm2592, %v2591, %v2589
  %2594 = vrot.lane.b32.xlu0 %v2593, 92
  %v2595 = vpop.permute.xlu0 %2594
  %vm2596 = vcmask 769760
  %s2597 = scalar_lea.vmem %s1, 16
  %2598 = vst.msk [vmem:[%s2597] sm:$0xff] %vm2596, %v2595
  %s2599 = scalar_lea.vmem %s0, 1582
  %v2600 = vld [vmem:[%s2599] sm:$0x1]
  %s2601 = scalar_lea.vmem %s0, 1645
  %v2602 = vld [vmem:[%s2601] sm:$0x2]
  %vm2603 = vcmask 1041409
  %v2604 = vsel %vm2603, %v2602, %v2600
  %s2605 = scalar_lea.vmem %s0, 1708
  %v2606 = vld [vmem:[%s2605] sm:$0x4]
  %vm2607 = vcmask 1042434
  %v2608 = vsel %vm2607, %v2606, %v2604
  %s2609 = scalar_lea.vmem %s0, 1771
  %v2610 = vld [vmem:[%s2609] sm:$0x8]
  %vm2611 = vcmask 1043459
  %v2612 = vsel %vm2611, %v2610, %v2608
  %s2613 = scalar_lea.vmem %s0, 1834
  %v2614 = vld [vmem:[%s2613] sm:$0x10]
  %vm2615 = vcmask 1044484
  %v2616 = vsel %vm2615, %v2614, %v2612
  %s2617 = scalar_lea.vmem %s0, 1897
  %v2618 = vld [vmem:[%s2617] sm:$0x20]
  %vm2619 = vcmask 1045509
  %v2620 = vsel %vm2619, %v2618, %v2616
  %s2621 = scalar_lea.vmem %s0, 1960
  %v2622 = vld [vmem:[%s2621] sm:$0x40]
  %vm2623 = vcmask 1046534
  %v2624 = vsel %vm2623, %v2622, %v2620
  %s2625 = scalar_lea.vmem %s0, 2023
  %v2626 = vld [vmem:[%s2625] sm:$0x80]
  %vm2627 = vcmask 1047559
  %v2628 = vsel %vm2627, %v2626, %v2624
  %2629 = vrot.lane.b32.xlu0 %v2628, 92
  %v2630 = vpop.permute.xlu0 %2629
  %vm2631 = vcmask 769760
  %s2632 = scalar_lea.vmem %s1, 24
  %2633 = vst.msk [vmem:[%s2632] sm:$0xff] %vm2631, %v2630
  %s2634 = scalar_lea.vmem %s0, 45
  %v2635 = vld [vmem:[%s2634] sm:$0x1]
  %s2636 = scalar_lea.vmem %s0, 108
  %v2637 = vld [vmem:[%s2636] sm:$0x2]
  %vm2638 = vcmask 1041409
  %v2639 = vsel %vm2638, %v2637, %v2635
  %s2640 = scalar_lea.vmem %s0, 171
  %v2641 = vld [vmem:[%s2640] sm:$0x4]
  %vm2642 = vcmask 1042434
  %v2643 = vsel %vm2642, %v2641, %v2639
  %s2644 = scalar_lea.vmem %s0, 234
  %v2645 = vld [vmem:[%s2644] sm:$0x8]
  %vm2646 = vcmask 1043459
  %v2647 = vsel %vm2646, %v2645, %v2643
  %s2648 = scalar_lea.vmem %s0, 297
  %v2649 = vld [vmem:[%s2648] sm:$0x10]
  %vm2650 = vcmask 1044484
  %v2651 = vsel %vm2650, %v2649, %v2647
  %s2652 = scalar_lea.vmem %s0, 360
  %v2653 = vld [vmem:[%s2652] sm:$0x20]
  %vm2654 = vcmask 1045509
  %v2655 = vsel %vm2654, %v2653, %v2651
  %s2656 = scalar_lea.vmem %s0, 423
  %v2657 = vld [vmem:[%s2656] sm:$0x40]
  %vm2658 = vcmask 1046534
  %v2659 = vsel %vm2658, %v2657, %v2655
  %s2660 = scalar_lea.vmem %s0, 486
  %v2661 = vld [vmem:[%s2660] sm:$0x80]
  %vm2662 = vcmask 1047559
  %v2663 = vsel %vm2662, %v2661, %v2659
  %2664 = vrot.lane.b32.xlu0 %v2663, 90
  %v2665 = vpop.permute.xlu0 %2664
  %vm2666 = vcmask 753360
  %2667 = vst.msk [vmem:[%s1] sm:$0xff] %vm2666, %v2665
  %s2668 = scalar_lea.vmem %s0, 557
  %v2669 = vld [vmem:[%s2668] sm:$0x1]
  %s2670 = scalar_lea.vmem %s0, 620
  %v2671 = vld [vmem:[%s2670] sm:$0x2]
  %vm2672 = vcmask 1041409
  %v2673 = vsel %vm2672, %v2671, %v2669
  %s2674 = scalar_lea.vmem %s0, 683
  %v2675 = vld [vmem:[%s2674] sm:$0x4]
  %vm2676 = vcmask 1042434
  %v2677 = vsel %vm2676, %v2675, %v2673
  %s2678 = scalar_lea.vmem %s0, 746
  %v2679 = vld [vmem:[%s2678] sm:$0x8]
  %vm2680 = vcmask 1043459
  %v2681 = vsel %vm2680, %v2679, %v2677
  %s2682 = scalar_lea.vmem %s0, 809
  %v2683 = vld [vmem:[%s2682] sm:$0x10]
  %vm2684 = vcmask 1044484
  %v2685 = vsel %vm2684, %v2683, %v2681
  %s2686 = scalar_lea.vmem %s0, 872
  %v2687 = vld [vmem:[%s2686] sm:$0x20]
  %vm2688 = vcmask 1045509
  %v2689 = vsel %vm2688, %v2687, %v2685
  %s2690 = scalar_lea.vmem %s0, 935
  %v2691 = vld [vmem:[%s2690] sm:$0x40]
  %vm2692 = vcmask 1046534
  %v2693 = vsel %vm2692, %v2691, %v2689
  %s2694 = scalar_lea.vmem %s0, 998
  %v2695 = vld [vmem:[%s2694] sm:$0x80]
  %vm2696 = vcmask 1047559
  %v2697 = vsel %vm2696, %v2695, %v2693
  %2698 = vrot.lane.b32.xlu0 %v2697, 90
  %v2699 = vpop.permute.xlu0 %2698
  %vm2700 = vcmask 753360
  %s2701 = scalar_lea.vmem %s1, 8
  %2702 = vst.msk [vmem:[%s2701] sm:$0xff] %vm2700, %v2699
  %s2703 = scalar_lea.vmem %s0, 1069
  %v2704 = vld [vmem:[%s2703] sm:$0x1]
  %s2705 = scalar_lea.vmem %s0, 1132
  %v2706 = vld [vmem:[%s2705] sm:$0x2]
  %vm2707 = vcmask 1041409
  %v2708 = vsel %vm2707, %v2706, %v2704
  %s2709 = scalar_lea.vmem %s0, 1195
  %v2710 = vld [vmem:[%s2709] sm:$0x4]
  %vm2711 = vcmask 1042434
  %v2712 = vsel %vm2711, %v2710, %v2708
  %s2713 = scalar_lea.vmem %s0, 1258
  %v2714 = vld [vmem:[%s2713] sm:$0x8]
  %vm2715 = vcmask 1043459
  %v2716 = vsel %vm2715, %v2714, %v2712
  %s2717 = scalar_lea.vmem %s0, 1321
  %v2718 = vld [vmem:[%s2717] sm:$0x10]
  %vm2719 = vcmask 1044484
  %v2720 = vsel %vm2719, %v2718, %v2716
  %s2721 = scalar_lea.vmem %s0, 1384
  %v2722 = vld [vmem:[%s2721] sm:$0x20]
  %vm2723 = vcmask 1045509
  %v2724 = vsel %vm2723, %v2722, %v2720
  %s2725 = scalar_lea.vmem %s0, 1447
  %v2726 = vld [vmem:[%s2725] sm:$0x40]
  %vm2727 = vcmask 1046534
  %v2728 = vsel %vm2727, %v2726, %v2724
  %s2729 = scalar_lea.vmem %s0, 1510
  %v2730 = vld [vmem:[%s2729] sm:$0x80]
  %vm2731 = vcmask 1047559
  %v2732 = vsel %vm2731, %v2730, %v2728
  %2733 = vrot.lane.b32.xlu0 %v2732, 90
  %v2734 = vpop.permute.xlu0 %2733
  %vm2735 = vcmask 753360
  %s2736 = scalar_lea.vmem %s1, 16
  %2737 = vst.msk [vmem:[%s2736] sm:$0xff] %vm2735, %v2734
  %s2738 = scalar_lea.vmem %s0, 1581
  %v2739 = vld [vmem:[%s2738] sm:$0x1]
  %s2740 = scalar_lea.vmem %s0, 1644
  %v2741 = vld [vmem:[%s2740] sm:$0x2]
  %vm2742 = vcmask 1041409
  %v2743 = vsel %vm2742, %v2741, %v2739
  %s2744 = scalar_lea.vmem %s0, 1707
  %v2745 = vld [vmem:[%s2744] sm:$0x4]
  %vm2746 = vcmask 1042434
  %v2747 = vsel %vm2746, %v2745, %v2743
  %s2748 = scalar_lea.vmem %s0, 1770
  %v2749 = vld [vmem:[%s2748] sm:$0x8]
  %vm2750 = vcmask 1043459
  %v2751 = vsel %vm2750, %v2749, %v2747
  %s2752 = scalar_lea.vmem %s0, 1833
  %v2753 = vld [vmem:[%s2752] sm:$0x10]
  %vm2754 = vcmask 1044484
  %v2755 = vsel %vm2754, %v2753, %v2751
  %s2756 = scalar_lea.vmem %s0, 1896
  %v2757 = vld [vmem:[%s2756] sm:$0x20]
  %vm2758 = vcmask 1045509
  %v2759 = vsel %vm2758, %v2757, %v2755
  %s2760 = scalar_lea.vmem %s0, 1959
  %v2761 = vld [vmem:[%s2760] sm:$0x40]
  %vm2762 = vcmask 1046534
  %v2763 = vsel %vm2762, %v2761, %v2759
  %s2764 = scalar_lea.vmem %s0, 2022
  %v2765 = vld [vmem:[%s2764] sm:$0x80]
  %vm2766 = vcmask 1047559
  %v2767 = vsel %vm2766, %v2765, %v2763
  %2768 = vrot.lane.b32.xlu0 %v2767, 90
  %v2769 = vpop.permute.xlu0 %2768
  %vm2770 = vcmask 753360
  %s2771 = scalar_lea.vmem %s1, 24
  %2772 = vst.msk [vmem:[%s2771] sm:$0xff] %vm2770, %v2769
  %s2773 = scalar_lea.vmem %s0, 44
  %v2774 = vld [vmem:[%s2773] sm:$0x1]
  %s2775 = scalar_lea.vmem %s0, 107
  %v2776 = vld [vmem:[%s2775] sm:$0x2]
  %vm2777 = vcmask 1041409
  %v2778 = vsel %vm2777, %v2776, %v2774
  %s2779 = scalar_lea.vmem %s0, 170
  %v2780 = vld [vmem:[%s2779] sm:$0x4]
  %vm2781 = vcmask 1042434
  %v2782 = vsel %vm2781, %v2780, %v2778
  %s2783 = scalar_lea.vmem %s0, 233
  %v2784 = vld [vmem:[%s2783] sm:$0x8]
  %vm2785 = vcmask 1043459
  %v2786 = vsel %vm2785, %v2784, %v2782
  %s2787 = scalar_lea.vmem %s0, 296
  %v2788 = vld [vmem:[%s2787] sm:$0x10]
  %vm2789 = vcmask 1044484
  %v2790 = vsel %vm2789, %v2788, %v2786
  %s2791 = scalar_lea.vmem %s0, 359
  %v2792 = vld [vmem:[%s2791] sm:$0x20]
  %vm2793 = vcmask 1045509
  %v2794 = vsel %vm2793, %v2792, %v2790
  %s2795 = scalar_lea.vmem %s0, 422
  %v2796 = vld [vmem:[%s2795] sm:$0x40]
  %vm2797 = vcmask 1046534
  %v2798 = vsel %vm2797, %v2796, %v2794
  %s2799 = scalar_lea.vmem %s0, 485
  %v2800 = vld [vmem:[%s2799] sm:$0x80]
  %vm2801 = vcmask 1047559
  %v2802 = vsel %vm2801, %v2800, %v2798
  %2803 = vrot.lane.b32.xlu0 %v2802, 88
  %v2804 = vpop.permute.xlu0 %2803
  %vm2805 = vcmask 736960
  %2806 = vst.msk [vmem:[%s1] sm:$0xff] %vm2805, %v2804
  %s2807 = scalar_lea.vmem %s0, 556
  %v2808 = vld [vmem:[%s2807] sm:$0x1]
  %s2809 = scalar_lea.vmem %s0, 619
  %v2810 = vld [vmem:[%s2809] sm:$0x2]
  %vm2811 = vcmask 1041409
  %v2812 = vsel %vm2811, %v2810, %v2808
  %s2813 = scalar_lea.vmem %s0, 682
  %v2814 = vld [vmem:[%s2813] sm:$0x4]
  %vm2815 = vcmask 1042434
  %v2816 = vsel %vm2815, %v2814, %v2812
  %s2817 = scalar_lea.vmem %s0, 745
  %v2818 = vld [vmem:[%s2817] sm:$0x8]
  %vm2819 = vcmask 1043459
  %v2820 = vsel %vm2819, %v2818, %v2816
  %s2821 = scalar_lea.vmem %s0, 808
  %v2822 = vld [vmem:[%s2821] sm:$0x10]
  %vm2823 = vcmask 1044484
  %v2824 = vsel %vm2823, %v2822, %v2820
  %s2825 = scalar_lea.vmem %s0, 871
  %v2826 = vld [vmem:[%s2825] sm:$0x20]
  %vm2827 = vcmask 1045509
  %v2828 = vsel %vm2827, %v2826, %v2824
  %s2829 = scalar_lea.vmem %s0, 934
  %v2830 = vld [vmem:[%s2829] sm:$0x40]
  %vm2831 = vcmask 1046534
  %v2832 = vsel %vm2831, %v2830, %v2828
  %s2833 = scalar_lea.vmem %s0, 997
  %v2834 = vld [vmem:[%s2833] sm:$0x80]
  %vm2835 = vcmask 1047559
  %v2836 = vsel %vm2835, %v2834, %v2832
  %2837 = vrot.lane.b32.xlu0 %v2836, 88
  %v2838 = vpop.permute.xlu0 %2837
  %vm2839 = vcmask 736960
  %s2840 = scalar_lea.vmem %s1, 8
  %2841 = vst.msk [vmem:[%s2840] sm:$0xff] %vm2839, %v2838
  %s2842 = scalar_lea.vmem %s0, 1068
  %v2843 = vld [vmem:[%s2842] sm:$0x1]
  %s2844 = scalar_lea.vmem %s0, 1131
  %v2845 = vld [vmem:[%s2844] sm:$0x2]
  %vm2846 = vcmask 1041409
  %v2847 = vsel %vm2846, %v2845, %v2843
  %s2848 = scalar_lea.vmem %s0, 1194
  %v2849 = vld [vmem:[%s2848] sm:$0x4]
  %vm2850 = vcmask 1042434
  %v2851 = vsel %vm2850, %v2849, %v2847
  %s2852 = scalar_lea.vmem %s0, 1257
  %v2853 = vld [vmem:[%s2852] sm:$0x8]
  %vm2854 = vcmask 1043459
  %v2855 = vsel %vm2854, %v2853, %v2851
  %s2856 = scalar_lea.vmem %s0, 1320
  %v2857 = vld [vmem:[%s2856] sm:$0x10]
  %vm2858 = vcmask 1044484
  %v2859 = vsel %vm2858, %v2857, %v2855
  %s2860 = scalar_lea.vmem %s0, 1383
  %v2861 = vld [vmem:[%s2860] sm:$0x20]
  %vm2862 = vcmask 1045509
  %v2863 = vsel %vm2862, %v2861, %v2859
  %s2864 = scalar_lea.vmem %s0, 1446
  %v2865 = vld [vmem:[%s2864] sm:$0x40]
  %vm2866 = vcmask 1046534
  %v2867 = vsel %vm2866, %v2865, %v2863
  %s2868 = scalar_lea.vmem %s0, 1509
  %v2869 = vld [vmem:[%s2868] sm:$0x80]
  %vm2870 = vcmask 1047559
  %v2871 = vsel %vm2870, %v2869, %v2867
  %2872 = vrot.lane.b32.xlu0 %v2871, 88
  %v2873 = vpop.permute.xlu0 %2872
  %vm2874 = vcmask 736960
  %s2875 = scalar_lea.vmem %s1, 16
  %2876 = vst.msk [vmem:[%s2875] sm:$0xff] %vm2874, %v2873
  %s2877 = scalar_lea.vmem %s0, 1580
  %v2878 = vld [vmem:[%s2877] sm:$0x1]
  %s2879 = scalar_lea.vmem %s0, 1643
  %v2880 = vld [vmem:[%s2879] sm:$0x2]
  %vm2881 = vcmask 1041409
  %v2882 = vsel %vm2881, %v2880, %v2878
  %s2883 = scalar_lea.vmem %s0, 1706
  %v2884 = vld [vmem:[%s2883] sm:$0x4]
  %vm2885 = vcmask 1042434
  %v2886 = vsel %vm2885, %v2884, %v2882
  %s2887 = scalar_lea.vmem %s0, 1769
  %v2888 = vld [vmem:[%s2887] sm:$0x8]
  %vm2889 = vcmask 1043459
  %v2890 = vsel %vm2889, %v2888, %v2886
  %s2891 = scalar_lea.vmem %s0, 1832
  %v2892 = vld [vmem:[%s2891] sm:$0x10]
  %vm2893 = vcmask 1044484
  %v2894 = vsel %vm2893, %v2892, %v2890
  %s2895 = scalar_lea.vmem %s0, 1895
  %v2896 = vld [vmem:[%s2895] sm:$0x20]
  %vm2897 = vcmask 1045509
  %v2898 = vsel %vm2897, %v2896, %v2894
  %s2899 = scalar_lea.vmem %s0, 1958
  %v2900 = vld [vmem:[%s2899] sm:$0x40]
  %vm2901 = vcmask 1046534
  %v2902 = vsel %vm2901, %v2900, %v2898
  %s2903 = scalar_lea.vmem %s0, 2021
  %v2904 = vld [vmem:[%s2903] sm:$0x80]
  %vm2905 = vcmask 1047559
  %v2906 = vsel %vm2905, %v2904, %v2902
  %2907 = vrot.lane.b32.xlu0 %v2906, 88
  %v2908 = vpop.permute.xlu0 %2907
  %vm2909 = vcmask 736960
  %s2910 = scalar_lea.vmem %s1, 24
  %2911 = vst.msk [vmem:[%s2910] sm:$0xff] %vm2909, %v2908
  %s2912 = scalar_lea.vmem %s0, 43
  %v2913 = vld [vmem:[%s2912] sm:$0x1]
  %s2914 = scalar_lea.vmem %s0, 106
  %v2915 = vld [vmem:[%s2914] sm:$0x2]
  %vm2916 = vcmask 1041409
  %v2917 = vsel %vm2916, %v2915, %v2913
  %s2918 = scalar_lea.vmem %s0, 169
  %v2919 = vld [vmem:[%s2918] sm:$0x4]
  %vm2920 = vcmask 1042434
  %v2921 = vsel %vm2920, %v2919, %v2917
  %s2922 = scalar_lea.vmem %s0, 232
  %v2923 = vld [vmem:[%s2922] sm:$0x8]
  %vm2924 = vcmask 1043459
  %v2925 = vsel %vm2924, %v2923, %v2921
  %s2926 = scalar_lea.vmem %s0, 295
  %v2927 = vld [vmem:[%s2926] sm:$0x10]
  %vm2928 = vcmask 1044484
  %v2929 = vsel %vm2928, %v2927, %v2925
  %s2930 = scalar_lea.vmem %s0, 358
  %v2931 = vld [vmem:[%s2930] sm:$0x20]
  %vm2932 = vcmask 1045509
  %v2933 = vsel %vm2932, %v2931, %v2929
  %s2934 = scalar_lea.vmem %s0, 421
  %v2935 = vld [vmem:[%s2934] sm:$0x40]
  %vm2936 = vcmask 1046534
  %v2937 = vsel %vm2936, %v2935, %v2933
  %s2938 = scalar_lea.vmem %s0, 484
  %v2939 = vld [vmem:[%s2938] sm:$0x80]
  %vm2940 = vcmask 1047559
  %v2941 = vsel %vm2940, %v2939, %v2937
  %2942 = vrot.lane.b32.xlu0 %v2941, 86
  %v2943 = vpop.permute.xlu0 %2942
  %vm2944 = vcmask 720560
  %2945 = vst.msk [vmem:[%s1] sm:$0xff] %vm2944, %v2943
  %s2946 = scalar_lea.vmem %s0, 555
  %v2947 = vld [vmem:[%s2946] sm:$0x1]
  %s2948 = scalar_lea.vmem %s0, 618
  %v2949 = vld [vmem:[%s2948] sm:$0x2]
  %vm2950 = vcmask 1041409
  %v2951 = vsel %vm2950, %v2949, %v2947
  %s2952 = scalar_lea.vmem %s0, 681
  %v2953 = vld [vmem:[%s2952] sm:$0x4]
  %vm2954 = vcmask 1042434
  %v2955 = vsel %vm2954, %v2953, %v2951
  %s2956 = scalar_lea.vmem %s0, 744
  %v2957 = vld [vmem:[%s2956] sm:$0x8]
  %vm2958 = vcmask 1043459
  %v2959 = vsel %vm2958, %v2957, %v2955
  %s2960 = scalar_lea.vmem %s0, 807
  %v2961 = vld [vmem:[%s2960] sm:$0x10]
  %vm2962 = vcmask 1044484
  %v2963 = vsel %vm2962, %v2961, %v2959
  %s2964 = scalar_lea.vmem %s0, 870
  %v2965 = vld [vmem:[%s2964] sm:$0x20]
  %vm2966 = vcmask 1045509
  %v2967 = vsel %vm2966, %v2965, %v2963
  %s2968 = scalar_lea.vmem %s0, 933
  %v2969 = vld [vmem:[%s2968] sm:$0x40]
  %vm2970 = vcmask 1046534
  %v2971 = vsel %vm2970, %v2969, %v2967
  %s2972 = scalar_lea.vmem %s0, 996
  %v2973 = vld [vmem:[%s2972] sm:$0x80]
  %vm2974 = vcmask 1047559
  %v2975 = vsel %vm2974, %v2973, %v2971
  %2976 = vrot.lane.b32.xlu0 %v2975, 86
  %v2977 = vpop.permute.xlu0 %2976
  %vm2978 = vcmask 720560
  %s2979 = scalar_lea.vmem %s1, 8
  %2980 = vst.msk [vmem:[%s2979] sm:$0xff] %vm2978, %v2977
  %s2981 = scalar_lea.vmem %s0, 1067
  %v2982 = vld [vmem:[%s2981] sm:$0x1]
  %s2983 = scalar_lea.vmem %s0, 1130
  %v2984 = vld [vmem:[%s2983] sm:$0x2]
  %vm2985 = vcmask 1041409
  %v2986 = vsel %vm2985, %v2984, %v2982
  %s2987 = scalar_lea.vmem %s0, 1193
  %v2988 = vld [vmem:[%s2987] sm:$0x4]
  %vm2989 = vcmask 1042434
  %v2990 = vsel %vm2989, %v2988, %v2986
  %s2991 = scalar_lea.vmem %s0, 1256
  %v2992 = vld [vmem:[%s2991] sm:$0x8]
  %vm2993 = vcmask 1043459
  %v2994 = vsel %vm2993, %v2992, %v2990
  %s2995 = scalar_lea.vmem %s0, 1319
  %v2996 = vld [vmem:[%s2995] sm:$0x10]
  %vm2997 = vcmask 1044484
  %v2998 = vsel %vm2997, %v2996, %v2994
  %s2999 = scalar_lea.vmem %s0, 1382
  %v3000 = vld [vmem:[%s2999] sm:$0x20]
  %vm3001 = vcmask 1045509
  %v3002 = vsel %vm3001, %v3000, %v2998
  %s3003 = scalar_lea.vmem %s0, 1445
  %v3004 = vld [vmem:[%s3003] sm:$0x40]
  %vm3005 = vcmask 1046534
  %v3006 = vsel %vm3005, %v3004, %v3002
  %s3007 = scalar_lea.vmem %s0, 1508
  %v3008 = vld [vmem:[%s3007] sm:$0x80]
  %vm3009 = vcmask 1047559
  %v3010 = vsel %vm3009, %v3008, %v3006
  %3011 = vrot.lane.b32.xlu0 %v3010, 86
  %v3012 = vpop.permute.xlu0 %3011
  %vm3013 = vcmask 720560
  %s3014 = scalar_lea.vmem %s1, 16
  %3015 = vst.msk [vmem:[%s3014] sm:$0xff] %vm3013, %v3012
  %s3016 = scalar_lea.vmem %s0, 1579
  %v3017 = vld [vmem:[%s3016] sm:$0x1]
  %s3018 = scalar_lea.vmem %s0, 1642
  %v3019 = vld [vmem:[%s3018] sm:$0x2]
  %vm3020 = vcmask 1041409
  %v3021 = vsel %vm3020, %v3019, %v3017
  %s3022 = scalar_lea.vmem %s0, 1705
  %v3023 = vld [vmem:[%s3022] sm:$0x4]
  %vm3024 = vcmask 1042434
  %v3025 = vsel %vm3024, %v3023, %v3021
  %s3026 = scalar_lea.vmem %s0, 1768
  %v3027 = vld [vmem:[%s3026] sm:$0x8]
  %vm3028 = vcmask 1043459
  %v3029 = vsel %vm3028, %v3027, %v3025
  %s3030 = scalar_lea.vmem %s0, 1831
  %v3031 = vld [vmem:[%s3030] sm:$0x10]
  %vm3032 = vcmask 1044484
  %v3033 = vsel %vm3032, %v3031, %v3029
  %s3034 = scalar_lea.vmem %s0, 1894
  %v3035 = vld [vmem:[%s3034] sm:$0x20]
  %vm3036 = vcmask 1045509
  %v3037 = vsel %vm3036, %v3035, %v3033
  %s3038 = scalar_lea.vmem %s0, 1957
  %v3039 = vld [vmem:[%s3038] sm:$0x40]
  %vm3040 = vcmask 1046534
  %v3041 = vsel %vm3040, %v3039, %v3037
  %s3042 = scalar_lea.vmem %s0, 2020
  %v3043 = vld [vmem:[%s3042] sm:$0x80]
  %vm3044 = vcmask 1047559
  %v3045 = vsel %vm3044, %v3043, %v3041
  %3046 = vrot.lane.b32.xlu0 %v3045, 86
  %v3047 = vpop.permute.xlu0 %3046
  %vm3048 = vcmask 720560
  %s3049 = scalar_lea.vmem %s1, 24
  %3050 = vst.msk [vmem:[%s3049] sm:$0xff] %vm3048, %v3047
  %s3051 = scalar_lea.vmem %s0, 42
  %v3052 = vld [vmem:[%s3051] sm:$0x1]
  %s3053 = scalar_lea.vmem %s0, 105
  %v3054 = vld [vmem:[%s3053] sm:$0x2]
  %vm3055 = vcmask 1041409
  %v3056 = vsel %vm3055, %v3054, %v3052
  %s3057 = scalar_lea.vmem %s0, 168
  %v3058 = vld [vmem:[%s3057] sm:$0x4]
  %vm3059 = vcmask 1042434
  %v3060 = vsel %vm3059, %v3058, %v3056
  %s3061 = scalar_lea.vmem %s0, 231
  %v3062 = vld [vmem:[%s3061] sm:$0x8]
  %vm3063 = vcmask 1043459
  %v3064 = vsel %vm3063, %v3062, %v3060
  %s3065 = scalar_lea.vmem %s0, 294
  %v3066 = vld [vmem:[%s3065] sm:$0x10]
  %vm3067 = vcmask 1044484
  %v3068 = vsel %vm3067, %v3066, %v3064
  %s3069 = scalar_lea.vmem %s0, 357
  %v3070 = vld [vmem:[%s3069] sm:$0x20]
  %vm3071 = vcmask 1045509
  %v3072 = vsel %vm3071, %v3070, %v3068
  %s3073 = scalar_lea.vmem %s0, 420
  %v3074 = vld [vmem:[%s3073] sm:$0x40]
  %vm3075 = vcmask 1046534
  %v3076 = vsel %vm3075, %v3074, %v3072
  %s3077 = scalar_lea.vmem %s0, 483
  %v3078 = vld [vmem:[%s3077] sm:$0x80]
  %vm3079 = vcmask 1047559
  %v3080 = vsel %vm3079, %v3078, %v3076
  %3081 = vrot.lane.b32.xlu0 %v3080, 84
  %v3082 = vpop.permute.xlu0 %3081
  %vm3083 = vcmask 704160
  %3084 = vst.msk [vmem:[%s1] sm:$0xff] %vm3083, %v3082
  %s3085 = scalar_lea.vmem %s0, 554
  %v3086 = vld [vmem:[%s3085] sm:$0x1]
  %s3087 = scalar_lea.vmem %s0, 617
  %v3088 = vld [vmem:[%s3087] sm:$0x2]
  %vm3089 = vcmask 1041409
  %v3090 = vsel %vm3089, %v3088, %v3086
  %s3091 = scalar_lea.vmem %s0, 680
  %v3092 = vld [vmem:[%s3091] sm:$0x4]
  %vm3093 = vcmask 1042434
  %v3094 = vsel %vm3093, %v3092, %v3090
  %s3095 = scalar_lea.vmem %s0, 743
  %v3096 = vld [vmem:[%s3095] sm:$0x8]
  %vm3097 = vcmask 1043459
  %v3098 = vsel %vm3097, %v3096, %v3094
  %s3099 = scalar_lea.vmem %s0, 806
  %v3100 = vld [vmem:[%s3099] sm:$0x10]
  %vm3101 = vcmask 1044484
  %v3102 = vsel %vm3101, %v3100, %v3098
  %s3103 = scalar_lea.vmem %s0, 869
  %v3104 = vld [vmem:[%s3103] sm:$0x20]
  %vm3105 = vcmask 1045509
  %v3106 = vsel %vm3105, %v3104, %v3102
  %s3107 = scalar_lea.vmem %s0, 932
  %v3108 = vld [vmem:[%s3107] sm:$0x40]
  %vm3109 = vcmask 1046534
  %v3110 = vsel %vm3109, %v3108, %v3106
  %s3111 = scalar_lea.vmem %s0, 995
  %v3112 = vld [vmem:[%s3111] sm:$0x80]
  %vm3113 = vcmask 1047559
  %v3114 = vsel %vm3113, %v3112, %v3110
  %3115 = vrot.lane.b32.xlu0 %v3114, 84
  %v3116 = vpop.permute.xlu0 %3115
  %vm3117 = vcmask 704160
  %s3118 = scalar_lea.vmem %s1, 8
  %3119 = vst.msk [vmem:[%s3118] sm:$0xff] %vm3117, %v3116
  %s3120 = scalar_lea.vmem %s0, 1066
  %v3121 = vld [vmem:[%s3120] sm:$0x1]
  %s3122 = scalar_lea.vmem %s0, 1129
  %v3123 = vld [vmem:[%s3122] sm:$0x2]
  %vm3124 = vcmask 1041409
  %v3125 = vsel %vm3124, %v3123, %v3121
  %s3126 = scalar_lea.vmem %s0, 1192
  %v3127 = vld [vmem:[%s3126] sm:$0x4]
  %vm3128 = vcmask 1042434
  %v3129 = vsel %vm3128, %v3127, %v3125
  %s3130 = scalar_lea.vmem %s0, 1255
  %v3131 = vld [vmem:[%s3130] sm:$0x8]
  %vm3132 = vcmask 1043459
  %v3133 = vsel %vm3132, %v3131, %v3129
  %s3134 = scalar_lea.vmem %s0, 1318
  %v3135 = vld [vmem:[%s3134] sm:$0x10]
  %vm3136 = vcmask 1044484
  %v3137 = vsel %vm3136, %v3135, %v3133
  %s3138 = scalar_lea.vmem %s0, 1381
  %v3139 = vld [vmem:[%s3138] sm:$0x20]
  %vm3140 = vcmask 1045509
  %v3141 = vsel %vm3140, %v3139, %v3137
  %s3142 = scalar_lea.vmem %s0, 1444
  %v3143 = vld [vmem:[%s3142] sm:$0x40]
  %vm3144 = vcmask 1046534
  %v3145 = vsel %vm3144, %v3143, %v3141
  %s3146 = scalar_lea.vmem %s0, 1507
  %v3147 = vld [vmem:[%s3146] sm:$0x80]
  %vm3148 = vcmask 1047559
  %v3149 = vsel %vm3148, %v3147, %v3145
  %3150 = vrot.lane.b32.xlu0 %v3149, 84
  %v3151 = vpop.permute.xlu0 %3150
  %vm3152 = vcmask 704160
  %s3153 = scalar_lea.vmem %s1, 16
  %3154 = vst.msk [vmem:[%s3153] sm:$0xff] %vm3152, %v3151
  %s3155 = scalar_lea.vmem %s0, 1578
  %v3156 = vld [vmem:[%s3155] sm:$0x1]
  %s3157 = scalar_lea.vmem %s0, 1641
  %v3158 = vld [vmem:[%s3157] sm:$0x2]
  %vm3159 = vcmask 1041409
  %v3160 = vsel %vm3159, %v3158, %v3156
  %s3161 = scalar_lea.vmem %s0, 1704
  %v3162 = vld [vmem:[%s3161] sm:$0x4]
  %vm3163 = vcmask 1042434
  %v3164 = vsel %vm3163, %v3162, %v3160
  %s3165 = scalar_lea.vmem %s0, 1767
  %v3166 = vld [vmem:[%s3165] sm:$0x8]
  %vm3167 = vcmask 1043459
  %v3168 = vsel %vm3167, %v3166, %v3164
  %s3169 = scalar_lea.vmem %s0, 1830
  %v3170 = vld [vmem:[%s3169] sm:$0x10]
  %vm3171 = vcmask 1044484
  %v3172 = vsel %vm3171, %v3170, %v3168
  %s3173 = scalar_lea.vmem %s0, 1893
  %v3174 = vld [vmem:[%s3173] sm:$0x20]
  %vm3175 = vcmask 1045509
  %v3176 = vsel %vm3175, %v3174, %v3172
  %s3177 = scalar_lea.vmem %s0, 1956
  %v3178 = vld [vmem:[%s3177] sm:$0x40]
  %vm3179 = vcmask 1046534
  %v3180 = vsel %vm3179, %v3178, %v3176
  %s3181 = scalar_lea.vmem %s0, 2019
  %v3182 = vld [vmem:[%s3181] sm:$0x80]
  %vm3183 = vcmask 1047559
  %v3184 = vsel %vm3183, %v3182, %v3180
  %3185 = vrot.lane.b32.xlu0 %v3184, 84
  %v3186 = vpop.permute.xlu0 %3185
  %vm3187 = vcmask 704160
  %s3188 = scalar_lea.vmem %s1, 24
  %3189 = vst.msk [vmem:[%s3188] sm:$0xff] %vm3187, %v3186
  %s3190 = scalar_lea.vmem %s0, 41
  %v3191 = vld [vmem:[%s3190] sm:$0x1]
  %s3192 = scalar_lea.vmem %s0, 104
  %v3193 = vld [vmem:[%s3192] sm:$0x2]
  %vm3194 = vcmask 1041409
  %v3195 = vsel %vm3194, %v3193, %v3191
  %s3196 = scalar_lea.vmem %s0, 167
  %v3197 = vld [vmem:[%s3196] sm:$0x4]
  %vm3198 = vcmask 1042434
  %v3199 = vsel %vm3198, %v3197, %v3195
  %s3200 = scalar_lea.vmem %s0, 230
  %v3201 = vld [vmem:[%s3200] sm:$0x8]
  %vm3202 = vcmask 1043459
  %v3203 = vsel %vm3202, %v3201, %v3199
  %s3204 = scalar_lea.vmem %s0, 293
  %v3205 = vld [vmem:[%s3204] sm:$0x10]
  %vm3206 = vcmask 1044484
  %v3207 = vsel %vm3206, %v3205, %v3203
  %s3208 = scalar_lea.vmem %s0, 356
  %v3209 = vld [vmem:[%s3208] sm:$0x20]
  %vm3210 = vcmask 1045509
  %v3211 = vsel %vm3210, %v3209, %v3207
  %s3212 = scalar_lea.vmem %s0, 419
  %v3213 = vld [vmem:[%s3212] sm:$0x40]
  %vm3214 = vcmask 1046534
  %v3215 = vsel %vm3214, %v3213, %v3211
  %s3216 = scalar_lea.vmem %s0, 482
  %v3217 = vld [vmem:[%s3216] sm:$0x80]
  %vm3218 = vcmask 1047559
  %v3219 = vsel %vm3218, %v3217, %v3215
  %3220 = vrot.lane.b32.xlu0 %v3219, 82
  %v3221 = vpop.permute.xlu0 %3220
  %vm3222 = vcmask 687760
  %3223 = vst.msk [vmem:[%s1] sm:$0xff] %vm3222, %v3221
  %s3224 = scalar_lea.vmem %s0, 553
  %v3225 = vld [vmem:[%s3224] sm:$0x1]
  %s3226 = scalar_lea.vmem %s0, 616
  %v3227 = vld [vmem:[%s3226] sm:$0x2]
  %vm3228 = vcmask 1041409
  %v3229 = vsel %vm3228, %v3227, %v3225
  %s3230 = scalar_lea.vmem %s0, 679
  %v3231 = vld [vmem:[%s3230] sm:$0x4]
  %vm3232 = vcmask 1042434
  %v3233 = vsel %vm3232, %v3231, %v3229
  %s3234 = scalar_lea.vmem %s0, 742
  %v3235 = vld [vmem:[%s3234] sm:$0x8]
  %vm3236 = vcmask 1043459
  %v3237 = vsel %vm3236, %v3235, %v3233
  %s3238 = scalar_lea.vmem %s0, 805
  %v3239 = vld [vmem:[%s3238] sm:$0x10]
  %vm3240 = vcmask 1044484
  %v3241 = vsel %vm3240, %v3239, %v3237
  %s3242 = scalar_lea.vmem %s0, 868
  %v3243 = vld [vmem:[%s3242] sm:$0x20]
  %vm3244 = vcmask 1045509
  %v3245 = vsel %vm3244, %v3243, %v3241
  %s3246 = scalar_lea.vmem %s0, 931
  %v3247 = vld [vmem:[%s3246] sm:$0x40]
  %vm3248 = vcmask 1046534
  %v3249 = vsel %vm3248, %v3247, %v3245
  %s3250 = scalar_lea.vmem %s0, 994
  %v3251 = vld [vmem:[%s3250] sm:$0x80]
  %vm3252 = vcmask 1047559
  %v3253 = vsel %vm3252, %v3251, %v3249
  %3254 = vrot.lane.b32.xlu0 %v3253, 82
  %v3255 = vpop.permute.xlu0 %3254
  %vm3256 = vcmask 687760
  %s3257 = scalar_lea.vmem %s1, 8
  %3258 = vst.msk [vmem:[%s3257] sm:$0xff] %vm3256, %v3255
  %s3259 = scalar_lea.vmem %s0, 1065
  %v3260 = vld [vmem:[%s3259] sm:$0x1]
  %s3261 = scalar_lea.vmem %s0, 1128
  %v3262 = vld [vmem:[%s3261] sm:$0x2]
  %vm3263 = vcmask 1041409
  %v3264 = vsel %vm3263, %v3262, %v3260
  %s3265 = scalar_lea.vmem %s0, 1191
  %v3266 = vld [vmem:[%s3265] sm:$0x4]
  %vm3267 = vcmask 1042434
  %v3268 = vsel %vm3267, %v3266, %v3264
  %s3269 = scalar_lea.vmem %s0, 1254
  %v3270 = vld [vmem:[%s3269] sm:$0x8]
  %vm3271 = vcmask 1043459
  %v3272 = vsel %vm3271, %v3270, %v3268
  %s3273 = scalar_lea.vmem %s0, 1317
  %v3274 = vld [vmem:[%s3273] sm:$0x10]
  %vm3275 = vcmask 1044484
  %v3276 = vsel %vm3275, %v3274, %v3272
  %s3277 = scalar_lea.vmem %s0, 1380
  %v3278 = vld [vmem:[%s3277] sm:$0x20]
  %vm3279 = vcmask 1045509
  %v3280 = vsel %vm3279, %v3278, %v3276
  %s3281 = scalar_lea.vmem %s0, 1443
  %v3282 = vld [vmem:[%s3281] sm:$0x40]
  %vm3283 = vcmask 1046534
  %v3284 = vsel %vm3283, %v3282, %v3280
  %s3285 = scalar_lea.vmem %s0, 1506
  %v3286 = vld [vmem:[%s3285] sm:$0x80]
  %vm3287 = vcmask 1047559
  %v3288 = vsel %vm3287, %v3286, %v3284
  %3289 = vrot.lane.b32.xlu0 %v3288, 82
  %v3290 = vpop.permute.xlu0 %3289
  %vm3291 = vcmask 687760
  %s3292 = scalar_lea.vmem %s1, 16
  %3293 = vst.msk [vmem:[%s3292] sm:$0xff] %vm3291, %v3290
  %s3294 = scalar_lea.vmem %s0, 1577
  %v3295 = vld [vmem:[%s3294] sm:$0x1]
  %s3296 = scalar_lea.vmem %s0, 1640
  %v3297 = vld [vmem:[%s3296] sm:$0x2]
  %vm3298 = vcmask 1041409
  %v3299 = vsel %vm3298, %v3297, %v3295
  %s3300 = scalar_lea.vmem %s0, 1703
  %v3301 = vld [vmem:[%s3300] sm:$0x4]
  %vm3302 = vcmask 1042434
  %v3303 = vsel %vm3302, %v3301, %v3299
  %s3304 = scalar_lea.vmem %s0, 1766
  %v3305 = vld [vmem:[%s3304] sm:$0x8]
  %vm3306 = vcmask 1043459
  %v3307 = vsel %vm3306, %v3305, %v3303
  %s3308 = scalar_lea.vmem %s0, 1829
  %v3309 = vld [vmem:[%s3308] sm:$0x10]
  %vm3310 = vcmask 1044484
  %v3311 = vsel %vm3310, %v3309, %v3307
  %s3312 = scalar_lea.vmem %s0, 1892
  %v3313 = vld [vmem:[%s3312] sm:$0x20]
  %vm3314 = vcmask 1045509
  %v3315 = vsel %vm3314, %v3313, %v3311
  %s3316 = scalar_lea.vmem %s0, 1955
  %v3317 = vld [vmem:[%s3316] sm:$0x40]
  %vm3318 = vcmask 1046534
  %v3319 = vsel %vm3318, %v3317, %v3315
  %s3320 = scalar_lea.vmem %s0, 2018
  %v3321 = vld [vmem:[%s3320] sm:$0x80]
  %vm3322 = vcmask 1047559
  %v3323 = vsel %vm3322, %v3321, %v3319
  %3324 = vrot.lane.b32.xlu0 %v3323, 82
  %v3325 = vpop.permute.xlu0 %3324
  %vm3326 = vcmask 687760
  %s3327 = scalar_lea.vmem %s1, 24
  %3328 = vst.msk [vmem:[%s3327] sm:$0xff] %vm3326, %v3325
  %s3329 = scalar_lea.vmem %s0, 40
  %v3330 = vld [vmem:[%s3329] sm:$0x1]
  %s3331 = scalar_lea.vmem %s0, 103
  %v3332 = vld [vmem:[%s3331] sm:$0x2]
  %vm3333 = vcmask 1041409
  %v3334 = vsel %vm3333, %v3332, %v3330
  %s3335 = scalar_lea.vmem %s0, 166
  %v3336 = vld [vmem:[%s3335] sm:$0x4]
  %vm3337 = vcmask 1042434
  %v3338 = vsel %vm3337, %v3336, %v3334
  %s3339 = scalar_lea.vmem %s0, 229
  %v3340 = vld [vmem:[%s3339] sm:$0x8]
  %vm3341 = vcmask 1043459
  %v3342 = vsel %vm3341, %v3340, %v3338
  %s3343 = scalar_lea.vmem %s0, 292
  %v3344 = vld [vmem:[%s3343] sm:$0x10]
  %vm3345 = vcmask 1044484
  %v3346 = vsel %vm3345, %v3344, %v3342
  %s3347 = scalar_lea.vmem %s0, 355
  %v3348 = vld [vmem:[%s3347] sm:$0x20]
  %vm3349 = vcmask 1045509
  %v3350 = vsel %vm3349, %v3348, %v3346
  %s3351 = scalar_lea.vmem %s0, 418
  %v3352 = vld [vmem:[%s3351] sm:$0x40]
  %vm3353 = vcmask 1046534
  %v3354 = vsel %vm3353, %v3352, %v3350
  %s3355 = scalar_lea.vmem %s0, 481
  %v3356 = vld [vmem:[%s3355] sm:$0x80]
  %vm3357 = vcmask 1047559
  %v3358 = vsel %vm3357, %v3356, %v3354
  %3359 = vrot.lane.b32.xlu0 %v3358, 80
  %v3360 = vpop.permute.xlu0 %3359
  %vm3361 = vcmask 671360
  %3362 = vst.msk [vmem:[%s1] sm:$0xff] %vm3361, %v3360
  %s3363 = scalar_lea.vmem %s0, 552
  %v3364 = vld [vmem:[%s3363] sm:$0x1]
  %s3365 = scalar_lea.vmem %s0, 615
  %v3366 = vld [vmem:[%s3365] sm:$0x2]
  %vm3367 = vcmask 1041409
  %v3368 = vsel %vm3367, %v3366, %v3364
  %s3369 = scalar_lea.vmem %s0, 678
  %v3370 = vld [vmem:[%s3369] sm:$0x4]
  %vm3371 = vcmask 1042434
  %v3372 = vsel %vm3371, %v3370, %v3368
  %s3373 = scalar_lea.vmem %s0, 741
  %v3374 = vld [vmem:[%s3373] sm:$0x8]
  %vm3375 = vcmask 1043459
  %v3376 = vsel %vm3375, %v3374, %v3372
  %s3377 = scalar_lea.vmem %s0, 804
  %v3378 = vld [vmem:[%s3377] sm:$0x10]
  %vm3379 = vcmask 1044484
  %v3380 = vsel %vm3379, %v3378, %v3376
  %s3381 = scalar_lea.vmem %s0, 867
  %v3382 = vld [vmem:[%s3381] sm:$0x20]
  %vm3383 = vcmask 1045509
  %v3384 = vsel %vm3383, %v3382, %v3380
  %s3385 = scalar_lea.vmem %s0, 930
  %v3386 = vld [vmem:[%s3385] sm:$0x40]
  %vm3387 = vcmask 1046534
  %v3388 = vsel %vm3387, %v3386, %v3384
  %s3389 = scalar_lea.vmem %s0, 993
  %v3390 = vld [vmem:[%s3389] sm:$0x80]
  %vm3391 = vcmask 1047559
  %v3392 = vsel %vm3391, %v3390, %v3388
  %3393 = vrot.lane.b32.xlu0 %v3392, 80
  %v3394 = vpop.permute.xlu0 %3393
  %vm3395 = vcmask 671360
  %s3396 = scalar_lea.vmem %s1, 8
  %3397 = vst.msk [vmem:[%s3396] sm:$0xff] %vm3395, %v3394
  %s3398 = scalar_lea.vmem %s0, 1064
  %v3399 = vld [vmem:[%s3398] sm:$0x1]
  %s3400 = scalar_lea.vmem %s0, 1127
  %v3401 = vld [vmem:[%s3400] sm:$0x2]
  %vm3402 = vcmask 1041409
  %v3403 = vsel %vm3402, %v3401, %v3399
  %s3404 = scalar_lea.vmem %s0, 1190
  %v3405 = vld [vmem:[%s3404] sm:$0x4]
  %vm3406 = vcmask 1042434
  %v3407 = vsel %vm3406, %v3405, %v3403
  %s3408 = scalar_lea.vmem %s0, 1253
  %v3409 = vld [vmem:[%s3408] sm:$0x8]
  %vm3410 = vcmask 1043459
  %v3411 = vsel %vm3410, %v3409, %v3407
  %s3412 = scalar_lea.vmem %s0, 1316
  %v3413 = vld [vmem:[%s3412] sm:$0x10]
  %vm3414 = vcmask 1044484
  %v3415 = vsel %vm3414, %v3413, %v3411
  %s3416 = scalar_lea.vmem %s0, 1379
  %v3417 = vld [vmem:[%s3416] sm:$0x20]
  %vm3418 = vcmask 1045509
  %v3419 = vsel %vm3418, %v3417, %v3415
  %s3420 = scalar_lea.vmem %s0, 1442
  %v3421 = vld [vmem:[%s3420] sm:$0x40]
  %vm3422 = vcmask 1046534
  %v3423 = vsel %vm3422, %v3421, %v3419
  %s3424 = scalar_lea.vmem %s0, 1505
  %v3425 = vld [vmem:[%s3424] sm:$0x80]
  %vm3426 = vcmask 1047559
  %v3427 = vsel %vm3426, %v3425, %v3423
  %3428 = vrot.lane.b32.xlu0 %v3427, 80
  %v3429 = vpop.permute.xlu0 %3428
  %vm3430 = vcmask 671360
  %s3431 = scalar_lea.vmem %s1, 16
  %3432 = vst.msk [vmem:[%s3431] sm:$0xff] %vm3430, %v3429
  %s3433 = scalar_lea.vmem %s0, 1576
  %v3434 = vld [vmem:[%s3433] sm:$0x1]
  %s3435 = scalar_lea.vmem %s0, 1639
  %v3436 = vld [vmem:[%s3435] sm:$0x2]
  %vm3437 = vcmask 1041409
  %v3438 = vsel %vm3437, %v3436, %v3434
  %s3439 = scalar_lea.vmem %s0, 1702
  %v3440 = vld [vmem:[%s3439] sm:$0x4]
  %vm3441 = vcmask 1042434
  %v3442 = vsel %vm3441, %v3440, %v3438
  %s3443 = scalar_lea.vmem %s0, 1765
  %v3444 = vld [vmem:[%s3443] sm:$0x8]
  %vm3445 = vcmask 1043459
  %v3446 = vsel %vm3445, %v3444, %v3442
  %s3447 = scalar_lea.vmem %s0, 1828
  %v3448 = vld [vmem:[%s3447] sm:$0x10]
  %vm3449 = vcmask 1044484
  %v3450 = vsel %vm3449, %v3448, %v3446
  %s3451 = scalar_lea.vmem %s0, 1891
  %v3452 = vld [vmem:[%s3451] sm:$0x20]
  %vm3453 = vcmask 1045509
  %v3454 = vsel %vm3453, %v3452, %v3450
  %s3455 = scalar_lea.vmem %s0, 1954
  %v3456 = vld [vmem:[%s3455] sm:$0x40]
  %vm3457 = vcmask 1046534
  %v3458 = vsel %vm3457, %v3456, %v3454
  %s3459 = scalar_lea.vmem %s0, 2017
  %v3460 = vld [vmem:[%s3459] sm:$0x80]
  %vm3461 = vcmask 1047559
  %v3462 = vsel %vm3461, %v3460, %v3458
  %3463 = vrot.lane.b32.xlu0 %v3462, 80
  %v3464 = vpop.permute.xlu0 %3463
  %vm3465 = vcmask 671360
  %s3466 = scalar_lea.vmem %s1, 24
  %3467 = vst.msk [vmem:[%s3466] sm:$0xff] %vm3465, %v3464
  %s3468 = scalar_lea.vmem %s0, 39
  %v3469 = vld [vmem:[%s3468] sm:$0x1]
  %s3470 = scalar_lea.vmem %s0, 102
  %v3471 = vld [vmem:[%s3470] sm:$0x2]
  %vm3472 = vcmask 1041409
  %v3473 = vsel %vm3472, %v3471, %v3469
  %s3474 = scalar_lea.vmem %s0, 165
  %v3475 = vld [vmem:[%s3474] sm:$0x4]
  %vm3476 = vcmask 1042434
  %v3477 = vsel %vm3476, %v3475, %v3473
  %s3478 = scalar_lea.vmem %s0, 228
  %v3479 = vld [vmem:[%s3478] sm:$0x8]
  %vm3480 = vcmask 1043459
  %v3481 = vsel %vm3480, %v3479, %v3477
  %s3482 = scalar_lea.vmem %s0, 291
  %v3483 = vld [vmem:[%s3482] sm:$0x10]
  %vm3484 = vcmask 1044484
  %v3485 = vsel %vm3484, %v3483, %v3481
  %s3486 = scalar_lea.vmem %s0, 354
  %v3487 = vld [vmem:[%s3486] sm:$0x20]
  %vm3488 = vcmask 1045509
  %v3489 = vsel %vm3488, %v3487, %v3485
  %s3490 = scalar_lea.vmem %s0, 417
  %v3491 = vld [vmem:[%s3490] sm:$0x40]
  %vm3492 = vcmask 1046534
  %v3493 = vsel %vm3492, %v3491, %v3489
  %s3494 = scalar_lea.vmem %s0, 480
  %v3495 = vld [vmem:[%s3494] sm:$0x80]
  %vm3496 = vcmask 1047559
  %v3497 = vsel %vm3496, %v3495, %v3493
  %3498 = vrot.lane.b32.xlu0 %v3497, 78
  %v3499 = vpop.permute.xlu0 %3498
  %vm3500 = vcmask 654960
  %3501 = vst.msk [vmem:[%s1] sm:$0xff] %vm3500, %v3499
  %s3502 = scalar_lea.vmem %s0, 551
  %v3503 = vld [vmem:[%s3502] sm:$0x1]
  %s3504 = scalar_lea.vmem %s0, 614
  %v3505 = vld [vmem:[%s3504] sm:$0x2]
  %vm3506 = vcmask 1041409
  %v3507 = vsel %vm3506, %v3505, %v3503
  %s3508 = scalar_lea.vmem %s0, 677
  %v3509 = vld [vmem:[%s3508] sm:$0x4]
  %vm3510 = vcmask 1042434
  %v3511 = vsel %vm3510, %v3509, %v3507
  %s3512 = scalar_lea.vmem %s0, 740
  %v3513 = vld [vmem:[%s3512] sm:$0x8]
  %vm3514 = vcmask 1043459
  %v3515 = vsel %vm3514, %v3513, %v3511
  %s3516 = scalar_lea.vmem %s0, 803
  %v3517 = vld [vmem:[%s3516] sm:$0x10]
  %vm3518 = vcmask 1044484
  %v3519 = vsel %vm3518, %v3517, %v3515
  %s3520 = scalar_lea.vmem %s0, 866
  %v3521 = vld [vmem:[%s3520] sm:$0x20]
  %vm3522 = vcmask 1045509
  %v3523 = vsel %vm3522, %v3521, %v3519
  %s3524 = scalar_lea.vmem %s0, 929
  %v3525 = vld [vmem:[%s3524] sm:$0x40]
  %vm3526 = vcmask 1046534
  %v3527 = vsel %vm3526, %v3525, %v3523
  %s3528 = scalar_lea.vmem %s0, 992
  %v3529 = vld [vmem:[%s3528] sm:$0x80]
  %vm3530 = vcmask 1047559
  %v3531 = vsel %vm3530, %v3529, %v3527
  %3532 = vrot.lane.b32.xlu0 %v3531, 78
  %v3533 = vpop.permute.xlu0 %3532
  %vm3534 = vcmask 654960
  %s3535 = scalar_lea.vmem %s1, 8
  %3536 = vst.msk [vmem:[%s3535] sm:$0xff] %vm3534, %v3533
  %s3537 = scalar_lea.vmem %s0, 1063
  %v3538 = vld [vmem:[%s3537] sm:$0x1]
  %s3539 = scalar_lea.vmem %s0, 1126
  %v3540 = vld [vmem:[%s3539] sm:$0x2]
  %vm3541 = vcmask 1041409
  %v3542 = vsel %vm3541, %v3540, %v3538
  %s3543 = scalar_lea.vmem %s0, 1189
  %v3544 = vld [vmem:[%s3543] sm:$0x4]
  %vm3545 = vcmask 1042434
  %v3546 = vsel %vm3545, %v3544, %v3542
  %s3547 = scalar_lea.vmem %s0, 1252
  %v3548 = vld [vmem:[%s3547] sm:$0x8]
  %vm3549 = vcmask 1043459
  %v3550 = vsel %vm3549, %v3548, %v3546
  %s3551 = scalar_lea.vmem %s0, 1315
  %v3552 = vld [vmem:[%s3551] sm:$0x10]
  %vm3553 = vcmask 1044484
  %v3554 = vsel %vm3553, %v3552, %v3550
  %s3555 = scalar_lea.vmem %s0, 1378
  %v3556 = vld [vmem:[%s3555] sm:$0x20]
  %vm3557 = vcmask 1045509
  %v3558 = vsel %vm3557, %v3556, %v3554
  %s3559 = scalar_lea.vmem %s0, 1441
  %v3560 = vld [vmem:[%s3559] sm:$0x40]
  %vm3561 = vcmask 1046534
  %v3562 = vsel %vm3561, %v3560, %v3558
  %s3563 = scalar_lea.vmem %s0, 1504
  %v3564 = vld [vmem:[%s3563] sm:$0x80]
  %vm3565 = vcmask 1047559
  %v3566 = vsel %vm3565, %v3564, %v3562
  %3567 = vrot.lane.b32.xlu0 %v3566, 78
  %v3568 = vpop.permute.xlu0 %3567
  %vm3569 = vcmask 654960
  %s3570 = scalar_lea.vmem %s1, 16
  %3571 = vst.msk [vmem:[%s3570] sm:$0xff] %vm3569, %v3568
  %s3572 = scalar_lea.vmem %s0, 1575
  %v3573 = vld [vmem:[%s3572] sm:$0x1]
  %s3574 = scalar_lea.vmem %s0, 1638
  %v3575 = vld [vmem:[%s3574] sm:$0x2]
  %vm3576 = vcmask 1041409
  %v3577 = vsel %vm3576, %v3575, %v3573
  %s3578 = scalar_lea.vmem %s0, 1701
  %v3579 = vld [vmem:[%s3578] sm:$0x4]
  %vm3580 = vcmask 1042434
  %v3581 = vsel %vm3580, %v3579, %v3577
  %s3582 = scalar_lea.vmem %s0, 1764
  %v3583 = vld [vmem:[%s3582] sm:$0x8]
  %vm3584 = vcmask 1043459
  %v3585 = vsel %vm3584, %v3583, %v3581
  %s3586 = scalar_lea.vmem %s0, 1827
  %v3587 = vld [vmem:[%s3586] sm:$0x10]
  %vm3588 = vcmask 1044484
  %v3589 = vsel %vm3588, %v3587, %v3585
  %s3590 = scalar_lea.vmem %s0, 1890
  %v3591 = vld [vmem:[%s3590] sm:$0x20]
  %vm3592 = vcmask 1045509
  %v3593 = vsel %vm3592, %v3591, %v3589
  %s3594 = scalar_lea.vmem %s0, 1953
  %v3595 = vld [vmem:[%s3594] sm:$0x40]
  %vm3596 = vcmask 1046534
  %v3597 = vsel %vm3596, %v3595, %v3593
  %s3598 = scalar_lea.vmem %s0, 2016
  %v3599 = vld [vmem:[%s3598] sm:$0x80]
  %vm3600 = vcmask 1047559
  %v3601 = vsel %vm3600, %v3599, %v3597
  %3602 = vrot.lane.b32.xlu0 %v3601, 78
  %v3603 = vpop.permute.xlu0 %3602
  %vm3604 = vcmask 654960
  %s3605 = scalar_lea.vmem %s1, 24
  %3606 = vst.msk [vmem:[%s3605] sm:$0xff] %vm3604, %v3603
  %s3607 = scalar_lea.vmem %s0, 38
  %v3608 = vld [vmem:[%s3607] sm:$0x1]
  %s3609 = scalar_lea.vmem %s0, 101
  %v3610 = vld [vmem:[%s3609] sm:$0x2]
  %vm3611 = vcmask 1041409
  %v3612 = vsel %vm3611, %v3610, %v3608
  %s3613 = scalar_lea.vmem %s0, 164
  %v3614 = vld [vmem:[%s3613] sm:$0x4]
  %vm3615 = vcmask 1042434
  %v3616 = vsel %vm3615, %v3614, %v3612
  %s3617 = scalar_lea.vmem %s0, 227
  %v3618 = vld [vmem:[%s3617] sm:$0x8]
  %vm3619 = vcmask 1043459
  %v3620 = vsel %vm3619, %v3618, %v3616
  %s3621 = scalar_lea.vmem %s0, 290
  %v3622 = vld [vmem:[%s3621] sm:$0x10]
  %vm3623 = vcmask 1044484
  %v3624 = vsel %vm3623, %v3622, %v3620
  %s3625 = scalar_lea.vmem %s0, 353
  %v3626 = vld [vmem:[%s3625] sm:$0x20]
  %vm3627 = vcmask 1045509
  %v3628 = vsel %vm3627, %v3626, %v3624
  %s3629 = scalar_lea.vmem %s0, 416
  %v3630 = vld [vmem:[%s3629] sm:$0x40]
  %vm3631 = vcmask 1046534
  %v3632 = vsel %vm3631, %v3630, %v3628
  %s3633 = scalar_lea.vmem %s0, 479
  %v3634 = vld [vmem:[%s3633] sm:$0x80]
  %vm3635 = vcmask 1047559
  %v3636 = vsel %vm3635, %v3634, %v3632
  %3637 = vrot.lane.b32.xlu0 %v3636, 76
  %v3638 = vpop.permute.xlu0 %3637
  %vm3639 = vcmask 638560
  %3640 = vst.msk [vmem:[%s1] sm:$0xff] %vm3639, %v3638
  %s3641 = scalar_lea.vmem %s0, 550
  %v3642 = vld [vmem:[%s3641] sm:$0x1]
  %s3643 = scalar_lea.vmem %s0, 613
  %v3644 = vld [vmem:[%s3643] sm:$0x2]
  %vm3645 = vcmask 1041409
  %v3646 = vsel %vm3645, %v3644, %v3642
  %s3647 = scalar_lea.vmem %s0, 676
  %v3648 = vld [vmem:[%s3647] sm:$0x4]
  %vm3649 = vcmask 1042434
  %v3650 = vsel %vm3649, %v3648, %v3646
  %s3651 = scalar_lea.vmem %s0, 739
  %v3652 = vld [vmem:[%s3651] sm:$0x8]
  %vm3653 = vcmask 1043459
  %v3654 = vsel %vm3653, %v3652, %v3650
  %s3655 = scalar_lea.vmem %s0, 802
  %v3656 = vld [vmem:[%s3655] sm:$0x10]
  %vm3657 = vcmask 1044484
  %v3658 = vsel %vm3657, %v3656, %v3654
  %s3659 = scalar_lea.vmem %s0, 865
  %v3660 = vld [vmem:[%s3659] sm:$0x20]
  %vm3661 = vcmask 1045509
  %v3662 = vsel %vm3661, %v3660, %v3658
  %s3663 = scalar_lea.vmem %s0, 928
  %v3664 = vld [vmem:[%s3663] sm:$0x40]
  %vm3665 = vcmask 1046534
  %v3666 = vsel %vm3665, %v3664, %v3662
  %s3667 = scalar_lea.vmem %s0, 991
  %v3668 = vld [vmem:[%s3667] sm:$0x80]
  %vm3669 = vcmask 1047559
  %v3670 = vsel %vm3669, %v3668, %v3666
  %3671 = vrot.lane.b32.xlu0 %v3670, 76
  %v3672 = vpop.permute.xlu0 %3671
  %vm3673 = vcmask 638560
  %s3674 = scalar_lea.vmem %s1, 8
  %3675 = vst.msk [vmem:[%s3674] sm:$0xff] %vm3673, %v3672
  %s3676 = scalar_lea.vmem %s0, 1062
  %v3677 = vld [vmem:[%s3676] sm:$0x1]
  %s3678 = scalar_lea.vmem %s0, 1125
  %v3679 = vld [vmem:[%s3678] sm:$0x2]
  %vm3680 = vcmask 1041409
  %v3681 = vsel %vm3680, %v3679, %v3677
  %s3682 = scalar_lea.vmem %s0, 1188
  %v3683 = vld [vmem:[%s3682] sm:$0x4]
  %vm3684 = vcmask 1042434
  %v3685 = vsel %vm3684, %v3683, %v3681
  %s3686 = scalar_lea.vmem %s0, 1251
  %v3687 = vld [vmem:[%s3686] sm:$0x8]
  %vm3688 = vcmask 1043459
  %v3689 = vsel %vm3688, %v3687, %v3685
  %s3690 = scalar_lea.vmem %s0, 1314
  %v3691 = vld [vmem:[%s3690] sm:$0x10]
  %vm3692 = vcmask 1044484
  %v3693 = vsel %vm3692, %v3691, %v3689
  %s3694 = scalar_lea.vmem %s0, 1377
  %v3695 = vld [vmem:[%s3694] sm:$0x20]
  %vm3696 = vcmask 1045509
  %v3697 = vsel %vm3696, %v3695, %v3693
  %s3698 = scalar_lea.vmem %s0, 1440
  %v3699 = vld [vmem:[%s3698] sm:$0x40]
  %vm3700 = vcmask 1046534
  %v3701 = vsel %vm3700, %v3699, %v3697
  %s3702 = scalar_lea.vmem %s0, 1503
  %v3703 = vld [vmem:[%s3702] sm:$0x80]
  %vm3704 = vcmask 1047559
  %v3705 = vsel %vm3704, %v3703, %v3701
  %3706 = vrot.lane.b32.xlu0 %v3705, 76
  %v3707 = vpop.permute.xlu0 %3706
  %vm3708 = vcmask 638560
  %s3709 = scalar_lea.vmem %s1, 16
  %3710 = vst.msk [vmem:[%s3709] sm:$0xff] %vm3708, %v3707
  %s3711 = scalar_lea.vmem %s0, 1574
  %v3712 = vld [vmem:[%s3711] sm:$0x1]
  %s3713 = scalar_lea.vmem %s0, 1637
  %v3714 = vld [vmem:[%s3713] sm:$0x2]
  %vm3715 = vcmask 1041409
  %v3716 = vsel %vm3715, %v3714, %v3712
  %s3717 = scalar_lea.vmem %s0, 1700
  %v3718 = vld [vmem:[%s3717] sm:$0x4]
  %vm3719 = vcmask 1042434
  %v3720 = vsel %vm3719, %v3718, %v3716
  %s3721 = scalar_lea.vmem %s0, 1763
  %v3722 = vld [vmem:[%s3721] sm:$0x8]
  %vm3723 = vcmask 1043459
  %v3724 = vsel %vm3723, %v3722, %v3720
  %s3725 = scalar_lea.vmem %s0, 1826
  %v3726 = vld [vmem:[%s3725] sm:$0x10]
  %vm3727 = vcmask 1044484
  %v3728 = vsel %vm3727, %v3726, %v3724
  %s3729 = scalar_lea.vmem %s0, 1889
  %v3730 = vld [vmem:[%s3729] sm:$0x20]
  %vm3731 = vcmask 1045509
  %v3732 = vsel %vm3731, %v3730, %v3728
  %s3733 = scalar_lea.vmem %s0, 1952
  %v3734 = vld [vmem:[%s3733] sm:$0x40]
  %vm3735 = vcmask 1046534
  %v3736 = vsel %vm3735, %v3734, %v3732
  %s3737 = scalar_lea.vmem %s0, 2015
  %v3738 = vld [vmem:[%s3737] sm:$0x80]
  %vm3739 = vcmask 1047559
  %v3740 = vsel %vm3739, %v3738, %v3736
  %3741 = vrot.lane.b32.xlu0 %v3740, 76
  %v3742 = vpop.permute.xlu0 %3741
  %vm3743 = vcmask 638560
  %s3744 = scalar_lea.vmem %s1, 24
  %3745 = vst.msk [vmem:[%s3744] sm:$0xff] %vm3743, %v3742
  %s3746 = scalar_lea.vmem %s0, 37
  %v3747 = vld [vmem:[%s3746] sm:$0x1]
  %s3748 = scalar_lea.vmem %s0, 100
  %v3749 = vld [vmem:[%s3748] sm:$0x2]
  %vm3750 = vcmask 1041409
  %v3751 = vsel %vm3750, %v3749, %v3747
  %s3752 = scalar_lea.vmem %s0, 163
  %v3753 = vld [vmem:[%s3752] sm:$0x4]
  %vm3754 = vcmask 1042434
  %v3755 = vsel %vm3754, %v3753, %v3751
  %s3756 = scalar_lea.vmem %s0, 226
  %v3757 = vld [vmem:[%s3756] sm:$0x8]
  %vm3758 = vcmask 1043459
  %v3759 = vsel %vm3758, %v3757, %v3755
  %s3760 = scalar_lea.vmem %s0, 289
  %v3761 = vld [vmem:[%s3760] sm:$0x10]
  %vm3762 = vcmask 1044484
  %v3763 = vsel %vm3762, %v3761, %v3759
  %s3764 = scalar_lea.vmem %s0, 352
  %v3765 = vld [vmem:[%s3764] sm:$0x20]
  %vm3766 = vcmask 1045509
  %v3767 = vsel %vm3766, %v3765, %v3763
  %s3768 = scalar_lea.vmem %s0, 415
  %v3769 = vld [vmem:[%s3768] sm:$0x40]
  %vm3770 = vcmask 1046534
  %v3771 = vsel %vm3770, %v3769, %v3767
  %s3772 = scalar_lea.vmem %s0, 478
  %v3773 = vld [vmem:[%s3772] sm:$0x80]
  %vm3774 = vcmask 1047559
  %v3775 = vsel %vm3774, %v3773, %v3771
  %3776 = vrot.lane.b32.xlu0 %v3775, 74
  %v3777 = vpop.permute.xlu0 %3776
  %vm3778 = vcmask 622160
  %3779 = vst.msk [vmem:[%s1] sm:$0xff] %vm3778, %v3777
  %s3780 = scalar_lea.vmem %s0, 549
  %v3781 = vld [vmem:[%s3780] sm:$0x1]
  %s3782 = scalar_lea.vmem %s0, 612
  %v3783 = vld [vmem:[%s3782] sm:$0x2]
  %vm3784 = vcmask 1041409
  %v3785 = vsel %vm3784, %v3783, %v3781
  %s3786 = scalar_lea.vmem %s0, 675
  %v3787 = vld [vmem:[%s3786] sm:$0x4]
  %vm3788 = vcmask 1042434
  %v3789 = vsel %vm3788, %v3787, %v3785
  %s3790 = scalar_lea.vmem %s0, 738
  %v3791 = vld [vmem:[%s3790] sm:$0x8]
  %vm3792 = vcmask 1043459
  %v3793 = vsel %vm3792, %v3791, %v3789
  %s3794 = scalar_lea.vmem %s0, 801
  %v3795 = vld [vmem:[%s3794] sm:$0x10]
  %vm3796 = vcmask 1044484
  %v3797 = vsel %vm3796, %v3795, %v3793
  %s3798 = scalar_lea.vmem %s0, 864
  %v3799 = vld [vmem:[%s3798] sm:$0x20]
  %vm3800 = vcmask 1045509
  %v3801 = vsel %vm3800, %v3799, %v3797
  %s3802 = scalar_lea.vmem %s0, 927
  %v3803 = vld [vmem:[%s3802] sm:$0x40]
  %vm3804 = vcmask 1046534
  %v3805 = vsel %vm3804, %v3803, %v3801
  %s3806 = scalar_lea.vmem %s0, 990
  %v3807 = vld [vmem:[%s3806] sm:$0x80]
  %vm3808 = vcmask 1047559
  %v3809 = vsel %vm3808, %v3807, %v3805
  %3810 = vrot.lane.b32.xlu0 %v3809, 74
  %v3811 = vpop.permute.xlu0 %3810
  %vm3812 = vcmask 622160
  %s3813 = scalar_lea.vmem %s1, 8
  %3814 = vst.msk [vmem:[%s3813] sm:$0xff] %vm3812, %v3811
  %s3815 = scalar_lea.vmem %s0, 1061
  %v3816 = vld [vmem:[%s3815] sm:$0x1]
  %s3817 = scalar_lea.vmem %s0, 1124
  %v3818 = vld [vmem:[%s3817] sm:$0x2]
  %vm3819 = vcmask 1041409
  %v3820 = vsel %vm3819, %v3818, %v3816
  %s3821 = scalar_lea.vmem %s0, 1187
  %v3822 = vld [vmem:[%s3821] sm:$0x4]
  %vm3823 = vcmask 1042434
  %v3824 = vsel %vm3823, %v3822, %v3820
  %s3825 = scalar_lea.vmem %s0, 1250
  %v3826 = vld [vmem:[%s3825] sm:$0x8]
  %vm3827 = vcmask 1043459
  %v3828 = vsel %vm3827, %v3826, %v3824
  %s3829 = scalar_lea.vmem %s0, 1313
  %v3830 = vld [vmem:[%s3829] sm:$0x10]
  %vm3831 = vcmask 1044484
  %v3832 = vsel %vm3831, %v3830, %v3828
  %s3833 = scalar_lea.vmem %s0, 1376
  %v3834 = vld [vmem:[%s3833] sm:$0x20]
  %vm3835 = vcmask 1045509
  %v3836 = vsel %vm3835, %v3834, %v3832
  %s3837 = scalar_lea.vmem %s0, 1439
  %v3838 = vld [vmem:[%s3837] sm:$0x40]
  %vm3839 = vcmask 1046534
  %v3840 = vsel %vm3839, %v3838, %v3836
  %s3841 = scalar_lea.vmem %s0, 1502
  %v3842 = vld [vmem:[%s3841] sm:$0x80]
  %vm3843 = vcmask 1047559
  %v3844 = vsel %vm3843, %v3842, %v3840
  %3845 = vrot.lane.b32.xlu0 %v3844, 74
  %v3846 = vpop.permute.xlu0 %3845
  %vm3847 = vcmask 622160
  %s3848 = scalar_lea.vmem %s1, 16
  %3849 = vst.msk [vmem:[%s3848] sm:$0xff] %vm3847, %v3846
  %s3850 = scalar_lea.vmem %s0, 1573
  %v3851 = vld [vmem:[%s3850] sm:$0x1]
  %s3852 = scalar_lea.vmem %s0, 1636
  %v3853 = vld [vmem:[%s3852] sm:$0x2]
  %vm3854 = vcmask 1041409
  %v3855 = vsel %vm3854, %v3853, %v3851
  %s3856 = scalar_lea.vmem %s0, 1699
  %v3857 = vld [vmem:[%s3856] sm:$0x4]
  %vm3858 = vcmask 1042434
  %v3859 = vsel %vm3858, %v3857, %v3855
  %s3860 = scalar_lea.vmem %s0, 1762
  %v3861 = vld [vmem:[%s3860] sm:$0x8]
  %vm3862 = vcmask 1043459
  %v3863 = vsel %vm3862, %v3861, %v3859
  %s3864 = scalar_lea.vmem %s0, 1825
  %v3865 = vld [vmem:[%s3864] sm:$0x10]
  %vm3866 = vcmask 1044484
  %v3867 = vsel %vm3866, %v3865, %v3863
  %s3868 = scalar_lea.vmem %s0, 1888
  %v3869 = vld [vmem:[%s3868] sm:$0x20]
  %vm3870 = vcmask 1045509
  %v3871 = vsel %vm3870, %v3869, %v3867
  %s3872 = scalar_lea.vmem %s0, 1951
  %v3873 = vld [vmem:[%s3872] sm:$0x40]
  %vm3874 = vcmask 1046534
  %v3875 = vsel %vm3874, %v3873, %v3871
  %s3876 = scalar_lea.vmem %s0, 2014
  %v3877 = vld [vmem:[%s3876] sm:$0x80]
  %vm3878 = vcmask 1047559
  %v3879 = vsel %vm3878, %v3877, %v3875
  %3880 = vrot.lane.b32.xlu0 %v3879, 74
  %v3881 = vpop.permute.xlu0 %3880
  %vm3882 = vcmask 622160
  %s3883 = scalar_lea.vmem %s1, 24
  %3884 = vst.msk [vmem:[%s3883] sm:$0xff] %vm3882, %v3881
  %s3885 = scalar_lea.vmem %s0, 36
  %v3886 = vld [vmem:[%s3885] sm:$0x1]
  %s3887 = scalar_lea.vmem %s0, 99
  %v3888 = vld [vmem:[%s3887] sm:$0x2]
  %vm3889 = vcmask 1041409
  %v3890 = vsel %vm3889, %v3888, %v3886
  %s3891 = scalar_lea.vmem %s0, 162
  %v3892 = vld [vmem:[%s3891] sm:$0x4]
  %vm3893 = vcmask 1042434
  %v3894 = vsel %vm3893, %v3892, %v3890
  %s3895 = scalar_lea.vmem %s0, 225
  %v3896 = vld [vmem:[%s3895] sm:$0x8]
  %vm3897 = vcmask 1043459
  %v3898 = vsel %vm3897, %v3896, %v3894
  %s3899 = scalar_lea.vmem %s0, 288
  %v3900 = vld [vmem:[%s3899] sm:$0x10]
  %vm3901 = vcmask 1044484
  %v3902 = vsel %vm3901, %v3900, %v3898
  %s3903 = scalar_lea.vmem %s0, 351
  %v3904 = vld [vmem:[%s3903] sm:$0x20]
  %vm3905 = vcmask 1045509
  %v3906 = vsel %vm3905, %v3904, %v3902
  %s3907 = scalar_lea.vmem %s0, 414
  %v3908 = vld [vmem:[%s3907] sm:$0x40]
  %vm3909 = vcmask 1046534
  %v3910 = vsel %vm3909, %v3908, %v3906
  %s3911 = scalar_lea.vmem %s0, 477
  %v3912 = vld [vmem:[%s3911] sm:$0x80]
  %vm3913 = vcmask 1047559
  %v3914 = vsel %vm3913, %v3912, %v3910
  %3915 = vrot.lane.b32.xlu0 %v3914, 72
  %v3916 = vpop.permute.xlu0 %3915
  %vm3917 = vcmask 605760
  %3918 = vst.msk [vmem:[%s1] sm:$0xff] %vm3917, %v3916
  %s3919 = scalar_lea.vmem %s0, 548
  %v3920 = vld [vmem:[%s3919] sm:$0x1]
  %s3921 = scalar_lea.vmem %s0, 611
  %v3922 = vld [vmem:[%s3921] sm:$0x2]
  %vm3923 = vcmask 1041409
  %v3924 = vsel %vm3923, %v3922, %v3920
  %s3925 = scalar_lea.vmem %s0, 674
  %v3926 = vld [vmem:[%s3925] sm:$0x4]
  %vm3927 = vcmask 1042434
  %v3928 = vsel %vm3927, %v3926, %v3924
  %s3929 = scalar_lea.vmem %s0, 737
  %v3930 = vld [vmem:[%s3929] sm:$0x8]
  %vm3931 = vcmask 1043459
  %v3932 = vsel %vm3931, %v3930, %v3928
  %s3933 = scalar_lea.vmem %s0, 800
  %v3934 = vld [vmem:[%s3933] sm:$0x10]
  %vm3935 = vcmask 1044484
  %v3936 = vsel %vm3935, %v3934, %v3932
  %s3937 = scalar_lea.vmem %s0, 863
  %v3938 = vld [vmem:[%s3937] sm:$0x20]
  %vm3939 = vcmask 1045509
  %v3940 = vsel %vm3939, %v3938, %v3936
  %s3941 = scalar_lea.vmem %s0, 926
  %v3942 = vld [vmem:[%s3941] sm:$0x40]
  %vm3943 = vcmask 1046534
  %v3944 = vsel %vm3943, %v3942, %v3940
  %s3945 = scalar_lea.vmem %s0, 989
  %v3946 = vld [vmem:[%s3945] sm:$0x80]
  %vm3947 = vcmask 1047559
  %v3948 = vsel %vm3947, %v3946, %v3944
  %3949 = vrot.lane.b32.xlu0 %v3948, 72
  %v3950 = vpop.permute.xlu0 %3949
  %vm3951 = vcmask 605760
  %s3952 = scalar_lea.vmem %s1, 8
  %3953 = vst.msk [vmem:[%s3952] sm:$0xff] %vm3951, %v3950
  %s3954 = scalar_lea.vmem %s0, 1060
  %v3955 = vld [vmem:[%s3954] sm:$0x1]
  %s3956 = scalar_lea.vmem %s0, 1123
  %v3957 = vld [vmem:[%s3956] sm:$0x2]
  %vm3958 = vcmask 1041409
  %v3959 = vsel %vm3958, %v3957, %v3955
  %s3960 = scalar_lea.vmem %s0, 1186
  %v3961 = vld [vmem:[%s3960] sm:$0x4]
  %vm3962 = vcmask 1042434
  %v3963 = vsel %vm3962, %v3961, %v3959
  %s3964 = scalar_lea.vmem %s0, 1249
  %v3965 = vld [vmem:[%s3964] sm:$0x8]
  %vm3966 = vcmask 1043459
  %v3967 = vsel %vm3966, %v3965, %v3963
  %s3968 = scalar_lea.vmem %s0, 1312
  %v3969 = vld [vmem:[%s3968] sm:$0x10]
  %vm3970 = vcmask 1044484
  %v3971 = vsel %vm3970, %v3969, %v3967
  %s3972 = scalar_lea.vmem %s0, 1375
  %v3973 = vld [vmem:[%s3972] sm:$0x20]
  %vm3974 = vcmask 1045509
  %v3975 = vsel %vm3974, %v3973, %v3971
  %s3976 = scalar_lea.vmem %s0, 1438
  %v3977 = vld [vmem:[%s3976] sm:$0x40]
  %vm3978 = vcmask 1046534
  %v3979 = vsel %vm3978, %v3977, %v3975
  %s3980 = scalar_lea.vmem %s0, 1501
  %v3981 = vld [vmem:[%s3980] sm:$0x80]
  %vm3982 = vcmask 1047559
  %v3983 = vsel %vm3982, %v3981, %v3979
  %3984 = vrot.lane.b32.xlu0 %v3983, 72
  %v3985 = vpop.permute.xlu0 %3984
  %vm3986 = vcmask 605760
  %s3987 = scalar_lea.vmem %s1, 16
  %3988 = vst.msk [vmem:[%s3987] sm:$0xff] %vm3986, %v3985
  %s3989 = scalar_lea.vmem %s0, 1572
  %v3990 = vld [vmem:[%s3989] sm:$0x1]
  %s3991 = scalar_lea.vmem %s0, 1635
  %v3992 = vld [vmem:[%s3991] sm:$0x2]
  %vm3993 = vcmask 1041409
  %v3994 = vsel %vm3993, %v3992, %v3990
  %s3995 = scalar_lea.vmem %s0, 1698
  %v3996 = vld [vmem:[%s3995] sm:$0x4]
  %vm3997 = vcmask 1042434
  %v3998 = vsel %vm3997, %v3996, %v3994
  %s3999 = scalar_lea.vmem %s0, 1761
  %v4000 = vld [vmem:[%s3999] sm:$0x8]
  %vm4001 = vcmask 1043459
  %v4002 = vsel %vm4001, %v4000, %v3998
  %s4003 = scalar_lea.vmem %s0, 1824
  %v4004 = vld [vmem:[%s4003] sm:$0x10]
  %vm4005 = vcmask 1044484
  %v4006 = vsel %vm4005, %v4004, %v4002
  %s4007 = scalar_lea.vmem %s0, 1887
  %v4008 = vld [vmem:[%s4007] sm:$0x20]
  %vm4009 = vcmask 1045509
  %v4010 = vsel %vm4009, %v4008, %v4006
  %s4011 = scalar_lea.vmem %s0, 1950
  %v4012 = vld [vmem:[%s4011] sm:$0x40]
  %vm4013 = vcmask 1046534
  %v4014 = vsel %vm4013, %v4012, %v4010
  %s4015 = scalar_lea.vmem %s0, 2013
  %v4016 = vld [vmem:[%s4015] sm:$0x80]
  %vm4017 = vcmask 1047559
  %v4018 = vsel %vm4017, %v4016, %v4014
  %4019 = vrot.lane.b32.xlu0 %v4018, 72
  %v4020 = vpop.permute.xlu0 %4019
  %vm4021 = vcmask 605760
  %s4022 = scalar_lea.vmem %s1, 24
  %4023 = vst.msk [vmem:[%s4022] sm:$0xff] %vm4021, %v4020
  %s4024 = scalar_lea.vmem %s0, 35
  %v4025 = vld [vmem:[%s4024] sm:$0x1]
  %s4026 = scalar_lea.vmem %s0, 98
  %v4027 = vld [vmem:[%s4026] sm:$0x2]
  %vm4028 = vcmask 1041409
  %v4029 = vsel %vm4028, %v4027, %v4025
  %s4030 = scalar_lea.vmem %s0, 161
  %v4031 = vld [vmem:[%s4030] sm:$0x4]
  %vm4032 = vcmask 1042434
  %v4033 = vsel %vm4032, %v4031, %v4029
  %s4034 = scalar_lea.vmem %s0, 224
  %v4035 = vld [vmem:[%s4034] sm:$0x8]
  %vm4036 = vcmask 1043459
  %v4037 = vsel %vm4036, %v4035, %v4033
  %s4038 = scalar_lea.vmem %s0, 287
  %v4039 = vld [vmem:[%s4038] sm:$0x10]
  %vm4040 = vcmask 1044484
  %v4041 = vsel %vm4040, %v4039, %v4037
  %s4042 = scalar_lea.vmem %s0, 350
  %v4043 = vld [vmem:[%s4042] sm:$0x20]
  %vm4044 = vcmask 1045509
  %v4045 = vsel %vm4044, %v4043, %v4041
  %s4046 = scalar_lea.vmem %s0, 413
  %v4047 = vld [vmem:[%s4046] sm:$0x40]
  %vm4048 = vcmask 1046534
  %v4049 = vsel %vm4048, %v4047, %v4045
  %s4050 = scalar_lea.vmem %s0, 476
  %v4051 = vld [vmem:[%s4050] sm:$0x80]
  %vm4052 = vcmask 1047559
  %v4053 = vsel %vm4052, %v4051, %v4049
  %4054 = vrot.lane.b32.xlu0 %v4053, 70
  %v4055 = vpop.permute.xlu0 %4054
  %vm4056 = vcmask 589360
  %4057 = vst.msk [vmem:[%s1] sm:$0xff] %vm4056, %v4055
  %s4058 = scalar_lea.vmem %s0, 547
  %v4059 = vld [vmem:[%s4058] sm:$0x1]
  %s4060 = scalar_lea.vmem %s0, 610
  %v4061 = vld [vmem:[%s4060] sm:$0x2]
  %vm4062 = vcmask 1041409
  %v4063 = vsel %vm4062, %v4061, %v4059
  %s4064 = scalar_lea.vmem %s0, 673
  %v4065 = vld [vmem:[%s4064] sm:$0x4]
  %vm4066 = vcmask 1042434
  %v4067 = vsel %vm4066, %v4065, %v4063
  %s4068 = scalar_lea.vmem %s0, 736
  %v4069 = vld [vmem:[%s4068] sm:$0x8]
  %vm4070 = vcmask 1043459
  %v4071 = vsel %vm4070, %v4069, %v4067
  %s4072 = scalar_lea.vmem %s0, 799
  %v4073 = vld [vmem:[%s4072] sm:$0x10]
  %vm4074 = vcmask 1044484
  %v4075 = vsel %vm4074, %v4073, %v4071
  %s4076 = scalar_lea.vmem %s0, 862
  %v4077 = vld [vmem:[%s4076] sm:$0x20]
  %vm4078 = vcmask 1045509
  %v4079 = vsel %vm4078, %v4077, %v4075
  %s4080 = scalar_lea.vmem %s0, 925
  %v4081 = vld [vmem:[%s4080] sm:$0x40]
  %vm4082 = vcmask 1046534
  %v4083 = vsel %vm4082, %v4081, %v4079
  %s4084 = scalar_lea.vmem %s0, 988
  %v4085 = vld [vmem:[%s4084] sm:$0x80]
  %vm4086 = vcmask 1047559
  %v4087 = vsel %vm4086, %v4085, %v4083
  %4088 = vrot.lane.b32.xlu0 %v4087, 70
  %v4089 = vpop.permute.xlu0 %4088
  %vm4090 = vcmask 589360
  %s4091 = scalar_lea.vmem %s1, 8
  %4092 = vst.msk [vmem:[%s4091] sm:$0xff] %vm4090, %v4089
  %s4093 = scalar_lea.vmem %s0, 1059
  %v4094 = vld [vmem:[%s4093] sm:$0x1]
  %s4095 = scalar_lea.vmem %s0, 1122
  %v4096 = vld [vmem:[%s4095] sm:$0x2]
  %vm4097 = vcmask 1041409
  %v4098 = vsel %vm4097, %v4096, %v4094
  %s4099 = scalar_lea.vmem %s0, 1185
  %v4100 = vld [vmem:[%s4099] sm:$0x4]
  %vm4101 = vcmask 1042434
  %v4102 = vsel %vm4101, %v4100, %v4098
  %s4103 = scalar_lea.vmem %s0, 1248
  %v4104 = vld [vmem:[%s4103] sm:$0x8]
  %vm4105 = vcmask 1043459
  %v4106 = vsel %vm4105, %v4104, %v4102
  %s4107 = scalar_lea.vmem %s0, 1311
  %v4108 = vld [vmem:[%s4107] sm:$0x10]
  %vm4109 = vcmask 1044484
  %v4110 = vsel %vm4109, %v4108, %v4106
  %s4111 = scalar_lea.vmem %s0, 1374
  %v4112 = vld [vmem:[%s4111] sm:$0x20]
  %vm4113 = vcmask 1045509
  %v4114 = vsel %vm4113, %v4112, %v4110
  %s4115 = scalar_lea.vmem %s0, 1437
  %v4116 = vld [vmem:[%s4115] sm:$0x40]
  %vm4117 = vcmask 1046534
  %v4118 = vsel %vm4117, %v4116, %v4114
  %s4119 = scalar_lea.vmem %s0, 1500
  %v4120 = vld [vmem:[%s4119] sm:$0x80]
  %vm4121 = vcmask 1047559
  %v4122 = vsel %vm4121, %v4120, %v4118
  %4123 = vrot.lane.b32.xlu0 %v4122, 70
  %v4124 = vpop.permute.xlu0 %4123
  %vm4125 = vcmask 589360
  %s4126 = scalar_lea.vmem %s1, 16
  %4127 = vst.msk [vmem:[%s4126] sm:$0xff] %vm4125, %v4124
  %s4128 = scalar_lea.vmem %s0, 1571
  %v4129 = vld [vmem:[%s4128] sm:$0x1]
  %s4130 = scalar_lea.vmem %s0, 1634
  %v4131 = vld [vmem:[%s4130] sm:$0x2]
  %vm4132 = vcmask 1041409
  %v4133 = vsel %vm4132, %v4131, %v4129
  %s4134 = scalar_lea.vmem %s0, 1697
  %v4135 = vld [vmem:[%s4134] sm:$0x4]
  %vm4136 = vcmask 1042434
  %v4137 = vsel %vm4136, %v4135, %v4133
  %s4138 = scalar_lea.vmem %s0, 1760
  %v4139 = vld [vmem:[%s4138] sm:$0x8]
  %vm4140 = vcmask 1043459
  %v4141 = vsel %vm4140, %v4139, %v4137
  %s4142 = scalar_lea.vmem %s0, 1823
  %v4143 = vld [vmem:[%s4142] sm:$0x10]
  %vm4144 = vcmask 1044484
  %v4145 = vsel %vm4144, %v4143, %v4141
  %s4146 = scalar_lea.vmem %s0, 1886
  %v4147 = vld [vmem:[%s4146] sm:$0x20]
  %vm4148 = vcmask 1045509
  %v4149 = vsel %vm4148, %v4147, %v4145
  %s4150 = scalar_lea.vmem %s0, 1949
  %v4151 = vld [vmem:[%s4150] sm:$0x40]
  %vm4152 = vcmask 1046534
  %v4153 = vsel %vm4152, %v4151, %v4149
  %s4154 = scalar_lea.vmem %s0, 2012
  %v4155 = vld [vmem:[%s4154] sm:$0x80]
  %vm4156 = vcmask 1047559
  %v4157 = vsel %vm4156, %v4155, %v4153
  %4158 = vrot.lane.b32.xlu0 %v4157, 70
  %v4159 = vpop.permute.xlu0 %4158
  %vm4160 = vcmask 589360
  %s4161 = scalar_lea.vmem %s1, 24
  %4162 = vst.msk [vmem:[%s4161] sm:$0xff] %vm4160, %v4159
  %s4163 = scalar_lea.vmem %s0, 34
  %v4164 = vld [vmem:[%s4163] sm:$0x1]
  %s4165 = scalar_lea.vmem %s0, 97
  %v4166 = vld [vmem:[%s4165] sm:$0x2]
  %vm4167 = vcmask 1041409
  %v4168 = vsel %vm4167, %v4166, %v4164
  %s4169 = scalar_lea.vmem %s0, 160
  %v4170 = vld [vmem:[%s4169] sm:$0x4]
  %vm4171 = vcmask 1042434
  %v4172 = vsel %vm4171, %v4170, %v4168
  %s4173 = scalar_lea.vmem %s0, 223
  %v4174 = vld [vmem:[%s4173] sm:$0x8]
  %vm4175 = vcmask 1043459
  %v4176 = vsel %vm4175, %v4174, %v4172
  %s4177 = scalar_lea.vmem %s0, 286
  %v4178 = vld [vmem:[%s4177] sm:$0x10]
  %vm4179 = vcmask 1044484
  %v4180 = vsel %vm4179, %v4178, %v4176
  %s4181 = scalar_lea.vmem %s0, 349
  %v4182 = vld [vmem:[%s4181] sm:$0x20]
  %vm4183 = vcmask 1045509
  %v4184 = vsel %vm4183, %v4182, %v4180
  %s4185 = scalar_lea.vmem %s0, 412
  %v4186 = vld [vmem:[%s4185] sm:$0x40]
  %vm4187 = vcmask 1046534
  %v4188 = vsel %vm4187, %v4186, %v4184
  %s4189 = scalar_lea.vmem %s0, 475
  %v4190 = vld [vmem:[%s4189] sm:$0x80]
  %vm4191 = vcmask 1047559
  %v4192 = vsel %vm4191, %v4190, %v4188
  %4193 = vrot.lane.b32.xlu0 %v4192, 68
  %v4194 = vpop.permute.xlu0 %4193
  %vm4195 = vcmask 572960
  %4196 = vst.msk [vmem:[%s1] sm:$0xff] %vm4195, %v4194
  %s4197 = scalar_lea.vmem %s0, 546
  %v4198 = vld [vmem:[%s4197] sm:$0x1]
  %s4199 = scalar_lea.vmem %s0, 609
  %v4200 = vld [vmem:[%s4199] sm:$0x2]
  %vm4201 = vcmask 1041409
  %v4202 = vsel %vm4201, %v4200, %v4198
  %s4203 = scalar_lea.vmem %s0, 672
  %v4204 = vld [vmem:[%s4203] sm:$0x4]
  %vm4205 = vcmask 1042434
  %v4206 = vsel %vm4205, %v4204, %v4202
  %s4207 = scalar_lea.vmem %s0, 735
  %v4208 = vld [vmem:[%s4207] sm:$0x8]
  %vm4209 = vcmask 1043459
  %v4210 = vsel %vm4209, %v4208, %v4206
  %s4211 = scalar_lea.vmem %s0, 798
  %v4212 = vld [vmem:[%s4211] sm:$0x10]
  %vm4213 = vcmask 1044484
  %v4214 = vsel %vm4213, %v4212, %v4210
  %s4215 = scalar_lea.vmem %s0, 861
  %v4216 = vld [vmem:[%s4215] sm:$0x20]
  %vm4217 = vcmask 1045509
  %v4218 = vsel %vm4217, %v4216, %v4214
  %s4219 = scalar_lea.vmem %s0, 924
  %v4220 = vld [vmem:[%s4219] sm:$0x40]
  %vm4221 = vcmask 1046534
  %v4222 = vsel %vm4221, %v4220, %v4218
  %s4223 = scalar_lea.vmem %s0, 987
  %v4224 = vld [vmem:[%s4223] sm:$0x80]
  %vm4225 = vcmask 1047559
  %v4226 = vsel %vm4225, %v4224, %v4222
  %4227 = vrot.lane.b32.xlu0 %v4226, 68
  %v4228 = vpop.permute.xlu0 %4227
  %vm4229 = vcmask 572960
  %s4230 = scalar_lea.vmem %s1, 8
  %4231 = vst.msk [vmem:[%s4230] sm:$0xff] %vm4229, %v4228
  %s4232 = scalar_lea.vmem %s0, 1058
  %v4233 = vld [vmem:[%s4232] sm:$0x1]
  %s4234 = scalar_lea.vmem %s0, 1121
  %v4235 = vld [vmem:[%s4234] sm:$0x2]
  %vm4236 = vcmask 1041409
  %v4237 = vsel %vm4236, %v4235, %v4233
  %s4238 = scalar_lea.vmem %s0, 1184
  %v4239 = vld [vmem:[%s4238] sm:$0x4]
  %vm4240 = vcmask 1042434
  %v4241 = vsel %vm4240, %v4239, %v4237
  %s4242 = scalar_lea.vmem %s0, 1247
  %v4243 = vld [vmem:[%s4242] sm:$0x8]
  %vm4244 = vcmask 1043459
  %v4245 = vsel %vm4244, %v4243, %v4241
  %s4246 = scalar_lea.vmem %s0, 1310
  %v4247 = vld [vmem:[%s4246] sm:$0x10]
  %vm4248 = vcmask 1044484
  %v4249 = vsel %vm4248, %v4247, %v4245
  %s4250 = scalar_lea.vmem %s0, 1373
  %v4251 = vld [vmem:[%s4250] sm:$0x20]
  %vm4252 = vcmask 1045509
  %v4253 = vsel %vm4252, %v4251, %v4249
  %s4254 = scalar_lea.vmem %s0, 1436
  %v4255 = vld [vmem:[%s4254] sm:$0x40]
  %vm4256 = vcmask 1046534
  %v4257 = vsel %vm4256, %v4255, %v4253
  %s4258 = scalar_lea.vmem %s0, 1499
  %v4259 = vld [vmem:[%s4258] sm:$0x80]
  %vm4260 = vcmask 1047559
  %v4261 = vsel %vm4260, %v4259, %v4257
  %4262 = vrot.lane.b32.xlu0 %v4261, 68
  %v4263 = vpop.permute.xlu0 %4262
  %vm4264 = vcmask 572960
  %s4265 = scalar_lea.vmem %s1, 16
  %4266 = vst.msk [vmem:[%s4265] sm:$0xff] %vm4264, %v4263
  %s4267 = scalar_lea.vmem %s0, 1570
  %v4268 = vld [vmem:[%s4267] sm:$0x1]
  %s4269 = scalar_lea.vmem %s0, 1633
  %v4270 = vld [vmem:[%s4269] sm:$0x2]
  %vm4271 = vcmask 1041409
  %v4272 = vsel %vm4271, %v4270, %v4268
  %s4273 = scalar_lea.vmem %s0, 1696
  %v4274 = vld [vmem:[%s4273] sm:$0x4]
  %vm4275 = vcmask 1042434
  %v4276 = vsel %vm4275, %v4274, %v4272
  %s4277 = scalar_lea.vmem %s0, 1759
  %v4278 = vld [vmem:[%s4277] sm:$0x8]
  %vm4279 = vcmask 1043459
  %v4280 = vsel %vm4279, %v4278, %v4276
  %s4281 = scalar_lea.vmem %s0, 1822
  %v4282 = vld [vmem:[%s4281] sm:$0x10]
  %vm4283 = vcmask 1044484
  %v4284 = vsel %vm4283, %v4282, %v4280
  %s4285 = scalar_lea.vmem %s0, 1885
  %v4286 = vld [vmem:[%s4285] sm:$0x20]
  %vm4287 = vcmask 1045509
  %v4288 = vsel %vm4287, %v4286, %v4284
  %s4289 = scalar_lea.vmem %s0, 1948
  %v4290 = vld [vmem:[%s4289] sm:$0x40]
  %vm4291 = vcmask 1046534
  %v4292 = vsel %vm4291, %v4290, %v4288
  %s4293 = scalar_lea.vmem %s0, 2011
  %v4294 = vld [vmem:[%s4293] sm:$0x80]
  %vm4295 = vcmask 1047559
  %v4296 = vsel %vm4295, %v4294, %v4292
  %4297 = vrot.lane.b32.xlu0 %v4296, 68
  %v4298 = vpop.permute.xlu0 %4297
  %vm4299 = vcmask 572960
  %s4300 = scalar_lea.vmem %s1, 24
  %4301 = vst.msk [vmem:[%s4300] sm:$0xff] %vm4299, %v4298
  %s4302 = scalar_lea.vmem %s0, 33
  %v4303 = vld [vmem:[%s4302] sm:$0x1]
  %s4304 = scalar_lea.vmem %s0, 96
  %v4305 = vld [vmem:[%s4304] sm:$0x2]
  %vm4306 = vcmask 1041409
  %v4307 = vsel %vm4306, %v4305, %v4303
  %s4308 = scalar_lea.vmem %s0, 159
  %v4309 = vld [vmem:[%s4308] sm:$0x4]
  %vm4310 = vcmask 1042434
  %v4311 = vsel %vm4310, %v4309, %v4307
  %s4312 = scalar_lea.vmem %s0, 222
  %v4313 = vld [vmem:[%s4312] sm:$0x8]
  %vm4314 = vcmask 1043459
  %v4315 = vsel %vm4314, %v4313, %v4311
  %s4316 = scalar_lea.vmem %s0, 285
  %v4317 = vld [vmem:[%s4316] sm:$0x10]
  %vm4318 = vcmask 1044484
  %v4319 = vsel %vm4318, %v4317, %v4315
  %s4320 = scalar_lea.vmem %s0, 348
  %v4321 = vld [vmem:[%s4320] sm:$0x20]
  %vm4322 = vcmask 1045509
  %v4323 = vsel %vm4322, %v4321, %v4319
  %s4324 = scalar_lea.vmem %s0, 411
  %v4325 = vld [vmem:[%s4324] sm:$0x40]
  %vm4326 = vcmask 1046534
  %v4327 = vsel %vm4326, %v4325, %v4323
  %s4328 = scalar_lea.vmem %s0, 474
  %v4329 = vld [vmem:[%s4328] sm:$0x80]
  %vm4330 = vcmask 1047559
  %v4331 = vsel %vm4330, %v4329, %v4327
  %4332 = vrot.lane.b32.xlu0 %v4331, 66
  %v4333 = vpop.permute.xlu0 %4332
  %vm4334 = vcmask 556560
  %4335 = vst.msk [vmem:[%s1] sm:$0xff] %vm4334, %v4333
  %s4336 = scalar_lea.vmem %s0, 545
  %v4337 = vld [vmem:[%s4336] sm:$0x1]
  %s4338 = scalar_lea.vmem %s0, 608
  %v4339 = vld [vmem:[%s4338] sm:$0x2]
  %vm4340 = vcmask 1041409
  %v4341 = vsel %vm4340, %v4339, %v4337
  %s4342 = scalar_lea.vmem %s0, 671
  %v4343 = vld [vmem:[%s4342] sm:$0x4]
  %vm4344 = vcmask 1042434
  %v4345 = vsel %vm4344, %v4343, %v4341
  %s4346 = scalar_lea.vmem %s0, 734
  %v4347 = vld [vmem:[%s4346] sm:$0x8]
  %vm4348 = vcmask 1043459
  %v4349 = vsel %vm4348, %v4347, %v4345
  %s4350 = scalar_lea.vmem %s0, 797
  %v4351 = vld [vmem:[%s4350] sm:$0x10]
  %vm4352 = vcmask 1044484
  %v4353 = vsel %vm4352, %v4351, %v4349
  %s4354 = scalar_lea.vmem %s0, 860
  %v4355 = vld [vmem:[%s4354] sm:$0x20]
  %vm4356 = vcmask 1045509
  %v4357 = vsel %vm4356, %v4355, %v4353
  %s4358 = scalar_lea.vmem %s0, 923
  %v4359 = vld [vmem:[%s4358] sm:$0x40]
  %vm4360 = vcmask 1046534
  %v4361 = vsel %vm4360, %v4359, %v4357
  %s4362 = scalar_lea.vmem %s0, 986
  %v4363 = vld [vmem:[%s4362] sm:$0x80]
  %vm4364 = vcmask 1047559
  %v4365 = vsel %vm4364, %v4363, %v4361
  %4366 = vrot.lane.b32.xlu0 %v4365, 66
  %v4367 = vpop.permute.xlu0 %4366
  %vm4368 = vcmask 556560
  %s4369 = scalar_lea.vmem %s1, 8
  %4370 = vst.msk [vmem:[%s4369] sm:$0xff] %vm4368, %v4367
  %s4371 = scalar_lea.vmem %s0, 1057
  %v4372 = vld [vmem:[%s4371] sm:$0x1]
  %s4373 = scalar_lea.vmem %s0, 1120
  %v4374 = vld [vmem:[%s4373] sm:$0x2]
  %vm4375 = vcmask 1041409
  %v4376 = vsel %vm4375, %v4374, %v4372
  %s4377 = scalar_lea.vmem %s0, 1183
  %v4378 = vld [vmem:[%s4377] sm:$0x4]
  %vm4379 = vcmask 1042434
  %v4380 = vsel %vm4379, %v4378, %v4376
  %s4381 = scalar_lea.vmem %s0, 1246
  %v4382 = vld [vmem:[%s4381] sm:$0x8]
  %vm4383 = vcmask 1043459
  %v4384 = vsel %vm4383, %v4382, %v4380
  %s4385 = scalar_lea.vmem %s0, 1309
  %v4386 = vld [vmem:[%s4385] sm:$0x10]
  %vm4387 = vcmask 1044484
  %v4388 = vsel %vm4387, %v4386, %v4384
  %s4389 = scalar_lea.vmem %s0, 1372
  %v4390 = vld [vmem:[%s4389] sm:$0x20]
  %vm4391 = vcmask 1045509
  %v4392 = vsel %vm4391, %v4390, %v4388
  %s4393 = scalar_lea.vmem %s0, 1435
  %v4394 = vld [vmem:[%s4393] sm:$0x40]
  %vm4395 = vcmask 1046534
  %v4396 = vsel %vm4395, %v4394, %v4392
  %s4397 = scalar_lea.vmem %s0, 1498
  %v4398 = vld [vmem:[%s4397] sm:$0x80]
  %vm4399 = vcmask 1047559
  %v4400 = vsel %vm4399, %v4398, %v4396
  %4401 = vrot.lane.b32.xlu0 %v4400, 66
  %v4402 = vpop.permute.xlu0 %4401
  %vm4403 = vcmask 556560
  %s4404 = scalar_lea.vmem %s1, 16
  %4405 = vst.msk [vmem:[%s4404] sm:$0xff] %vm4403, %v4402
  %s4406 = scalar_lea.vmem %s0, 1569
  %v4407 = vld [vmem:[%s4406] sm:$0x1]
  %s4408 = scalar_lea.vmem %s0, 1632
  %v4409 = vld [vmem:[%s4408] sm:$0x2]
  %vm4410 = vcmask 1041409
  %v4411 = vsel %vm4410, %v4409, %v4407
  %s4412 = scalar_lea.vmem %s0, 1695
  %v4413 = vld [vmem:[%s4412] sm:$0x4]
  %vm4414 = vcmask 1042434
  %v4415 = vsel %vm4414, %v4413, %v4411
  %s4416 = scalar_lea.vmem %s0, 1758
  %v4417 = vld [vmem:[%s4416] sm:$0x8]
  %vm4418 = vcmask 1043459
  %v4419 = vsel %vm4418, %v4417, %v4415
  %s4420 = scalar_lea.vmem %s0, 1821
  %v4421 = vld [vmem:[%s4420] sm:$0x10]
  %vm4422 = vcmask 1044484
  %v4423 = vsel %vm4422, %v4421, %v4419
  %s4424 = scalar_lea.vmem %s0, 1884
  %v4425 = vld [vmem:[%s4424] sm:$0x20]
  %vm4426 = vcmask 1045509
  %v4427 = vsel %vm4426, %v4425, %v4423
  %s4428 = scalar_lea.vmem %s0, 1947
  %v4429 = vld [vmem:[%s4428] sm:$0x40]
  %vm4430 = vcmask 1046534
  %v4431 = vsel %vm4430, %v4429, %v4427
  %s4432 = scalar_lea.vmem %s0, 2010
  %v4433 = vld [vmem:[%s4432] sm:$0x80]
  %vm4434 = vcmask 1047559
  %v4435 = vsel %vm4434, %v4433, %v4431
  %4436 = vrot.lane.b32.xlu0 %v4435, 66
  %v4437 = vpop.permute.xlu0 %4436
  %vm4438 = vcmask 556560
  %s4439 = scalar_lea.vmem %s1, 24
  %4440 = vst.msk [vmem:[%s4439] sm:$0xff] %vm4438, %v4437
  %s4441 = scalar_lea.vmem %s0, 32
  %v4442 = vld [vmem:[%s4441] sm:$0x1]
  %s4443 = scalar_lea.vmem %s0, 95
  %v4444 = vld [vmem:[%s4443] sm:$0x2]
  %vm4445 = vcmask 1041409
  %v4446 = vsel %vm4445, %v4444, %v4442
  %s4447 = scalar_lea.vmem %s0, 158
  %v4448 = vld [vmem:[%s4447] sm:$0x4]
  %vm4449 = vcmask 1042434
  %v4450 = vsel %vm4449, %v4448, %v4446
  %s4451 = scalar_lea.vmem %s0, 221
  %v4452 = vld [vmem:[%s4451] sm:$0x8]
  %vm4453 = vcmask 1043459
  %v4454 = vsel %vm4453, %v4452, %v4450
  %s4455 = scalar_lea.vmem %s0, 284
  %v4456 = vld [vmem:[%s4455] sm:$0x10]
  %vm4457 = vcmask 1044484
  %v4458 = vsel %vm4457, %v4456, %v4454
  %s4459 = scalar_lea.vmem %s0, 347
  %v4460 = vld [vmem:[%s4459] sm:$0x20]
  %vm4461 = vcmask 1045509
  %v4462 = vsel %vm4461, %v4460, %v4458
  %s4463 = scalar_lea.vmem %s0, 410
  %v4464 = vld [vmem:[%s4463] sm:$0x40]
  %vm4465 = vcmask 1046534
  %v4466 = vsel %vm4465, %v4464, %v4462
  %s4467 = scalar_lea.vmem %s0, 473
  %v4468 = vld [vmem:[%s4467] sm:$0x80]
  %vm4469 = vcmask 1047559
  %v4470 = vsel %vm4469, %v4468, %v4466
  %4471 = vrot.lane.b32.xlu0 %v4470, 64
  %v4472 = vpop.permute.xlu0 %4471
  %vm4473 = vcmask 540160
  %4474 = vst.msk [vmem:[%s1] sm:$0xff] %vm4473, %v4472
  %s4475 = scalar_lea.vmem %s0, 544
  %v4476 = vld [vmem:[%s4475] sm:$0x1]
  %s4477 = scalar_lea.vmem %s0, 607
  %v4478 = vld [vmem:[%s4477] sm:$0x2]
  %vm4479 = vcmask 1041409
  %v4480 = vsel %vm4479, %v4478, %v4476
  %s4481 = scalar_lea.vmem %s0, 670
  %v4482 = vld [vmem:[%s4481] sm:$0x4]
  %vm4483 = vcmask 1042434
  %v4484 = vsel %vm4483, %v4482, %v4480
  %s4485 = scalar_lea.vmem %s0, 733
  %v4486 = vld [vmem:[%s4485] sm:$0x8]
  %vm4487 = vcmask 1043459
  %v4488 = vsel %vm4487, %v4486, %v4484
  %s4489 = scalar_lea.vmem %s0, 796
  %v4490 = vld [vmem:[%s4489] sm:$0x10]
  %vm4491 = vcmask 1044484
  %v4492 = vsel %vm4491, %v4490, %v4488
  %s4493 = scalar_lea.vmem %s0, 859
  %v4494 = vld [vmem:[%s4493] sm:$0x20]
  %vm4495 = vcmask 1045509
  %v4496 = vsel %vm4495, %v4494, %v4492
  %s4497 = scalar_lea.vmem %s0, 922
  %v4498 = vld [vmem:[%s4497] sm:$0x40]
  %vm4499 = vcmask 1046534
  %v4500 = vsel %vm4499, %v4498, %v4496
  %s4501 = scalar_lea.vmem %s0, 985
  %v4502 = vld [vmem:[%s4501] sm:$0x80]
  %vm4503 = vcmask 1047559
  %v4504 = vsel %vm4503, %v4502, %v4500
  %4505 = vrot.lane.b32.xlu0 %v4504, 64
  %v4506 = vpop.permute.xlu0 %4505
  %vm4507 = vcmask 540160
  %s4508 = scalar_lea.vmem %s1, 8
  %4509 = vst.msk [vmem:[%s4508] sm:$0xff] %vm4507, %v4506
  %s4510 = scalar_lea.vmem %s0, 1056
  %v4511 = vld [vmem:[%s4510] sm:$0x1]
  %s4512 = scalar_lea.vmem %s0, 1119
  %v4513 = vld [vmem:[%s4512] sm:$0x2]
  %vm4514 = vcmask 1041409
  %v4515 = vsel %vm4514, %v4513, %v4511
  %s4516 = scalar_lea.vmem %s0, 1182
  %v4517 = vld [vmem:[%s4516] sm:$0x4]
  %vm4518 = vcmask 1042434
  %v4519 = vsel %vm4518, %v4517, %v4515
  %s4520 = scalar_lea.vmem %s0, 1245
  %v4521 = vld [vmem:[%s4520] sm:$0x8]
  %vm4522 = vcmask 1043459
  %v4523 = vsel %vm4522, %v4521, %v4519
  %s4524 = scalar_lea.vmem %s0, 1308
  %v4525 = vld [vmem:[%s4524] sm:$0x10]
  %vm4526 = vcmask 1044484
  %v4527 = vsel %vm4526, %v4525, %v4523
  %s4528 = scalar_lea.vmem %s0, 1371
  %v4529 = vld [vmem:[%s4528] sm:$0x20]
  %vm4530 = vcmask 1045509
  %v4531 = vsel %vm4530, %v4529, %v4527
  %s4532 = scalar_lea.vmem %s0, 1434
  %v4533 = vld [vmem:[%s4532] sm:$0x40]
  %vm4534 = vcmask 1046534
  %v4535 = vsel %vm4534, %v4533, %v4531
  %s4536 = scalar_lea.vmem %s0, 1497
  %v4537 = vld [vmem:[%s4536] sm:$0x80]
  %vm4538 = vcmask 1047559
  %v4539 = vsel %vm4538, %v4537, %v4535
  %4540 = vrot.lane.b32.xlu0 %v4539, 64
  %v4541 = vpop.permute.xlu0 %4540
  %vm4542 = vcmask 540160
  %s4543 = scalar_lea.vmem %s1, 16
  %4544 = vst.msk [vmem:[%s4543] sm:$0xff] %vm4542, %v4541
  %s4545 = scalar_lea.vmem %s0, 1568
  %v4546 = vld [vmem:[%s4545] sm:$0x1]
  %s4547 = scalar_lea.vmem %s0, 1631
  %v4548 = vld [vmem:[%s4547] sm:$0x2]
  %vm4549 = vcmask 1041409
  %v4550 = vsel %vm4549, %v4548, %v4546
  %s4551 = scalar_lea.vmem %s0, 1694
  %v4552 = vld [vmem:[%s4551] sm:$0x4]
  %vm4553 = vcmask 1042434
  %v4554 = vsel %vm4553, %v4552, %v4550
  %s4555 = scalar_lea.vmem %s0, 1757
  %v4556 = vld [vmem:[%s4555] sm:$0x8]
  %vm4557 = vcmask 1043459
  %v4558 = vsel %vm4557, %v4556, %v4554
  %s4559 = scalar_lea.vmem %s0, 1820
  %v4560 = vld [vmem:[%s4559] sm:$0x10]
  %vm4561 = vcmask 1044484
  %v4562 = vsel %vm4561, %v4560, %v4558
  %s4563 = scalar_lea.vmem %s0, 1883
  %v4564 = vld [vmem:[%s4563] sm:$0x20]
  %vm4565 = vcmask 1045509
  %v4566 = vsel %vm4565, %v4564, %v4562
  %s4567 = scalar_lea.vmem %s0, 1946
  %v4568 = vld [vmem:[%s4567] sm:$0x40]
  %vm4569 = vcmask 1046534
  %v4570 = vsel %vm4569, %v4568, %v4566
  %s4571 = scalar_lea.vmem %s0, 2009
  %v4572 = vld [vmem:[%s4571] sm:$0x80]
  %vm4573 = vcmask 1047559
  %v4574 = vsel %vm4573, %v4572, %v4570
  %4575 = vrot.lane.b32.xlu0 %v4574, 64
  %v4576 = vpop.permute.xlu0 %4575
  %vm4577 = vcmask 540160
  %s4578 = scalar_lea.vmem %s1, 24
  %4579 = vst.msk [vmem:[%s4578] sm:$0xff] %vm4577, %v4576
  %s4580 = scalar_lea.vmem %s0, 31
  %v4581 = vld [vmem:[%s4580] sm:$0x1]
  %s4582 = scalar_lea.vmem %s0, 94
  %v4583 = vld [vmem:[%s4582] sm:$0x2]
  %vm4584 = vcmask 1041409
  %v4585 = vsel %vm4584, %v4583, %v4581
  %s4586 = scalar_lea.vmem %s0, 157
  %v4587 = vld [vmem:[%s4586] sm:$0x4]
  %vm4588 = vcmask 1042434
  %v4589 = vsel %vm4588, %v4587, %v4585
  %s4590 = scalar_lea.vmem %s0, 220
  %v4591 = vld [vmem:[%s4590] sm:$0x8]
  %vm4592 = vcmask 1043459
  %v4593 = vsel %vm4592, %v4591, %v4589
  %s4594 = scalar_lea.vmem %s0, 283
  %v4595 = vld [vmem:[%s4594] sm:$0x10]
  %vm4596 = vcmask 1044484
  %v4597 = vsel %vm4596, %v4595, %v4593
  %s4598 = scalar_lea.vmem %s0, 346
  %v4599 = vld [vmem:[%s4598] sm:$0x20]
  %vm4600 = vcmask 1045509
  %v4601 = vsel %vm4600, %v4599, %v4597
  %s4602 = scalar_lea.vmem %s0, 409
  %v4603 = vld [vmem:[%s4602] sm:$0x40]
  %vm4604 = vcmask 1046534
  %v4605 = vsel %vm4604, %v4603, %v4601
  %s4606 = scalar_lea.vmem %s0, 472
  %v4607 = vld [vmem:[%s4606] sm:$0x80]
  %vm4608 = vcmask 1047559
  %v4609 = vsel %vm4608, %v4607, %v4605
  %4610 = vrot.lane.b32.xlu0 %v4609, 62
  %v4611 = vpop.permute.xlu0 %4610
  %vm4612 = vcmask 523760
  %4613 = vst.msk [vmem:[%s1] sm:$0xff] %vm4612, %v4611
  %s4614 = scalar_lea.vmem %s0, 543
  %v4615 = vld [vmem:[%s4614] sm:$0x1]
  %s4616 = scalar_lea.vmem %s0, 606
  %v4617 = vld [vmem:[%s4616] sm:$0x2]
  %vm4618 = vcmask 1041409
  %v4619 = vsel %vm4618, %v4617, %v4615
  %s4620 = scalar_lea.vmem %s0, 669
  %v4621 = vld [vmem:[%s4620] sm:$0x4]
  %vm4622 = vcmask 1042434
  %v4623 = vsel %vm4622, %v4621, %v4619
  %s4624 = scalar_lea.vmem %s0, 732
  %v4625 = vld [vmem:[%s4624] sm:$0x8]
  %vm4626 = vcmask 1043459
  %v4627 = vsel %vm4626, %v4625, %v4623
  %s4628 = scalar_lea.vmem %s0, 795
  %v4629 = vld [vmem:[%s4628] sm:$0x10]
  %vm4630 = vcmask 1044484
  %v4631 = vsel %vm4630, %v4629, %v4627
  %s4632 = scalar_lea.vmem %s0, 858
  %v4633 = vld [vmem:[%s4632] sm:$0x20]
  %vm4634 = vcmask 1045509
  %v4635 = vsel %vm4634, %v4633, %v4631
  %s4636 = scalar_lea.vmem %s0, 921
  %v4637 = vld [vmem:[%s4636] sm:$0x40]
  %vm4638 = vcmask 1046534
  %v4639 = vsel %vm4638, %v4637, %v4635
  %s4640 = scalar_lea.vmem %s0, 984
  %v4641 = vld [vmem:[%s4640] sm:$0x80]
  %vm4642 = vcmask 1047559
  %v4643 = vsel %vm4642, %v4641, %v4639
  %4644 = vrot.lane.b32.xlu0 %v4643, 62
  %v4645 = vpop.permute.xlu0 %4644
  %vm4646 = vcmask 523760
  %s4647 = scalar_lea.vmem %s1, 8
  %4648 = vst.msk [vmem:[%s4647] sm:$0xff] %vm4646, %v4645
  %s4649 = scalar_lea.vmem %s0, 1055
  %v4650 = vld [vmem:[%s4649] sm:$0x1]
  %s4651 = scalar_lea.vmem %s0, 1118
  %v4652 = vld [vmem:[%s4651] sm:$0x2]
  %vm4653 = vcmask 1041409
  %v4654 = vsel %vm4653, %v4652, %v4650
  %s4655 = scalar_lea.vmem %s0, 1181
  %v4656 = vld [vmem:[%s4655] sm:$0x4]
  %vm4657 = vcmask 1042434
  %v4658 = vsel %vm4657, %v4656, %v4654
  %s4659 = scalar_lea.vmem %s0, 1244
  %v4660 = vld [vmem:[%s4659] sm:$0x8]
  %vm4661 = vcmask 1043459
  %v4662 = vsel %vm4661, %v4660, %v4658
  %s4663 = scalar_lea.vmem %s0, 1307
  %v4664 = vld [vmem:[%s4663] sm:$0x10]
  %vm4665 = vcmask 1044484
  %v4666 = vsel %vm4665, %v4664, %v4662
  %s4667 = scalar_lea.vmem %s0, 1370
  %v4668 = vld [vmem:[%s4667] sm:$0x20]
  %vm4669 = vcmask 1045509
  %v4670 = vsel %vm4669, %v4668, %v4666
  %s4671 = scalar_lea.vmem %s0, 1433
  %v4672 = vld [vmem:[%s4671] sm:$0x40]
  %vm4673 = vcmask 1046534
  %v4674 = vsel %vm4673, %v4672, %v4670
  %s4675 = scalar_lea.vmem %s0, 1496
  %v4676 = vld [vmem:[%s4675] sm:$0x80]
  %vm4677 = vcmask 1047559
  %v4678 = vsel %vm4677, %v4676, %v4674
  %4679 = vrot.lane.b32.xlu0 %v4678, 62
  %v4680 = vpop.permute.xlu0 %4679
  %vm4681 = vcmask 523760
  %s4682 = scalar_lea.vmem %s1, 16
  %4683 = vst.msk [vmem:[%s4682] sm:$0xff] %vm4681, %v4680
  %s4684 = scalar_lea.vmem %s0, 1567
  %v4685 = vld [vmem:[%s4684] sm:$0x1]
  %s4686 = scalar_lea.vmem %s0, 1630
  %v4687 = vld [vmem:[%s4686] sm:$0x2]
  %vm4688 = vcmask 1041409
  %v4689 = vsel %vm4688, %v4687, %v4685
  %s4690 = scalar_lea.vmem %s0, 1693
  %v4691 = vld [vmem:[%s4690] sm:$0x4]
  %vm4692 = vcmask 1042434
  %v4693 = vsel %vm4692, %v4691, %v4689
  %s4694 = scalar_lea.vmem %s0, 1756
  %v4695 = vld [vmem:[%s4694] sm:$0x8]
  %vm4696 = vcmask 1043459
  %v4697 = vsel %vm4696, %v4695, %v4693
  %s4698 = scalar_lea.vmem %s0, 1819
  %v4699 = vld [vmem:[%s4698] sm:$0x10]
  %vm4700 = vcmask 1044484
  %v4701 = vsel %vm4700, %v4699, %v4697
  %s4702 = scalar_lea.vmem %s0, 1882
  %v4703 = vld [vmem:[%s4702] sm:$0x20]
  %vm4704 = vcmask 1045509
  %v4705 = vsel %vm4704, %v4703, %v4701
  %s4706 = scalar_lea.vmem %s0, 1945
  %v4707 = vld [vmem:[%s4706] sm:$0x40]
  %vm4708 = vcmask 1046534
  %v4709 = vsel %vm4708, %v4707, %v4705
  %s4710 = scalar_lea.vmem %s0, 2008
  %v4711 = vld [vmem:[%s4710] sm:$0x80]
  %vm4712 = vcmask 1047559
  %v4713 = vsel %vm4712, %v4711, %v4709
  %4714 = vrot.lane.b32.xlu0 %v4713, 62
  %v4715 = vpop.permute.xlu0 %4714
  %vm4716 = vcmask 523760
  %s4717 = scalar_lea.vmem %s1, 24
  %4718 = vst.msk [vmem:[%s4717] sm:$0xff] %vm4716, %v4715
  %s4719 = scalar_lea.vmem %s0, 30
  %v4720 = vld [vmem:[%s4719] sm:$0x1]
  %s4721 = scalar_lea.vmem %s0, 93
  %v4722 = vld [vmem:[%s4721] sm:$0x2]
  %vm4723 = vcmask 1041409
  %v4724 = vsel %vm4723, %v4722, %v4720
  %s4725 = scalar_lea.vmem %s0, 156
  %v4726 = vld [vmem:[%s4725] sm:$0x4]
  %vm4727 = vcmask 1042434
  %v4728 = vsel %vm4727, %v4726, %v4724
  %s4729 = scalar_lea.vmem %s0, 219
  %v4730 = vld [vmem:[%s4729] sm:$0x8]
  %vm4731 = vcmask 1043459
  %v4732 = vsel %vm4731, %v4730, %v4728
  %s4733 = scalar_lea.vmem %s0, 282
  %v4734 = vld [vmem:[%s4733] sm:$0x10]
  %vm4735 = vcmask 1044484
  %v4736 = vsel %vm4735, %v4734, %v4732
  %s4737 = scalar_lea.vmem %s0, 345
  %v4738 = vld [vmem:[%s4737] sm:$0x20]
  %vm4739 = vcmask 1045509
  %v4740 = vsel %vm4739, %v4738, %v4736
  %s4741 = scalar_lea.vmem %s0, 408
  %v4742 = vld [vmem:[%s4741] sm:$0x40]
  %vm4743 = vcmask 1046534
  %v4744 = vsel %vm4743, %v4742, %v4740
  %s4745 = scalar_lea.vmem %s0, 471
  %v4746 = vld [vmem:[%s4745] sm:$0x80]
  %vm4747 = vcmask 1047559
  %v4748 = vsel %vm4747, %v4746, %v4744
  %4749 = vrot.lane.b32.xlu0 %v4748, 60
  %v4750 = vpop.permute.xlu0 %4749
  %vm4751 = vcmask 507360
  %4752 = vst.msk [vmem:[%s1] sm:$0xff] %vm4751, %v4750
  %s4753 = scalar_lea.vmem %s0, 542
  %v4754 = vld [vmem:[%s4753] sm:$0x1]
  %s4755 = scalar_lea.vmem %s0, 605
  %v4756 = vld [vmem:[%s4755] sm:$0x2]
  %vm4757 = vcmask 1041409
  %v4758 = vsel %vm4757, %v4756, %v4754
  %s4759 = scalar_lea.vmem %s0, 668
  %v4760 = vld [vmem:[%s4759] sm:$0x4]
  %vm4761 = vcmask 1042434
  %v4762 = vsel %vm4761, %v4760, %v4758
  %s4763 = scalar_lea.vmem %s0, 731
  %v4764 = vld [vmem:[%s4763] sm:$0x8]
  %vm4765 = vcmask 1043459
  %v4766 = vsel %vm4765, %v4764, %v4762
  %s4767 = scalar_lea.vmem %s0, 794
  %v4768 = vld [vmem:[%s4767] sm:$0x10]
  %vm4769 = vcmask 1044484
  %v4770 = vsel %vm4769, %v4768, %v4766
  %s4771 = scalar_lea.vmem %s0, 857
  %v4772 = vld [vmem:[%s4771] sm:$0x20]
  %vm4773 = vcmask 1045509
  %v4774 = vsel %vm4773, %v4772, %v4770
  %s4775 = scalar_lea.vmem %s0, 920
  %v4776 = vld [vmem:[%s4775] sm:$0x40]
  %vm4777 = vcmask 1046534
  %v4778 = vsel %vm4777, %v4776, %v4774
  %s4779 = scalar_lea.vmem %s0, 983
  %v4780 = vld [vmem:[%s4779] sm:$0x80]
  %vm4781 = vcmask 1047559
  %v4782 = vsel %vm4781, %v4780, %v4778
  %4783 = vrot.lane.b32.xlu0 %v4782, 60
  %v4784 = vpop.permute.xlu0 %4783
  %vm4785 = vcmask 507360
  %s4786 = scalar_lea.vmem %s1, 8
  %4787 = vst.msk [vmem:[%s4786] sm:$0xff] %vm4785, %v4784
  %s4788 = scalar_lea.vmem %s0, 1054
  %v4789 = vld [vmem:[%s4788] sm:$0x1]
  %s4790 = scalar_lea.vmem %s0, 1117
  %v4791 = vld [vmem:[%s4790] sm:$0x2]
  %vm4792 = vcmask 1041409
  %v4793 = vsel %vm4792, %v4791, %v4789
  %s4794 = scalar_lea.vmem %s0, 1180
  %v4795 = vld [vmem:[%s4794] sm:$0x4]
  %vm4796 = vcmask 1042434
  %v4797 = vsel %vm4796, %v4795, %v4793
  %s4798 = scalar_lea.vmem %s0, 1243
  %v4799 = vld [vmem:[%s4798] sm:$0x8]
  %vm4800 = vcmask 1043459
  %v4801 = vsel %vm4800, %v4799, %v4797
  %s4802 = scalar_lea.vmem %s0, 1306
  %v4803 = vld [vmem:[%s4802] sm:$0x10]
  %vm4804 = vcmask 1044484
  %v4805 = vsel %vm4804, %v4803, %v4801
  %s4806 = scalar_lea.vmem %s0, 1369
  %v4807 = vld [vmem:[%s4806] sm:$0x20]
  %vm4808 = vcmask 1045509
  %v4809 = vsel %vm4808, %v4807, %v4805
  %s4810 = scalar_lea.vmem %s0, 1432
  %v4811 = vld [vmem:[%s4810] sm:$0x40]
  %vm4812 = vcmask 1046534
  %v4813 = vsel %vm4812, %v4811, %v4809
  %s4814 = scalar_lea.vmem %s0, 1495
  %v4815 = vld [vmem:[%s4814] sm:$0x80]
  %vm4816 = vcmask 1047559
  %v4817 = vsel %vm4816, %v4815, %v4813
  %4818 = vrot.lane.b32.xlu0 %v4817, 60
  %v4819 = vpop.permute.xlu0 %4818
  %vm4820 = vcmask 507360
  %s4821 = scalar_lea.vmem %s1, 16
  %4822 = vst.msk [vmem:[%s4821] sm:$0xff] %vm4820, %v4819
  %s4823 = scalar_lea.vmem %s0, 1566
  %v4824 = vld [vmem:[%s4823] sm:$0x1]
  %s4825 = scalar_lea.vmem %s0, 1629
  %v4826 = vld [vmem:[%s4825] sm:$0x2]
  %vm4827 = vcmask 1041409
  %v4828 = vsel %vm4827, %v4826, %v4824
  %s4829 = scalar_lea.vmem %s0, 1692
  %v4830 = vld [vmem:[%s4829] sm:$0x4]
  %vm4831 = vcmask 1042434
  %v4832 = vsel %vm4831, %v4830, %v4828
  %s4833 = scalar_lea.vmem %s0, 1755
  %v4834 = vld [vmem:[%s4833] sm:$0x8]
  %vm4835 = vcmask 1043459
  %v4836 = vsel %vm4835, %v4834, %v4832
  %s4837 = scalar_lea.vmem %s0, 1818
  %v4838 = vld [vmem:[%s4837] sm:$0x10]
  %vm4839 = vcmask 1044484
  %v4840 = vsel %vm4839, %v4838, %v4836
  %s4841 = scalar_lea.vmem %s0, 1881
  %v4842 = vld [vmem:[%s4841] sm:$0x20]
  %vm4843 = vcmask 1045509
  %v4844 = vsel %vm4843, %v4842, %v4840
  %s4845 = scalar_lea.vmem %s0, 1944
  %v4846 = vld [vmem:[%s4845] sm:$0x40]
  %vm4847 = vcmask 1046534
  %v4848 = vsel %vm4847, %v4846, %v4844
  %s4849 = scalar_lea.vmem %s0, 2007
  %v4850 = vld [vmem:[%s4849] sm:$0x80]
  %vm4851 = vcmask 1047559
  %v4852 = vsel %vm4851, %v4850, %v4848
  %4853 = vrot.lane.b32.xlu0 %v4852, 60
  %v4854 = vpop.permute.xlu0 %4853
  %vm4855 = vcmask 507360
  %s4856 = scalar_lea.vmem %s1, 24
  %4857 = vst.msk [vmem:[%s4856] sm:$0xff] %vm4855, %v4854
  %s4858 = scalar_lea.vmem %s0, 29
  %v4859 = vld [vmem:[%s4858] sm:$0x1]
  %s4860 = scalar_lea.vmem %s0, 92
  %v4861 = vld [vmem:[%s4860] sm:$0x2]
  %vm4862 = vcmask 1041409
  %v4863 = vsel %vm4862, %v4861, %v4859
  %s4864 = scalar_lea.vmem %s0, 155
  %v4865 = vld [vmem:[%s4864] sm:$0x4]
  %vm4866 = vcmask 1042434
  %v4867 = vsel %vm4866, %v4865, %v4863
  %s4868 = scalar_lea.vmem %s0, 218
  %v4869 = vld [vmem:[%s4868] sm:$0x8]
  %vm4870 = vcmask 1043459
  %v4871 = vsel %vm4870, %v4869, %v4867
  %s4872 = scalar_lea.vmem %s0, 281
  %v4873 = vld [vmem:[%s4872] sm:$0x10]
  %vm4874 = vcmask 1044484
  %v4875 = vsel %vm4874, %v4873, %v4871
  %s4876 = scalar_lea.vmem %s0, 344
  %v4877 = vld [vmem:[%s4876] sm:$0x20]
  %vm4878 = vcmask 1045509
  %v4879 = vsel %vm4878, %v4877, %v4875
  %s4880 = scalar_lea.vmem %s0, 407
  %v4881 = vld [vmem:[%s4880] sm:$0x40]
  %vm4882 = vcmask 1046534
  %v4883 = vsel %vm4882, %v4881, %v4879
  %s4884 = scalar_lea.vmem %s0, 470
  %v4885 = vld [vmem:[%s4884] sm:$0x80]
  %vm4886 = vcmask 1047559
  %v4887 = vsel %vm4886, %v4885, %v4883
  %4888 = vrot.lane.b32.xlu0 %v4887, 58
  %v4889 = vpop.permute.xlu0 %4888
  %vm4890 = vcmask 490960
  %4891 = vst.msk [vmem:[%s1] sm:$0xff] %vm4890, %v4889
  %s4892 = scalar_lea.vmem %s0, 541
  %v4893 = vld [vmem:[%s4892] sm:$0x1]
  %s4894 = scalar_lea.vmem %s0, 604
  %v4895 = vld [vmem:[%s4894] sm:$0x2]
  %vm4896 = vcmask 1041409
  %v4897 = vsel %vm4896, %v4895, %v4893
  %s4898 = scalar_lea.vmem %s0, 667
  %v4899 = vld [vmem:[%s4898] sm:$0x4]
  %vm4900 = vcmask 1042434
  %v4901 = vsel %vm4900, %v4899, %v4897
  %s4902 = scalar_lea.vmem %s0, 730
  %v4903 = vld [vmem:[%s4902] sm:$0x8]
  %vm4904 = vcmask 1043459
  %v4905 = vsel %vm4904, %v4903, %v4901
  %s4906 = scalar_lea.vmem %s0, 793
  %v4907 = vld [vmem:[%s4906] sm:$0x10]
  %vm4908 = vcmask 1044484
  %v4909 = vsel %vm4908, %v4907, %v4905
  %s4910 = scalar_lea.vmem %s0, 856
  %v4911 = vld [vmem:[%s4910] sm:$0x20]
  %vm4912 = vcmask 1045509
  %v4913 = vsel %vm4912, %v4911, %v4909
  %s4914 = scalar_lea.vmem %s0, 919
  %v4915 = vld [vmem:[%s4914] sm:$0x40]
  %vm4916 = vcmask 1046534
  %v4917 = vsel %vm4916, %v4915, %v4913
  %s4918 = scalar_lea.vmem %s0, 982
  %v4919 = vld [vmem:[%s4918] sm:$0x80]
  %vm4920 = vcmask 1047559
  %v4921 = vsel %vm4920, %v4919, %v4917
  %4922 = vrot.lane.b32.xlu0 %v4921, 58
  %v4923 = vpop.permute.xlu0 %4922
  %vm4924 = vcmask 490960
  %s4925 = scalar_lea.vmem %s1, 8
  %4926 = vst.msk [vmem:[%s4925] sm:$0xff] %vm4924, %v4923
  %s4927 = scalar_lea.vmem %s0, 1053
  %v4928 = vld [vmem:[%s4927] sm:$0x1]
  %s4929 = scalar_lea.vmem %s0, 1116
  %v4930 = vld [vmem:[%s4929] sm:$0x2]
  %vm4931 = vcmask 1041409
  %v4932 = vsel %vm4931, %v4930, %v4928
  %s4933 = scalar_lea.vmem %s0, 1179
  %v4934 = vld [vmem:[%s4933] sm:$0x4]
  %vm4935 = vcmask 1042434
  %v4936 = vsel %vm4935, %v4934, %v4932
  %s4937 = scalar_lea.vmem %s0, 1242
  %v4938 = vld [vmem:[%s4937] sm:$0x8]
  %vm4939 = vcmask 1043459
  %v4940 = vsel %vm4939, %v4938, %v4936
  %s4941 = scalar_lea.vmem %s0, 1305
  %v4942 = vld [vmem:[%s4941] sm:$0x10]
  %vm4943 = vcmask 1044484
  %v4944 = vsel %vm4943, %v4942, %v4940
  %s4945 = scalar_lea.vmem %s0, 1368
  %v4946 = vld [vmem:[%s4945] sm:$0x20]
  %vm4947 = vcmask 1045509
  %v4948 = vsel %vm4947, %v4946, %v4944
  %s4949 = scalar_lea.vmem %s0, 1431
  %v4950 = vld [vmem:[%s4949] sm:$0x40]
  %vm4951 = vcmask 1046534
  %v4952 = vsel %vm4951, %v4950, %v4948
  %s4953 = scalar_lea.vmem %s0, 1494
  %v4954 = vld [vmem:[%s4953] sm:$0x80]
  %vm4955 = vcmask 1047559
  %v4956 = vsel %vm4955, %v4954, %v4952
  %4957 = vrot.lane.b32.xlu0 %v4956, 58
  %v4958 = vpop.permute.xlu0 %4957
  %vm4959 = vcmask 490960
  %s4960 = scalar_lea.vmem %s1, 16
  %4961 = vst.msk [vmem:[%s4960] sm:$0xff] %vm4959, %v4958
  %s4962 = scalar_lea.vmem %s0, 1565
  %v4963 = vld [vmem:[%s4962] sm:$0x1]
  %s4964 = scalar_lea.vmem %s0, 1628
  %v4965 = vld [vmem:[%s4964] sm:$0x2]
  %vm4966 = vcmask 1041409
  %v4967 = vsel %vm4966, %v4965, %v4963
  %s4968 = scalar_lea.vmem %s0, 1691
  %v4969 = vld [vmem:[%s4968] sm:$0x4]
  %vm4970 = vcmask 1042434
  %v4971 = vsel %vm4970, %v4969, %v4967
  %s4972 = scalar_lea.vmem %s0, 1754
  %v4973 = vld [vmem:[%s4972] sm:$0x8]
  %vm4974 = vcmask 1043459
  %v4975 = vsel %vm4974, %v4973, %v4971
  %s4976 = scalar_lea.vmem %s0, 1817
  %v4977 = vld [vmem:[%s4976] sm:$0x10]
  %vm4978 = vcmask 1044484
  %v4979 = vsel %vm4978, %v4977, %v4975
  %s4980 = scalar_lea.vmem %s0, 1880
  %v4981 = vld [vmem:[%s4980] sm:$0x20]
  %vm4982 = vcmask 1045509
  %v4983 = vsel %vm4982, %v4981, %v4979
  %s4984 = scalar_lea.vmem %s0, 1943
  %v4985 = vld [vmem:[%s4984] sm:$0x40]
  %vm4986 = vcmask 1046534
  %v4987 = vsel %vm4986, %v4985, %v4983
  %s4988 = scalar_lea.vmem %s0, 2006
  %v4989 = vld [vmem:[%s4988] sm:$0x80]
  %vm4990 = vcmask 1047559
  %v4991 = vsel %vm4990, %v4989, %v4987
  %4992 = vrot.lane.b32.xlu0 %v4991, 58
  %v4993 = vpop.permute.xlu0 %4992
  %vm4994 = vcmask 490960
  %s4995 = scalar_lea.vmem %s1, 24
  %4996 = vst.msk [vmem:[%s4995] sm:$0xff] %vm4994, %v4993
  %s4997 = scalar_lea.vmem %s0, 28
  %v4998 = vld [vmem:[%s4997] sm:$0x1]
  %s4999 = scalar_lea.vmem %s0, 91
  %v5000 = vld [vmem:[%s4999] sm:$0x2]
  %vm5001 = vcmask 1041409
  %v5002 = vsel %vm5001, %v5000, %v4998
  %s5003 = scalar_lea.vmem %s0, 154
  %v5004 = vld [vmem:[%s5003] sm:$0x4]
  %vm5005 = vcmask 1042434
  %v5006 = vsel %vm5005, %v5004, %v5002
  %s5007 = scalar_lea.vmem %s0, 217
  %v5008 = vld [vmem:[%s5007] sm:$0x8]
  %vm5009 = vcmask 1043459
  %v5010 = vsel %vm5009, %v5008, %v5006
  %s5011 = scalar_lea.vmem %s0, 280
  %v5012 = vld [vmem:[%s5011] sm:$0x10]
  %vm5013 = vcmask 1044484
  %v5014 = vsel %vm5013, %v5012, %v5010
  %s5015 = scalar_lea.vmem %s0, 343
  %v5016 = vld [vmem:[%s5015] sm:$0x20]
  %vm5017 = vcmask 1045509
  %v5018 = vsel %vm5017, %v5016, %v5014
  %s5019 = scalar_lea.vmem %s0, 406
  %v5020 = vld [vmem:[%s5019] sm:$0x40]
  %vm5021 = vcmask 1046534
  %v5022 = vsel %vm5021, %v5020, %v5018
  %s5023 = scalar_lea.vmem %s0, 469
  %v5024 = vld [vmem:[%s5023] sm:$0x80]
  %vm5025 = vcmask 1047559
  %v5026 = vsel %vm5025, %v5024, %v5022
  %5027 = vrot.lane.b32.xlu0 %v5026, 56
  %v5028 = vpop.permute.xlu0 %5027
  %vm5029 = vcmask 474560
  %5030 = vst.msk [vmem:[%s1] sm:$0xff] %vm5029, %v5028
  %s5031 = scalar_lea.vmem %s0, 540
  %v5032 = vld [vmem:[%s5031] sm:$0x1]
  %s5033 = scalar_lea.vmem %s0, 603
  %v5034 = vld [vmem:[%s5033] sm:$0x2]
  %vm5035 = vcmask 1041409
  %v5036 = vsel %vm5035, %v5034, %v5032
  %s5037 = scalar_lea.vmem %s0, 666
  %v5038 = vld [vmem:[%s5037] sm:$0x4]
  %vm5039 = vcmask 1042434
  %v5040 = vsel %vm5039, %v5038, %v5036
  %s5041 = scalar_lea.vmem %s0, 729
  %v5042 = vld [vmem:[%s5041] sm:$0x8]
  %vm5043 = vcmask 1043459
  %v5044 = vsel %vm5043, %v5042, %v5040
  %s5045 = scalar_lea.vmem %s0, 792
  %v5046 = vld [vmem:[%s5045] sm:$0x10]
  %vm5047 = vcmask 1044484
  %v5048 = vsel %vm5047, %v5046, %v5044
  %s5049 = scalar_lea.vmem %s0, 855
  %v5050 = vld [vmem:[%s5049] sm:$0x20]
  %vm5051 = vcmask 1045509
  %v5052 = vsel %vm5051, %v5050, %v5048
  %s5053 = scalar_lea.vmem %s0, 918
  %v5054 = vld [vmem:[%s5053] sm:$0x40]
  %vm5055 = vcmask 1046534
  %v5056 = vsel %vm5055, %v5054, %v5052
  %s5057 = scalar_lea.vmem %s0, 981
  %v5058 = vld [vmem:[%s5057] sm:$0x80]
  %vm5059 = vcmask 1047559
  %v5060 = vsel %vm5059, %v5058, %v5056
  %5061 = vrot.lane.b32.xlu0 %v5060, 56
  %v5062 = vpop.permute.xlu0 %5061
  %vm5063 = vcmask 474560
  %s5064 = scalar_lea.vmem %s1, 8
  %5065 = vst.msk [vmem:[%s5064] sm:$0xff] %vm5063, %v5062
  %s5066 = scalar_lea.vmem %s0, 1052
  %v5067 = vld [vmem:[%s5066] sm:$0x1]
  %s5068 = scalar_lea.vmem %s0, 1115
  %v5069 = vld [vmem:[%s5068] sm:$0x2]
  %vm5070 = vcmask 1041409
  %v5071 = vsel %vm5070, %v5069, %v5067
  %s5072 = scalar_lea.vmem %s0, 1178
  %v5073 = vld [vmem:[%s5072] sm:$0x4]
  %vm5074 = vcmask 1042434
  %v5075 = vsel %vm5074, %v5073, %v5071
  %s5076 = scalar_lea.vmem %s0, 1241
  %v5077 = vld [vmem:[%s5076] sm:$0x8]
  %vm5078 = vcmask 1043459
  %v5079 = vsel %vm5078, %v5077, %v5075
  %s5080 = scalar_lea.vmem %s0, 1304
  %v5081 = vld [vmem:[%s5080] sm:$0x10]
  %vm5082 = vcmask 1044484
  %v5083 = vsel %vm5082, %v5081, %v5079
  %s5084 = scalar_lea.vmem %s0, 1367
  %v5085 = vld [vmem:[%s5084] sm:$0x20]
  %vm5086 = vcmask 1045509
  %v5087 = vsel %vm5086, %v5085, %v5083
  %s5088 = scalar_lea.vmem %s0, 1430
  %v5089 = vld [vmem:[%s5088] sm:$0x40]
  %vm5090 = vcmask 1046534
  %v5091 = vsel %vm5090, %v5089, %v5087
  %s5092 = scalar_lea.vmem %s0, 1493
  %v5093 = vld [vmem:[%s5092] sm:$0x80]
  %vm5094 = vcmask 1047559
  %v5095 = vsel %vm5094, %v5093, %v5091
  %5096 = vrot.lane.b32.xlu0 %v5095, 56
  %v5097 = vpop.permute.xlu0 %5096
  %vm5098 = vcmask 474560
  %s5099 = scalar_lea.vmem %s1, 16
  %5100 = vst.msk [vmem:[%s5099] sm:$0xff] %vm5098, %v5097
  %s5101 = scalar_lea.vmem %s0, 1564
  %v5102 = vld [vmem:[%s5101] sm:$0x1]
  %s5103 = scalar_lea.vmem %s0, 1627
  %v5104 = vld [vmem:[%s5103] sm:$0x2]
  %vm5105 = vcmask 1041409
  %v5106 = vsel %vm5105, %v5104, %v5102
  %s5107 = scalar_lea.vmem %s0, 1690
  %v5108 = vld [vmem:[%s5107] sm:$0x4]
  %vm5109 = vcmask 1042434
  %v5110 = vsel %vm5109, %v5108, %v5106
  %s5111 = scalar_lea.vmem %s0, 1753
  %v5112 = vld [vmem:[%s5111] sm:$0x8]
  %vm5113 = vcmask 1043459
  %v5114 = vsel %vm5113, %v5112, %v5110
  %s5115 = scalar_lea.vmem %s0, 1816
  %v5116 = vld [vmem:[%s5115] sm:$0x10]
  %vm5117 = vcmask 1044484
  %v5118 = vsel %vm5117, %v5116, %v5114
  %s5119 = scalar_lea.vmem %s0, 1879
  %v5120 = vld [vmem:[%s5119] sm:$0x20]
  %vm5121 = vcmask 1045509
  %v5122 = vsel %vm5121, %v5120, %v5118
  %s5123 = scalar_lea.vmem %s0, 1942
  %v5124 = vld [vmem:[%s5123] sm:$0x40]
  %vm5125 = vcmask 1046534
  %v5126 = vsel %vm5125, %v5124, %v5122
  %s5127 = scalar_lea.vmem %s0, 2005
  %v5128 = vld [vmem:[%s5127] sm:$0x80]
  %vm5129 = vcmask 1047559
  %v5130 = vsel %vm5129, %v5128, %v5126
  %5131 = vrot.lane.b32.xlu0 %v5130, 56
  %v5132 = vpop.permute.xlu0 %5131
  %vm5133 = vcmask 474560
  %s5134 = scalar_lea.vmem %s1, 24
  %5135 = vst.msk [vmem:[%s5134] sm:$0xff] %vm5133, %v5132
  %s5136 = scalar_lea.vmem %s0, 27
  %v5137 = vld [vmem:[%s5136] sm:$0x1]
  %s5138 = scalar_lea.vmem %s0, 90
  %v5139 = vld [vmem:[%s5138] sm:$0x2]
  %vm5140 = vcmask 1041409
  %v5141 = vsel %vm5140, %v5139, %v5137
  %s5142 = scalar_lea.vmem %s0, 153
  %v5143 = vld [vmem:[%s5142] sm:$0x4]
  %vm5144 = vcmask 1042434
  %v5145 = vsel %vm5144, %v5143, %v5141
  %s5146 = scalar_lea.vmem %s0, 216
  %v5147 = vld [vmem:[%s5146] sm:$0x8]
  %vm5148 = vcmask 1043459
  %v5149 = vsel %vm5148, %v5147, %v5145
  %s5150 = scalar_lea.vmem %s0, 279
  %v5151 = vld [vmem:[%s5150] sm:$0x10]
  %vm5152 = vcmask 1044484
  %v5153 = vsel %vm5152, %v5151, %v5149
  %s5154 = scalar_lea.vmem %s0, 342
  %v5155 = vld [vmem:[%s5154] sm:$0x20]
  %vm5156 = vcmask 1045509
  %v5157 = vsel %vm5156, %v5155, %v5153
  %s5158 = scalar_lea.vmem %s0, 405
  %v5159 = vld [vmem:[%s5158] sm:$0x40]
  %vm5160 = vcmask 1046534
  %v5161 = vsel %vm5160, %v5159, %v5157
  %s5162 = scalar_lea.vmem %s0, 468
  %v5163 = vld [vmem:[%s5162] sm:$0x80]
  %vm5164 = vcmask 1047559
  %v5165 = vsel %vm5164, %v5163, %v5161
  %5166 = vrot.lane.b32.xlu0 %v5165, 54
  %v5167 = vpop.permute.xlu0 %5166
  %vm5168 = vcmask 458160
  %5169 = vst.msk [vmem:[%s1] sm:$0xff] %vm5168, %v5167
  %s5170 = scalar_lea.vmem %s0, 539
  %v5171 = vld [vmem:[%s5170] sm:$0x1]
  %s5172 = scalar_lea.vmem %s0, 602
  %v5173 = vld [vmem:[%s5172] sm:$0x2]
  %vm5174 = vcmask 1041409
  %v5175 = vsel %vm5174, %v5173, %v5171
  %s5176 = scalar_lea.vmem %s0, 665
  %v5177 = vld [vmem:[%s5176] sm:$0x4]
  %vm5178 = vcmask 1042434
  %v5179 = vsel %vm5178, %v5177, %v5175
  %s5180 = scalar_lea.vmem %s0, 728
  %v5181 = vld [vmem:[%s5180] sm:$0x8]
  %vm5182 = vcmask 1043459
  %v5183 = vsel %vm5182, %v5181, %v5179
  %s5184 = scalar_lea.vmem %s0, 791
  %v5185 = vld [vmem:[%s5184] sm:$0x10]
  %vm5186 = vcmask 1044484
  %v5187 = vsel %vm5186, %v5185, %v5183
  %s5188 = scalar_lea.vmem %s0, 854
  %v5189 = vld [vmem:[%s5188] sm:$0x20]
  %vm5190 = vcmask 1045509
  %v5191 = vsel %vm5190, %v5189, %v5187
  %s5192 = scalar_lea.vmem %s0, 917
  %v5193 = vld [vmem:[%s5192] sm:$0x40]
  %vm5194 = vcmask 1046534
  %v5195 = vsel %vm5194, %v5193, %v5191
  %s5196 = scalar_lea.vmem %s0, 980
  %v5197 = vld [vmem:[%s5196] sm:$0x80]
  %vm5198 = vcmask 1047559
  %v5199 = vsel %vm5198, %v5197, %v5195
  %5200 = vrot.lane.b32.xlu0 %v5199, 54
  %v5201 = vpop.permute.xlu0 %5200
  %vm5202 = vcmask 458160
  %s5203 = scalar_lea.vmem %s1, 8
  %5204 = vst.msk [vmem:[%s5203] sm:$0xff] %vm5202, %v5201
  %s5205 = scalar_lea.vmem %s0, 1051
  %v5206 = vld [vmem:[%s5205] sm:$0x1]
  %s5207 = scalar_lea.vmem %s0, 1114
  %v5208 = vld [vmem:[%s5207] sm:$0x2]
  %vm5209 = vcmask 1041409
  %v5210 = vsel %vm5209, %v5208, %v5206
  %s5211 = scalar_lea.vmem %s0, 1177
  %v5212 = vld [vmem:[%s5211] sm:$0x4]
  %vm5213 = vcmask 1042434
  %v5214 = vsel %vm5213, %v5212, %v5210
  %s5215 = scalar_lea.vmem %s0, 1240
  %v5216 = vld [vmem:[%s5215] sm:$0x8]
  %vm5217 = vcmask 1043459
  %v5218 = vsel %vm5217, %v5216, %v5214
  %s5219 = scalar_lea.vmem %s0, 1303
  %v5220 = vld [vmem:[%s5219] sm:$0x10]
  %vm5221 = vcmask 1044484
  %v5222 = vsel %vm5221, %v5220, %v5218
  %s5223 = scalar_lea.vmem %s0, 1366
  %v5224 = vld [vmem:[%s5223] sm:$0x20]
  %vm5225 = vcmask 1045509
  %v5226 = vsel %vm5225, %v5224, %v5222
  %s5227 = scalar_lea.vmem %s0, 1429
  %v5228 = vld [vmem:[%s5227] sm:$0x40]
  %vm5229 = vcmask 1046534
  %v5230 = vsel %vm5229, %v5228, %v5226
  %s5231 = scalar_lea.vmem %s0, 1492
  %v5232 = vld [vmem:[%s5231] sm:$0x80]
  %vm5233 = vcmask 1047559
  %v5234 = vsel %vm5233, %v5232, %v5230
  %5235 = vrot.lane.b32.xlu0 %v5234, 54
  %v5236 = vpop.permute.xlu0 %5235
  %vm5237 = vcmask 458160
  %s5238 = scalar_lea.vmem %s1, 16
  %5239 = vst.msk [vmem:[%s5238] sm:$0xff] %vm5237, %v5236
  %s5240 = scalar_lea.vmem %s0, 1563
  %v5241 = vld [vmem:[%s5240] sm:$0x1]
  %s5242 = scalar_lea.vmem %s0, 1626
  %v5243 = vld [vmem:[%s5242] sm:$0x2]
  %vm5244 = vcmask 1041409
  %v5245 = vsel %vm5244, %v5243, %v5241
  %s5246 = scalar_lea.vmem %s0, 1689
  %v5247 = vld [vmem:[%s5246] sm:$0x4]
  %vm5248 = vcmask 1042434
  %v5249 = vsel %vm5248, %v5247, %v5245
  %s5250 = scalar_lea.vmem %s0, 1752
  %v5251 = vld [vmem:[%s5250] sm:$0x8]
  %vm5252 = vcmask 1043459
  %v5253 = vsel %vm5252, %v5251, %v5249
  %s5254 = scalar_lea.vmem %s0, 1815
  %v5255 = vld [vmem:[%s5254] sm:$0x10]
  %vm5256 = vcmask 1044484
  %v5257 = vsel %vm5256, %v5255, %v5253
  %s5258 = scalar_lea.vmem %s0, 1878
  %v5259 = vld [vmem:[%s5258] sm:$0x20]
  %vm5260 = vcmask 1045509
  %v5261 = vsel %vm5260, %v5259, %v5257
  %s5262 = scalar_lea.vmem %s0, 1941
  %v5263 = vld [vmem:[%s5262] sm:$0x40]
  %vm5264 = vcmask 1046534
  %v5265 = vsel %vm5264, %v5263, %v5261
  %s5266 = scalar_lea.vmem %s0, 2004
  %v5267 = vld [vmem:[%s5266] sm:$0x80]
  %vm5268 = vcmask 1047559
  %v5269 = vsel %vm5268, %v5267, %v5265
  %5270 = vrot.lane.b32.xlu0 %v5269, 54
  %v5271 = vpop.permute.xlu0 %5270
  %vm5272 = vcmask 458160
  %s5273 = scalar_lea.vmem %s1, 24
  %5274 = vst.msk [vmem:[%s5273] sm:$0xff] %vm5272, %v5271
  %s5275 = scalar_lea.vmem %s0, 26
  %v5276 = vld [vmem:[%s5275] sm:$0x1]
  %s5277 = scalar_lea.vmem %s0, 89
  %v5278 = vld [vmem:[%s5277] sm:$0x2]
  %vm5279 = vcmask 1041409
  %v5280 = vsel %vm5279, %v5278, %v5276
  %s5281 = scalar_lea.vmem %s0, 152
  %v5282 = vld [vmem:[%s5281] sm:$0x4]
  %vm5283 = vcmask 1042434
  %v5284 = vsel %vm5283, %v5282, %v5280
  %s5285 = scalar_lea.vmem %s0, 215
  %v5286 = vld [vmem:[%s5285] sm:$0x8]
  %vm5287 = vcmask 1043459
  %v5288 = vsel %vm5287, %v5286, %v5284
  %s5289 = scalar_lea.vmem %s0, 278
  %v5290 = vld [vmem:[%s5289] sm:$0x10]
  %vm5291 = vcmask 1044484
  %v5292 = vsel %vm5291, %v5290, %v5288
  %s5293 = scalar_lea.vmem %s0, 341
  %v5294 = vld [vmem:[%s5293] sm:$0x20]
  %vm5295 = vcmask 1045509
  %v5296 = vsel %vm5295, %v5294, %v5292
  %s5297 = scalar_lea.vmem %s0, 404
  %v5298 = vld [vmem:[%s5297] sm:$0x40]
  %vm5299 = vcmask 1046534
  %v5300 = vsel %vm5299, %v5298, %v5296
  %s5301 = scalar_lea.vmem %s0, 467
  %v5302 = vld [vmem:[%s5301] sm:$0x80]
  %vm5303 = vcmask 1047559
  %v5304 = vsel %vm5303, %v5302, %v5300
  %5305 = vrot.lane.b32.xlu0 %v5304, 52
  %v5306 = vpop.permute.xlu0 %5305
  %vm5307 = vcmask 441760
  %5308 = vst.msk [vmem:[%s1] sm:$0xff] %vm5307, %v5306
  %s5309 = scalar_lea.vmem %s0, 538
  %v5310 = vld [vmem:[%s5309] sm:$0x1]
  %s5311 = scalar_lea.vmem %s0, 601
  %v5312 = vld [vmem:[%s5311] sm:$0x2]
  %vm5313 = vcmask 1041409
  %v5314 = vsel %vm5313, %v5312, %v5310
  %s5315 = scalar_lea.vmem %s0, 664
  %v5316 = vld [vmem:[%s5315] sm:$0x4]
  %vm5317 = vcmask 1042434
  %v5318 = vsel %vm5317, %v5316, %v5314
  %s5319 = scalar_lea.vmem %s0, 727
  %v5320 = vld [vmem:[%s5319] sm:$0x8]
  %vm5321 = vcmask 1043459
  %v5322 = vsel %vm5321, %v5320, %v5318
  %s5323 = scalar_lea.vmem %s0, 790
  %v5324 = vld [vmem:[%s5323] sm:$0x10]
  %vm5325 = vcmask 1044484
  %v5326 = vsel %vm5325, %v5324, %v5322
  %s5327 = scalar_lea.vmem %s0, 853
  %v5328 = vld [vmem:[%s5327] sm:$0x20]
  %vm5329 = vcmask 1045509
  %v5330 = vsel %vm5329, %v5328, %v5326
  %s5331 = scalar_lea.vmem %s0, 916
  %v5332 = vld [vmem:[%s5331] sm:$0x40]
  %vm5333 = vcmask 1046534
  %v5334 = vsel %vm5333, %v5332, %v5330
  %s5335 = scalar_lea.vmem %s0, 979
  %v5336 = vld [vmem:[%s5335] sm:$0x80]
  %vm5337 = vcmask 1047559
  %v5338 = vsel %vm5337, %v5336, %v5334
  %5339 = vrot.lane.b32.xlu0 %v5338, 52
  %v5340 = vpop.permute.xlu0 %5339
  %vm5341 = vcmask 441760
  %s5342 = scalar_lea.vmem %s1, 8
  %5343 = vst.msk [vmem:[%s5342] sm:$0xff] %vm5341, %v5340
  %s5344 = scalar_lea.vmem %s0, 1050
  %v5345 = vld [vmem:[%s5344] sm:$0x1]
  %s5346 = scalar_lea.vmem %s0, 1113
  %v5347 = vld [vmem:[%s5346] sm:$0x2]
  %vm5348 = vcmask 1041409
  %v5349 = vsel %vm5348, %v5347, %v5345
  %s5350 = scalar_lea.vmem %s0, 1176
  %v5351 = vld [vmem:[%s5350] sm:$0x4]
  %vm5352 = vcmask 1042434
  %v5353 = vsel %vm5352, %v5351, %v5349
  %s5354 = scalar_lea.vmem %s0, 1239
  %v5355 = vld [vmem:[%s5354] sm:$0x8]
  %vm5356 = vcmask 1043459
  %v5357 = vsel %vm5356, %v5355, %v5353
  %s5358 = scalar_lea.vmem %s0, 1302
  %v5359 = vld [vmem:[%s5358] sm:$0x10]
  %vm5360 = vcmask 1044484
  %v5361 = vsel %vm5360, %v5359, %v5357
  %s5362 = scalar_lea.vmem %s0, 1365
  %v5363 = vld [vmem:[%s5362] sm:$0x20]
  %vm5364 = vcmask 1045509
  %v5365 = vsel %vm5364, %v5363, %v5361
  %s5366 = scalar_lea.vmem %s0, 1428
  %v5367 = vld [vmem:[%s5366] sm:$0x40]
  %vm5368 = vcmask 1046534
  %v5369 = vsel %vm5368, %v5367, %v5365
  %s5370 = scalar_lea.vmem %s0, 1491
  %v5371 = vld [vmem:[%s5370] sm:$0x80]
  %vm5372 = vcmask 1047559
  %v5373 = vsel %vm5372, %v5371, %v5369
  %5374 = vrot.lane.b32.xlu0 %v5373, 52
  %v5375 = vpop.permute.xlu0 %5374
  %vm5376 = vcmask 441760
  %s5377 = scalar_lea.vmem %s1, 16
  %5378 = vst.msk [vmem:[%s5377] sm:$0xff] %vm5376, %v5375
  %s5379 = scalar_lea.vmem %s0, 1562
  %v5380 = vld [vmem:[%s5379] sm:$0x1]
  %s5381 = scalar_lea.vmem %s0, 1625
  %v5382 = vld [vmem:[%s5381] sm:$0x2]
  %vm5383 = vcmask 1041409
  %v5384 = vsel %vm5383, %v5382, %v5380
  %s5385 = scalar_lea.vmem %s0, 1688
  %v5386 = vld [vmem:[%s5385] sm:$0x4]
  %vm5387 = vcmask 1042434
  %v5388 = vsel %vm5387, %v5386, %v5384
  %s5389 = scalar_lea.vmem %s0, 1751
  %v5390 = vld [vmem:[%s5389] sm:$0x8]
  %vm5391 = vcmask 1043459
  %v5392 = vsel %vm5391, %v5390, %v5388
  %s5393 = scalar_lea.vmem %s0, 1814
  %v5394 = vld [vmem:[%s5393] sm:$0x10]
  %vm5395 = vcmask 1044484
  %v5396 = vsel %vm5395, %v5394, %v5392
  %s5397 = scalar_lea.vmem %s0, 1877
  %v5398 = vld [vmem:[%s5397] sm:$0x20]
  %vm5399 = vcmask 1045509
  %v5400 = vsel %vm5399, %v5398, %v5396
  %s5401 = scalar_lea.vmem %s0, 1940
  %v5402 = vld [vmem:[%s5401] sm:$0x40]
  %vm5403 = vcmask 1046534
  %v5404 = vsel %vm5403, %v5402, %v5400
  %s5405 = scalar_lea.vmem %s0, 2003
  %v5406 = vld [vmem:[%s5405] sm:$0x80]
  %vm5407 = vcmask 1047559
  %v5408 = vsel %vm5407, %v5406, %v5404
  %5409 = vrot.lane.b32.xlu0 %v5408, 52
  %v5410 = vpop.permute.xlu0 %5409
  %vm5411 = vcmask 441760
  %s5412 = scalar_lea.vmem %s1, 24
  %5413 = vst.msk [vmem:[%s5412] sm:$0xff] %vm5411, %v5410
  %s5414 = scalar_lea.vmem %s0, 25
  %v5415 = vld [vmem:[%s5414] sm:$0x1]
  %s5416 = scalar_lea.vmem %s0, 88
  %v5417 = vld [vmem:[%s5416] sm:$0x2]
  %vm5418 = vcmask 1041409
  %v5419 = vsel %vm5418, %v5417, %v5415
  %s5420 = scalar_lea.vmem %s0, 151
  %v5421 = vld [vmem:[%s5420] sm:$0x4]
  %vm5422 = vcmask 1042434
  %v5423 = vsel %vm5422, %v5421, %v5419
  %s5424 = scalar_lea.vmem %s0, 214
  %v5425 = vld [vmem:[%s5424] sm:$0x8]
  %vm5426 = vcmask 1043459
  %v5427 = vsel %vm5426, %v5425, %v5423
  %s5428 = scalar_lea.vmem %s0, 277
  %v5429 = vld [vmem:[%s5428] sm:$0x10]
  %vm5430 = vcmask 1044484
  %v5431 = vsel %vm5430, %v5429, %v5427
  %s5432 = scalar_lea.vmem %s0, 340
  %v5433 = vld [vmem:[%s5432] sm:$0x20]
  %vm5434 = vcmask 1045509
  %v5435 = vsel %vm5434, %v5433, %v5431
  %s5436 = scalar_lea.vmem %s0, 403
  %v5437 = vld [vmem:[%s5436] sm:$0x40]
  %vm5438 = vcmask 1046534
  %v5439 = vsel %vm5438, %v5437, %v5435
  %s5440 = scalar_lea.vmem %s0, 466
  %v5441 = vld [vmem:[%s5440] sm:$0x80]
  %vm5442 = vcmask 1047559
  %v5443 = vsel %vm5442, %v5441, %v5439
  %5444 = vrot.lane.b32.xlu0 %v5443, 50
  %v5445 = vpop.permute.xlu0 %5444
  %vm5446 = vcmask 425360
  %5447 = vst.msk [vmem:[%s1] sm:$0xff] %vm5446, %v5445
  %s5448 = scalar_lea.vmem %s0, 537
  %v5449 = vld [vmem:[%s5448] sm:$0x1]
  %s5450 = scalar_lea.vmem %s0, 600
  %v5451 = vld [vmem:[%s5450] sm:$0x2]
  %vm5452 = vcmask 1041409
  %v5453 = vsel %vm5452, %v5451, %v5449
  %s5454 = scalar_lea.vmem %s0, 663
  %v5455 = vld [vmem:[%s5454] sm:$0x4]
  %vm5456 = vcmask 1042434
  %v5457 = vsel %vm5456, %v5455, %v5453
  %s5458 = scalar_lea.vmem %s0, 726
  %v5459 = vld [vmem:[%s5458] sm:$0x8]
  %vm5460 = vcmask 1043459
  %v5461 = vsel %vm5460, %v5459, %v5457
  %s5462 = scalar_lea.vmem %s0, 789
  %v5463 = vld [vmem:[%s5462] sm:$0x10]
  %vm5464 = vcmask 1044484
  %v5465 = vsel %vm5464, %v5463, %v5461
  %s5466 = scalar_lea.vmem %s0, 852
  %v5467 = vld [vmem:[%s5466] sm:$0x20]
  %vm5468 = vcmask 1045509
  %v5469 = vsel %vm5468, %v5467, %v5465
  %s5470 = scalar_lea.vmem %s0, 915
  %v5471 = vld [vmem:[%s5470] sm:$0x40]
  %vm5472 = vcmask 1046534
  %v5473 = vsel %vm5472, %v5471, %v5469
  %s5474 = scalar_lea.vmem %s0, 978
  %v5475 = vld [vmem:[%s5474] sm:$0x80]
  %vm5476 = vcmask 1047559
  %v5477 = vsel %vm5476, %v5475, %v5473
  %5478 = vrot.lane.b32.xlu0 %v5477, 50
  %v5479 = vpop.permute.xlu0 %5478
  %vm5480 = vcmask 425360
  %s5481 = scalar_lea.vmem %s1, 8
  %5482 = vst.msk [vmem:[%s5481] sm:$0xff] %vm5480, %v5479
  %s5483 = scalar_lea.vmem %s0, 1049
  %v5484 = vld [vmem:[%s5483] sm:$0x1]
  %s5485 = scalar_lea.vmem %s0, 1112
  %v5486 = vld [vmem:[%s5485] sm:$0x2]
  %vm5487 = vcmask 1041409
  %v5488 = vsel %vm5487, %v5486, %v5484
  %s5489 = scalar_lea.vmem %s0, 1175
  %v5490 = vld [vmem:[%s5489] sm:$0x4]
  %vm5491 = vcmask 1042434
  %v5492 = vsel %vm5491, %v5490, %v5488
  %s5493 = scalar_lea.vmem %s0, 1238
  %v5494 = vld [vmem:[%s5493] sm:$0x8]
  %vm5495 = vcmask 1043459
  %v5496 = vsel %vm5495, %v5494, %v5492
  %s5497 = scalar_lea.vmem %s0, 1301
  %v5498 = vld [vmem:[%s5497] sm:$0x10]
  %vm5499 = vcmask 1044484
  %v5500 = vsel %vm5499, %v5498, %v5496
  %s5501 = scalar_lea.vmem %s0, 1364
  %v5502 = vld [vmem:[%s5501] sm:$0x20]
  %vm5503 = vcmask 1045509
  %v5504 = vsel %vm5503, %v5502, %v5500
  %s5505 = scalar_lea.vmem %s0, 1427
  %v5506 = vld [vmem:[%s5505] sm:$0x40]
  %vm5507 = vcmask 1046534
  %v5508 = vsel %vm5507, %v5506, %v5504
  %s5509 = scalar_lea.vmem %s0, 1490
  %v5510 = vld [vmem:[%s5509] sm:$0x80]
  %vm5511 = vcmask 1047559
  %v5512 = vsel %vm5511, %v5510, %v5508
  %5513 = vrot.lane.b32.xlu0 %v5512, 50
  %v5514 = vpop.permute.xlu0 %5513
  %vm5515 = vcmask 425360
  %s5516 = scalar_lea.vmem %s1, 16
  %5517 = vst.msk [vmem:[%s5516] sm:$0xff] %vm5515, %v5514
  %s5518 = scalar_lea.vmem %s0, 1561
  %v5519 = vld [vmem:[%s5518] sm:$0x1]
  %s5520 = scalar_lea.vmem %s0, 1624
  %v5521 = vld [vmem:[%s5520] sm:$0x2]
  %vm5522 = vcmask 1041409
  %v5523 = vsel %vm5522, %v5521, %v5519
  %s5524 = scalar_lea.vmem %s0, 1687
  %v5525 = vld [vmem:[%s5524] sm:$0x4]
  %vm5526 = vcmask 1042434
  %v5527 = vsel %vm5526, %v5525, %v5523
  %s5528 = scalar_lea.vmem %s0, 1750
  %v5529 = vld [vmem:[%s5528] sm:$0x8]
  %vm5530 = vcmask 1043459
  %v5531 = vsel %vm5530, %v5529, %v5527
  %s5532 = scalar_lea.vmem %s0, 1813
  %v5533 = vld [vmem:[%s5532] sm:$0x10]
  %vm5534 = vcmask 1044484
  %v5535 = vsel %vm5534, %v5533, %v5531
  %s5536 = scalar_lea.vmem %s0, 1876
  %v5537 = vld [vmem:[%s5536] sm:$0x20]
  %vm5538 = vcmask 1045509
  %v5539 = vsel %vm5538, %v5537, %v5535
  %s5540 = scalar_lea.vmem %s0, 1939
  %v5541 = vld [vmem:[%s5540] sm:$0x40]
  %vm5542 = vcmask 1046534
  %v5543 = vsel %vm5542, %v5541, %v5539
  %s5544 = scalar_lea.vmem %s0, 2002
  %v5545 = vld [vmem:[%s5544] sm:$0x80]
  %vm5546 = vcmask 1047559
  %v5547 = vsel %vm5546, %v5545, %v5543
  %5548 = vrot.lane.b32.xlu0 %v5547, 50
  %v5549 = vpop.permute.xlu0 %5548
  %vm5550 = vcmask 425360
  %s5551 = scalar_lea.vmem %s1, 24
  %5552 = vst.msk [vmem:[%s5551] sm:$0xff] %vm5550, %v5549
  %s5553 = scalar_lea.vmem %s0, 24
  %v5554 = vld [vmem:[%s5553] sm:$0x1]
  %s5555 = scalar_lea.vmem %s0, 87
  %v5556 = vld [vmem:[%s5555] sm:$0x2]
  %vm5557 = vcmask 1041409
  %v5558 = vsel %vm5557, %v5556, %v5554
  %s5559 = scalar_lea.vmem %s0, 150
  %v5560 = vld [vmem:[%s5559] sm:$0x4]
  %vm5561 = vcmask 1042434
  %v5562 = vsel %vm5561, %v5560, %v5558
  %s5563 = scalar_lea.vmem %s0, 213
  %v5564 = vld [vmem:[%s5563] sm:$0x8]
  %vm5565 = vcmask 1043459
  %v5566 = vsel %vm5565, %v5564, %v5562
  %s5567 = scalar_lea.vmem %s0, 276
  %v5568 = vld [vmem:[%s5567] sm:$0x10]
  %vm5569 = vcmask 1044484
  %v5570 = vsel %vm5569, %v5568, %v5566
  %s5571 = scalar_lea.vmem %s0, 339
  %v5572 = vld [vmem:[%s5571] sm:$0x20]
  %vm5573 = vcmask 1045509
  %v5574 = vsel %vm5573, %v5572, %v5570
  %s5575 = scalar_lea.vmem %s0, 402
  %v5576 = vld [vmem:[%s5575] sm:$0x40]
  %vm5577 = vcmask 1046534
  %v5578 = vsel %vm5577, %v5576, %v5574
  %s5579 = scalar_lea.vmem %s0, 465
  %v5580 = vld [vmem:[%s5579] sm:$0x80]
  %vm5581 = vcmask 1047559
  %v5582 = vsel %vm5581, %v5580, %v5578
  %5583 = vrot.lane.b32.xlu0 %v5582, 48
  %v5584 = vpop.permute.xlu0 %5583
  %vm5585 = vcmask 408960
  %5586 = vst.msk [vmem:[%s1] sm:$0xff] %vm5585, %v5584
  %s5587 = scalar_lea.vmem %s0, 536
  %v5588 = vld [vmem:[%s5587] sm:$0x1]
  %s5589 = scalar_lea.vmem %s0, 599
  %v5590 = vld [vmem:[%s5589] sm:$0x2]
  %vm5591 = vcmask 1041409
  %v5592 = vsel %vm5591, %v5590, %v5588
  %s5593 = scalar_lea.vmem %s0, 662
  %v5594 = vld [vmem:[%s5593] sm:$0x4]
  %vm5595 = vcmask 1042434
  %v5596 = vsel %vm5595, %v5594, %v5592
  %s5597 = scalar_lea.vmem %s0, 725
  %v5598 = vld [vmem:[%s5597] sm:$0x8]
  %vm5599 = vcmask 1043459
  %v5600 = vsel %vm5599, %v5598, %v5596
  %s5601 = scalar_lea.vmem %s0, 788
  %v5602 = vld [vmem:[%s5601] sm:$0x10]
  %vm5603 = vcmask 1044484
  %v5604 = vsel %vm5603, %v5602, %v5600
  %s5605 = scalar_lea.vmem %s0, 851
  %v5606 = vld [vmem:[%s5605] sm:$0x20]
  %vm5607 = vcmask 1045509
  %v5608 = vsel %vm5607, %v5606, %v5604
  %s5609 = scalar_lea.vmem %s0, 914
  %v5610 = vld [vmem:[%s5609] sm:$0x40]
  %vm5611 = vcmask 1046534
  %v5612 = vsel %vm5611, %v5610, %v5608
  %s5613 = scalar_lea.vmem %s0, 977
  %v5614 = vld [vmem:[%s5613] sm:$0x80]
  %vm5615 = vcmask 1047559
  %v5616 = vsel %vm5615, %v5614, %v5612
  %5617 = vrot.lane.b32.xlu0 %v5616, 48
  %v5618 = vpop.permute.xlu0 %5617
  %vm5619 = vcmask 408960
  %s5620 = scalar_lea.vmem %s1, 8
  %5621 = vst.msk [vmem:[%s5620] sm:$0xff] %vm5619, %v5618
  %s5622 = scalar_lea.vmem %s0, 1048
  %v5623 = vld [vmem:[%s5622] sm:$0x1]
  %s5624 = scalar_lea.vmem %s0, 1111
  %v5625 = vld [vmem:[%s5624] sm:$0x2]
  %vm5626 = vcmask 1041409
  %v5627 = vsel %vm5626, %v5625, %v5623
  %s5628 = scalar_lea.vmem %s0, 1174
  %v5629 = vld [vmem:[%s5628] sm:$0x4]
  %vm5630 = vcmask 1042434
  %v5631 = vsel %vm5630, %v5629, %v5627
  %s5632 = scalar_lea.vmem %s0, 1237
  %v5633 = vld [vmem:[%s5632] sm:$0x8]
  %vm5634 = vcmask 1043459
  %v5635 = vsel %vm5634, %v5633, %v5631
  %s5636 = scalar_lea.vmem %s0, 1300
  %v5637 = vld [vmem:[%s5636] sm:$0x10]
  %vm5638 = vcmask 1044484
  %v5639 = vsel %vm5638, %v5637, %v5635
  %s5640 = scalar_lea.vmem %s0, 1363
  %v5641 = vld [vmem:[%s5640] sm:$0x20]
  %vm5642 = vcmask 1045509
  %v5643 = vsel %vm5642, %v5641, %v5639
  %s5644 = scalar_lea.vmem %s0, 1426
  %v5645 = vld [vmem:[%s5644] sm:$0x40]
  %vm5646 = vcmask 1046534
  %v5647 = vsel %vm5646, %v5645, %v5643
  %s5648 = scalar_lea.vmem %s0, 1489
  %v5649 = vld [vmem:[%s5648] sm:$0x80]
  %vm5650 = vcmask 1047559
  %v5651 = vsel %vm5650, %v5649, %v5647
  %5652 = vrot.lane.b32.xlu0 %v5651, 48
  %v5653 = vpop.permute.xlu0 %5652
  %vm5654 = vcmask 408960
  %s5655 = scalar_lea.vmem %s1, 16
  %5656 = vst.msk [vmem:[%s5655] sm:$0xff] %vm5654, %v5653
  %s5657 = scalar_lea.vmem %s0, 1560
  %v5658 = vld [vmem:[%s5657] sm:$0x1]
  %s5659 = scalar_lea.vmem %s0, 1623
  %v5660 = vld [vmem:[%s5659] sm:$0x2]
  %vm5661 = vcmask 1041409
  %v5662 = vsel %vm5661, %v5660, %v5658
  %s5663 = scalar_lea.vmem %s0, 1686
  %v5664 = vld [vmem:[%s5663] sm:$0x4]
  %vm5665 = vcmask 1042434
  %v5666 = vsel %vm5665, %v5664, %v5662
  %s5667 = scalar_lea.vmem %s0, 1749
  %v5668 = vld [vmem:[%s5667] sm:$0x8]
  %vm5669 = vcmask 1043459
  %v5670 = vsel %vm5669, %v5668, %v5666
  %s5671 = scalar_lea.vmem %s0, 1812
  %v5672 = vld [vmem:[%s5671] sm:$0x10]
  %vm5673 = vcmask 1044484
  %v5674 = vsel %vm5673, %v5672, %v5670
  %s5675 = scalar_lea.vmem %s0, 1875
  %v5676 = vld [vmem:[%s5675] sm:$0x20]
  %vm5677 = vcmask 1045509
  %v5678 = vsel %vm5677, %v5676, %v5674
  %s5679 = scalar_lea.vmem %s0, 1938
  %v5680 = vld [vmem:[%s5679] sm:$0x40]
  %vm5681 = vcmask 1046534
  %v5682 = vsel %vm5681, %v5680, %v5678
  %s5683 = scalar_lea.vmem %s0, 2001
  %v5684 = vld [vmem:[%s5683] sm:$0x80]
  %vm5685 = vcmask 1047559
  %v5686 = vsel %vm5685, %v5684, %v5682
  %5687 = vrot.lane.b32.xlu0 %v5686, 48
  %v5688 = vpop.permute.xlu0 %5687
  %vm5689 = vcmask 408960
  %s5690 = scalar_lea.vmem %s1, 24
  %5691 = vst.msk [vmem:[%s5690] sm:$0xff] %vm5689, %v5688
  %s5692 = scalar_lea.vmem %s0, 23
  %v5693 = vld [vmem:[%s5692] sm:$0x1]
  %s5694 = scalar_lea.vmem %s0, 86
  %v5695 = vld [vmem:[%s5694] sm:$0x2]
  %vm5696 = vcmask 1041409
  %v5697 = vsel %vm5696, %v5695, %v5693
  %s5698 = scalar_lea.vmem %s0, 149
  %v5699 = vld [vmem:[%s5698] sm:$0x4]
  %vm5700 = vcmask 1042434
  %v5701 = vsel %vm5700, %v5699, %v5697
  %s5702 = scalar_lea.vmem %s0, 212
  %v5703 = vld [vmem:[%s5702] sm:$0x8]
  %vm5704 = vcmask 1043459
  %v5705 = vsel %vm5704, %v5703, %v5701
  %s5706 = scalar_lea.vmem %s0, 275
  %v5707 = vld [vmem:[%s5706] sm:$0x10]
  %vm5708 = vcmask 1044484
  %v5709 = vsel %vm5708, %v5707, %v5705
  %s5710 = scalar_lea.vmem %s0, 338
  %v5711 = vld [vmem:[%s5710] sm:$0x20]
  %vm5712 = vcmask 1045509
  %v5713 = vsel %vm5712, %v5711, %v5709
  %s5714 = scalar_lea.vmem %s0, 401
  %v5715 = vld [vmem:[%s5714] sm:$0x40]
  %vm5716 = vcmask 1046534
  %v5717 = vsel %vm5716, %v5715, %v5713
  %s5718 = scalar_lea.vmem %s0, 464
  %v5719 = vld [vmem:[%s5718] sm:$0x80]
  %vm5720 = vcmask 1047559
  %v5721 = vsel %vm5720, %v5719, %v5717
  %5722 = vrot.lane.b32.xlu0 %v5721, 46
  %v5723 = vpop.permute.xlu0 %5722
  %vm5724 = vcmask 392560
  %5725 = vst.msk [vmem:[%s1] sm:$0xff] %vm5724, %v5723
  %s5726 = scalar_lea.vmem %s0, 535
  %v5727 = vld [vmem:[%s5726] sm:$0x1]
  %s5728 = scalar_lea.vmem %s0, 598
  %v5729 = vld [vmem:[%s5728] sm:$0x2]
  %vm5730 = vcmask 1041409
  %v5731 = vsel %vm5730, %v5729, %v5727
  %s5732 = scalar_lea.vmem %s0, 661
  %v5733 = vld [vmem:[%s5732] sm:$0x4]
  %vm5734 = vcmask 1042434
  %v5735 = vsel %vm5734, %v5733, %v5731
  %s5736 = scalar_lea.vmem %s0, 724
  %v5737 = vld [vmem:[%s5736] sm:$0x8]
  %vm5738 = vcmask 1043459
  %v5739 = vsel %vm5738, %v5737, %v5735
  %s5740 = scalar_lea.vmem %s0, 787
  %v5741 = vld [vmem:[%s5740] sm:$0x10]
  %vm5742 = vcmask 1044484
  %v5743 = vsel %vm5742, %v5741, %v5739
  %s5744 = scalar_lea.vmem %s0, 850
  %v5745 = vld [vmem:[%s5744] sm:$0x20]
  %vm5746 = vcmask 1045509
  %v5747 = vsel %vm5746, %v5745, %v5743
  %s5748 = scalar_lea.vmem %s0, 913
  %v5749 = vld [vmem:[%s5748] sm:$0x40]
  %vm5750 = vcmask 1046534
  %v5751 = vsel %vm5750, %v5749, %v5747
  %s5752 = scalar_lea.vmem %s0, 976
  %v5753 = vld [vmem:[%s5752] sm:$0x80]
  %vm5754 = vcmask 1047559
  %v5755 = vsel %vm5754, %v5753, %v5751
  %5756 = vrot.lane.b32.xlu0 %v5755, 46
  %v5757 = vpop.permute.xlu0 %5756
  %vm5758 = vcmask 392560
  %s5759 = scalar_lea.vmem %s1, 8
  %5760 = vst.msk [vmem:[%s5759] sm:$0xff] %vm5758, %v5757
  %s5761 = scalar_lea.vmem %s0, 1047
  %v5762 = vld [vmem:[%s5761] sm:$0x1]
  %s5763 = scalar_lea.vmem %s0, 1110
  %v5764 = vld [vmem:[%s5763] sm:$0x2]
  %vm5765 = vcmask 1041409
  %v5766 = vsel %vm5765, %v5764, %v5762
  %s5767 = scalar_lea.vmem %s0, 1173
  %v5768 = vld [vmem:[%s5767] sm:$0x4]
  %vm5769 = vcmask 1042434
  %v5770 = vsel %vm5769, %v5768, %v5766
  %s5771 = scalar_lea.vmem %s0, 1236
  %v5772 = vld [vmem:[%s5771] sm:$0x8]
  %vm5773 = vcmask 1043459
  %v5774 = vsel %vm5773, %v5772, %v5770
  %s5775 = scalar_lea.vmem %s0, 1299
  %v5776 = vld [vmem:[%s5775] sm:$0x10]
  %vm5777 = vcmask 1044484
  %v5778 = vsel %vm5777, %v5776, %v5774
  %s5779 = scalar_lea.vmem %s0, 1362
  %v5780 = vld [vmem:[%s5779] sm:$0x20]
  %vm5781 = vcmask 1045509
  %v5782 = vsel %vm5781, %v5780, %v5778
  %s5783 = scalar_lea.vmem %s0, 1425
  %v5784 = vld [vmem:[%s5783] sm:$0x40]
  %vm5785 = vcmask 1046534
  %v5786 = vsel %vm5785, %v5784, %v5782
  %s5787 = scalar_lea.vmem %s0, 1488
  %v5788 = vld [vmem:[%s5787] sm:$0x80]
  %vm5789 = vcmask 1047559
  %v5790 = vsel %vm5789, %v5788, %v5786
  %5791 = vrot.lane.b32.xlu0 %v5790, 46
  %v5792 = vpop.permute.xlu0 %5791
  %vm5793 = vcmask 392560
  %s5794 = scalar_lea.vmem %s1, 16
  %5795 = vst.msk [vmem:[%s5794] sm:$0xff] %vm5793, %v5792
  %s5796 = scalar_lea.vmem %s0, 1559
  %v5797 = vld [vmem:[%s5796] sm:$0x1]
  %s5798 = scalar_lea.vmem %s0, 1622
  %v5799 = vld [vmem:[%s5798] sm:$0x2]
  %vm5800 = vcmask 1041409
  %v5801 = vsel %vm5800, %v5799, %v5797
  %s5802 = scalar_lea.vmem %s0, 1685
  %v5803 = vld [vmem:[%s5802] sm:$0x4]
  %vm5804 = vcmask 1042434
  %v5805 = vsel %vm5804, %v5803, %v5801
  %s5806 = scalar_lea.vmem %s0, 1748
  %v5807 = vld [vmem:[%s5806] sm:$0x8]
  %vm5808 = vcmask 1043459
  %v5809 = vsel %vm5808, %v5807, %v5805
  %s5810 = scalar_lea.vmem %s0, 1811
  %v5811 = vld [vmem:[%s5810] sm:$0x10]
  %vm5812 = vcmask 1044484
  %v5813 = vsel %vm5812, %v5811, %v5809
  %s5814 = scalar_lea.vmem %s0, 1874
  %v5815 = vld [vmem:[%s5814] sm:$0x20]
  %vm5816 = vcmask 1045509
  %v5817 = vsel %vm5816, %v5815, %v5813
  %s5818 = scalar_lea.vmem %s0, 1937
  %v5819 = vld [vmem:[%s5818] sm:$0x40]
  %vm5820 = vcmask 1046534
  %v5821 = vsel %vm5820, %v5819, %v5817
  %s5822 = scalar_lea.vmem %s0, 2000
  %v5823 = vld [vmem:[%s5822] sm:$0x80]
  %vm5824 = vcmask 1047559
  %v5825 = vsel %vm5824, %v5823, %v5821
  %5826 = vrot.lane.b32.xlu0 %v5825, 46
  %v5827 = vpop.permute.xlu0 %5826
  %vm5828 = vcmask 392560
  %s5829 = scalar_lea.vmem %s1, 24
  %5830 = vst.msk [vmem:[%s5829] sm:$0xff] %vm5828, %v5827
  %s5831 = scalar_lea.vmem %s0, 22
  %v5832 = vld [vmem:[%s5831] sm:$0x1]
  %s5833 = scalar_lea.vmem %s0, 85
  %v5834 = vld [vmem:[%s5833] sm:$0x2]
  %vm5835 = vcmask 1041409
  %v5836 = vsel %vm5835, %v5834, %v5832
  %s5837 = scalar_lea.vmem %s0, 148
  %v5838 = vld [vmem:[%s5837] sm:$0x4]
  %vm5839 = vcmask 1042434
  %v5840 = vsel %vm5839, %v5838, %v5836
  %s5841 = scalar_lea.vmem %s0, 211
  %v5842 = vld [vmem:[%s5841] sm:$0x8]
  %vm5843 = vcmask 1043459
  %v5844 = vsel %vm5843, %v5842, %v5840
  %s5845 = scalar_lea.vmem %s0, 274
  %v5846 = vld [vmem:[%s5845] sm:$0x10]
  %vm5847 = vcmask 1044484
  %v5848 = vsel %vm5847, %v5846, %v5844
  %s5849 = scalar_lea.vmem %s0, 337
  %v5850 = vld [vmem:[%s5849] sm:$0x20]
  %vm5851 = vcmask 1045509
  %v5852 = vsel %vm5851, %v5850, %v5848
  %s5853 = scalar_lea.vmem %s0, 400
  %v5854 = vld [vmem:[%s5853] sm:$0x40]
  %vm5855 = vcmask 1046534
  %v5856 = vsel %vm5855, %v5854, %v5852
  %s5857 = scalar_lea.vmem %s0, 463
  %v5858 = vld [vmem:[%s5857] sm:$0x80]
  %vm5859 = vcmask 1047559
  %v5860 = vsel %vm5859, %v5858, %v5856
  %5861 = vrot.lane.b32.xlu0 %v5860, 44
  %v5862 = vpop.permute.xlu0 %5861
  %vm5863 = vcmask 376160
  %5864 = vst.msk [vmem:[%s1] sm:$0xff] %vm5863, %v5862
  %s5865 = scalar_lea.vmem %s0, 534
  %v5866 = vld [vmem:[%s5865] sm:$0x1]
  %s5867 = scalar_lea.vmem %s0, 597
  %v5868 = vld [vmem:[%s5867] sm:$0x2]
  %vm5869 = vcmask 1041409
  %v5870 = vsel %vm5869, %v5868, %v5866
  %s5871 = scalar_lea.vmem %s0, 660
  %v5872 = vld [vmem:[%s5871] sm:$0x4]
  %vm5873 = vcmask 1042434
  %v5874 = vsel %vm5873, %v5872, %v5870
  %s5875 = scalar_lea.vmem %s0, 723
  %v5876 = vld [vmem:[%s5875] sm:$0x8]
  %vm5877 = vcmask 1043459
  %v5878 = vsel %vm5877, %v5876, %v5874
  %s5879 = scalar_lea.vmem %s0, 786
  %v5880 = vld [vmem:[%s5879] sm:$0x10]
  %vm5881 = vcmask 1044484
  %v5882 = vsel %vm5881, %v5880, %v5878
  %s5883 = scalar_lea.vmem %s0, 849
  %v5884 = vld [vmem:[%s5883] sm:$0x20]
  %vm5885 = vcmask 1045509
  %v5886 = vsel %vm5885, %v5884, %v5882
  %s5887 = scalar_lea.vmem %s0, 912
  %v5888 = vld [vmem:[%s5887] sm:$0x40]
  %vm5889 = vcmask 1046534
  %v5890 = vsel %vm5889, %v5888, %v5886
  %s5891 = scalar_lea.vmem %s0, 975
  %v5892 = vld [vmem:[%s5891] sm:$0x80]
  %vm5893 = vcmask 1047559
  %v5894 = vsel %vm5893, %v5892, %v5890
  %5895 = vrot.lane.b32.xlu0 %v5894, 44
  %v5896 = vpop.permute.xlu0 %5895
  %vm5897 = vcmask 376160
  %s5898 = scalar_lea.vmem %s1, 8
  %5899 = vst.msk [vmem:[%s5898] sm:$0xff] %vm5897, %v5896
  %s5900 = scalar_lea.vmem %s0, 1046
  %v5901 = vld [vmem:[%s5900] sm:$0x1]
  %s5902 = scalar_lea.vmem %s0, 1109
  %v5903 = vld [vmem:[%s5902] sm:$0x2]
  %vm5904 = vcmask 1041409
  %v5905 = vsel %vm5904, %v5903, %v5901
  %s5906 = scalar_lea.vmem %s0, 1172
  %v5907 = vld [vmem:[%s5906] sm:$0x4]
  %vm5908 = vcmask 1042434
  %v5909 = vsel %vm5908, %v5907, %v5905
  %s5910 = scalar_lea.vmem %s0, 1235
  %v5911 = vld [vmem:[%s5910] sm:$0x8]
  %vm5912 = vcmask 1043459
  %v5913 = vsel %vm5912, %v5911, %v5909
  %s5914 = scalar_lea.vmem %s0, 1298
  %v5915 = vld [vmem:[%s5914] sm:$0x10]
  %vm5916 = vcmask 1044484
  %v5917 = vsel %vm5916, %v5915, %v5913
  %s5918 = scalar_lea.vmem %s0, 1361
  %v5919 = vld [vmem:[%s5918] sm:$0x20]
  %vm5920 = vcmask 1045509
  %v5921 = vsel %vm5920, %v5919, %v5917
  %s5922 = scalar_lea.vmem %s0, 1424
  %v5923 = vld [vmem:[%s5922] sm:$0x40]
  %vm5924 = vcmask 1046534
  %v5925 = vsel %vm5924, %v5923, %v5921
  %s5926 = scalar_lea.vmem %s0, 1487
  %v5927 = vld [vmem:[%s5926] sm:$0x80]
  %vm5928 = vcmask 1047559
  %v5929 = vsel %vm5928, %v5927, %v5925
  %5930 = vrot.lane.b32.xlu0 %v5929, 44
  %v5931 = vpop.permute.xlu0 %5930
  %vm5932 = vcmask 376160
  %s5933 = scalar_lea.vmem %s1, 16
  %5934 = vst.msk [vmem:[%s5933] sm:$0xff] %vm5932, %v5931
  %s5935 = scalar_lea.vmem %s0, 1558
  %v5936 = vld [vmem:[%s5935] sm:$0x1]
  %s5937 = scalar_lea.vmem %s0, 1621
  %v5938 = vld [vmem:[%s5937] sm:$0x2]
  %vm5939 = vcmask 1041409
  %v5940 = vsel %vm5939, %v5938, %v5936
  %s5941 = scalar_lea.vmem %s0, 1684
  %v5942 = vld [vmem:[%s5941] sm:$0x4]
  %vm5943 = vcmask 1042434
  %v5944 = vsel %vm5943, %v5942, %v5940
  %s5945 = scalar_lea.vmem %s0, 1747
  %v5946 = vld [vmem:[%s5945] sm:$0x8]
  %vm5947 = vcmask 1043459
  %v5948 = vsel %vm5947, %v5946, %v5944
  %s5949 = scalar_lea.vmem %s0, 1810
  %v5950 = vld [vmem:[%s5949] sm:$0x10]
  %vm5951 = vcmask 1044484
  %v5952 = vsel %vm5951, %v5950, %v5948
  %s5953 = scalar_lea.vmem %s0, 1873
  %v5954 = vld [vmem:[%s5953] sm:$0x20]
  %vm5955 = vcmask 1045509
  %v5956 = vsel %vm5955, %v5954, %v5952
  %s5957 = scalar_lea.vmem %s0, 1936
  %v5958 = vld [vmem:[%s5957] sm:$0x40]
  %vm5959 = vcmask 1046534
  %v5960 = vsel %vm5959, %v5958, %v5956
  %s5961 = scalar_lea.vmem %s0, 1999
  %v5962 = vld [vmem:[%s5961] sm:$0x80]
  %vm5963 = vcmask 1047559
  %v5964 = vsel %vm5963, %v5962, %v5960
  %5965 = vrot.lane.b32.xlu0 %v5964, 44
  %v5966 = vpop.permute.xlu0 %5965
  %vm5967 = vcmask 376160
  %s5968 = scalar_lea.vmem %s1, 24
  %5969 = vst.msk [vmem:[%s5968] sm:$0xff] %vm5967, %v5966
  %s5970 = scalar_lea.vmem %s0, 21
  %v5971 = vld [vmem:[%s5970] sm:$0x1]
  %s5972 = scalar_lea.vmem %s0, 84
  %v5973 = vld [vmem:[%s5972] sm:$0x2]
  %vm5974 = vcmask 1041409
  %v5975 = vsel %vm5974, %v5973, %v5971
  %s5976 = scalar_lea.vmem %s0, 147
  %v5977 = vld [vmem:[%s5976] sm:$0x4]
  %vm5978 = vcmask 1042434
  %v5979 = vsel %vm5978, %v5977, %v5975
  %s5980 = scalar_lea.vmem %s0, 210
  %v5981 = vld [vmem:[%s5980] sm:$0x8]
  %vm5982 = vcmask 1043459
  %v5983 = vsel %vm5982, %v5981, %v5979
  %s5984 = scalar_lea.vmem %s0, 273
  %v5985 = vld [vmem:[%s5984] sm:$0x10]
  %vm5986 = vcmask 1044484
  %v5987 = vsel %vm5986, %v5985, %v5983
  %s5988 = scalar_lea.vmem %s0, 336
  %v5989 = vld [vmem:[%s5988] sm:$0x20]
  %vm5990 = vcmask 1045509
  %v5991 = vsel %vm5990, %v5989, %v5987
  %s5992 = scalar_lea.vmem %s0, 399
  %v5993 = vld [vmem:[%s5992] sm:$0x40]
  %vm5994 = vcmask 1046534
  %v5995 = vsel %vm5994, %v5993, %v5991
  %s5996 = scalar_lea.vmem %s0, 462
  %v5997 = vld [vmem:[%s5996] sm:$0x80]
  %vm5998 = vcmask 1047559
  %v5999 = vsel %vm5998, %v5997, %v5995
  %6000 = vrot.lane.b32.xlu0 %v5999, 42
  %v6001 = vpop.permute.xlu0 %6000
  %vm6002 = vcmask 359760
  %6003 = vst.msk [vmem:[%s1] sm:$0xff] %vm6002, %v6001
  %s6004 = scalar_lea.vmem %s0, 533
  %v6005 = vld [vmem:[%s6004] sm:$0x1]
  %s6006 = scalar_lea.vmem %s0, 596
  %v6007 = vld [vmem:[%s6006] sm:$0x2]
  %vm6008 = vcmask 1041409
  %v6009 = vsel %vm6008, %v6007, %v6005
  %s6010 = scalar_lea.vmem %s0, 659
  %v6011 = vld [vmem:[%s6010] sm:$0x4]
  %vm6012 = vcmask 1042434
  %v6013 = vsel %vm6012, %v6011, %v6009
  %s6014 = scalar_lea.vmem %s0, 722
  %v6015 = vld [vmem:[%s6014] sm:$0x8]
  %vm6016 = vcmask 1043459
  %v6017 = vsel %vm6016, %v6015, %v6013
  %s6018 = scalar_lea.vmem %s0, 785
  %v6019 = vld [vmem:[%s6018] sm:$0x10]
  %vm6020 = vcmask 1044484
  %v6021 = vsel %vm6020, %v6019, %v6017
  %s6022 = scalar_lea.vmem %s0, 848
  %v6023 = vld [vmem:[%s6022] sm:$0x20]
  %vm6024 = vcmask 1045509
  %v6025 = vsel %vm6024, %v6023, %v6021
  %s6026 = scalar_lea.vmem %s0, 911
  %v6027 = vld [vmem:[%s6026] sm:$0x40]
  %vm6028 = vcmask 1046534
  %v6029 = vsel %vm6028, %v6027, %v6025
  %s6030 = scalar_lea.vmem %s0, 974
  %v6031 = vld [vmem:[%s6030] sm:$0x80]
  %vm6032 = vcmask 1047559
  %v6033 = vsel %vm6032, %v6031, %v6029
  %6034 = vrot.lane.b32.xlu0 %v6033, 42
  %v6035 = vpop.permute.xlu0 %6034
  %vm6036 = vcmask 359760
  %s6037 = scalar_lea.vmem %s1, 8
  %6038 = vst.msk [vmem:[%s6037] sm:$0xff] %vm6036, %v6035
  %s6039 = scalar_lea.vmem %s0, 1045
  %v6040 = vld [vmem:[%s6039] sm:$0x1]
  %s6041 = scalar_lea.vmem %s0, 1108
  %v6042 = vld [vmem:[%s6041] sm:$0x2]
  %vm6043 = vcmask 1041409
  %v6044 = vsel %vm6043, %v6042, %v6040
  %s6045 = scalar_lea.vmem %s0, 1171
  %v6046 = vld [vmem:[%s6045] sm:$0x4]
  %vm6047 = vcmask 1042434
  %v6048 = vsel %vm6047, %v6046, %v6044
  %s6049 = scalar_lea.vmem %s0, 1234
  %v6050 = vld [vmem:[%s6049] sm:$0x8]
  %vm6051 = vcmask 1043459
  %v6052 = vsel %vm6051, %v6050, %v6048
  %s6053 = scalar_lea.vmem %s0, 1297
  %v6054 = vld [vmem:[%s6053] sm:$0x10]
  %vm6055 = vcmask 1044484
  %v6056 = vsel %vm6055, %v6054, %v6052
  %s6057 = scalar_lea.vmem %s0, 1360
  %v6058 = vld [vmem:[%s6057] sm:$0x20]
  %vm6059 = vcmask 1045509
  %v6060 = vsel %vm6059, %v6058, %v6056
  %s6061 = scalar_lea.vmem %s0, 1423
  %v6062 = vld [vmem:[%s6061] sm:$0x40]
  %vm6063 = vcmask 1046534
  %v6064 = vsel %vm6063, %v6062, %v6060
  %s6065 = scalar_lea.vmem %s0, 1486
  %v6066 = vld [vmem:[%s6065] sm:$0x80]
  %vm6067 = vcmask 1047559
  %v6068 = vsel %vm6067, %v6066, %v6064
  %6069 = vrot.lane.b32.xlu0 %v6068, 42
  %v6070 = vpop.permute.xlu0 %6069
  %vm6071 = vcmask 359760
  %s6072 = scalar_lea.vmem %s1, 16
  %6073 = vst.msk [vmem:[%s6072] sm:$0xff] %vm6071, %v6070
  %s6074 = scalar_lea.vmem %s0, 1557
  %v6075 = vld [vmem:[%s6074] sm:$0x1]
  %s6076 = scalar_lea.vmem %s0, 1620
  %v6077 = vld [vmem:[%s6076] sm:$0x2]
  %vm6078 = vcmask 1041409
  %v6079 = vsel %vm6078, %v6077, %v6075
  %s6080 = scalar_lea.vmem %s0, 1683
  %v6081 = vld [vmem:[%s6080] sm:$0x4]
  %vm6082 = vcmask 1042434
  %v6083 = vsel %vm6082, %v6081, %v6079
  %s6084 = scalar_lea.vmem %s0, 1746
  %v6085 = vld [vmem:[%s6084] sm:$0x8]
  %vm6086 = vcmask 1043459
  %v6087 = vsel %vm6086, %v6085, %v6083
  %s6088 = scalar_lea.vmem %s0, 1809
  %v6089 = vld [vmem:[%s6088] sm:$0x10]
  %vm6090 = vcmask 1044484
  %v6091 = vsel %vm6090, %v6089, %v6087
  %s6092 = scalar_lea.vmem %s0, 1872
  %v6093 = vld [vmem:[%s6092] sm:$0x20]
  %vm6094 = vcmask 1045509
  %v6095 = vsel %vm6094, %v6093, %v6091
  %s6096 = scalar_lea.vmem %s0, 1935
  %v6097 = vld [vmem:[%s6096] sm:$0x40]
  %vm6098 = vcmask 1046534
  %v6099 = vsel %vm6098, %v6097, %v6095
  %s6100 = scalar_lea.vmem %s0, 1998
  %v6101 = vld [vmem:[%s6100] sm:$0x80]
  %vm6102 = vcmask 1047559
  %v6103 = vsel %vm6102, %v6101, %v6099
  %6104 = vrot.lane.b32.xlu0 %v6103, 42
  %v6105 = vpop.permute.xlu0 %6104
  %vm6106 = vcmask 359760
  %s6107 = scalar_lea.vmem %s1, 24
  %6108 = vst.msk [vmem:[%s6107] sm:$0xff] %vm6106, %v6105
  %s6109 = scalar_lea.vmem %s0, 20
  %v6110 = vld [vmem:[%s6109] sm:$0x1]
  %s6111 = scalar_lea.vmem %s0, 83
  %v6112 = vld [vmem:[%s6111] sm:$0x2]
  %vm6113 = vcmask 1041409
  %v6114 = vsel %vm6113, %v6112, %v6110
  %s6115 = scalar_lea.vmem %s0, 146
  %v6116 = vld [vmem:[%s6115] sm:$0x4]
  %vm6117 = vcmask 1042434
  %v6118 = vsel %vm6117, %v6116, %v6114
  %s6119 = scalar_lea.vmem %s0, 209
  %v6120 = vld [vmem:[%s6119] sm:$0x8]
  %vm6121 = vcmask 1043459
  %v6122 = vsel %vm6121, %v6120, %v6118
  %s6123 = scalar_lea.vmem %s0, 272
  %v6124 = vld [vmem:[%s6123] sm:$0x10]
  %vm6125 = vcmask 1044484
  %v6126 = vsel %vm6125, %v6124, %v6122
  %s6127 = scalar_lea.vmem %s0, 335
  %v6128 = vld [vmem:[%s6127] sm:$0x20]
  %vm6129 = vcmask 1045509
  %v6130 = vsel %vm6129, %v6128, %v6126
  %s6131 = scalar_lea.vmem %s0, 398
  %v6132 = vld [vmem:[%s6131] sm:$0x40]
  %vm6133 = vcmask 1046534
  %v6134 = vsel %vm6133, %v6132, %v6130
  %s6135 = scalar_lea.vmem %s0, 461
  %v6136 = vld [vmem:[%s6135] sm:$0x80]
  %vm6137 = vcmask 1047559
  %v6138 = vsel %vm6137, %v6136, %v6134
  %6139 = vrot.lane.b32.xlu0 %v6138, 40
  %v6140 = vpop.permute.xlu0 %6139
  %vm6141 = vcmask 343360
  %6142 = vst.msk [vmem:[%s1] sm:$0xff] %vm6141, %v6140
  %s6143 = scalar_lea.vmem %s0, 532
  %v6144 = vld [vmem:[%s6143] sm:$0x1]
  %s6145 = scalar_lea.vmem %s0, 595
  %v6146 = vld [vmem:[%s6145] sm:$0x2]
  %vm6147 = vcmask 1041409
  %v6148 = vsel %vm6147, %v6146, %v6144
  %s6149 = scalar_lea.vmem %s0, 658
  %v6150 = vld [vmem:[%s6149] sm:$0x4]
  %vm6151 = vcmask 1042434
  %v6152 = vsel %vm6151, %v6150, %v6148
  %s6153 = scalar_lea.vmem %s0, 721
  %v6154 = vld [vmem:[%s6153] sm:$0x8]
  %vm6155 = vcmask 1043459
  %v6156 = vsel %vm6155, %v6154, %v6152
  %s6157 = scalar_lea.vmem %s0, 784
  %v6158 = vld [vmem:[%s6157] sm:$0x10]
  %vm6159 = vcmask 1044484
  %v6160 = vsel %vm6159, %v6158, %v6156
  %s6161 = scalar_lea.vmem %s0, 847
  %v6162 = vld [vmem:[%s6161] sm:$0x20]
  %vm6163 = vcmask 1045509
  %v6164 = vsel %vm6163, %v6162, %v6160
  %s6165 = scalar_lea.vmem %s0, 910
  %v6166 = vld [vmem:[%s6165] sm:$0x40]
  %vm6167 = vcmask 1046534
  %v6168 = vsel %vm6167, %v6166, %v6164
  %s6169 = scalar_lea.vmem %s0, 973
  %v6170 = vld [vmem:[%s6169] sm:$0x80]
  %vm6171 = vcmask 1047559
  %v6172 = vsel %vm6171, %v6170, %v6168
  %6173 = vrot.lane.b32.xlu0 %v6172, 40
  %v6174 = vpop.permute.xlu0 %6173
  %vm6175 = vcmask 343360
  %s6176 = scalar_lea.vmem %s1, 8
  %6177 = vst.msk [vmem:[%s6176] sm:$0xff] %vm6175, %v6174
  %s6178 = scalar_lea.vmem %s0, 1044
  %v6179 = vld [vmem:[%s6178] sm:$0x1]
  %s6180 = scalar_lea.vmem %s0, 1107
  %v6181 = vld [vmem:[%s6180] sm:$0x2]
  %vm6182 = vcmask 1041409
  %v6183 = vsel %vm6182, %v6181, %v6179
  %s6184 = scalar_lea.vmem %s0, 1170
  %v6185 = vld [vmem:[%s6184] sm:$0x4]
  %vm6186 = vcmask 1042434
  %v6187 = vsel %vm6186, %v6185, %v6183
  %s6188 = scalar_lea.vmem %s0, 1233
  %v6189 = vld [vmem:[%s6188] sm:$0x8]
  %vm6190 = vcmask 1043459
  %v6191 = vsel %vm6190, %v6189, %v6187
  %s6192 = scalar_lea.vmem %s0, 1296
  %v6193 = vld [vmem:[%s6192] sm:$0x10]
  %vm6194 = vcmask 1044484
  %v6195 = vsel %vm6194, %v6193, %v6191
  %s6196 = scalar_lea.vmem %s0, 1359
  %v6197 = vld [vmem:[%s6196] sm:$0x20]
  %vm6198 = vcmask 1045509
  %v6199 = vsel %vm6198, %v6197, %v6195
  %s6200 = scalar_lea.vmem %s0, 1422
  %v6201 = vld [vmem:[%s6200] sm:$0x40]
  %vm6202 = vcmask 1046534
  %v6203 = vsel %vm6202, %v6201, %v6199
  %s6204 = scalar_lea.vmem %s0, 1485
  %v6205 = vld [vmem:[%s6204] sm:$0x80]
  %vm6206 = vcmask 1047559
  %v6207 = vsel %vm6206, %v6205, %v6203
  %6208 = vrot.lane.b32.xlu0 %v6207, 40
  %v6209 = vpop.permute.xlu0 %6208
  %vm6210 = vcmask 343360
  %s6211 = scalar_lea.vmem %s1, 16
  %6212 = vst.msk [vmem:[%s6211] sm:$0xff] %vm6210, %v6209
  %s6213 = scalar_lea.vmem %s0, 1556
  %v6214 = vld [vmem:[%s6213] sm:$0x1]
  %s6215 = scalar_lea.vmem %s0, 1619
  %v6216 = vld [vmem:[%s6215] sm:$0x2]
  %vm6217 = vcmask 1041409
  %v6218 = vsel %vm6217, %v6216, %v6214
  %s6219 = scalar_lea.vmem %s0, 1682
  %v6220 = vld [vmem:[%s6219] sm:$0x4]
  %vm6221 = vcmask 1042434
  %v6222 = vsel %vm6221, %v6220, %v6218
  %s6223 = scalar_lea.vmem %s0, 1745
  %v6224 = vld [vmem:[%s6223] sm:$0x8]
  %vm6225 = vcmask 1043459
  %v6226 = vsel %vm6225, %v6224, %v6222
  %s6227 = scalar_lea.vmem %s0, 1808
  %v6228 = vld [vmem:[%s6227] sm:$0x10]
  %vm6229 = vcmask 1044484
  %v6230 = vsel %vm6229, %v6228, %v6226
  %s6231 = scalar_lea.vmem %s0, 1871
  %v6232 = vld [vmem:[%s6231] sm:$0x20]
  %vm6233 = vcmask 1045509
  %v6234 = vsel %vm6233, %v6232, %v6230
  %s6235 = scalar_lea.vmem %s0, 1934
  %v6236 = vld [vmem:[%s6235] sm:$0x40]
  %vm6237 = vcmask 1046534
  %v6238 = vsel %vm6237, %v6236, %v6234
  %s6239 = scalar_lea.vmem %s0, 1997
  %v6240 = vld [vmem:[%s6239] sm:$0x80]
  %vm6241 = vcmask 1047559
  %v6242 = vsel %vm6241, %v6240, %v6238
  %6243 = vrot.lane.b32.xlu0 %v6242, 40
  %v6244 = vpop.permute.xlu0 %6243
  %vm6245 = vcmask 343360
  %s6246 = scalar_lea.vmem %s1, 24
  %6247 = vst.msk [vmem:[%s6246] sm:$0xff] %vm6245, %v6244
  %s6248 = scalar_lea.vmem %s0, 19
  %v6249 = vld [vmem:[%s6248] sm:$0x1]
  %s6250 = scalar_lea.vmem %s0, 82
  %v6251 = vld [vmem:[%s6250] sm:$0x2]
  %vm6252 = vcmask 1041409
  %v6253 = vsel %vm6252, %v6251, %v6249
  %s6254 = scalar_lea.vmem %s0, 145
  %v6255 = vld [vmem:[%s6254] sm:$0x4]
  %vm6256 = vcmask 1042434
  %v6257 = vsel %vm6256, %v6255, %v6253
  %s6258 = scalar_lea.vmem %s0, 208
  %v6259 = vld [vmem:[%s6258] sm:$0x8]
  %vm6260 = vcmask 1043459
  %v6261 = vsel %vm6260, %v6259, %v6257
  %s6262 = scalar_lea.vmem %s0, 271
  %v6263 = vld [vmem:[%s6262] sm:$0x10]
  %vm6264 = vcmask 1044484
  %v6265 = vsel %vm6264, %v6263, %v6261
  %s6266 = scalar_lea.vmem %s0, 334
  %v6267 = vld [vmem:[%s6266] sm:$0x20]
  %vm6268 = vcmask 1045509
  %v6269 = vsel %vm6268, %v6267, %v6265
  %s6270 = scalar_lea.vmem %s0, 397
  %v6271 = vld [vmem:[%s6270] sm:$0x40]
  %vm6272 = vcmask 1046534
  %v6273 = vsel %vm6272, %v6271, %v6269
  %s6274 = scalar_lea.vmem %s0, 460
  %v6275 = vld [vmem:[%s6274] sm:$0x80]
  %vm6276 = vcmask 1047559
  %v6277 = vsel %vm6276, %v6275, %v6273
  %6278 = vrot.lane.b32.xlu0 %v6277, 38
  %v6279 = vpop.permute.xlu0 %6278
  %vm6280 = vcmask 326960
  %6281 = vst.msk [vmem:[%s1] sm:$0xff] %vm6280, %v6279
  %s6282 = scalar_lea.vmem %s0, 531
  %v6283 = vld [vmem:[%s6282] sm:$0x1]
  %s6284 = scalar_lea.vmem %s0, 594
  %v6285 = vld [vmem:[%s6284] sm:$0x2]
  %vm6286 = vcmask 1041409
  %v6287 = vsel %vm6286, %v6285, %v6283
  %s6288 = scalar_lea.vmem %s0, 657
  %v6289 = vld [vmem:[%s6288] sm:$0x4]
  %vm6290 = vcmask 1042434
  %v6291 = vsel %vm6290, %v6289, %v6287
  %s6292 = scalar_lea.vmem %s0, 720
  %v6293 = vld [vmem:[%s6292] sm:$0x8]
  %vm6294 = vcmask 1043459
  %v6295 = vsel %vm6294, %v6293, %v6291
  %s6296 = scalar_lea.vmem %s0, 783
  %v6297 = vld [vmem:[%s6296] sm:$0x10]
  %vm6298 = vcmask 1044484
  %v6299 = vsel %vm6298, %v6297, %v6295
  %s6300 = scalar_lea.vmem %s0, 846
  %v6301 = vld [vmem:[%s6300] sm:$0x20]
  %vm6302 = vcmask 1045509
  %v6303 = vsel %vm6302, %v6301, %v6299
  %s6304 = scalar_lea.vmem %s0, 909
  %v6305 = vld [vmem:[%s6304] sm:$0x40]
  %vm6306 = vcmask 1046534
  %v6307 = vsel %vm6306, %v6305, %v6303
  %s6308 = scalar_lea.vmem %s0, 972
  %v6309 = vld [vmem:[%s6308] sm:$0x80]
  %vm6310 = vcmask 1047559
  %v6311 = vsel %vm6310, %v6309, %v6307
  %6312 = vrot.lane.b32.xlu0 %v6311, 38
  %v6313 = vpop.permute.xlu0 %6312
  %vm6314 = vcmask 326960
  %s6315 = scalar_lea.vmem %s1, 8
  %6316 = vst.msk [vmem:[%s6315] sm:$0xff] %vm6314, %v6313
  %s6317 = scalar_lea.vmem %s0, 1043
  %v6318 = vld [vmem:[%s6317] sm:$0x1]
  %s6319 = scalar_lea.vmem %s0, 1106
  %v6320 = vld [vmem:[%s6319] sm:$0x2]
  %vm6321 = vcmask 1041409
  %v6322 = vsel %vm6321, %v6320, %v6318
  %s6323 = scalar_lea.vmem %s0, 1169
  %v6324 = vld [vmem:[%s6323] sm:$0x4]
  %vm6325 = vcmask 1042434
  %v6326 = vsel %vm6325, %v6324, %v6322
  %s6327 = scalar_lea.vmem %s0, 1232
  %v6328 = vld [vmem:[%s6327] sm:$0x8]
  %vm6329 = vcmask 1043459
  %v6330 = vsel %vm6329, %v6328, %v6326
  %s6331 = scalar_lea.vmem %s0, 1295
  %v6332 = vld [vmem:[%s6331] sm:$0x10]
  %vm6333 = vcmask 1044484
  %v6334 = vsel %vm6333, %v6332, %v6330
  %s6335 = scalar_lea.vmem %s0, 1358
  %v6336 = vld [vmem:[%s6335] sm:$0x20]
  %vm6337 = vcmask 1045509
  %v6338 = vsel %vm6337, %v6336, %v6334
  %s6339 = scalar_lea.vmem %s0, 1421
  %v6340 = vld [vmem:[%s6339] sm:$0x40]
  %vm6341 = vcmask 1046534
  %v6342 = vsel %vm6341, %v6340, %v6338
  %s6343 = scalar_lea.vmem %s0, 1484
  %v6344 = vld [vmem:[%s6343] sm:$0x80]
  %vm6345 = vcmask 1047559
  %v6346 = vsel %vm6345, %v6344, %v6342
  %6347 = vrot.lane.b32.xlu0 %v6346, 38
  %v6348 = vpop.permute.xlu0 %6347
  %vm6349 = vcmask 326960
  %s6350 = scalar_lea.vmem %s1, 16
  %6351 = vst.msk [vmem:[%s6350] sm:$0xff] %vm6349, %v6348
  %s6352 = scalar_lea.vmem %s0, 1555
  %v6353 = vld [vmem:[%s6352] sm:$0x1]
  %s6354 = scalar_lea.vmem %s0, 1618
  %v6355 = vld [vmem:[%s6354] sm:$0x2]
  %vm6356 = vcmask 1041409
  %v6357 = vsel %vm6356, %v6355, %v6353
  %s6358 = scalar_lea.vmem %s0, 1681
  %v6359 = vld [vmem:[%s6358] sm:$0x4]
  %vm6360 = vcmask 1042434
  %v6361 = vsel %vm6360, %v6359, %v6357
  %s6362 = scalar_lea.vmem %s0, 1744
  %v6363 = vld [vmem:[%s6362] sm:$0x8]
  %vm6364 = vcmask 1043459
  %v6365 = vsel %vm6364, %v6363, %v6361
  %s6366 = scalar_lea.vmem %s0, 1807
  %v6367 = vld [vmem:[%s6366] sm:$0x10]
  %vm6368 = vcmask 1044484
  %v6369 = vsel %vm6368, %v6367, %v6365
  %s6370 = scalar_lea.vmem %s0, 1870
  %v6371 = vld [vmem:[%s6370] sm:$0x20]
  %vm6372 = vcmask 1045509
  %v6373 = vsel %vm6372, %v6371, %v6369
  %s6374 = scalar_lea.vmem %s0, 1933
  %v6375 = vld [vmem:[%s6374] sm:$0x40]
  %vm6376 = vcmask 1046534
  %v6377 = vsel %vm6376, %v6375, %v6373
  %s6378 = scalar_lea.vmem %s0, 1996
  %v6379 = vld [vmem:[%s6378] sm:$0x80]
  %vm6380 = vcmask 1047559
  %v6381 = vsel %vm6380, %v6379, %v6377
  %6382 = vrot.lane.b32.xlu0 %v6381, 38
  %v6383 = vpop.permute.xlu0 %6382
  %vm6384 = vcmask 326960
  %s6385 = scalar_lea.vmem %s1, 24
  %6386 = vst.msk [vmem:[%s6385] sm:$0xff] %vm6384, %v6383
  %s6387 = scalar_lea.vmem %s0, 18
  %v6388 = vld [vmem:[%s6387] sm:$0x1]
  %s6389 = scalar_lea.vmem %s0, 81
  %v6390 = vld [vmem:[%s6389] sm:$0x2]
  %vm6391 = vcmask 1041409
  %v6392 = vsel %vm6391, %v6390, %v6388
  %s6393 = scalar_lea.vmem %s0, 144
  %v6394 = vld [vmem:[%s6393] sm:$0x4]
  %vm6395 = vcmask 1042434
  %v6396 = vsel %vm6395, %v6394, %v6392
  %s6397 = scalar_lea.vmem %s0, 207
  %v6398 = vld [vmem:[%s6397] sm:$0x8]
  %vm6399 = vcmask 1043459
  %v6400 = vsel %vm6399, %v6398, %v6396
  %s6401 = scalar_lea.vmem %s0, 270
  %v6402 = vld [vmem:[%s6401] sm:$0x10]
  %vm6403 = vcmask 1044484
  %v6404 = vsel %vm6403, %v6402, %v6400
  %s6405 = scalar_lea.vmem %s0, 333
  %v6406 = vld [vmem:[%s6405] sm:$0x20]
  %vm6407 = vcmask 1045509
  %v6408 = vsel %vm6407, %v6406, %v6404
  %s6409 = scalar_lea.vmem %s0, 396
  %v6410 = vld [vmem:[%s6409] sm:$0x40]
  %vm6411 = vcmask 1046534
  %v6412 = vsel %vm6411, %v6410, %v6408
  %s6413 = scalar_lea.vmem %s0, 459
  %v6414 = vld [vmem:[%s6413] sm:$0x80]
  %vm6415 = vcmask 1047559
  %v6416 = vsel %vm6415, %v6414, %v6412
  %6417 = vrot.lane.b32.xlu0 %v6416, 36
  %v6418 = vpop.permute.xlu0 %6417
  %vm6419 = vcmask 310560
  %6420 = vst.msk [vmem:[%s1] sm:$0xff] %vm6419, %v6418
  %s6421 = scalar_lea.vmem %s0, 530
  %v6422 = vld [vmem:[%s6421] sm:$0x1]
  %s6423 = scalar_lea.vmem %s0, 593
  %v6424 = vld [vmem:[%s6423] sm:$0x2]
  %vm6425 = vcmask 1041409
  %v6426 = vsel %vm6425, %v6424, %v6422
  %s6427 = scalar_lea.vmem %s0, 656
  %v6428 = vld [vmem:[%s6427] sm:$0x4]
  %vm6429 = vcmask 1042434
  %v6430 = vsel %vm6429, %v6428, %v6426
  %s6431 = scalar_lea.vmem %s0, 719
  %v6432 = vld [vmem:[%s6431] sm:$0x8]
  %vm6433 = vcmask 1043459
  %v6434 = vsel %vm6433, %v6432, %v6430
  %s6435 = scalar_lea.vmem %s0, 782
  %v6436 = vld [vmem:[%s6435] sm:$0x10]
  %vm6437 = vcmask 1044484
  %v6438 = vsel %vm6437, %v6436, %v6434
  %s6439 = scalar_lea.vmem %s0, 845
  %v6440 = vld [vmem:[%s6439] sm:$0x20]
  %vm6441 = vcmask 1045509
  %v6442 = vsel %vm6441, %v6440, %v6438
  %s6443 = scalar_lea.vmem %s0, 908
  %v6444 = vld [vmem:[%s6443] sm:$0x40]
  %vm6445 = vcmask 1046534
  %v6446 = vsel %vm6445, %v6444, %v6442
  %s6447 = scalar_lea.vmem %s0, 971
  %v6448 = vld [vmem:[%s6447] sm:$0x80]
  %vm6449 = vcmask 1047559
  %v6450 = vsel %vm6449, %v6448, %v6446
  %6451 = vrot.lane.b32.xlu0 %v6450, 36
  %v6452 = vpop.permute.xlu0 %6451
  %vm6453 = vcmask 310560
  %s6454 = scalar_lea.vmem %s1, 8
  %6455 = vst.msk [vmem:[%s6454] sm:$0xff] %vm6453, %v6452
  %s6456 = scalar_lea.vmem %s0, 1042
  %v6457 = vld [vmem:[%s6456] sm:$0x1]
  %s6458 = scalar_lea.vmem %s0, 1105
  %v6459 = vld [vmem:[%s6458] sm:$0x2]
  %vm6460 = vcmask 1041409
  %v6461 = vsel %vm6460, %v6459, %v6457
  %s6462 = scalar_lea.vmem %s0, 1168
  %v6463 = vld [vmem:[%s6462] sm:$0x4]
  %vm6464 = vcmask 1042434
  %v6465 = vsel %vm6464, %v6463, %v6461
  %s6466 = scalar_lea.vmem %s0, 1231
  %v6467 = vld [vmem:[%s6466] sm:$0x8]
  %vm6468 = vcmask 1043459
  %v6469 = vsel %vm6468, %v6467, %v6465
  %s6470 = scalar_lea.vmem %s0, 1294
  %v6471 = vld [vmem:[%s6470] sm:$0x10]
  %vm6472 = vcmask 1044484
  %v6473 = vsel %vm6472, %v6471, %v6469
  %s6474 = scalar_lea.vmem %s0, 1357
  %v6475 = vld [vmem:[%s6474] sm:$0x20]
  %vm6476 = vcmask 1045509
  %v6477 = vsel %vm6476, %v6475, %v6473
  %s6478 = scalar_lea.vmem %s0, 1420
  %v6479 = vld [vmem:[%s6478] sm:$0x40]
  %vm6480 = vcmask 1046534
  %v6481 = vsel %vm6480, %v6479, %v6477
  %s6482 = scalar_lea.vmem %s0, 1483
  %v6483 = vld [vmem:[%s6482] sm:$0x80]
  %vm6484 = vcmask 1047559
  %v6485 = vsel %vm6484, %v6483, %v6481
  %6486 = vrot.lane.b32.xlu0 %v6485, 36
  %v6487 = vpop.permute.xlu0 %6486
  %vm6488 = vcmask 310560
  %s6489 = scalar_lea.vmem %s1, 16
  %6490 = vst.msk [vmem:[%s6489] sm:$0xff] %vm6488, %v6487
  %s6491 = scalar_lea.vmem %s0, 1554
  %v6492 = vld [vmem:[%s6491] sm:$0x1]
  %s6493 = scalar_lea.vmem %s0, 1617
  %v6494 = vld [vmem:[%s6493] sm:$0x2]
  %vm6495 = vcmask 1041409
  %v6496 = vsel %vm6495, %v6494, %v6492
  %s6497 = scalar_lea.vmem %s0, 1680
  %v6498 = vld [vmem:[%s6497] sm:$0x4]
  %vm6499 = vcmask 1042434
  %v6500 = vsel %vm6499, %v6498, %v6496
  %s6501 = scalar_lea.vmem %s0, 1743
  %v6502 = vld [vmem:[%s6501] sm:$0x8]
  %vm6503 = vcmask 1043459
  %v6504 = vsel %vm6503, %v6502, %v6500
  %s6505 = scalar_lea.vmem %s0, 1806
  %v6506 = vld [vmem:[%s6505] sm:$0x10]
  %vm6507 = vcmask 1044484
  %v6508 = vsel %vm6507, %v6506, %v6504
  %s6509 = scalar_lea.vmem %s0, 1869
  %v6510 = vld [vmem:[%s6509] sm:$0x20]
  %vm6511 = vcmask 1045509
  %v6512 = vsel %vm6511, %v6510, %v6508
  %s6513 = scalar_lea.vmem %s0, 1932
  %v6514 = vld [vmem:[%s6513] sm:$0x40]
  %vm6515 = vcmask 1046534
  %v6516 = vsel %vm6515, %v6514, %v6512
  %s6517 = scalar_lea.vmem %s0, 1995
  %v6518 = vld [vmem:[%s6517] sm:$0x80]
  %vm6519 = vcmask 1047559
  %v6520 = vsel %vm6519, %v6518, %v6516
  %6521 = vrot.lane.b32.xlu0 %v6520, 36
  %v6522 = vpop.permute.xlu0 %6521
  %vm6523 = vcmask 310560
  %s6524 = scalar_lea.vmem %s1, 24
  %6525 = vst.msk [vmem:[%s6524] sm:$0xff] %vm6523, %v6522
  %s6526 = scalar_lea.vmem %s0, 17
  %v6527 = vld [vmem:[%s6526] sm:$0x1]
  %s6528 = scalar_lea.vmem %s0, 80
  %v6529 = vld [vmem:[%s6528] sm:$0x2]
  %vm6530 = vcmask 1041409
  %v6531 = vsel %vm6530, %v6529, %v6527
  %s6532 = scalar_lea.vmem %s0, 143
  %v6533 = vld [vmem:[%s6532] sm:$0x4]
  %vm6534 = vcmask 1042434
  %v6535 = vsel %vm6534, %v6533, %v6531
  %s6536 = scalar_lea.vmem %s0, 206
  %v6537 = vld [vmem:[%s6536] sm:$0x8]
  %vm6538 = vcmask 1043459
  %v6539 = vsel %vm6538, %v6537, %v6535
  %s6540 = scalar_lea.vmem %s0, 269
  %v6541 = vld [vmem:[%s6540] sm:$0x10]
  %vm6542 = vcmask 1044484
  %v6543 = vsel %vm6542, %v6541, %v6539
  %s6544 = scalar_lea.vmem %s0, 332
  %v6545 = vld [vmem:[%s6544] sm:$0x20]
  %vm6546 = vcmask 1045509
  %v6547 = vsel %vm6546, %v6545, %v6543
  %s6548 = scalar_lea.vmem %s0, 395
  %v6549 = vld [vmem:[%s6548] sm:$0x40]
  %vm6550 = vcmask 1046534
  %v6551 = vsel %vm6550, %v6549, %v6547
  %s6552 = scalar_lea.vmem %s0, 458
  %v6553 = vld [vmem:[%s6552] sm:$0x80]
  %vm6554 = vcmask 1047559
  %v6555 = vsel %vm6554, %v6553, %v6551
  %6556 = vrot.lane.b32.xlu0 %v6555, 34
  %v6557 = vpop.permute.xlu0 %6556
  %vm6558 = vcmask 294160
  %6559 = vst.msk [vmem:[%s1] sm:$0xff] %vm6558, %v6557
  %s6560 = scalar_lea.vmem %s0, 529
  %v6561 = vld [vmem:[%s6560] sm:$0x1]
  %s6562 = scalar_lea.vmem %s0, 592
  %v6563 = vld [vmem:[%s6562] sm:$0x2]
  %vm6564 = vcmask 1041409
  %v6565 = vsel %vm6564, %v6563, %v6561
  %s6566 = scalar_lea.vmem %s0, 655
  %v6567 = vld [vmem:[%s6566] sm:$0x4]
  %vm6568 = vcmask 1042434
  %v6569 = vsel %vm6568, %v6567, %v6565
  %s6570 = scalar_lea.vmem %s0, 718
  %v6571 = vld [vmem:[%s6570] sm:$0x8]
  %vm6572 = vcmask 1043459
  %v6573 = vsel %vm6572, %v6571, %v6569
  %s6574 = scalar_lea.vmem %s0, 781
  %v6575 = vld [vmem:[%s6574] sm:$0x10]
  %vm6576 = vcmask 1044484
  %v6577 = vsel %vm6576, %v6575, %v6573
  %s6578 = scalar_lea.vmem %s0, 844
  %v6579 = vld [vmem:[%s6578] sm:$0x20]
  %vm6580 = vcmask 1045509
  %v6581 = vsel %vm6580, %v6579, %v6577
  %s6582 = scalar_lea.vmem %s0, 907
  %v6583 = vld [vmem:[%s6582] sm:$0x40]
  %vm6584 = vcmask 1046534
  %v6585 = vsel %vm6584, %v6583, %v6581
  %s6586 = scalar_lea.vmem %s0, 970
  %v6587 = vld [vmem:[%s6586] sm:$0x80]
  %vm6588 = vcmask 1047559
  %v6589 = vsel %vm6588, %v6587, %v6585
  %6590 = vrot.lane.b32.xlu0 %v6589, 34
  %v6591 = vpop.permute.xlu0 %6590
  %vm6592 = vcmask 294160
  %s6593 = scalar_lea.vmem %s1, 8
  %6594 = vst.msk [vmem:[%s6593] sm:$0xff] %vm6592, %v6591
  %s6595 = scalar_lea.vmem %s0, 1041
  %v6596 = vld [vmem:[%s6595] sm:$0x1]
  %s6597 = scalar_lea.vmem %s0, 1104
  %v6598 = vld [vmem:[%s6597] sm:$0x2]
  %vm6599 = vcmask 1041409
  %v6600 = vsel %vm6599, %v6598, %v6596
  %s6601 = scalar_lea.vmem %s0, 1167
  %v6602 = vld [vmem:[%s6601] sm:$0x4]
  %vm6603 = vcmask 1042434
  %v6604 = vsel %vm6603, %v6602, %v6600
  %s6605 = scalar_lea.vmem %s0, 1230
  %v6606 = vld [vmem:[%s6605] sm:$0x8]
  %vm6607 = vcmask 1043459
  %v6608 = vsel %vm6607, %v6606, %v6604
  %s6609 = scalar_lea.vmem %s0, 1293
  %v6610 = vld [vmem:[%s6609] sm:$0x10]
  %vm6611 = vcmask 1044484
  %v6612 = vsel %vm6611, %v6610, %v6608
  %s6613 = scalar_lea.vmem %s0, 1356
  %v6614 = vld [vmem:[%s6613] sm:$0x20]
  %vm6615 = vcmask 1045509
  %v6616 = vsel %vm6615, %v6614, %v6612
  %s6617 = scalar_lea.vmem %s0, 1419
  %v6618 = vld [vmem:[%s6617] sm:$0x40]
  %vm6619 = vcmask 1046534
  %v6620 = vsel %vm6619, %v6618, %v6616
  %s6621 = scalar_lea.vmem %s0, 1482
  %v6622 = vld [vmem:[%s6621] sm:$0x80]
  %vm6623 = vcmask 1047559
  %v6624 = vsel %vm6623, %v6622, %v6620
  %6625 = vrot.lane.b32.xlu0 %v6624, 34
  %v6626 = vpop.permute.xlu0 %6625
  %vm6627 = vcmask 294160
  %s6628 = scalar_lea.vmem %s1, 16
  %6629 = vst.msk [vmem:[%s6628] sm:$0xff] %vm6627, %v6626
  %s6630 = scalar_lea.vmem %s0, 1553
  %v6631 = vld [vmem:[%s6630] sm:$0x1]
  %s6632 = scalar_lea.vmem %s0, 1616
  %v6633 = vld [vmem:[%s6632] sm:$0x2]
  %vm6634 = vcmask 1041409
  %v6635 = vsel %vm6634, %v6633, %v6631
  %s6636 = scalar_lea.vmem %s0, 1679
  %v6637 = vld [vmem:[%s6636] sm:$0x4]
  %vm6638 = vcmask 1042434
  %v6639 = vsel %vm6638, %v6637, %v6635
  %s6640 = scalar_lea.vmem %s0, 1742
  %v6641 = vld [vmem:[%s6640] sm:$0x8]
  %vm6642 = vcmask 1043459
  %v6643 = vsel %vm6642, %v6641, %v6639
  %s6644 = scalar_lea.vmem %s0, 1805
  %v6645 = vld [vmem:[%s6644] sm:$0x10]
  %vm6646 = vcmask 1044484
  %v6647 = vsel %vm6646, %v6645, %v6643
  %s6648 = scalar_lea.vmem %s0, 1868
  %v6649 = vld [vmem:[%s6648] sm:$0x20]
  %vm6650 = vcmask 1045509
  %v6651 = vsel %vm6650, %v6649, %v6647
  %s6652 = scalar_lea.vmem %s0, 1931
  %v6653 = vld [vmem:[%s6652] sm:$0x40]
  %vm6654 = vcmask 1046534
  %v6655 = vsel %vm6654, %v6653, %v6651
  %s6656 = scalar_lea.vmem %s0, 1994
  %v6657 = vld [vmem:[%s6656] sm:$0x80]
  %vm6658 = vcmask 1047559
  %v6659 = vsel %vm6658, %v6657, %v6655
  %6660 = vrot.lane.b32.xlu0 %v6659, 34
  %v6661 = vpop.permute.xlu0 %6660
  %vm6662 = vcmask 294160
  %s6663 = scalar_lea.vmem %s1, 24
  %6664 = vst.msk [vmem:[%s6663] sm:$0xff] %vm6662, %v6661
  %s6665 = scalar_lea.vmem %s0, 16
  %v6666 = vld [vmem:[%s6665] sm:$0x1]
  %s6667 = scalar_lea.vmem %s0, 79
  %v6668 = vld [vmem:[%s6667] sm:$0x2]
  %vm6669 = vcmask 1041409
  %v6670 = vsel %vm6669, %v6668, %v6666
  %s6671 = scalar_lea.vmem %s0, 142
  %v6672 = vld [vmem:[%s6671] sm:$0x4]
  %vm6673 = vcmask 1042434
  %v6674 = vsel %vm6673, %v6672, %v6670
  %s6675 = scalar_lea.vmem %s0, 205
  %v6676 = vld [vmem:[%s6675] sm:$0x8]
  %vm6677 = vcmask 1043459
  %v6678 = vsel %vm6677, %v6676, %v6674
  %s6679 = scalar_lea.vmem %s0, 268
  %v6680 = vld [vmem:[%s6679] sm:$0x10]
  %vm6681 = vcmask 1044484
  %v6682 = vsel %vm6681, %v6680, %v6678
  %s6683 = scalar_lea.vmem %s0, 331
  %v6684 = vld [vmem:[%s6683] sm:$0x20]
  %vm6685 = vcmask 1045509
  %v6686 = vsel %vm6685, %v6684, %v6682
  %s6687 = scalar_lea.vmem %s0, 394
  %v6688 = vld [vmem:[%s6687] sm:$0x40]
  %vm6689 = vcmask 1046534
  %v6690 = vsel %vm6689, %v6688, %v6686
  %s6691 = scalar_lea.vmem %s0, 457
  %v6692 = vld [vmem:[%s6691] sm:$0x80]
  %vm6693 = vcmask 1047559
  %v6694 = vsel %vm6693, %v6692, %v6690
  %6695 = vrot.lane.b32.xlu0 %v6694, 32
  %v6696 = vpop.permute.xlu0 %6695
  %vm6697 = vcmask 277760
  %6698 = vst.msk [vmem:[%s1] sm:$0xff] %vm6697, %v6696
  %s6699 = scalar_lea.vmem %s0, 528
  %v6700 = vld [vmem:[%s6699] sm:$0x1]
  %s6701 = scalar_lea.vmem %s0, 591
  %v6702 = vld [vmem:[%s6701] sm:$0x2]
  %vm6703 = vcmask 1041409
  %v6704 = vsel %vm6703, %v6702, %v6700
  %s6705 = scalar_lea.vmem %s0, 654
  %v6706 = vld [vmem:[%s6705] sm:$0x4]
  %vm6707 = vcmask 1042434
  %v6708 = vsel %vm6707, %v6706, %v6704
  %s6709 = scalar_lea.vmem %s0, 717
  %v6710 = vld [vmem:[%s6709] sm:$0x8]
  %vm6711 = vcmask 1043459
  %v6712 = vsel %vm6711, %v6710, %v6708
  %s6713 = scalar_lea.vmem %s0, 780
  %v6714 = vld [vmem:[%s6713] sm:$0x10]
  %vm6715 = vcmask 1044484
  %v6716 = vsel %vm6715, %v6714, %v6712
  %s6717 = scalar_lea.vmem %s0, 843
  %v6718 = vld [vmem:[%s6717] sm:$0x20]
  %vm6719 = vcmask 1045509
  %v6720 = vsel %vm6719, %v6718, %v6716
  %s6721 = scalar_lea.vmem %s0, 906
  %v6722 = vld [vmem:[%s6721] sm:$0x40]
  %vm6723 = vcmask 1046534
  %v6724 = vsel %vm6723, %v6722, %v6720
  %s6725 = scalar_lea.vmem %s0, 969
  %v6726 = vld [vmem:[%s6725] sm:$0x80]
  %vm6727 = vcmask 1047559
  %v6728 = vsel %vm6727, %v6726, %v6724
  %6729 = vrot.lane.b32.xlu0 %v6728, 32
  %v6730 = vpop.permute.xlu0 %6729
  %vm6731 = vcmask 277760
  %s6732 = scalar_lea.vmem %s1, 8
  %6733 = vst.msk [vmem:[%s6732] sm:$0xff] %vm6731, %v6730
  %s6734 = scalar_lea.vmem %s0, 1040
  %v6735 = vld [vmem:[%s6734] sm:$0x1]
  %s6736 = scalar_lea.vmem %s0, 1103
  %v6737 = vld [vmem:[%s6736] sm:$0x2]
  %vm6738 = vcmask 1041409
  %v6739 = vsel %vm6738, %v6737, %v6735
  %s6740 = scalar_lea.vmem %s0, 1166
  %v6741 = vld [vmem:[%s6740] sm:$0x4]
  %vm6742 = vcmask 1042434
  %v6743 = vsel %vm6742, %v6741, %v6739
  %s6744 = scalar_lea.vmem %s0, 1229
  %v6745 = vld [vmem:[%s6744] sm:$0x8]
  %vm6746 = vcmask 1043459
  %v6747 = vsel %vm6746, %v6745, %v6743
  %s6748 = scalar_lea.vmem %s0, 1292
  %v6749 = vld [vmem:[%s6748] sm:$0x10]
  %vm6750 = vcmask 1044484
  %v6751 = vsel %vm6750, %v6749, %v6747
  %s6752 = scalar_lea.vmem %s0, 1355
  %v6753 = vld [vmem:[%s6752] sm:$0x20]
  %vm6754 = vcmask 1045509
  %v6755 = vsel %vm6754, %v6753, %v6751
  %s6756 = scalar_lea.vmem %s0, 1418
  %v6757 = vld [vmem:[%s6756] sm:$0x40]
  %vm6758 = vcmask 1046534
  %v6759 = vsel %vm6758, %v6757, %v6755
  %s6760 = scalar_lea.vmem %s0, 1481
  %v6761 = vld [vmem:[%s6760] sm:$0x80]
  %vm6762 = vcmask 1047559
  %v6763 = vsel %vm6762, %v6761, %v6759
  %6764 = vrot.lane.b32.xlu0 %v6763, 32
  %v6765 = vpop.permute.xlu0 %6764
  %vm6766 = vcmask 277760
  %s6767 = scalar_lea.vmem %s1, 16
  %6768 = vst.msk [vmem:[%s6767] sm:$0xff] %vm6766, %v6765
  %s6769 = scalar_lea.vmem %s0, 1552
  %v6770 = vld [vmem:[%s6769] sm:$0x1]
  %s6771 = scalar_lea.vmem %s0, 1615
  %v6772 = vld [vmem:[%s6771] sm:$0x2]
  %vm6773 = vcmask 1041409
  %v6774 = vsel %vm6773, %v6772, %v6770
  %s6775 = scalar_lea.vmem %s0, 1678
  %v6776 = vld [vmem:[%s6775] sm:$0x4]
  %vm6777 = vcmask 1042434
  %v6778 = vsel %vm6777, %v6776, %v6774
  %s6779 = scalar_lea.vmem %s0, 1741
  %v6780 = vld [vmem:[%s6779] sm:$0x8]
  %vm6781 = vcmask 1043459
  %v6782 = vsel %vm6781, %v6780, %v6778
  %s6783 = scalar_lea.vmem %s0, 1804
  %v6784 = vld [vmem:[%s6783] sm:$0x10]
  %vm6785 = vcmask 1044484
  %v6786 = vsel %vm6785, %v6784, %v6782
  %s6787 = scalar_lea.vmem %s0, 1867
  %v6788 = vld [vmem:[%s6787] sm:$0x20]
  %vm6789 = vcmask 1045509
  %v6790 = vsel %vm6789, %v6788, %v6786
  %s6791 = scalar_lea.vmem %s0, 1930
  %v6792 = vld [vmem:[%s6791] sm:$0x40]
  %vm6793 = vcmask 1046534
  %v6794 = vsel %vm6793, %v6792, %v6790
  %s6795 = scalar_lea.vmem %s0, 1993
  %v6796 = vld [vmem:[%s6795] sm:$0x80]
  %vm6797 = vcmask 1047559
  %v6798 = vsel %vm6797, %v6796, %v6794
  %6799 = vrot.lane.b32.xlu0 %v6798, 32
  %v6800 = vpop.permute.xlu0 %6799
  %vm6801 = vcmask 277760
  %s6802 = scalar_lea.vmem %s1, 24
  %6803 = vst.msk [vmem:[%s6802] sm:$0xff] %vm6801, %v6800
  %s6804 = scalar_lea.vmem %s0, 15
  %v6805 = vld [vmem:[%s6804] sm:$0x1]
  %s6806 = scalar_lea.vmem %s0, 78
  %v6807 = vld [vmem:[%s6806] sm:$0x2]
  %vm6808 = vcmask 1041409
  %v6809 = vsel %vm6808, %v6807, %v6805
  %s6810 = scalar_lea.vmem %s0, 141
  %v6811 = vld [vmem:[%s6810] sm:$0x4]
  %vm6812 = vcmask 1042434
  %v6813 = vsel %vm6812, %v6811, %v6809
  %s6814 = scalar_lea.vmem %s0, 204
  %v6815 = vld [vmem:[%s6814] sm:$0x8]
  %vm6816 = vcmask 1043459
  %v6817 = vsel %vm6816, %v6815, %v6813
  %s6818 = scalar_lea.vmem %s0, 267
  %v6819 = vld [vmem:[%s6818] sm:$0x10]
  %vm6820 = vcmask 1044484
  %v6821 = vsel %vm6820, %v6819, %v6817
  %s6822 = scalar_lea.vmem %s0, 330
  %v6823 = vld [vmem:[%s6822] sm:$0x20]
  %vm6824 = vcmask 1045509
  %v6825 = vsel %vm6824, %v6823, %v6821
  %s6826 = scalar_lea.vmem %s0, 393
  %v6827 = vld [vmem:[%s6826] sm:$0x40]
  %vm6828 = vcmask 1046534
  %v6829 = vsel %vm6828, %v6827, %v6825
  %s6830 = scalar_lea.vmem %s0, 456
  %v6831 = vld [vmem:[%s6830] sm:$0x80]
  %vm6832 = vcmask 1047559
  %v6833 = vsel %vm6832, %v6831, %v6829
  %6834 = vrot.lane.b32.xlu0 %v6833, 30
  %v6835 = vpop.permute.xlu0 %6834
  %vm6836 = vcmask 261360
  %6837 = vst.msk [vmem:[%s1] sm:$0xff] %vm6836, %v6835
  %s6838 = scalar_lea.vmem %s0, 527
  %v6839 = vld [vmem:[%s6838] sm:$0x1]
  %s6840 = scalar_lea.vmem %s0, 590
  %v6841 = vld [vmem:[%s6840] sm:$0x2]
  %vm6842 = vcmask 1041409
  %v6843 = vsel %vm6842, %v6841, %v6839
  %s6844 = scalar_lea.vmem %s0, 653
  %v6845 = vld [vmem:[%s6844] sm:$0x4]
  %vm6846 = vcmask 1042434
  %v6847 = vsel %vm6846, %v6845, %v6843
  %s6848 = scalar_lea.vmem %s0, 716
  %v6849 = vld [vmem:[%s6848] sm:$0x8]
  %vm6850 = vcmask 1043459
  %v6851 = vsel %vm6850, %v6849, %v6847
  %s6852 = scalar_lea.vmem %s0, 779
  %v6853 = vld [vmem:[%s6852] sm:$0x10]
  %vm6854 = vcmask 1044484
  %v6855 = vsel %vm6854, %v6853, %v6851
  %s6856 = scalar_lea.vmem %s0, 842
  %v6857 = vld [vmem:[%s6856] sm:$0x20]
  %vm6858 = vcmask 1045509
  %v6859 = vsel %vm6858, %v6857, %v6855
  %s6860 = scalar_lea.vmem %s0, 905
  %v6861 = vld [vmem:[%s6860] sm:$0x40]
  %vm6862 = vcmask 1046534
  %v6863 = vsel %vm6862, %v6861, %v6859
  %s6864 = scalar_lea.vmem %s0, 968
  %v6865 = vld [vmem:[%s6864] sm:$0x80]
  %vm6866 = vcmask 1047559
  %v6867 = vsel %vm6866, %v6865, %v6863
  %6868 = vrot.lane.b32.xlu0 %v6867, 30
  %v6869 = vpop.permute.xlu0 %6868
  %vm6870 = vcmask 261360
  %s6871 = scalar_lea.vmem %s1, 8
  %6872 = vst.msk [vmem:[%s6871] sm:$0xff] %vm6870, %v6869
  %s6873 = scalar_lea.vmem %s0, 1039
  %v6874 = vld [vmem:[%s6873] sm:$0x1]
  %s6875 = scalar_lea.vmem %s0, 1102
  %v6876 = vld [vmem:[%s6875] sm:$0x2]
  %vm6877 = vcmask 1041409
  %v6878 = vsel %vm6877, %v6876, %v6874
  %s6879 = scalar_lea.vmem %s0, 1165
  %v6880 = vld [vmem:[%s6879] sm:$0x4]
  %vm6881 = vcmask 1042434
  %v6882 = vsel %vm6881, %v6880, %v6878
  %s6883 = scalar_lea.vmem %s0, 1228
  %v6884 = vld [vmem:[%s6883] sm:$0x8]
  %vm6885 = vcmask 1043459
  %v6886 = vsel %vm6885, %v6884, %v6882
  %s6887 = scalar_lea.vmem %s0, 1291
  %v6888 = vld [vmem:[%s6887] sm:$0x10]
  %vm6889 = vcmask 1044484
  %v6890 = vsel %vm6889, %v6888, %v6886
  %s6891 = scalar_lea.vmem %s0, 1354
  %v6892 = vld [vmem:[%s6891] sm:$0x20]
  %vm6893 = vcmask 1045509
  %v6894 = vsel %vm6893, %v6892, %v6890
  %s6895 = scalar_lea.vmem %s0, 1417
  %v6896 = vld [vmem:[%s6895] sm:$0x40]
  %vm6897 = vcmask 1046534
  %v6898 = vsel %vm6897, %v6896, %v6894
  %s6899 = scalar_lea.vmem %s0, 1480
  %v6900 = vld [vmem:[%s6899] sm:$0x80]
  %vm6901 = vcmask 1047559
  %v6902 = vsel %vm6901, %v6900, %v6898
  %6903 = vrot.lane.b32.xlu0 %v6902, 30
  %v6904 = vpop.permute.xlu0 %6903
  %vm6905 = vcmask 261360
  %s6906 = scalar_lea.vmem %s1, 16
  %6907 = vst.msk [vmem:[%s6906] sm:$0xff] %vm6905, %v6904
  %s6908 = scalar_lea.vmem %s0, 1551
  %v6909 = vld [vmem:[%s6908] sm:$0x1]
  %s6910 = scalar_lea.vmem %s0, 1614
  %v6911 = vld [vmem:[%s6910] sm:$0x2]
  %vm6912 = vcmask 1041409
  %v6913 = vsel %vm6912, %v6911, %v6909
  %s6914 = scalar_lea.vmem %s0, 1677
  %v6915 = vld [vmem:[%s6914] sm:$0x4]
  %vm6916 = vcmask 1042434
  %v6917 = vsel %vm6916, %v6915, %v6913
  %s6918 = scalar_lea.vmem %s0, 1740
  %v6919 = vld [vmem:[%s6918] sm:$0x8]
  %vm6920 = vcmask 1043459
  %v6921 = vsel %vm6920, %v6919, %v6917
  %s6922 = scalar_lea.vmem %s0, 1803
  %v6923 = vld [vmem:[%s6922] sm:$0x10]
  %vm6924 = vcmask 1044484
  %v6925 = vsel %vm6924, %v6923, %v6921
  %s6926 = scalar_lea.vmem %s0, 1866
  %v6927 = vld [vmem:[%s6926] sm:$0x20]
  %vm6928 = vcmask 1045509
  %v6929 = vsel %vm6928, %v6927, %v6925
  %s6930 = scalar_lea.vmem %s0, 1929
  %v6931 = vld [vmem:[%s6930] sm:$0x40]
  %vm6932 = vcmask 1046534
  %v6933 = vsel %vm6932, %v6931, %v6929
  %s6934 = scalar_lea.vmem %s0, 1992
  %v6935 = vld [vmem:[%s6934] sm:$0x80]
  %vm6936 = vcmask 1047559
  %v6937 = vsel %vm6936, %v6935, %v6933
  %6938 = vrot.lane.b32.xlu0 %v6937, 30
  %v6939 = vpop.permute.xlu0 %6938
  %vm6940 = vcmask 261360
  %s6941 = scalar_lea.vmem %s1, 24
  %6942 = vst.msk [vmem:[%s6941] sm:$0xff] %vm6940, %v6939
  %s6943 = scalar_lea.vmem %s0, 14
  %v6944 = vld [vmem:[%s6943] sm:$0x1]
  %s6945 = scalar_lea.vmem %s0, 77
  %v6946 = vld [vmem:[%s6945] sm:$0x2]
  %vm6947 = vcmask 1041409
  %v6948 = vsel %vm6947, %v6946, %v6944
  %s6949 = scalar_lea.vmem %s0, 140
  %v6950 = vld [vmem:[%s6949] sm:$0x4]
  %vm6951 = vcmask 1042434
  %v6952 = vsel %vm6951, %v6950, %v6948
  %s6953 = scalar_lea.vmem %s0, 203
  %v6954 = vld [vmem:[%s6953] sm:$0x8]
  %vm6955 = vcmask 1043459
  %v6956 = vsel %vm6955, %v6954, %v6952
  %s6957 = scalar_lea.vmem %s0, 266
  %v6958 = vld [vmem:[%s6957] sm:$0x10]
  %vm6959 = vcmask 1044484
  %v6960 = vsel %vm6959, %v6958, %v6956
  %s6961 = scalar_lea.vmem %s0, 329
  %v6962 = vld [vmem:[%s6961] sm:$0x20]
  %vm6963 = vcmask 1045509
  %v6964 = vsel %vm6963, %v6962, %v6960
  %s6965 = scalar_lea.vmem %s0, 392
  %v6966 = vld [vmem:[%s6965] sm:$0x40]
  %vm6967 = vcmask 1046534
  %v6968 = vsel %vm6967, %v6966, %v6964
  %s6969 = scalar_lea.vmem %s0, 455
  %v6970 = vld [vmem:[%s6969] sm:$0x80]
  %vm6971 = vcmask 1047559
  %v6972 = vsel %vm6971, %v6970, %v6968
  %6973 = vrot.lane.b32.xlu0 %v6972, 28
  %v6974 = vpop.permute.xlu0 %6973
  %vm6975 = vcmask 244960
  %6976 = vst.msk [vmem:[%s1] sm:$0xff] %vm6975, %v6974
  %s6977 = scalar_lea.vmem %s0, 526
  %v6978 = vld [vmem:[%s6977] sm:$0x1]
  %s6979 = scalar_lea.vmem %s0, 589
  %v6980 = vld [vmem:[%s6979] sm:$0x2]
  %vm6981 = vcmask 1041409
  %v6982 = vsel %vm6981, %v6980, %v6978
  %s6983 = scalar_lea.vmem %s0, 652
  %v6984 = vld [vmem:[%s6983] sm:$0x4]
  %vm6985 = vcmask 1042434
  %v6986 = vsel %vm6985, %v6984, %v6982
  %s6987 = scalar_lea.vmem %s0, 715
  %v6988 = vld [vmem:[%s6987] sm:$0x8]
  %vm6989 = vcmask 1043459
  %v6990 = vsel %vm6989, %v6988, %v6986
  %s6991 = scalar_lea.vmem %s0, 778
  %v6992 = vld [vmem:[%s6991] sm:$0x10]
  %vm6993 = vcmask 1044484
  %v6994 = vsel %vm6993, %v6992, %v6990
  %s6995 = scalar_lea.vmem %s0, 841
  %v6996 = vld [vmem:[%s6995] sm:$0x20]
  %vm6997 = vcmask 1045509
  %v6998 = vsel %vm6997, %v6996, %v6994
  %s6999 = scalar_lea.vmem %s0, 904
  %v7000 = vld [vmem:[%s6999] sm:$0x40]
  %vm7001 = vcmask 1046534
  %v7002 = vsel %vm7001, %v7000, %v6998
  %s7003 = scalar_lea.vmem %s0, 967
  %v7004 = vld [vmem:[%s7003] sm:$0x80]
  %vm7005 = vcmask 1047559
  %v7006 = vsel %vm7005, %v7004, %v7002
  %7007 = vrot.lane.b32.xlu0 %v7006, 28
  %v7008 = vpop.permute.xlu0 %7007
  %vm7009 = vcmask 244960
  %s7010 = scalar_lea.vmem %s1, 8
  %7011 = vst.msk [vmem:[%s7010] sm:$0xff] %vm7009, %v7008
  %s7012 = scalar_lea.vmem %s0, 1038
  %v7013 = vld [vmem:[%s7012] sm:$0x1]
  %s7014 = scalar_lea.vmem %s0, 1101
  %v7015 = vld [vmem:[%s7014] sm:$0x2]
  %vm7016 = vcmask 1041409
  %v7017 = vsel %vm7016, %v7015, %v7013
  %s7018 = scalar_lea.vmem %s0, 1164
  %v7019 = vld [vmem:[%s7018] sm:$0x4]
  %vm7020 = vcmask 1042434
  %v7021 = vsel %vm7020, %v7019, %v7017
  %s7022 = scalar_lea.vmem %s0, 1227
  %v7023 = vld [vmem:[%s7022] sm:$0x8]
  %vm7024 = vcmask 1043459
  %v7025 = vsel %vm7024, %v7023, %v7021
  %s7026 = scalar_lea.vmem %s0, 1290
  %v7027 = vld [vmem:[%s7026] sm:$0x10]
  %vm7028 = vcmask 1044484
  %v7029 = vsel %vm7028, %v7027, %v7025
  %s7030 = scalar_lea.vmem %s0, 1353
  %v7031 = vld [vmem:[%s7030] sm:$0x20]
  %vm7032 = vcmask 1045509
  %v7033 = vsel %vm7032, %v7031, %v7029
  %s7034 = scalar_lea.vmem %s0, 1416
  %v7035 = vld [vmem:[%s7034] sm:$0x40]
  %vm7036 = vcmask 1046534
  %v7037 = vsel %vm7036, %v7035, %v7033
  %s7038 = scalar_lea.vmem %s0, 1479
  %v7039 = vld [vmem:[%s7038] sm:$0x80]
  %vm7040 = vcmask 1047559
  %v7041 = vsel %vm7040, %v7039, %v7037
  %7042 = vrot.lane.b32.xlu0 %v7041, 28
  %v7043 = vpop.permute.xlu0 %7042
  %vm7044 = vcmask 244960
  %s7045 = scalar_lea.vmem %s1, 16
  %7046 = vst.msk [vmem:[%s7045] sm:$0xff] %vm7044, %v7043
  %s7047 = scalar_lea.vmem %s0, 1550
  %v7048 = vld [vmem:[%s7047] sm:$0x1]
  %s7049 = scalar_lea.vmem %s0, 1613
  %v7050 = vld [vmem:[%s7049] sm:$0x2]
  %vm7051 = vcmask 1041409
  %v7052 = vsel %vm7051, %v7050, %v7048
  %s7053 = scalar_lea.vmem %s0, 1676
  %v7054 = vld [vmem:[%s7053] sm:$0x4]
  %vm7055 = vcmask 1042434
  %v7056 = vsel %vm7055, %v7054, %v7052
  %s7057 = scalar_lea.vmem %s0, 1739
  %v7058 = vld [vmem:[%s7057] sm:$0x8]
  %vm7059 = vcmask 1043459
  %v7060 = vsel %vm7059, %v7058, %v7056
  %s7061 = scalar_lea.vmem %s0, 1802
  %v7062 = vld [vmem:[%s7061] sm:$0x10]
  %vm7063 = vcmask 1044484
  %v7064 = vsel %vm7063, %v7062, %v7060
  %s7065 = scalar_lea.vmem %s0, 1865
  %v7066 = vld [vmem:[%s7065] sm:$0x20]
  %vm7067 = vcmask 1045509
  %v7068 = vsel %vm7067, %v7066, %v7064
  %s7069 = scalar_lea.vmem %s0, 1928
  %v7070 = vld [vmem:[%s7069] sm:$0x40]
  %vm7071 = vcmask 1046534
  %v7072 = vsel %vm7071, %v7070, %v7068
  %s7073 = scalar_lea.vmem %s0, 1991
  %v7074 = vld [vmem:[%s7073] sm:$0x80]
  %vm7075 = vcmask 1047559
  %v7076 = vsel %vm7075, %v7074, %v7072
  %7077 = vrot.lane.b32.xlu0 %v7076, 28
  %v7078 = vpop.permute.xlu0 %7077
  %vm7079 = vcmask 244960
  %s7080 = scalar_lea.vmem %s1, 24
  %7081 = vst.msk [vmem:[%s7080] sm:$0xff] %vm7079, %v7078
  %s7082 = scalar_lea.vmem %s0, 13
  %v7083 = vld [vmem:[%s7082] sm:$0x1]
  %s7084 = scalar_lea.vmem %s0, 76
  %v7085 = vld [vmem:[%s7084] sm:$0x2]
  %vm7086 = vcmask 1041409
  %v7087 = vsel %vm7086, %v7085, %v7083
  %s7088 = scalar_lea.vmem %s0, 139
  %v7089 = vld [vmem:[%s7088] sm:$0x4]
  %vm7090 = vcmask 1042434
  %v7091 = vsel %vm7090, %v7089, %v7087
  %s7092 = scalar_lea.vmem %s0, 202
  %v7093 = vld [vmem:[%s7092] sm:$0x8]
  %vm7094 = vcmask 1043459
  %v7095 = vsel %vm7094, %v7093, %v7091
  %s7096 = scalar_lea.vmem %s0, 265
  %v7097 = vld [vmem:[%s7096] sm:$0x10]
  %vm7098 = vcmask 1044484
  %v7099 = vsel %vm7098, %v7097, %v7095
  %s7100 = scalar_lea.vmem %s0, 328
  %v7101 = vld [vmem:[%s7100] sm:$0x20]
  %vm7102 = vcmask 1045509
  %v7103 = vsel %vm7102, %v7101, %v7099
  %s7104 = scalar_lea.vmem %s0, 391
  %v7105 = vld [vmem:[%s7104] sm:$0x40]
  %vm7106 = vcmask 1046534
  %v7107 = vsel %vm7106, %v7105, %v7103
  %s7108 = scalar_lea.vmem %s0, 454
  %v7109 = vld [vmem:[%s7108] sm:$0x80]
  %vm7110 = vcmask 1047559
  %v7111 = vsel %vm7110, %v7109, %v7107
  %7112 = vrot.lane.b32.xlu0 %v7111, 26
  %v7113 = vpop.permute.xlu0 %7112
  %vm7114 = vcmask 228560
  %7115 = vst.msk [vmem:[%s1] sm:$0xff] %vm7114, %v7113
  %s7116 = scalar_lea.vmem %s0, 525
  %v7117 = vld [vmem:[%s7116] sm:$0x1]
  %s7118 = scalar_lea.vmem %s0, 588
  %v7119 = vld [vmem:[%s7118] sm:$0x2]
  %vm7120 = vcmask 1041409
  %v7121 = vsel %vm7120, %v7119, %v7117
  %s7122 = scalar_lea.vmem %s0, 651
  %v7123 = vld [vmem:[%s7122] sm:$0x4]
  %vm7124 = vcmask 1042434
  %v7125 = vsel %vm7124, %v7123, %v7121
  %s7126 = scalar_lea.vmem %s0, 714
  %v7127 = vld [vmem:[%s7126] sm:$0x8]
  %vm7128 = vcmask 1043459
  %v7129 = vsel %vm7128, %v7127, %v7125
  %s7130 = scalar_lea.vmem %s0, 777
  %v7131 = vld [vmem:[%s7130] sm:$0x10]
  %vm7132 = vcmask 1044484
  %v7133 = vsel %vm7132, %v7131, %v7129
  %s7134 = scalar_lea.vmem %s0, 840
  %v7135 = vld [vmem:[%s7134] sm:$0x20]
  %vm7136 = vcmask 1045509
  %v7137 = vsel %vm7136, %v7135, %v7133
  %s7138 = scalar_lea.vmem %s0, 903
  %v7139 = vld [vmem:[%s7138] sm:$0x40]
  %vm7140 = vcmask 1046534
  %v7141 = vsel %vm7140, %v7139, %v7137
  %s7142 = scalar_lea.vmem %s0, 966
  %v7143 = vld [vmem:[%s7142] sm:$0x80]
  %vm7144 = vcmask 1047559
  %v7145 = vsel %vm7144, %v7143, %v7141
  %7146 = vrot.lane.b32.xlu0 %v7145, 26
  %v7147 = vpop.permute.xlu0 %7146
  %vm7148 = vcmask 228560
  %s7149 = scalar_lea.vmem %s1, 8
  %7150 = vst.msk [vmem:[%s7149] sm:$0xff] %vm7148, %v7147
  %s7151 = scalar_lea.vmem %s0, 1037
  %v7152 = vld [vmem:[%s7151] sm:$0x1]
  %s7153 = scalar_lea.vmem %s0, 1100
  %v7154 = vld [vmem:[%s7153] sm:$0x2]
  %vm7155 = vcmask 1041409
  %v7156 = vsel %vm7155, %v7154, %v7152
  %s7157 = scalar_lea.vmem %s0, 1163
  %v7158 = vld [vmem:[%s7157] sm:$0x4]
  %vm7159 = vcmask 1042434
  %v7160 = vsel %vm7159, %v7158, %v7156
  %s7161 = scalar_lea.vmem %s0, 1226
  %v7162 = vld [vmem:[%s7161] sm:$0x8]
  %vm7163 = vcmask 1043459
  %v7164 = vsel %vm7163, %v7162, %v7160
  %s7165 = scalar_lea.vmem %s0, 1289
  %v7166 = vld [vmem:[%s7165] sm:$0x10]
  %vm7167 = vcmask 1044484
  %v7168 = vsel %vm7167, %v7166, %v7164
  %s7169 = scalar_lea.vmem %s0, 1352
  %v7170 = vld [vmem:[%s7169] sm:$0x20]
  %vm7171 = vcmask 1045509
  %v7172 = vsel %vm7171, %v7170, %v7168
  %s7173 = scalar_lea.vmem %s0, 1415
  %v7174 = vld [vmem:[%s7173] sm:$0x40]
  %vm7175 = vcmask 1046534
  %v7176 = vsel %vm7175, %v7174, %v7172
  %s7177 = scalar_lea.vmem %s0, 1478
  %v7178 = vld [vmem:[%s7177] sm:$0x80]
  %vm7179 = vcmask 1047559
  %v7180 = vsel %vm7179, %v7178, %v7176
  %7181 = vrot.lane.b32.xlu0 %v7180, 26
  %v7182 = vpop.permute.xlu0 %7181
  %vm7183 = vcmask 228560
  %s7184 = scalar_lea.vmem %s1, 16
  %7185 = vst.msk [vmem:[%s7184] sm:$0xff] %vm7183, %v7182
  %s7186 = scalar_lea.vmem %s0, 1549
  %v7187 = vld [vmem:[%s7186] sm:$0x1]
  %s7188 = scalar_lea.vmem %s0, 1612
  %v7189 = vld [vmem:[%s7188] sm:$0x2]
  %vm7190 = vcmask 1041409
  %v7191 = vsel %vm7190, %v7189, %v7187
  %s7192 = scalar_lea.vmem %s0, 1675
  %v7193 = vld [vmem:[%s7192] sm:$0x4]
  %vm7194 = vcmask 1042434
  %v7195 = vsel %vm7194, %v7193, %v7191
  %s7196 = scalar_lea.vmem %s0, 1738
  %v7197 = vld [vmem:[%s7196] sm:$0x8]
  %vm7198 = vcmask 1043459
  %v7199 = vsel %vm7198, %v7197, %v7195
  %s7200 = scalar_lea.vmem %s0, 1801
  %v7201 = vld [vmem:[%s7200] sm:$0x10]
  %vm7202 = vcmask 1044484
  %v7203 = vsel %vm7202, %v7201, %v7199
  %s7204 = scalar_lea.vmem %s0, 1864
  %v7205 = vld [vmem:[%s7204] sm:$0x20]
  %vm7206 = vcmask 1045509
  %v7207 = vsel %vm7206, %v7205, %v7203
  %s7208 = scalar_lea.vmem %s0, 1927
  %v7209 = vld [vmem:[%s7208] sm:$0x40]
  %vm7210 = vcmask 1046534
  %v7211 = vsel %vm7210, %v7209, %v7207
  %s7212 = scalar_lea.vmem %s0, 1990
  %v7213 = vld [vmem:[%s7212] sm:$0x80]
  %vm7214 = vcmask 1047559
  %v7215 = vsel %vm7214, %v7213, %v7211
  %7216 = vrot.lane.b32.xlu0 %v7215, 26
  %v7217 = vpop.permute.xlu0 %7216
  %vm7218 = vcmask 228560
  %s7219 = scalar_lea.vmem %s1, 24
  %7220 = vst.msk [vmem:[%s7219] sm:$0xff] %vm7218, %v7217
  %s7221 = scalar_lea.vmem %s0, 12
  %v7222 = vld [vmem:[%s7221] sm:$0x1]
  %s7223 = scalar_lea.vmem %s0, 75
  %v7224 = vld [vmem:[%s7223] sm:$0x2]
  %vm7225 = vcmask 1041409
  %v7226 = vsel %vm7225, %v7224, %v7222
  %s7227 = scalar_lea.vmem %s0, 138
  %v7228 = vld [vmem:[%s7227] sm:$0x4]
  %vm7229 = vcmask 1042434
  %v7230 = vsel %vm7229, %v7228, %v7226
  %s7231 = scalar_lea.vmem %s0, 201
  %v7232 = vld [vmem:[%s7231] sm:$0x8]
  %vm7233 = vcmask 1043459
  %v7234 = vsel %vm7233, %v7232, %v7230
  %s7235 = scalar_lea.vmem %s0, 264
  %v7236 = vld [vmem:[%s7235] sm:$0x10]
  %vm7237 = vcmask 1044484
  %v7238 = vsel %vm7237, %v7236, %v7234
  %s7239 = scalar_lea.vmem %s0, 327
  %v7240 = vld [vmem:[%s7239] sm:$0x20]
  %vm7241 = vcmask 1045509
  %v7242 = vsel %vm7241, %v7240, %v7238
  %s7243 = scalar_lea.vmem %s0, 390
  %v7244 = vld [vmem:[%s7243] sm:$0x40]
  %vm7245 = vcmask 1046534
  %v7246 = vsel %vm7245, %v7244, %v7242
  %s7247 = scalar_lea.vmem %s0, 453
  %v7248 = vld [vmem:[%s7247] sm:$0x80]
  %vm7249 = vcmask 1047559
  %v7250 = vsel %vm7249, %v7248, %v7246
  %7251 = vrot.lane.b32.xlu0 %v7250, 24
  %v7252 = vpop.permute.xlu0 %7251
  %vm7253 = vcmask 212160
  %7254 = vst.msk [vmem:[%s1] sm:$0xff] %vm7253, %v7252
  %s7255 = scalar_lea.vmem %s0, 524
  %v7256 = vld [vmem:[%s7255] sm:$0x1]
  %s7257 = scalar_lea.vmem %s0, 587
  %v7258 = vld [vmem:[%s7257] sm:$0x2]
  %vm7259 = vcmask 1041409
  %v7260 = vsel %vm7259, %v7258, %v7256
  %s7261 = scalar_lea.vmem %s0, 650
  %v7262 = vld [vmem:[%s7261] sm:$0x4]
  %vm7263 = vcmask 1042434
  %v7264 = vsel %vm7263, %v7262, %v7260
  %s7265 = scalar_lea.vmem %s0, 713
  %v7266 = vld [vmem:[%s7265] sm:$0x8]
  %vm7267 = vcmask 1043459
  %v7268 = vsel %vm7267, %v7266, %v7264
  %s7269 = scalar_lea.vmem %s0, 776
  %v7270 = vld [vmem:[%s7269] sm:$0x10]
  %vm7271 = vcmask 1044484
  %v7272 = vsel %vm7271, %v7270, %v7268
  %s7273 = scalar_lea.vmem %s0, 839
  %v7274 = vld [vmem:[%s7273] sm:$0x20]
  %vm7275 = vcmask 1045509
  %v7276 = vsel %vm7275, %v7274, %v7272
  %s7277 = scalar_lea.vmem %s0, 902
  %v7278 = vld [vmem:[%s7277] sm:$0x40]
  %vm7279 = vcmask 1046534
  %v7280 = vsel %vm7279, %v7278, %v7276
  %s7281 = scalar_lea.vmem %s0, 965
  %v7282 = vld [vmem:[%s7281] sm:$0x80]
  %vm7283 = vcmask 1047559
  %v7284 = vsel %vm7283, %v7282, %v7280
  %7285 = vrot.lane.b32.xlu0 %v7284, 24
  %v7286 = vpop.permute.xlu0 %7285
  %vm7287 = vcmask 212160
  %s7288 = scalar_lea.vmem %s1, 8
  %7289 = vst.msk [vmem:[%s7288] sm:$0xff] %vm7287, %v7286
  %s7290 = scalar_lea.vmem %s0, 1036
  %v7291 = vld [vmem:[%s7290] sm:$0x1]
  %s7292 = scalar_lea.vmem %s0, 1099
  %v7293 = vld [vmem:[%s7292] sm:$0x2]
  %vm7294 = vcmask 1041409
  %v7295 = vsel %vm7294, %v7293, %v7291
  %s7296 = scalar_lea.vmem %s0, 1162
  %v7297 = vld [vmem:[%s7296] sm:$0x4]
  %vm7298 = vcmask 1042434
  %v7299 = vsel %vm7298, %v7297, %v7295
  %s7300 = scalar_lea.vmem %s0, 1225
  %v7301 = vld [vmem:[%s7300] sm:$0x8]
  %vm7302 = vcmask 1043459
  %v7303 = vsel %vm7302, %v7301, %v7299
  %s7304 = scalar_lea.vmem %s0, 1288
  %v7305 = vld [vmem:[%s7304] sm:$0x10]
  %vm7306 = vcmask 1044484
  %v7307 = vsel %vm7306, %v7305, %v7303
  %s7308 = scalar_lea.vmem %s0, 1351
  %v7309 = vld [vmem:[%s7308] sm:$0x20]
  %vm7310 = vcmask 1045509
  %v7311 = vsel %vm7310, %v7309, %v7307
  %s7312 = scalar_lea.vmem %s0, 1414
  %v7313 = vld [vmem:[%s7312] sm:$0x40]
  %vm7314 = vcmask 1046534
  %v7315 = vsel %vm7314, %v7313, %v7311
  %s7316 = scalar_lea.vmem %s0, 1477
  %v7317 = vld [vmem:[%s7316] sm:$0x80]
  %vm7318 = vcmask 1047559
  %v7319 = vsel %vm7318, %v7317, %v7315
  %7320 = vrot.lane.b32.xlu0 %v7319, 24
  %v7321 = vpop.permute.xlu0 %7320
  %vm7322 = vcmask 212160
  %s7323 = scalar_lea.vmem %s1, 16
  %7324 = vst.msk [vmem:[%s7323] sm:$0xff] %vm7322, %v7321
  %s7325 = scalar_lea.vmem %s0, 1548
  %v7326 = vld [vmem:[%s7325] sm:$0x1]
  %s7327 = scalar_lea.vmem %s0, 1611
  %v7328 = vld [vmem:[%s7327] sm:$0x2]
  %vm7329 = vcmask 1041409
  %v7330 = vsel %vm7329, %v7328, %v7326
  %s7331 = scalar_lea.vmem %s0, 1674
  %v7332 = vld [vmem:[%s7331] sm:$0x4]
  %vm7333 = vcmask 1042434
  %v7334 = vsel %vm7333, %v7332, %v7330
  %s7335 = scalar_lea.vmem %s0, 1737
  %v7336 = vld [vmem:[%s7335] sm:$0x8]
  %vm7337 = vcmask 1043459
  %v7338 = vsel %vm7337, %v7336, %v7334
  %s7339 = scalar_lea.vmem %s0, 1800
  %v7340 = vld [vmem:[%s7339] sm:$0x10]
  %vm7341 = vcmask 1044484
  %v7342 = vsel %vm7341, %v7340, %v7338
  %s7343 = scalar_lea.vmem %s0, 1863
  %v7344 = vld [vmem:[%s7343] sm:$0x20]
  %vm7345 = vcmask 1045509
  %v7346 = vsel %vm7345, %v7344, %v7342
  %s7347 = scalar_lea.vmem %s0, 1926
  %v7348 = vld [vmem:[%s7347] sm:$0x40]
  %vm7349 = vcmask 1046534
  %v7350 = vsel %vm7349, %v7348, %v7346
  %s7351 = scalar_lea.vmem %s0, 1989
  %v7352 = vld [vmem:[%s7351] sm:$0x80]
  %vm7353 = vcmask 1047559
  %v7354 = vsel %vm7353, %v7352, %v7350
  %7355 = vrot.lane.b32.xlu0 %v7354, 24
  %v7356 = vpop.permute.xlu0 %7355
  %vm7357 = vcmask 212160
  %s7358 = scalar_lea.vmem %s1, 24
  %7359 = vst.msk [vmem:[%s7358] sm:$0xff] %vm7357, %v7356
  %s7360 = scalar_lea.vmem %s0, 11
  %v7361 = vld [vmem:[%s7360] sm:$0x1]
  %s7362 = scalar_lea.vmem %s0, 74
  %v7363 = vld [vmem:[%s7362] sm:$0x2]
  %vm7364 = vcmask 1041409
  %v7365 = vsel %vm7364, %v7363, %v7361
  %s7366 = scalar_lea.vmem %s0, 137
  %v7367 = vld [vmem:[%s7366] sm:$0x4]
  %vm7368 = vcmask 1042434
  %v7369 = vsel %vm7368, %v7367, %v7365
  %s7370 = scalar_lea.vmem %s0, 200
  %v7371 = vld [vmem:[%s7370] sm:$0x8]
  %vm7372 = vcmask 1043459
  %v7373 = vsel %vm7372, %v7371, %v7369
  %s7374 = scalar_lea.vmem %s0, 263
  %v7375 = vld [vmem:[%s7374] sm:$0x10]
  %vm7376 = vcmask 1044484
  %v7377 = vsel %vm7376, %v7375, %v7373
  %s7378 = scalar_lea.vmem %s0, 326
  %v7379 = vld [vmem:[%s7378] sm:$0x20]
  %vm7380 = vcmask 1045509
  %v7381 = vsel %vm7380, %v7379, %v7377
  %s7382 = scalar_lea.vmem %s0, 389
  %v7383 = vld [vmem:[%s7382] sm:$0x40]
  %vm7384 = vcmask 1046534
  %v7385 = vsel %vm7384, %v7383, %v7381
  %s7386 = scalar_lea.vmem %s0, 452
  %v7387 = vld [vmem:[%s7386] sm:$0x80]
  %vm7388 = vcmask 1047559
  %v7389 = vsel %vm7388, %v7387, %v7385
  %7390 = vrot.lane.b32.xlu0 %v7389, 22
  %v7391 = vpop.permute.xlu0 %7390
  %vm7392 = vcmask 195760
  %7393 = vst.msk [vmem:[%s1] sm:$0xff] %vm7392, %v7391
  %s7394 = scalar_lea.vmem %s0, 523
  %v7395 = vld [vmem:[%s7394] sm:$0x1]
  %s7396 = scalar_lea.vmem %s0, 586
  %v7397 = vld [vmem:[%s7396] sm:$0x2]
  %vm7398 = vcmask 1041409
  %v7399 = vsel %vm7398, %v7397, %v7395
  %s7400 = scalar_lea.vmem %s0, 649
  %v7401 = vld [vmem:[%s7400] sm:$0x4]
  %vm7402 = vcmask 1042434
  %v7403 = vsel %vm7402, %v7401, %v7399
  %s7404 = scalar_lea.vmem %s0, 712
  %v7405 = vld [vmem:[%s7404] sm:$0x8]
  %vm7406 = vcmask 1043459
  %v7407 = vsel %vm7406, %v7405, %v7403
  %s7408 = scalar_lea.vmem %s0, 775
  %v7409 = vld [vmem:[%s7408] sm:$0x10]
  %vm7410 = vcmask 1044484
  %v7411 = vsel %vm7410, %v7409, %v7407
  %s7412 = scalar_lea.vmem %s0, 838
  %v7413 = vld [vmem:[%s7412] sm:$0x20]
  %vm7414 = vcmask 1045509
  %v7415 = vsel %vm7414, %v7413, %v7411
  %s7416 = scalar_lea.vmem %s0, 901
  %v7417 = vld [vmem:[%s7416] sm:$0x40]
  %vm7418 = vcmask 1046534
  %v7419 = vsel %vm7418, %v7417, %v7415
  %s7420 = scalar_lea.vmem %s0, 964
  %v7421 = vld [vmem:[%s7420] sm:$0x80]
  %vm7422 = vcmask 1047559
  %v7423 = vsel %vm7422, %v7421, %v7419
  %7424 = vrot.lane.b32.xlu0 %v7423, 22
  %v7425 = vpop.permute.xlu0 %7424
  %vm7426 = vcmask 195760
  %s7427 = scalar_lea.vmem %s1, 8
  %7428 = vst.msk [vmem:[%s7427] sm:$0xff] %vm7426, %v7425
  %s7429 = scalar_lea.vmem %s0, 1035
  %v7430 = vld [vmem:[%s7429] sm:$0x1]
  %s7431 = scalar_lea.vmem %s0, 1098
  %v7432 = vld [vmem:[%s7431] sm:$0x2]
  %vm7433 = vcmask 1041409
  %v7434 = vsel %vm7433, %v7432, %v7430
  %s7435 = scalar_lea.vmem %s0, 1161
  %v7436 = vld [vmem:[%s7435] sm:$0x4]
  %vm7437 = vcmask 1042434
  %v7438 = vsel %vm7437, %v7436, %v7434
  %s7439 = scalar_lea.vmem %s0, 1224
  %v7440 = vld [vmem:[%s7439] sm:$0x8]
  %vm7441 = vcmask 1043459
  %v7442 = vsel %vm7441, %v7440, %v7438
  %s7443 = scalar_lea.vmem %s0, 1287
  %v7444 = vld [vmem:[%s7443] sm:$0x10]
  %vm7445 = vcmask 1044484
  %v7446 = vsel %vm7445, %v7444, %v7442
  %s7447 = scalar_lea.vmem %s0, 1350
  %v7448 = vld [vmem:[%s7447] sm:$0x20]
  %vm7449 = vcmask 1045509
  %v7450 = vsel %vm7449, %v7448, %v7446
  %s7451 = scalar_lea.vmem %s0, 1413
  %v7452 = vld [vmem:[%s7451] sm:$0x40]
  %vm7453 = vcmask 1046534
  %v7454 = vsel %vm7453, %v7452, %v7450
  %s7455 = scalar_lea.vmem %s0, 1476
  %v7456 = vld [vmem:[%s7455] sm:$0x80]
  %vm7457 = vcmask 1047559
  %v7458 = vsel %vm7457, %v7456, %v7454
  %7459 = vrot.lane.b32.xlu0 %v7458, 22
  %v7460 = vpop.permute.xlu0 %7459
  %vm7461 = vcmask 195760
  %s7462 = scalar_lea.vmem %s1, 16
  %7463 = vst.msk [vmem:[%s7462] sm:$0xff] %vm7461, %v7460
  %s7464 = scalar_lea.vmem %s0, 1547
  %v7465 = vld [vmem:[%s7464] sm:$0x1]
  %s7466 = scalar_lea.vmem %s0, 1610
  %v7467 = vld [vmem:[%s7466] sm:$0x2]
  %vm7468 = vcmask 1041409
  %v7469 = vsel %vm7468, %v7467, %v7465
  %s7470 = scalar_lea.vmem %s0, 1673
  %v7471 = vld [vmem:[%s7470] sm:$0x4]
  %vm7472 = vcmask 1042434
  %v7473 = vsel %vm7472, %v7471, %v7469
  %s7474 = scalar_lea.vmem %s0, 1736
  %v7475 = vld [vmem:[%s7474] sm:$0x8]
  %vm7476 = vcmask 1043459
  %v7477 = vsel %vm7476, %v7475, %v7473
  %s7478 = scalar_lea.vmem %s0, 1799
  %v7479 = vld [vmem:[%s7478] sm:$0x10]
  %vm7480 = vcmask 1044484
  %v7481 = vsel %vm7480, %v7479, %v7477
  %s7482 = scalar_lea.vmem %s0, 1862
  %v7483 = vld [vmem:[%s7482] sm:$0x20]
  %vm7484 = vcmask 1045509
  %v7485 = vsel %vm7484, %v7483, %v7481
  %s7486 = scalar_lea.vmem %s0, 1925
  %v7487 = vld [vmem:[%s7486] sm:$0x40]
  %vm7488 = vcmask 1046534
  %v7489 = vsel %vm7488, %v7487, %v7485
  %s7490 = scalar_lea.vmem %s0, 1988
  %v7491 = vld [vmem:[%s7490] sm:$0x80]
  %vm7492 = vcmask 1047559
  %v7493 = vsel %vm7492, %v7491, %v7489
  %7494 = vrot.lane.b32.xlu0 %v7493, 22
  %v7495 = vpop.permute.xlu0 %7494
  %vm7496 = vcmask 195760
  %s7497 = scalar_lea.vmem %s1, 24
  %7498 = vst.msk [vmem:[%s7497] sm:$0xff] %vm7496, %v7495
  %s7499 = scalar_lea.vmem %s0, 10
  %v7500 = vld [vmem:[%s7499] sm:$0x1]
  %s7501 = scalar_lea.vmem %s0, 73
  %v7502 = vld [vmem:[%s7501] sm:$0x2]
  %vm7503 = vcmask 1041409
  %v7504 = vsel %vm7503, %v7502, %v7500
  %s7505 = scalar_lea.vmem %s0, 136
  %v7506 = vld [vmem:[%s7505] sm:$0x4]
  %vm7507 = vcmask 1042434
  %v7508 = vsel %vm7507, %v7506, %v7504
  %s7509 = scalar_lea.vmem %s0, 199
  %v7510 = vld [vmem:[%s7509] sm:$0x8]
  %vm7511 = vcmask 1043459
  %v7512 = vsel %vm7511, %v7510, %v7508
  %s7513 = scalar_lea.vmem %s0, 262
  %v7514 = vld [vmem:[%s7513] sm:$0x10]
  %vm7515 = vcmask 1044484
  %v7516 = vsel %vm7515, %v7514, %v7512
  %s7517 = scalar_lea.vmem %s0, 325
  %v7518 = vld [vmem:[%s7517] sm:$0x20]
  %vm7519 = vcmask 1045509
  %v7520 = vsel %vm7519, %v7518, %v7516
  %s7521 = scalar_lea.vmem %s0, 388
  %v7522 = vld [vmem:[%s7521] sm:$0x40]
  %vm7523 = vcmask 1046534
  %v7524 = vsel %vm7523, %v7522, %v7520
  %s7525 = scalar_lea.vmem %s0, 451
  %v7526 = vld [vmem:[%s7525] sm:$0x80]
  %vm7527 = vcmask 1047559
  %v7528 = vsel %vm7527, %v7526, %v7524
  %7529 = vrot.lane.b32.xlu0 %v7528, 20
  %v7530 = vpop.permute.xlu0 %7529
  %vm7531 = vcmask 179360
  %7532 = vst.msk [vmem:[%s1] sm:$0xff] %vm7531, %v7530
  %s7533 = scalar_lea.vmem %s0, 522
  %v7534 = vld [vmem:[%s7533] sm:$0x1]
  %s7535 = scalar_lea.vmem %s0, 585
  %v7536 = vld [vmem:[%s7535] sm:$0x2]
  %vm7537 = vcmask 1041409
  %v7538 = vsel %vm7537, %v7536, %v7534
  %s7539 = scalar_lea.vmem %s0, 648
  %v7540 = vld [vmem:[%s7539] sm:$0x4]
  %vm7541 = vcmask 1042434
  %v7542 = vsel %vm7541, %v7540, %v7538
  %s7543 = scalar_lea.vmem %s0, 711
  %v7544 = vld [vmem:[%s7543] sm:$0x8]
  %vm7545 = vcmask 1043459
  %v7546 = vsel %vm7545, %v7544, %v7542
  %s7547 = scalar_lea.vmem %s0, 774
  %v7548 = vld [vmem:[%s7547] sm:$0x10]
  %vm7549 = vcmask 1044484
  %v7550 = vsel %vm7549, %v7548, %v7546
  %s7551 = scalar_lea.vmem %s0, 837
  %v7552 = vld [vmem:[%s7551] sm:$0x20]
  %vm7553 = vcmask 1045509
  %v7554 = vsel %vm7553, %v7552, %v7550
  %s7555 = scalar_lea.vmem %s0, 900
  %v7556 = vld [vmem:[%s7555] sm:$0x40]
  %vm7557 = vcmask 1046534
  %v7558 = vsel %vm7557, %v7556, %v7554
  %s7559 = scalar_lea.vmem %s0, 963
  %v7560 = vld [vmem:[%s7559] sm:$0x80]
  %vm7561 = vcmask 1047559
  %v7562 = vsel %vm7561, %v7560, %v7558
  %7563 = vrot.lane.b32.xlu0 %v7562, 20
  %v7564 = vpop.permute.xlu0 %7563
  %vm7565 = vcmask 179360
  %s7566 = scalar_lea.vmem %s1, 8
  %7567 = vst.msk [vmem:[%s7566] sm:$0xff] %vm7565, %v7564
  %s7568 = scalar_lea.vmem %s0, 1034
  %v7569 = vld [vmem:[%s7568] sm:$0x1]
  %s7570 = scalar_lea.vmem %s0, 1097
  %v7571 = vld [vmem:[%s7570] sm:$0x2]
  %vm7572 = vcmask 1041409
  %v7573 = vsel %vm7572, %v7571, %v7569
  %s7574 = scalar_lea.vmem %s0, 1160
  %v7575 = vld [vmem:[%s7574] sm:$0x4]
  %vm7576 = vcmask 1042434
  %v7577 = vsel %vm7576, %v7575, %v7573
  %s7578 = scalar_lea.vmem %s0, 1223
  %v7579 = vld [vmem:[%s7578] sm:$0x8]
  %vm7580 = vcmask 1043459
  %v7581 = vsel %vm7580, %v7579, %v7577
  %s7582 = scalar_lea.vmem %s0, 1286
  %v7583 = vld [vmem:[%s7582] sm:$0x10]
  %vm7584 = vcmask 1044484
  %v7585 = vsel %vm7584, %v7583, %v7581
  %s7586 = scalar_lea.vmem %s0, 1349
  %v7587 = vld [vmem:[%s7586] sm:$0x20]
  %vm7588 = vcmask 1045509
  %v7589 = vsel %vm7588, %v7587, %v7585
  %s7590 = scalar_lea.vmem %s0, 1412
  %v7591 = vld [vmem:[%s7590] sm:$0x40]
  %vm7592 = vcmask 1046534
  %v7593 = vsel %vm7592, %v7591, %v7589
  %s7594 = scalar_lea.vmem %s0, 1475
  %v7595 = vld [vmem:[%s7594] sm:$0x80]
  %vm7596 = vcmask 1047559
  %v7597 = vsel %vm7596, %v7595, %v7593
  %7598 = vrot.lane.b32.xlu0 %v7597, 20
  %v7599 = vpop.permute.xlu0 %7598
  %vm7600 = vcmask 179360
  %s7601 = scalar_lea.vmem %s1, 16
  %7602 = vst.msk [vmem:[%s7601] sm:$0xff] %vm7600, %v7599
  %s7603 = scalar_lea.vmem %s0, 1546
  %v7604 = vld [vmem:[%s7603] sm:$0x1]
  %s7605 = scalar_lea.vmem %s0, 1609
  %v7606 = vld [vmem:[%s7605] sm:$0x2]
  %vm7607 = vcmask 1041409
  %v7608 = vsel %vm7607, %v7606, %v7604
  %s7609 = scalar_lea.vmem %s0, 1672
  %v7610 = vld [vmem:[%s7609] sm:$0x4]
  %vm7611 = vcmask 1042434
  %v7612 = vsel %vm7611, %v7610, %v7608
  %s7613 = scalar_lea.vmem %s0, 1735
  %v7614 = vld [vmem:[%s7613] sm:$0x8]
  %vm7615 = vcmask 1043459
  %v7616 = vsel %vm7615, %v7614, %v7612
  %s7617 = scalar_lea.vmem %s0, 1798
  %v7618 = vld [vmem:[%s7617] sm:$0x10]
  %vm7619 = vcmask 1044484
  %v7620 = vsel %vm7619, %v7618, %v7616
  %s7621 = scalar_lea.vmem %s0, 1861
  %v7622 = vld [vmem:[%s7621] sm:$0x20]
  %vm7623 = vcmask 1045509
  %v7624 = vsel %vm7623, %v7622, %v7620
  %s7625 = scalar_lea.vmem %s0, 1924
  %v7626 = vld [vmem:[%s7625] sm:$0x40]
  %vm7627 = vcmask 1046534
  %v7628 = vsel %vm7627, %v7626, %v7624
  %s7629 = scalar_lea.vmem %s0, 1987
  %v7630 = vld [vmem:[%s7629] sm:$0x80]
  %vm7631 = vcmask 1047559
  %v7632 = vsel %vm7631, %v7630, %v7628
  %7633 = vrot.lane.b32.xlu0 %v7632, 20
  %v7634 = vpop.permute.xlu0 %7633
  %vm7635 = vcmask 179360
  %s7636 = scalar_lea.vmem %s1, 24
  %7637 = vst.msk [vmem:[%s7636] sm:$0xff] %vm7635, %v7634
  %s7638 = scalar_lea.vmem %s0, 9
  %v7639 = vld [vmem:[%s7638] sm:$0x1]
  %s7640 = scalar_lea.vmem %s0, 72
  %v7641 = vld [vmem:[%s7640] sm:$0x2]
  %vm7642 = vcmask 1041409
  %v7643 = vsel %vm7642, %v7641, %v7639
  %s7644 = scalar_lea.vmem %s0, 135
  %v7645 = vld [vmem:[%s7644] sm:$0x4]
  %vm7646 = vcmask 1042434
  %v7647 = vsel %vm7646, %v7645, %v7643
  %s7648 = scalar_lea.vmem %s0, 198
  %v7649 = vld [vmem:[%s7648] sm:$0x8]
  %vm7650 = vcmask 1043459
  %v7651 = vsel %vm7650, %v7649, %v7647
  %s7652 = scalar_lea.vmem %s0, 261
  %v7653 = vld [vmem:[%s7652] sm:$0x10]
  %vm7654 = vcmask 1044484
  %v7655 = vsel %vm7654, %v7653, %v7651
  %s7656 = scalar_lea.vmem %s0, 324
  %v7657 = vld [vmem:[%s7656] sm:$0x20]
  %vm7658 = vcmask 1045509
  %v7659 = vsel %vm7658, %v7657, %v7655
  %s7660 = scalar_lea.vmem %s0, 387
  %v7661 = vld [vmem:[%s7660] sm:$0x40]
  %vm7662 = vcmask 1046534
  %v7663 = vsel %vm7662, %v7661, %v7659
  %s7664 = scalar_lea.vmem %s0, 450
  %v7665 = vld [vmem:[%s7664] sm:$0x80]
  %vm7666 = vcmask 1047559
  %v7667 = vsel %vm7666, %v7665, %v7663
  %7668 = vrot.lane.b32.xlu0 %v7667, 18
  %v7669 = vpop.permute.xlu0 %7668
  %vm7670 = vcmask 162960
  %7671 = vst.msk [vmem:[%s1] sm:$0xff] %vm7670, %v7669
  %s7672 = scalar_lea.vmem %s0, 521
  %v7673 = vld [vmem:[%s7672] sm:$0x1]
  %s7674 = scalar_lea.vmem %s0, 584
  %v7675 = vld [vmem:[%s7674] sm:$0x2]
  %vm7676 = vcmask 1041409
  %v7677 = vsel %vm7676, %v7675, %v7673
  %s7678 = scalar_lea.vmem %s0, 647
  %v7679 = vld [vmem:[%s7678] sm:$0x4]
  %vm7680 = vcmask 1042434
  %v7681 = vsel %vm7680, %v7679, %v7677
  %s7682 = scalar_lea.vmem %s0, 710
  %v7683 = vld [vmem:[%s7682] sm:$0x8]
  %vm7684 = vcmask 1043459
  %v7685 = vsel %vm7684, %v7683, %v7681
  %s7686 = scalar_lea.vmem %s0, 773
  %v7687 = vld [vmem:[%s7686] sm:$0x10]
  %vm7688 = vcmask 1044484
  %v7689 = vsel %vm7688, %v7687, %v7685
  %s7690 = scalar_lea.vmem %s0, 836
  %v7691 = vld [vmem:[%s7690] sm:$0x20]
  %vm7692 = vcmask 1045509
  %v7693 = vsel %vm7692, %v7691, %v7689
  %s7694 = scalar_lea.vmem %s0, 899
  %v7695 = vld [vmem:[%s7694] sm:$0x40]
  %vm7696 = vcmask 1046534
  %v7697 = vsel %vm7696, %v7695, %v7693
  %s7698 = scalar_lea.vmem %s0, 962
  %v7699 = vld [vmem:[%s7698] sm:$0x80]
  %vm7700 = vcmask 1047559
  %v7701 = vsel %vm7700, %v7699, %v7697
  %7702 = vrot.lane.b32.xlu0 %v7701, 18
  %v7703 = vpop.permute.xlu0 %7702
  %vm7704 = vcmask 162960
  %s7705 = scalar_lea.vmem %s1, 8
  %7706 = vst.msk [vmem:[%s7705] sm:$0xff] %vm7704, %v7703
  %s7707 = scalar_lea.vmem %s0, 1033
  %v7708 = vld [vmem:[%s7707] sm:$0x1]
  %s7709 = scalar_lea.vmem %s0, 1096
  %v7710 = vld [vmem:[%s7709] sm:$0x2]
  %vm7711 = vcmask 1041409
  %v7712 = vsel %vm7711, %v7710, %v7708
  %s7713 = scalar_lea.vmem %s0, 1159
  %v7714 = vld [vmem:[%s7713] sm:$0x4]
  %vm7715 = vcmask 1042434
  %v7716 = vsel %vm7715, %v7714, %v7712
  %s7717 = scalar_lea.vmem %s0, 1222
  %v7718 = vld [vmem:[%s7717] sm:$0x8]
  %vm7719 = vcmask 1043459
  %v7720 = vsel %vm7719, %v7718, %v7716
  %s7721 = scalar_lea.vmem %s0, 1285
  %v7722 = vld [vmem:[%s7721] sm:$0x10]
  %vm7723 = vcmask 1044484
  %v7724 = vsel %vm7723, %v7722, %v7720
  %s7725 = scalar_lea.vmem %s0, 1348
  %v7726 = vld [vmem:[%s7725] sm:$0x20]
  %vm7727 = vcmask 1045509
  %v7728 = vsel %vm7727, %v7726, %v7724
  %s7729 = scalar_lea.vmem %s0, 1411
  %v7730 = vld [vmem:[%s7729] sm:$0x40]
  %vm7731 = vcmask 1046534
  %v7732 = vsel %vm7731, %v7730, %v7728
  %s7733 = scalar_lea.vmem %s0, 1474
  %v7734 = vld [vmem:[%s7733] sm:$0x80]
  %vm7735 = vcmask 1047559
  %v7736 = vsel %vm7735, %v7734, %v7732
  %7737 = vrot.lane.b32.xlu0 %v7736, 18
  %v7738 = vpop.permute.xlu0 %7737
  %vm7739 = vcmask 162960
  %s7740 = scalar_lea.vmem %s1, 16
  %7741 = vst.msk [vmem:[%s7740] sm:$0xff] %vm7739, %v7738
  %s7742 = scalar_lea.vmem %s0, 1545
  %v7743 = vld [vmem:[%s7742] sm:$0x1]
  %s7744 = scalar_lea.vmem %s0, 1608
  %v7745 = vld [vmem:[%s7744] sm:$0x2]
  %vm7746 = vcmask 1041409
  %v7747 = vsel %vm7746, %v7745, %v7743
  %s7748 = scalar_lea.vmem %s0, 1671
  %v7749 = vld [vmem:[%s7748] sm:$0x4]
  %vm7750 = vcmask 1042434
  %v7751 = vsel %vm7750, %v7749, %v7747
  %s7752 = scalar_lea.vmem %s0, 1734
  %v7753 = vld [vmem:[%s7752] sm:$0x8]
  %vm7754 = vcmask 1043459
  %v7755 = vsel %vm7754, %v7753, %v7751
  %s7756 = scalar_lea.vmem %s0, 1797
  %v7757 = vld [vmem:[%s7756] sm:$0x10]
  %vm7758 = vcmask 1044484
  %v7759 = vsel %vm7758, %v7757, %v7755
  %s7760 = scalar_lea.vmem %s0, 1860
  %v7761 = vld [vmem:[%s7760] sm:$0x20]
  %vm7762 = vcmask 1045509
  %v7763 = vsel %vm7762, %v7761, %v7759
  %s7764 = scalar_lea.vmem %s0, 1923
  %v7765 = vld [vmem:[%s7764] sm:$0x40]
  %vm7766 = vcmask 1046534
  %v7767 = vsel %vm7766, %v7765, %v7763
  %s7768 = scalar_lea.vmem %s0, 1986
  %v7769 = vld [vmem:[%s7768] sm:$0x80]
  %vm7770 = vcmask 1047559
  %v7771 = vsel %vm7770, %v7769, %v7767
  %7772 = vrot.lane.b32.xlu0 %v7771, 18
  %v7773 = vpop.permute.xlu0 %7772
  %vm7774 = vcmask 162960
  %s7775 = scalar_lea.vmem %s1, 24
  %7776 = vst.msk [vmem:[%s7775] sm:$0xff] %vm7774, %v7773
  %s7777 = scalar_lea.vmem %s0, 8
  %v7778 = vld [vmem:[%s7777] sm:$0x1]
  %s7779 = scalar_lea.vmem %s0, 71
  %v7780 = vld [vmem:[%s7779] sm:$0x2]
  %vm7781 = vcmask 1041409
  %v7782 = vsel %vm7781, %v7780, %v7778
  %s7783 = scalar_lea.vmem %s0, 134
  %v7784 = vld [vmem:[%s7783] sm:$0x4]
  %vm7785 = vcmask 1042434
  %v7786 = vsel %vm7785, %v7784, %v7782
  %s7787 = scalar_lea.vmem %s0, 197
  %v7788 = vld [vmem:[%s7787] sm:$0x8]
  %vm7789 = vcmask 1043459
  %v7790 = vsel %vm7789, %v7788, %v7786
  %s7791 = scalar_lea.vmem %s0, 260
  %v7792 = vld [vmem:[%s7791] sm:$0x10]
  %vm7793 = vcmask 1044484
  %v7794 = vsel %vm7793, %v7792, %v7790
  %s7795 = scalar_lea.vmem %s0, 323
  %v7796 = vld [vmem:[%s7795] sm:$0x20]
  %vm7797 = vcmask 1045509
  %v7798 = vsel %vm7797, %v7796, %v7794
  %s7799 = scalar_lea.vmem %s0, 386
  %v7800 = vld [vmem:[%s7799] sm:$0x40]
  %vm7801 = vcmask 1046534
  %v7802 = vsel %vm7801, %v7800, %v7798
  %s7803 = scalar_lea.vmem %s0, 449
  %v7804 = vld [vmem:[%s7803] sm:$0x80]
  %vm7805 = vcmask 1047559
  %v7806 = vsel %vm7805, %v7804, %v7802
  %7807 = vrot.lane.b32.xlu0 %v7806, 16
  %v7808 = vpop.permute.xlu0 %7807
  %vm7809 = vcmask 146560
  %7810 = vst.msk [vmem:[%s1] sm:$0xff] %vm7809, %v7808
  %s7811 = scalar_lea.vmem %s0, 520
  %v7812 = vld [vmem:[%s7811] sm:$0x1]
  %s7813 = scalar_lea.vmem %s0, 583
  %v7814 = vld [vmem:[%s7813] sm:$0x2]
  %vm7815 = vcmask 1041409
  %v7816 = vsel %vm7815, %v7814, %v7812
  %s7817 = scalar_lea.vmem %s0, 646
  %v7818 = vld [vmem:[%s7817] sm:$0x4]
  %vm7819 = vcmask 1042434
  %v7820 = vsel %vm7819, %v7818, %v7816
  %s7821 = scalar_lea.vmem %s0, 709
  %v7822 = vld [vmem:[%s7821] sm:$0x8]
  %vm7823 = vcmask 1043459
  %v7824 = vsel %vm7823, %v7822, %v7820
  %s7825 = scalar_lea.vmem %s0, 772
  %v7826 = vld [vmem:[%s7825] sm:$0x10]
  %vm7827 = vcmask 1044484
  %v7828 = vsel %vm7827, %v7826, %v7824
  %s7829 = scalar_lea.vmem %s0, 835
  %v7830 = vld [vmem:[%s7829] sm:$0x20]
  %vm7831 = vcmask 1045509
  %v7832 = vsel %vm7831, %v7830, %v7828
  %s7833 = scalar_lea.vmem %s0, 898
  %v7834 = vld [vmem:[%s7833] sm:$0x40]
  %vm7835 = vcmask 1046534
  %v7836 = vsel %vm7835, %v7834, %v7832
  %s7837 = scalar_lea.vmem %s0, 961
  %v7838 = vld [vmem:[%s7837] sm:$0x80]
  %vm7839 = vcmask 1047559
  %v7840 = vsel %vm7839, %v7838, %v7836
  %7841 = vrot.lane.b32.xlu0 %v7840, 16
  %v7842 = vpop.permute.xlu0 %7841
  %vm7843 = vcmask 146560
  %s7844 = scalar_lea.vmem %s1, 8
  %7845 = vst.msk [vmem:[%s7844] sm:$0xff] %vm7843, %v7842
  %s7846 = scalar_lea.vmem %s0, 1032
  %v7847 = vld [vmem:[%s7846] sm:$0x1]
  %s7848 = scalar_lea.vmem %s0, 1095
  %v7849 = vld [vmem:[%s7848] sm:$0x2]
  %vm7850 = vcmask 1041409
  %v7851 = vsel %vm7850, %v7849, %v7847
  %s7852 = scalar_lea.vmem %s0, 1158
  %v7853 = vld [vmem:[%s7852] sm:$0x4]
  %vm7854 = vcmask 1042434
  %v7855 = vsel %vm7854, %v7853, %v7851
  %s7856 = scalar_lea.vmem %s0, 1221
  %v7857 = vld [vmem:[%s7856] sm:$0x8]
  %vm7858 = vcmask 1043459
  %v7859 = vsel %vm7858, %v7857, %v7855
  %s7860 = scalar_lea.vmem %s0, 1284
  %v7861 = vld [vmem:[%s7860] sm:$0x10]
  %vm7862 = vcmask 1044484
  %v7863 = vsel %vm7862, %v7861, %v7859
  %s7864 = scalar_lea.vmem %s0, 1347
  %v7865 = vld [vmem:[%s7864] sm:$0x20]
  %vm7866 = vcmask 1045509
  %v7867 = vsel %vm7866, %v7865, %v7863
  %s7868 = scalar_lea.vmem %s0, 1410
  %v7869 = vld [vmem:[%s7868] sm:$0x40]
  %vm7870 = vcmask 1046534
  %v7871 = vsel %vm7870, %v7869, %v7867
  %s7872 = scalar_lea.vmem %s0, 1473
  %v7873 = vld [vmem:[%s7872] sm:$0x80]
  %vm7874 = vcmask 1047559
  %v7875 = vsel %vm7874, %v7873, %v7871
  %7876 = vrot.lane.b32.xlu0 %v7875, 16
  %v7877 = vpop.permute.xlu0 %7876
  %vm7878 = vcmask 146560
  %s7879 = scalar_lea.vmem %s1, 16
  %7880 = vst.msk [vmem:[%s7879] sm:$0xff] %vm7878, %v7877
  %s7881 = scalar_lea.vmem %s0, 1544
  %v7882 = vld [vmem:[%s7881] sm:$0x1]
  %s7883 = scalar_lea.vmem %s0, 1607
  %v7884 = vld [vmem:[%s7883] sm:$0x2]
  %vm7885 = vcmask 1041409
  %v7886 = vsel %vm7885, %v7884, %v7882
  %s7887 = scalar_lea.vmem %s0, 1670
  %v7888 = vld [vmem:[%s7887] sm:$0x4]
  %vm7889 = vcmask 1042434
  %v7890 = vsel %vm7889, %v7888, %v7886
  %s7891 = scalar_lea.vmem %s0, 1733
  %v7892 = vld [vmem:[%s7891] sm:$0x8]
  %vm7893 = vcmask 1043459
  %v7894 = vsel %vm7893, %v7892, %v7890
  %s7895 = scalar_lea.vmem %s0, 1796
  %v7896 = vld [vmem:[%s7895] sm:$0x10]
  %vm7897 = vcmask 1044484
  %v7898 = vsel %vm7897, %v7896, %v7894
  %s7899 = scalar_lea.vmem %s0, 1859
  %v7900 = vld [vmem:[%s7899] sm:$0x20]
  %vm7901 = vcmask 1045509
  %v7902 = vsel %vm7901, %v7900, %v7898
  %s7903 = scalar_lea.vmem %s0, 1922
  %v7904 = vld [vmem:[%s7903] sm:$0x40]
  %vm7905 = vcmask 1046534
  %v7906 = vsel %vm7905, %v7904, %v7902
  %s7907 = scalar_lea.vmem %s0, 1985
  %v7908 = vld [vmem:[%s7907] sm:$0x80]
  %vm7909 = vcmask 1047559
  %v7910 = vsel %vm7909, %v7908, %v7906
  %7911 = vrot.lane.b32.xlu0 %v7910, 16
  %v7912 = vpop.permute.xlu0 %7911
  %vm7913 = vcmask 146560
  %s7914 = scalar_lea.vmem %s1, 24
  %7915 = vst.msk [vmem:[%s7914] sm:$0xff] %vm7913, %v7912
  %s7916 = scalar_lea.vmem %s0, 7
  %v7917 = vld [vmem:[%s7916] sm:$0x1]
  %s7918 = scalar_lea.vmem %s0, 70
  %v7919 = vld [vmem:[%s7918] sm:$0x2]
  %vm7920 = vcmask 1041409
  %v7921 = vsel %vm7920, %v7919, %v7917
  %s7922 = scalar_lea.vmem %s0, 133
  %v7923 = vld [vmem:[%s7922] sm:$0x4]
  %vm7924 = vcmask 1042434
  %v7925 = vsel %vm7924, %v7923, %v7921
  %s7926 = scalar_lea.vmem %s0, 196
  %v7927 = vld [vmem:[%s7926] sm:$0x8]
  %vm7928 = vcmask 1043459
  %v7929 = vsel %vm7928, %v7927, %v7925
  %s7930 = scalar_lea.vmem %s0, 259
  %v7931 = vld [vmem:[%s7930] sm:$0x10]
  %vm7932 = vcmask 1044484
  %v7933 = vsel %vm7932, %v7931, %v7929
  %s7934 = scalar_lea.vmem %s0, 322
  %v7935 = vld [vmem:[%s7934] sm:$0x20]
  %vm7936 = vcmask 1045509
  %v7937 = vsel %vm7936, %v7935, %v7933
  %s7938 = scalar_lea.vmem %s0, 385
  %v7939 = vld [vmem:[%s7938] sm:$0x40]
  %vm7940 = vcmask 1046534
  %v7941 = vsel %vm7940, %v7939, %v7937
  %s7942 = scalar_lea.vmem %s0, 448
  %v7943 = vld [vmem:[%s7942] sm:$0x80]
  %vm7944 = vcmask 1047559
  %v7945 = vsel %vm7944, %v7943, %v7941
  %7946 = vrot.lane.b32.xlu0 %v7945, 14
  %v7947 = vpop.permute.xlu0 %7946
  %vm7948 = vcmask 130160
  %7949 = vst.msk [vmem:[%s1] sm:$0xff] %vm7948, %v7947
  %s7950 = scalar_lea.vmem %s0, 519
  %v7951 = vld [vmem:[%s7950] sm:$0x1]
  %s7952 = scalar_lea.vmem %s0, 582
  %v7953 = vld [vmem:[%s7952] sm:$0x2]
  %vm7954 = vcmask 1041409
  %v7955 = vsel %vm7954, %v7953, %v7951
  %s7956 = scalar_lea.vmem %s0, 645
  %v7957 = vld [vmem:[%s7956] sm:$0x4]
  %vm7958 = vcmask 1042434
  %v7959 = vsel %vm7958, %v7957, %v7955
  %s7960 = scalar_lea.vmem %s0, 708
  %v7961 = vld [vmem:[%s7960] sm:$0x8]
  %vm7962 = vcmask 1043459
  %v7963 = vsel %vm7962, %v7961, %v7959
  %s7964 = scalar_lea.vmem %s0, 771
  %v7965 = vld [vmem:[%s7964] sm:$0x10]
  %vm7966 = vcmask 1044484
  %v7967 = vsel %vm7966, %v7965, %v7963
  %s7968 = scalar_lea.vmem %s0, 834
  %v7969 = vld [vmem:[%s7968] sm:$0x20]
  %vm7970 = vcmask 1045509
  %v7971 = vsel %vm7970, %v7969, %v7967
  %s7972 = scalar_lea.vmem %s0, 897
  %v7973 = vld [vmem:[%s7972] sm:$0x40]
  %vm7974 = vcmask 1046534
  %v7975 = vsel %vm7974, %v7973, %v7971
  %s7976 = scalar_lea.vmem %s0, 960
  %v7977 = vld [vmem:[%s7976] sm:$0x80]
  %vm7978 = vcmask 1047559
  %v7979 = vsel %vm7978, %v7977, %v7975
  %7980 = vrot.lane.b32.xlu0 %v7979, 14
  %v7981 = vpop.permute.xlu0 %7980
  %vm7982 = vcmask 130160
  %s7983 = scalar_lea.vmem %s1, 8
  %7984 = vst.msk [vmem:[%s7983] sm:$0xff] %vm7982, %v7981
  %s7985 = scalar_lea.vmem %s0, 1031
  %v7986 = vld [vmem:[%s7985] sm:$0x1]
  %s7987 = scalar_lea.vmem %s0, 1094
  %v7988 = vld [vmem:[%s7987] sm:$0x2]
  %vm7989 = vcmask 1041409
  %v7990 = vsel %vm7989, %v7988, %v7986
  %s7991 = scalar_lea.vmem %s0, 1157
  %v7992 = vld [vmem:[%s7991] sm:$0x4]
  %vm7993 = vcmask 1042434
  %v7994 = vsel %vm7993, %v7992, %v7990
  %s7995 = scalar_lea.vmem %s0, 1220
  %v7996 = vld [vmem:[%s7995] sm:$0x8]
  %vm7997 = vcmask 1043459
  %v7998 = vsel %vm7997, %v7996, %v7994
  %s7999 = scalar_lea.vmem %s0, 1283
  %v8000 = vld [vmem:[%s7999] sm:$0x10]
  %vm8001 = vcmask 1044484
  %v8002 = vsel %vm8001, %v8000, %v7998
  %s8003 = scalar_lea.vmem %s0, 1346
  %v8004 = vld [vmem:[%s8003] sm:$0x20]
  %vm8005 = vcmask 1045509
  %v8006 = vsel %vm8005, %v8004, %v8002
  %s8007 = scalar_lea.vmem %s0, 1409
  %v8008 = vld [vmem:[%s8007] sm:$0x40]
  %vm8009 = vcmask 1046534
  %v8010 = vsel %vm8009, %v8008, %v8006
  %s8011 = scalar_lea.vmem %s0, 1472
  %v8012 = vld [vmem:[%s8011] sm:$0x80]
  %vm8013 = vcmask 1047559
  %v8014 = vsel %vm8013, %v8012, %v8010
  %8015 = vrot.lane.b32.xlu0 %v8014, 14
  %v8016 = vpop.permute.xlu0 %8015
  %vm8017 = vcmask 130160
  %s8018 = scalar_lea.vmem %s1, 16
  %8019 = vst.msk [vmem:[%s8018] sm:$0xff] %vm8017, %v8016
  %s8020 = scalar_lea.vmem %s0, 1543
  %v8021 = vld [vmem:[%s8020] sm:$0x1]
  %s8022 = scalar_lea.vmem %s0, 1606
  %v8023 = vld [vmem:[%s8022] sm:$0x2]
  %vm8024 = vcmask 1041409
  %v8025 = vsel %vm8024, %v8023, %v8021
  %s8026 = scalar_lea.vmem %s0, 1669
  %v8027 = vld [vmem:[%s8026] sm:$0x4]
  %vm8028 = vcmask 1042434
  %v8029 = vsel %vm8028, %v8027, %v8025
  %s8030 = scalar_lea.vmem %s0, 1732
  %v8031 = vld [vmem:[%s8030] sm:$0x8]
  %vm8032 = vcmask 1043459
  %v8033 = vsel %vm8032, %v8031, %v8029
  %s8034 = scalar_lea.vmem %s0, 1795
  %v8035 = vld [vmem:[%s8034] sm:$0x10]
  %vm8036 = vcmask 1044484
  %v8037 = vsel %vm8036, %v8035, %v8033
  %s8038 = scalar_lea.vmem %s0, 1858
  %v8039 = vld [vmem:[%s8038] sm:$0x20]
  %vm8040 = vcmask 1045509
  %v8041 = vsel %vm8040, %v8039, %v8037
  %s8042 = scalar_lea.vmem %s0, 1921
  %v8043 = vld [vmem:[%s8042] sm:$0x40]
  %vm8044 = vcmask 1046534
  %v8045 = vsel %vm8044, %v8043, %v8041
  %s8046 = scalar_lea.vmem %s0, 1984
  %v8047 = vld [vmem:[%s8046] sm:$0x80]
  %vm8048 = vcmask 1047559
  %v8049 = vsel %vm8048, %v8047, %v8045
  %8050 = vrot.lane.b32.xlu0 %v8049, 14
  %v8051 = vpop.permute.xlu0 %8050
  %vm8052 = vcmask 130160
  %s8053 = scalar_lea.vmem %s1, 24
  %8054 = vst.msk [vmem:[%s8053] sm:$0xff] %vm8052, %v8051
  %s8055 = scalar_lea.vmem %s0, 6
  %v8056 = vld [vmem:[%s8055] sm:$0x1]
  %s8057 = scalar_lea.vmem %s0, 69
  %v8058 = vld [vmem:[%s8057] sm:$0x2]
  %vm8059 = vcmask 1041409
  %v8060 = vsel %vm8059, %v8058, %v8056
  %s8061 = scalar_lea.vmem %s0, 132
  %v8062 = vld [vmem:[%s8061] sm:$0x4]
  %vm8063 = vcmask 1042434
  %v8064 = vsel %vm8063, %v8062, %v8060
  %s8065 = scalar_lea.vmem %s0, 195
  %v8066 = vld [vmem:[%s8065] sm:$0x8]
  %vm8067 = vcmask 1043459
  %v8068 = vsel %vm8067, %v8066, %v8064
  %s8069 = scalar_lea.vmem %s0, 258
  %v8070 = vld [vmem:[%s8069] sm:$0x10]
  %vm8071 = vcmask 1044484
  %v8072 = vsel %vm8071, %v8070, %v8068
  %s8073 = scalar_lea.vmem %s0, 321
  %v8074 = vld [vmem:[%s8073] sm:$0x20]
  %vm8075 = vcmask 1045509
  %v8076 = vsel %vm8075, %v8074, %v8072
  %s8077 = scalar_lea.vmem %s0, 384
  %v8078 = vld [vmem:[%s8077] sm:$0x40]
  %vm8079 = vcmask 1046534
  %v8080 = vsel %vm8079, %v8078, %v8076
  %s8081 = scalar_lea.vmem %s0, 447
  %v8082 = vld [vmem:[%s8081] sm:$0x80]
  %vm8083 = vcmask 1047559
  %v8084 = vsel %vm8083, %v8082, %v8080
  %8085 = vrot.lane.b32.xlu0 %v8084, 12
  %v8086 = vpop.permute.xlu0 %8085
  %vm8087 = vcmask 113760
  %8088 = vst.msk [vmem:[%s1] sm:$0xff] %vm8087, %v8086
  %s8089 = scalar_lea.vmem %s0, 518
  %v8090 = vld [vmem:[%s8089] sm:$0x1]
  %s8091 = scalar_lea.vmem %s0, 581
  %v8092 = vld [vmem:[%s8091] sm:$0x2]
  %vm8093 = vcmask 1041409
  %v8094 = vsel %vm8093, %v8092, %v8090
  %s8095 = scalar_lea.vmem %s0, 644
  %v8096 = vld [vmem:[%s8095] sm:$0x4]
  %vm8097 = vcmask 1042434
  %v8098 = vsel %vm8097, %v8096, %v8094
  %s8099 = scalar_lea.vmem %s0, 707
  %v8100 = vld [vmem:[%s8099] sm:$0x8]
  %vm8101 = vcmask 1043459
  %v8102 = vsel %vm8101, %v8100, %v8098
  %s8103 = scalar_lea.vmem %s0, 770
  %v8104 = vld [vmem:[%s8103] sm:$0x10]
  %vm8105 = vcmask 1044484
  %v8106 = vsel %vm8105, %v8104, %v8102
  %s8107 = scalar_lea.vmem %s0, 833
  %v8108 = vld [vmem:[%s8107] sm:$0x20]
  %vm8109 = vcmask 1045509
  %v8110 = vsel %vm8109, %v8108, %v8106
  %s8111 = scalar_lea.vmem %s0, 896
  %v8112 = vld [vmem:[%s8111] sm:$0x40]
  %vm8113 = vcmask 1046534
  %v8114 = vsel %vm8113, %v8112, %v8110
  %s8115 = scalar_lea.vmem %s0, 959
  %v8116 = vld [vmem:[%s8115] sm:$0x80]
  %vm8117 = vcmask 1047559
  %v8118 = vsel %vm8117, %v8116, %v8114
  %8119 = vrot.lane.b32.xlu0 %v8118, 12
  %v8120 = vpop.permute.xlu0 %8119
  %vm8121 = vcmask 113760
  %s8122 = scalar_lea.vmem %s1, 8
  %8123 = vst.msk [vmem:[%s8122] sm:$0xff] %vm8121, %v8120
  %s8124 = scalar_lea.vmem %s0, 1030
  %v8125 = vld [vmem:[%s8124] sm:$0x1]
  %s8126 = scalar_lea.vmem %s0, 1093
  %v8127 = vld [vmem:[%s8126] sm:$0x2]
  %vm8128 = vcmask 1041409
  %v8129 = vsel %vm8128, %v8127, %v8125
  %s8130 = scalar_lea.vmem %s0, 1156
  %v8131 = vld [vmem:[%s8130] sm:$0x4]
  %vm8132 = vcmask 1042434
  %v8133 = vsel %vm8132, %v8131, %v8129
  %s8134 = scalar_lea.vmem %s0, 1219
  %v8135 = vld [vmem:[%s8134] sm:$0x8]
  %vm8136 = vcmask 1043459
  %v8137 = vsel %vm8136, %v8135, %v8133
  %s8138 = scalar_lea.vmem %s0, 1282
  %v8139 = vld [vmem:[%s8138] sm:$0x10]
  %vm8140 = vcmask 1044484
  %v8141 = vsel %vm8140, %v8139, %v8137
  %s8142 = scalar_lea.vmem %s0, 1345
  %v8143 = vld [vmem:[%s8142] sm:$0x20]
  %vm8144 = vcmask 1045509
  %v8145 = vsel %vm8144, %v8143, %v8141
  %s8146 = scalar_lea.vmem %s0, 1408
  %v8147 = vld [vmem:[%s8146] sm:$0x40]
  %vm8148 = vcmask 1046534
  %v8149 = vsel %vm8148, %v8147, %v8145
  %s8150 = scalar_lea.vmem %s0, 1471
  %v8151 = vld [vmem:[%s8150] sm:$0x80]
  %vm8152 = vcmask 1047559
  %v8153 = vsel %vm8152, %v8151, %v8149
  %8154 = vrot.lane.b32.xlu0 %v8153, 12
  %v8155 = vpop.permute.xlu0 %8154
  %vm8156 = vcmask 113760
  %s8157 = scalar_lea.vmem %s1, 16
  %8158 = vst.msk [vmem:[%s8157] sm:$0xff] %vm8156, %v8155
  %s8159 = scalar_lea.vmem %s0, 1542
  %v8160 = vld [vmem:[%s8159] sm:$0x1]
  %s8161 = scalar_lea.vmem %s0, 1605
  %v8162 = vld [vmem:[%s8161] sm:$0x2]
  %vm8163 = vcmask 1041409
  %v8164 = vsel %vm8163, %v8162, %v8160
  %s8165 = scalar_lea.vmem %s0, 1668
  %v8166 = vld [vmem:[%s8165] sm:$0x4]
  %vm8167 = vcmask 1042434
  %v8168 = vsel %vm8167, %v8166, %v8164
  %s8169 = scalar_lea.vmem %s0, 1731
  %v8170 = vld [vmem:[%s8169] sm:$0x8]
  %vm8171 = vcmask 1043459
  %v8172 = vsel %vm8171, %v8170, %v8168
  %s8173 = scalar_lea.vmem %s0, 1794
  %v8174 = vld [vmem:[%s8173] sm:$0x10]
  %vm8175 = vcmask 1044484
  %v8176 = vsel %vm8175, %v8174, %v8172
  %s8177 = scalar_lea.vmem %s0, 1857
  %v8178 = vld [vmem:[%s8177] sm:$0x20]
  %vm8179 = vcmask 1045509
  %v8180 = vsel %vm8179, %v8178, %v8176
  %s8181 = scalar_lea.vmem %s0, 1920
  %v8182 = vld [vmem:[%s8181] sm:$0x40]
  %vm8183 = vcmask 1046534
  %v8184 = vsel %vm8183, %v8182, %v8180
  %s8185 = scalar_lea.vmem %s0, 1983
  %v8186 = vld [vmem:[%s8185] sm:$0x80]
  %vm8187 = vcmask 1047559
  %v8188 = vsel %vm8187, %v8186, %v8184
  %8189 = vrot.lane.b32.xlu0 %v8188, 12
  %v8190 = vpop.permute.xlu0 %8189
  %vm8191 = vcmask 113760
  %s8192 = scalar_lea.vmem %s1, 24
  %8193 = vst.msk [vmem:[%s8192] sm:$0xff] %vm8191, %v8190
  %s8194 = scalar_lea.vmem %s0, 5
  %v8195 = vld [vmem:[%s8194] sm:$0x1]
  %s8196 = scalar_lea.vmem %s0, 68
  %v8197 = vld [vmem:[%s8196] sm:$0x2]
  %vm8198 = vcmask 1041409
  %v8199 = vsel %vm8198, %v8197, %v8195
  %s8200 = scalar_lea.vmem %s0, 131
  %v8201 = vld [vmem:[%s8200] sm:$0x4]
  %vm8202 = vcmask 1042434
  %v8203 = vsel %vm8202, %v8201, %v8199
  %s8204 = scalar_lea.vmem %s0, 194
  %v8205 = vld [vmem:[%s8204] sm:$0x8]
  %vm8206 = vcmask 1043459
  %v8207 = vsel %vm8206, %v8205, %v8203
  %s8208 = scalar_lea.vmem %s0, 257
  %v8209 = vld [vmem:[%s8208] sm:$0x10]
  %vm8210 = vcmask 1044484
  %v8211 = vsel %vm8210, %v8209, %v8207
  %s8212 = scalar_lea.vmem %s0, 320
  %v8213 = vld [vmem:[%s8212] sm:$0x20]
  %vm8214 = vcmask 1045509
  %v8215 = vsel %vm8214, %v8213, %v8211
  %s8216 = scalar_lea.vmem %s0, 383
  %v8217 = vld [vmem:[%s8216] sm:$0x40]
  %vm8218 = vcmask 1046534
  %v8219 = vsel %vm8218, %v8217, %v8215
  %s8220 = scalar_lea.vmem %s0, 446
  %v8221 = vld [vmem:[%s8220] sm:$0x80]
  %vm8222 = vcmask 1047559
  %v8223 = vsel %vm8222, %v8221, %v8219
  %8224 = vrot.lane.b32.xlu0 %v8223, 10
  %v8225 = vpop.permute.xlu0 %8224
  %vm8226 = vcmask 97360
  %8227 = vst.msk [vmem:[%s1] sm:$0xff] %vm8226, %v8225
  %s8228 = scalar_lea.vmem %s0, 517
  %v8229 = vld [vmem:[%s8228] sm:$0x1]
  %s8230 = scalar_lea.vmem %s0, 580
  %v8231 = vld [vmem:[%s8230] sm:$0x2]
  %vm8232 = vcmask 1041409
  %v8233 = vsel %vm8232, %v8231, %v8229
  %s8234 = scalar_lea.vmem %s0, 643
  %v8235 = vld [vmem:[%s8234] sm:$0x4]
  %vm8236 = vcmask 1042434
  %v8237 = vsel %vm8236, %v8235, %v8233
  %s8238 = scalar_lea.vmem %s0, 706
  %v8239 = vld [vmem:[%s8238] sm:$0x8]
  %vm8240 = vcmask 1043459
  %v8241 = vsel %vm8240, %v8239, %v8237
  %s8242 = scalar_lea.vmem %s0, 769
  %v8243 = vld [vmem:[%s8242] sm:$0x10]
  %vm8244 = vcmask 1044484
  %v8245 = vsel %vm8244, %v8243, %v8241
  %s8246 = scalar_lea.vmem %s0, 832
  %v8247 = vld [vmem:[%s8246] sm:$0x20]
  %vm8248 = vcmask 1045509
  %v8249 = vsel %vm8248, %v8247, %v8245
  %s8250 = scalar_lea.vmem %s0, 895
  %v8251 = vld [vmem:[%s8250] sm:$0x40]
  %vm8252 = vcmask 1046534
  %v8253 = vsel %vm8252, %v8251, %v8249
  %s8254 = scalar_lea.vmem %s0, 958
  %v8255 = vld [vmem:[%s8254] sm:$0x80]
  %vm8256 = vcmask 1047559
  %v8257 = vsel %vm8256, %v8255, %v8253
  %8258 = vrot.lane.b32.xlu0 %v8257, 10
  %v8259 = vpop.permute.xlu0 %8258
  %vm8260 = vcmask 97360
  %s8261 = scalar_lea.vmem %s1, 8
  %8262 = vst.msk [vmem:[%s8261] sm:$0xff] %vm8260, %v8259
  %s8263 = scalar_lea.vmem %s0, 1029
  %v8264 = vld [vmem:[%s8263] sm:$0x1]
  %s8265 = scalar_lea.vmem %s0, 1092
  %v8266 = vld [vmem:[%s8265] sm:$0x2]
  %vm8267 = vcmask 1041409
  %v8268 = vsel %vm8267, %v8266, %v8264
  %s8269 = scalar_lea.vmem %s0, 1155
  %v8270 = vld [vmem:[%s8269] sm:$0x4]
  %vm8271 = vcmask 1042434
  %v8272 = vsel %vm8271, %v8270, %v8268
  %s8273 = scalar_lea.vmem %s0, 1218
  %v8274 = vld [vmem:[%s8273] sm:$0x8]
  %vm8275 = vcmask 1043459
  %v8276 = vsel %vm8275, %v8274, %v8272
  %s8277 = scalar_lea.vmem %s0, 1281
  %v8278 = vld [vmem:[%s8277] sm:$0x10]
  %vm8279 = vcmask 1044484
  %v8280 = vsel %vm8279, %v8278, %v8276
  %s8281 = scalar_lea.vmem %s0, 1344
  %v8282 = vld [vmem:[%s8281] sm:$0x20]
  %vm8283 = vcmask 1045509
  %v8284 = vsel %vm8283, %v8282, %v8280
  %s8285 = scalar_lea.vmem %s0, 1407
  %v8286 = vld [vmem:[%s8285] sm:$0x40]
  %vm8287 = vcmask 1046534
  %v8288 = vsel %vm8287, %v8286, %v8284
  %s8289 = scalar_lea.vmem %s0, 1470
  %v8290 = vld [vmem:[%s8289] sm:$0x80]
  %vm8291 = vcmask 1047559
  %v8292 = vsel %vm8291, %v8290, %v8288
  %8293 = vrot.lane.b32.xlu0 %v8292, 10
  %v8294 = vpop.permute.xlu0 %8293
  %vm8295 = vcmask 97360
  %s8296 = scalar_lea.vmem %s1, 16
  %8297 = vst.msk [vmem:[%s8296] sm:$0xff] %vm8295, %v8294
  %s8298 = scalar_lea.vmem %s0, 1541
  %v8299 = vld [vmem:[%s8298] sm:$0x1]
  %s8300 = scalar_lea.vmem %s0, 1604
  %v8301 = vld [vmem:[%s8300] sm:$0x2]
  %vm8302 = vcmask 1041409
  %v8303 = vsel %vm8302, %v8301, %v8299
  %s8304 = scalar_lea.vmem %s0, 1667
  %v8305 = vld [vmem:[%s8304] sm:$0x4]
  %vm8306 = vcmask 1042434
  %v8307 = vsel %vm8306, %v8305, %v8303
  %s8308 = scalar_lea.vmem %s0, 1730
  %v8309 = vld [vmem:[%s8308] sm:$0x8]
  %vm8310 = vcmask 1043459
  %v8311 = vsel %vm8310, %v8309, %v8307
  %s8312 = scalar_lea.vmem %s0, 1793
  %v8313 = vld [vmem:[%s8312] sm:$0x10]
  %vm8314 = vcmask 1044484
  %v8315 = vsel %vm8314, %v8313, %v8311
  %s8316 = scalar_lea.vmem %s0, 1856
  %v8317 = vld [vmem:[%s8316] sm:$0x20]
  %vm8318 = vcmask 1045509
  %v8319 = vsel %vm8318, %v8317, %v8315
  %s8320 = scalar_lea.vmem %s0, 1919
  %v8321 = vld [vmem:[%s8320] sm:$0x40]
  %vm8322 = vcmask 1046534
  %v8323 = vsel %vm8322, %v8321, %v8319
  %s8324 = scalar_lea.vmem %s0, 1982
  %v8325 = vld [vmem:[%s8324] sm:$0x80]
  %vm8326 = vcmask 1047559
  %v8327 = vsel %vm8326, %v8325, %v8323
  %8328 = vrot.lane.b32.xlu0 %v8327, 10
  %v8329 = vpop.permute.xlu0 %8328
  %vm8330 = vcmask 97360
  %s8331 = scalar_lea.vmem %s1, 24
  %8332 = vst.msk [vmem:[%s8331] sm:$0xff] %vm8330, %v8329
  %s8333 = scalar_lea.vmem %s0, 4
  %v8334 = vld [vmem:[%s8333] sm:$0x1]
  %s8335 = scalar_lea.vmem %s0, 67
  %v8336 = vld [vmem:[%s8335] sm:$0x2]
  %vm8337 = vcmask 1041409
  %v8338 = vsel %vm8337, %v8336, %v8334
  %s8339 = scalar_lea.vmem %s0, 130
  %v8340 = vld [vmem:[%s8339] sm:$0x4]
  %vm8341 = vcmask 1042434
  %v8342 = vsel %vm8341, %v8340, %v8338
  %s8343 = scalar_lea.vmem %s0, 193
  %v8344 = vld [vmem:[%s8343] sm:$0x8]
  %vm8345 = vcmask 1043459
  %v8346 = vsel %vm8345, %v8344, %v8342
  %s8347 = scalar_lea.vmem %s0, 256
  %v8348 = vld [vmem:[%s8347] sm:$0x10]
  %vm8349 = vcmask 1044484
  %v8350 = vsel %vm8349, %v8348, %v8346
  %s8351 = scalar_lea.vmem %s0, 319
  %v8352 = vld [vmem:[%s8351] sm:$0x20]
  %vm8353 = vcmask 1045509
  %v8354 = vsel %vm8353, %v8352, %v8350
  %s8355 = scalar_lea.vmem %s0, 382
  %v8356 = vld [vmem:[%s8355] sm:$0x40]
  %vm8357 = vcmask 1046534
  %v8358 = vsel %vm8357, %v8356, %v8354
  %s8359 = scalar_lea.vmem %s0, 445
  %v8360 = vld [vmem:[%s8359] sm:$0x80]
  %vm8361 = vcmask 1047559
  %v8362 = vsel %vm8361, %v8360, %v8358
  %8363 = vrot.lane.b32.xlu0 %v8362, 8
  %v8364 = vpop.permute.xlu0 %8363
  %vm8365 = vcmask 80960
  %8366 = vst.msk [vmem:[%s1] sm:$0xff] %vm8365, %v8364
  %s8367 = scalar_lea.vmem %s0, 516
  %v8368 = vld [vmem:[%s8367] sm:$0x1]
  %s8369 = scalar_lea.vmem %s0, 579
  %v8370 = vld [vmem:[%s8369] sm:$0x2]
  %vm8371 = vcmask 1041409
  %v8372 = vsel %vm8371, %v8370, %v8368
  %s8373 = scalar_lea.vmem %s0, 642
  %v8374 = vld [vmem:[%s8373] sm:$0x4]
  %vm8375 = vcmask 1042434
  %v8376 = vsel %vm8375, %v8374, %v8372
  %s8377 = scalar_lea.vmem %s0, 705
  %v8378 = vld [vmem:[%s8377] sm:$0x8]
  %vm8379 = vcmask 1043459
  %v8380 = vsel %vm8379, %v8378, %v8376
  %s8381 = scalar_lea.vmem %s0, 768
  %v8382 = vld [vmem:[%s8381] sm:$0x10]
  %vm8383 = vcmask 1044484
  %v8384 = vsel %vm8383, %v8382, %v8380
  %s8385 = scalar_lea.vmem %s0, 831
  %v8386 = vld [vmem:[%s8385] sm:$0x20]
  %vm8387 = vcmask 1045509
  %v8388 = vsel %vm8387, %v8386, %v8384
  %s8389 = scalar_lea.vmem %s0, 894
  %v8390 = vld [vmem:[%s8389] sm:$0x40]
  %vm8391 = vcmask 1046534
  %v8392 = vsel %vm8391, %v8390, %v8388
  %s8393 = scalar_lea.vmem %s0, 957
  %v8394 = vld [vmem:[%s8393] sm:$0x80]
  %vm8395 = vcmask 1047559
  %v8396 = vsel %vm8395, %v8394, %v8392
  %8397 = vrot.lane.b32.xlu0 %v8396, 8
  %v8398 = vpop.permute.xlu0 %8397
  %vm8399 = vcmask 80960
  %s8400 = scalar_lea.vmem %s1, 8
  %8401 = vst.msk [vmem:[%s8400] sm:$0xff] %vm8399, %v8398
  %s8402 = scalar_lea.vmem %s0, 1028
  %v8403 = vld [vmem:[%s8402] sm:$0x1]
  %s8404 = scalar_lea.vmem %s0, 1091
  %v8405 = vld [vmem:[%s8404] sm:$0x2]
  %vm8406 = vcmask 1041409
  %v8407 = vsel %vm8406, %v8405, %v8403
  %s8408 = scalar_lea.vmem %s0, 1154
  %v8409 = vld [vmem:[%s8408] sm:$0x4]
  %vm8410 = vcmask 1042434
  %v8411 = vsel %vm8410, %v8409, %v8407
  %s8412 = scalar_lea.vmem %s0, 1217
  %v8413 = vld [vmem:[%s8412] sm:$0x8]
  %vm8414 = vcmask 1043459
  %v8415 = vsel %vm8414, %v8413, %v8411
  %s8416 = scalar_lea.vmem %s0, 1280
  %v8417 = vld [vmem:[%s8416] sm:$0x10]
  %vm8418 = vcmask 1044484
  %v8419 = vsel %vm8418, %v8417, %v8415
  %s8420 = scalar_lea.vmem %s0, 1343
  %v8421 = vld [vmem:[%s8420] sm:$0x20]
  %vm8422 = vcmask 1045509
  %v8423 = vsel %vm8422, %v8421, %v8419
  %s8424 = scalar_lea.vmem %s0, 1406
  %v8425 = vld [vmem:[%s8424] sm:$0x40]
  %vm8426 = vcmask 1046534
  %v8427 = vsel %vm8426, %v8425, %v8423
  %s8428 = scalar_lea.vmem %s0, 1469
  %v8429 = vld [vmem:[%s8428] sm:$0x80]
  %vm8430 = vcmask 1047559
  %v8431 = vsel %vm8430, %v8429, %v8427
  %8432 = vrot.lane.b32.xlu0 %v8431, 8
  %v8433 = vpop.permute.xlu0 %8432
  %vm8434 = vcmask 80960
  %s8435 = scalar_lea.vmem %s1, 16
  %8436 = vst.msk [vmem:[%s8435] sm:$0xff] %vm8434, %v8433
  %s8437 = scalar_lea.vmem %s0, 1540
  %v8438 = vld [vmem:[%s8437] sm:$0x1]
  %s8439 = scalar_lea.vmem %s0, 1603
  %v8440 = vld [vmem:[%s8439] sm:$0x2]
  %vm8441 = vcmask 1041409
  %v8442 = vsel %vm8441, %v8440, %v8438
  %s8443 = scalar_lea.vmem %s0, 1666
  %v8444 = vld [vmem:[%s8443] sm:$0x4]
  %vm8445 = vcmask 1042434
  %v8446 = vsel %vm8445, %v8444, %v8442
  %s8447 = scalar_lea.vmem %s0, 1729
  %v8448 = vld [vmem:[%s8447] sm:$0x8]
  %vm8449 = vcmask 1043459
  %v8450 = vsel %vm8449, %v8448, %v8446
  %s8451 = scalar_lea.vmem %s0, 1792
  %v8452 = vld [vmem:[%s8451] sm:$0x10]
  %vm8453 = vcmask 1044484
  %v8454 = vsel %vm8453, %v8452, %v8450
  %s8455 = scalar_lea.vmem %s0, 1855
  %v8456 = vld [vmem:[%s8455] sm:$0x20]
  %vm8457 = vcmask 1045509
  %v8458 = vsel %vm8457, %v8456, %v8454
  %s8459 = scalar_lea.vmem %s0, 1918
  %v8460 = vld [vmem:[%s8459] sm:$0x40]
  %vm8461 = vcmask 1046534
  %v8462 = vsel %vm8461, %v8460, %v8458
  %s8463 = scalar_lea.vmem %s0, 1981
  %v8464 = vld [vmem:[%s8463] sm:$0x80]
  %vm8465 = vcmask 1047559
  %v8466 = vsel %vm8465, %v8464, %v8462
  %8467 = vrot.lane.b32.xlu0 %v8466, 8
  %v8468 = vpop.permute.xlu0 %8467
  %vm8469 = vcmask 80960
  %s8470 = scalar_lea.vmem %s1, 24
  %8471 = vst.msk [vmem:[%s8470] sm:$0xff] %vm8469, %v8468
  %s8472 = scalar_lea.vmem %s0, 3
  %v8473 = vld [vmem:[%s8472] sm:$0x1]
  %s8474 = scalar_lea.vmem %s0, 66
  %v8475 = vld [vmem:[%s8474] sm:$0x2]
  %vm8476 = vcmask 1041409
  %v8477 = vsel %vm8476, %v8475, %v8473
  %s8478 = scalar_lea.vmem %s0, 129
  %v8479 = vld [vmem:[%s8478] sm:$0x4]
  %vm8480 = vcmask 1042434
  %v8481 = vsel %vm8480, %v8479, %v8477
  %s8482 = scalar_lea.vmem %s0, 192
  %v8483 = vld [vmem:[%s8482] sm:$0x8]
  %vm8484 = vcmask 1043459
  %v8485 = vsel %vm8484, %v8483, %v8481
  %s8486 = scalar_lea.vmem %s0, 255
  %v8487 = vld [vmem:[%s8486] sm:$0x10]
  %vm8488 = vcmask 1044484
  %v8489 = vsel %vm8488, %v8487, %v8485
  %s8490 = scalar_lea.vmem %s0, 318
  %v8491 = vld [vmem:[%s8490] sm:$0x20]
  %vm8492 = vcmask 1045509
  %v8493 = vsel %vm8492, %v8491, %v8489
  %s8494 = scalar_lea.vmem %s0, 381
  %v8495 = vld [vmem:[%s8494] sm:$0x40]
  %vm8496 = vcmask 1046534
  %v8497 = vsel %vm8496, %v8495, %v8493
  %s8498 = scalar_lea.vmem %s0, 444
  %v8499 = vld [vmem:[%s8498] sm:$0x80]
  %vm8500 = vcmask 1047559
  %v8501 = vsel %vm8500, %v8499, %v8497
  %8502 = vrot.lane.b32.xlu0 %v8501, 6
  %v8503 = vpop.permute.xlu0 %8502
  %vm8504 = vcmask 64560
  %8505 = vst.msk [vmem:[%s1] sm:$0xff] %vm8504, %v8503
  %s8506 = scalar_lea.vmem %s0, 515
  %v8507 = vld [vmem:[%s8506] sm:$0x1]
  %s8508 = scalar_lea.vmem %s0, 578
  %v8509 = vld [vmem:[%s8508] sm:$0x2]
  %vm8510 = vcmask 1041409
  %v8511 = vsel %vm8510, %v8509, %v8507
  %s8512 = scalar_lea.vmem %s0, 641
  %v8513 = vld [vmem:[%s8512] sm:$0x4]
  %vm8514 = vcmask 1042434
  %v8515 = vsel %vm8514, %v8513, %v8511
  %s8516 = scalar_lea.vmem %s0, 704
  %v8517 = vld [vmem:[%s8516] sm:$0x8]
  %vm8518 = vcmask 1043459
  %v8519 = vsel %vm8518, %v8517, %v8515
  %s8520 = scalar_lea.vmem %s0, 767
  %v8521 = vld [vmem:[%s8520] sm:$0x10]
  %vm8522 = vcmask 1044484
  %v8523 = vsel %vm8522, %v8521, %v8519
  %s8524 = scalar_lea.vmem %s0, 830
  %v8525 = vld [vmem:[%s8524] sm:$0x20]
  %vm8526 = vcmask 1045509
  %v8527 = vsel %vm8526, %v8525, %v8523
  %s8528 = scalar_lea.vmem %s0, 893
  %v8529 = vld [vmem:[%s8528] sm:$0x40]
  %vm8530 = vcmask 1046534
  %v8531 = vsel %vm8530, %v8529, %v8527
  %s8532 = scalar_lea.vmem %s0, 956
  %v8533 = vld [vmem:[%s8532] sm:$0x80]
  %vm8534 = vcmask 1047559
  %v8535 = vsel %vm8534, %v8533, %v8531
  %8536 = vrot.lane.b32.xlu0 %v8535, 6
  %v8537 = vpop.permute.xlu0 %8536
  %vm8538 = vcmask 64560
  %s8539 = scalar_lea.vmem %s1, 8
  %8540 = vst.msk [vmem:[%s8539] sm:$0xff] %vm8538, %v8537
  %s8541 = scalar_lea.vmem %s0, 1027
  %v8542 = vld [vmem:[%s8541] sm:$0x1]
  %s8543 = scalar_lea.vmem %s0, 1090
  %v8544 = vld [vmem:[%s8543] sm:$0x2]
  %vm8545 = vcmask 1041409
  %v8546 = vsel %vm8545, %v8544, %v8542
  %s8547 = scalar_lea.vmem %s0, 1153
  %v8548 = vld [vmem:[%s8547] sm:$0x4]
  %vm8549 = vcmask 1042434
  %v8550 = vsel %vm8549, %v8548, %v8546
  %s8551 = scalar_lea.vmem %s0, 1216
  %v8552 = vld [vmem:[%s8551] sm:$0x8]
  %vm8553 = vcmask 1043459
  %v8554 = vsel %vm8553, %v8552, %v8550
  %s8555 = scalar_lea.vmem %s0, 1279
  %v8556 = vld [vmem:[%s8555] sm:$0x10]
  %vm8557 = vcmask 1044484
  %v8558 = vsel %vm8557, %v8556, %v8554
  %s8559 = scalar_lea.vmem %s0, 1342
  %v8560 = vld [vmem:[%s8559] sm:$0x20]
  %vm8561 = vcmask 1045509
  %v8562 = vsel %vm8561, %v8560, %v8558
  %s8563 = scalar_lea.vmem %s0, 1405
  %v8564 = vld [vmem:[%s8563] sm:$0x40]
  %vm8565 = vcmask 1046534
  %v8566 = vsel %vm8565, %v8564, %v8562
  %s8567 = scalar_lea.vmem %s0, 1468
  %v8568 = vld [vmem:[%s8567] sm:$0x80]
  %vm8569 = vcmask 1047559
  %v8570 = vsel %vm8569, %v8568, %v8566
  %8571 = vrot.lane.b32.xlu0 %v8570, 6
  %v8572 = vpop.permute.xlu0 %8571
  %vm8573 = vcmask 64560
  %s8574 = scalar_lea.vmem %s1, 16
  %8575 = vst.msk [vmem:[%s8574] sm:$0xff] %vm8573, %v8572
  %s8576 = scalar_lea.vmem %s0, 1539
  %v8577 = vld [vmem:[%s8576] sm:$0x1]
  %s8578 = scalar_lea.vmem %s0, 1602
  %v8579 = vld [vmem:[%s8578] sm:$0x2]
  %vm8580 = vcmask 1041409
  %v8581 = vsel %vm8580, %v8579, %v8577
  %s8582 = scalar_lea.vmem %s0, 1665
  %v8583 = vld [vmem:[%s8582] sm:$0x4]
  %vm8584 = vcmask 1042434
  %v8585 = vsel %vm8584, %v8583, %v8581
  %s8586 = scalar_lea.vmem %s0, 1728
  %v8587 = vld [vmem:[%s8586] sm:$0x8]
  %vm8588 = vcmask 1043459
  %v8589 = vsel %vm8588, %v8587, %v8585
  %s8590 = scalar_lea.vmem %s0, 1791
  %v8591 = vld [vmem:[%s8590] sm:$0x10]
  %vm8592 = vcmask 1044484
  %v8593 = vsel %vm8592, %v8591, %v8589
  %s8594 = scalar_lea.vmem %s0, 1854
  %v8595 = vld [vmem:[%s8594] sm:$0x20]
  %vm8596 = vcmask 1045509
  %v8597 = vsel %vm8596, %v8595, %v8593
  %s8598 = scalar_lea.vmem %s0, 1917
  %v8599 = vld [vmem:[%s8598] sm:$0x40]
  %vm8600 = vcmask 1046534
  %v8601 = vsel %vm8600, %v8599, %v8597
  %s8602 = scalar_lea.vmem %s0, 1980
  %v8603 = vld [vmem:[%s8602] sm:$0x80]
  %vm8604 = vcmask 1047559
  %v8605 = vsel %vm8604, %v8603, %v8601
  %8606 = vrot.lane.b32.xlu0 %v8605, 6
  %v8607 = vpop.permute.xlu0 %8606
  %vm8608 = vcmask 64560
  %s8609 = scalar_lea.vmem %s1, 24
  %8610 = vst.msk [vmem:[%s8609] sm:$0xff] %vm8608, %v8607
  %s8611 = scalar_lea.vmem %s0, 2
  %v8612 = vld [vmem:[%s8611] sm:$0x1]
  %s8613 = scalar_lea.vmem %s0, 65
  %v8614 = vld [vmem:[%s8613] sm:$0x2]
  %vm8615 = vcmask 1041409
  %v8616 = vsel %vm8615, %v8614, %v8612
  %s8617 = scalar_lea.vmem %s0, 128
  %v8618 = vld [vmem:[%s8617] sm:$0x4]
  %vm8619 = vcmask 1042434
  %v8620 = vsel %vm8619, %v8618, %v8616
  %s8621 = scalar_lea.vmem %s0, 191
  %v8622 = vld [vmem:[%s8621] sm:$0x8]
  %vm8623 = vcmask 1043459
  %v8624 = vsel %vm8623, %v8622, %v8620
  %s8625 = scalar_lea.vmem %s0, 254
  %v8626 = vld [vmem:[%s8625] sm:$0x10]
  %vm8627 = vcmask 1044484
  %v8628 = vsel %vm8627, %v8626, %v8624
  %s8629 = scalar_lea.vmem %s0, 317
  %v8630 = vld [vmem:[%s8629] sm:$0x20]
  %vm8631 = vcmask 1045509
  %v8632 = vsel %vm8631, %v8630, %v8628
  %s8633 = scalar_lea.vmem %s0, 380
  %v8634 = vld [vmem:[%s8633] sm:$0x40]
  %vm8635 = vcmask 1046534
  %v8636 = vsel %vm8635, %v8634, %v8632
  %s8637 = scalar_lea.vmem %s0, 443
  %v8638 = vld [vmem:[%s8637] sm:$0x80]
  %vm8639 = vcmask 1047559
  %v8640 = vsel %vm8639, %v8638, %v8636
  %8641 = vrot.lane.b32.xlu0 %v8640, 4
  %v8642 = vpop.permute.xlu0 %8641
  %vm8643 = vcmask 48160
  %8644 = vst.msk [vmem:[%s1] sm:$0xff] %vm8643, %v8642
  %s8645 = scalar_lea.vmem %s0, 514
  %v8646 = vld [vmem:[%s8645] sm:$0x1]
  %s8647 = scalar_lea.vmem %s0, 577
  %v8648 = vld [vmem:[%s8647] sm:$0x2]
  %vm8649 = vcmask 1041409
  %v8650 = vsel %vm8649, %v8648, %v8646
  %s8651 = scalar_lea.vmem %s0, 640
  %v8652 = vld [vmem:[%s8651] sm:$0x4]
  %vm8653 = vcmask 1042434
  %v8654 = vsel %vm8653, %v8652, %v8650
  %s8655 = scalar_lea.vmem %s0, 703
  %v8656 = vld [vmem:[%s8655] sm:$0x8]
  %vm8657 = vcmask 1043459
  %v8658 = vsel %vm8657, %v8656, %v8654
  %s8659 = scalar_lea.vmem %s0, 766
  %v8660 = vld [vmem:[%s8659] sm:$0x10]
  %vm8661 = vcmask 1044484
  %v8662 = vsel %vm8661, %v8660, %v8658
  %s8663 = scalar_lea.vmem %s0, 829
  %v8664 = vld [vmem:[%s8663] sm:$0x20]
  %vm8665 = vcmask 1045509
  %v8666 = vsel %vm8665, %v8664, %v8662
  %s8667 = scalar_lea.vmem %s0, 892
  %v8668 = vld [vmem:[%s8667] sm:$0x40]
  %vm8669 = vcmask 1046534
  %v8670 = vsel %vm8669, %v8668, %v8666
  %s8671 = scalar_lea.vmem %s0, 955
  %v8672 = vld [vmem:[%s8671] sm:$0x80]
  %vm8673 = vcmask 1047559
  %v8674 = vsel %vm8673, %v8672, %v8670
  %8675 = vrot.lane.b32.xlu0 %v8674, 4
  %v8676 = vpop.permute.xlu0 %8675
  %vm8677 = vcmask 48160
  %s8678 = scalar_lea.vmem %s1, 8
  %8679 = vst.msk [vmem:[%s8678] sm:$0xff] %vm8677, %v8676
  %s8680 = scalar_lea.vmem %s0, 1026
  %v8681 = vld [vmem:[%s8680] sm:$0x1]
  %s8682 = scalar_lea.vmem %s0, 1089
  %v8683 = vld [vmem:[%s8682] sm:$0x2]
  %vm8684 = vcmask 1041409
  %v8685 = vsel %vm8684, %v8683, %v8681
  %s8686 = scalar_lea.vmem %s0, 1152
  %v8687 = vld [vmem:[%s8686] sm:$0x4]
  %vm8688 = vcmask 1042434
  %v8689 = vsel %vm8688, %v8687, %v8685
  %s8690 = scalar_lea.vmem %s0, 1215
  %v8691 = vld [vmem:[%s8690] sm:$0x8]
  %vm8692 = vcmask 1043459
  %v8693 = vsel %vm8692, %v8691, %v8689
  %s8694 = scalar_lea.vmem %s0, 1278
  %v8695 = vld [vmem:[%s8694] sm:$0x10]
  %vm8696 = vcmask 1044484
  %v8697 = vsel %vm8696, %v8695, %v8693
  %s8698 = scalar_lea.vmem %s0, 1341
  %v8699 = vld [vmem:[%s8698] sm:$0x20]
  %vm8700 = vcmask 1045509
  %v8701 = vsel %vm8700, %v8699, %v8697
  %s8702 = scalar_lea.vmem %s0, 1404
  %v8703 = vld [vmem:[%s8702] sm:$0x40]
  %vm8704 = vcmask 1046534
  %v8705 = vsel %vm8704, %v8703, %v8701
  %s8706 = scalar_lea.vmem %s0, 1467
  %v8707 = vld [vmem:[%s8706] sm:$0x80]
  %vm8708 = vcmask 1047559
  %v8709 = vsel %vm8708, %v8707, %v8705
  %8710 = vrot.lane.b32.xlu0 %v8709, 4
  %v8711 = vpop.permute.xlu0 %8710
  %vm8712 = vcmask 48160
  %s8713 = scalar_lea.vmem %s1, 16
  %8714 = vst.msk [vmem:[%s8713] sm:$0xff] %vm8712, %v8711
  %s8715 = scalar_lea.vmem %s0, 1538
  %v8716 = vld [vmem:[%s8715] sm:$0x1]
  %s8717 = scalar_lea.vmem %s0, 1601
  %v8718 = vld [vmem:[%s8717] sm:$0x2]
  %vm8719 = vcmask 1041409
  %v8720 = vsel %vm8719, %v8718, %v8716
  %s8721 = scalar_lea.vmem %s0, 1664
  %v8722 = vld [vmem:[%s8721] sm:$0x4]
  %vm8723 = vcmask 1042434
  %v8724 = vsel %vm8723, %v8722, %v8720
  %s8725 = scalar_lea.vmem %s0, 1727
  %v8726 = vld [vmem:[%s8725] sm:$0x8]
  %vm8727 = vcmask 1043459
  %v8728 = vsel %vm8727, %v8726, %v8724
  %s8729 = scalar_lea.vmem %s0, 1790
  %v8730 = vld [vmem:[%s8729] sm:$0x10]
  %vm8731 = vcmask 1044484
  %v8732 = vsel %vm8731, %v8730, %v8728
  %s8733 = scalar_lea.vmem %s0, 1853
  %v8734 = vld [vmem:[%s8733] sm:$0x20]
  %vm8735 = vcmask 1045509
  %v8736 = vsel %vm8735, %v8734, %v8732
  %s8737 = scalar_lea.vmem %s0, 1916
  %v8738 = vld [vmem:[%s8737] sm:$0x40]
  %vm8739 = vcmask 1046534
  %v8740 = vsel %vm8739, %v8738, %v8736
  %s8741 = scalar_lea.vmem %s0, 1979
  %v8742 = vld [vmem:[%s8741] sm:$0x80]
  %vm8743 = vcmask 1047559
  %v8744 = vsel %vm8743, %v8742, %v8740
  %8745 = vrot.lane.b32.xlu0 %v8744, 4
  %v8746 = vpop.permute.xlu0 %8745
  %vm8747 = vcmask 48160
  %s8748 = scalar_lea.vmem %s1, 24
  %8749 = vst.msk [vmem:[%s8748] sm:$0xff] %vm8747, %v8746
  %s8750 = scalar_lea.vmem %s0, 1
  %v8751 = vld [vmem:[%s8750] sm:$0x1]
  %s8752 = scalar_lea.vmem %s0, 64
  %v8753 = vld [vmem:[%s8752] sm:$0x2]
  %vm8754 = vcmask 1041409
  %v8755 = vsel %vm8754, %v8753, %v8751
  %s8756 = scalar_lea.vmem %s0, 127
  %v8757 = vld [vmem:[%s8756] sm:$0x4]
  %vm8758 = vcmask 1042434
  %v8759 = vsel %vm8758, %v8757, %v8755
  %s8760 = scalar_lea.vmem %s0, 190
  %v8761 = vld [vmem:[%s8760] sm:$0x8]
  %vm8762 = vcmask 1043459
  %v8763 = vsel %vm8762, %v8761, %v8759
  %s8764 = scalar_lea.vmem %s0, 253
  %v8765 = vld [vmem:[%s8764] sm:$0x10]
  %vm8766 = vcmask 1044484
  %v8767 = vsel %vm8766, %v8765, %v8763
  %s8768 = scalar_lea.vmem %s0, 316
  %v8769 = vld [vmem:[%s8768] sm:$0x20]
  %vm8770 = vcmask 1045509
  %v8771 = vsel %vm8770, %v8769, %v8767
  %s8772 = scalar_lea.vmem %s0, 379
  %v8773 = vld [vmem:[%s8772] sm:$0x40]
  %vm8774 = vcmask 1046534
  %v8775 = vsel %vm8774, %v8773, %v8771
  %s8776 = scalar_lea.vmem %s0, 442
  %v8777 = vld [vmem:[%s8776] sm:$0x80]
  %vm8778 = vcmask 1047559
  %v8779 = vsel %vm8778, %v8777, %v8775
  %8780 = vrot.lane.b32.xlu0 %v8779, 2
  %v8781 = vpop.permute.xlu0 %8780
  %vm8782 = vcmask 31760
  %8783 = vst.msk [vmem:[%s1] sm:$0xff] %vm8782, %v8781
  %s8784 = scalar_lea.vmem %s0, 513
  %v8785 = vld [vmem:[%s8784] sm:$0x1]
  %s8786 = scalar_lea.vmem %s0, 576
  %v8787 = vld [vmem:[%s8786] sm:$0x2]
  %vm8788 = vcmask 1041409
  %v8789 = vsel %vm8788, %v8787, %v8785
  %s8790 = scalar_lea.vmem %s0, 639
  %v8791 = vld [vmem:[%s8790] sm:$0x4]
  %vm8792 = vcmask 1042434
  %v8793 = vsel %vm8792, %v8791, %v8789
  %s8794 = scalar_lea.vmem %s0, 702
  %v8795 = vld [vmem:[%s8794] sm:$0x8]
  %vm8796 = vcmask 1043459
  %v8797 = vsel %vm8796, %v8795, %v8793
  %s8798 = scalar_lea.vmem %s0, 765
  %v8799 = vld [vmem:[%s8798] sm:$0x10]
  %vm8800 = vcmask 1044484
  %v8801 = vsel %vm8800, %v8799, %v8797
  %s8802 = scalar_lea.vmem %s0, 828
  %v8803 = vld [vmem:[%s8802] sm:$0x20]
  %vm8804 = vcmask 1045509
  %v8805 = vsel %vm8804, %v8803, %v8801
  %s8806 = scalar_lea.vmem %s0, 891
  %v8807 = vld [vmem:[%s8806] sm:$0x40]
  %vm8808 = vcmask 1046534
  %v8809 = vsel %vm8808, %v8807, %v8805
  %s8810 = scalar_lea.vmem %s0, 954
  %v8811 = vld [vmem:[%s8810] sm:$0x80]
  %vm8812 = vcmask 1047559
  %v8813 = vsel %vm8812, %v8811, %v8809
  %8814 = vrot.lane.b32.xlu0 %v8813, 2
  %v8815 = vpop.permute.xlu0 %8814
  %vm8816 = vcmask 31760
  %s8817 = scalar_lea.vmem %s1, 8
  %8818 = vst.msk [vmem:[%s8817] sm:$0xff] %vm8816, %v8815
  %s8819 = scalar_lea.vmem %s0, 1025
  %v8820 = vld [vmem:[%s8819] sm:$0x1]
  %s8821 = scalar_lea.vmem %s0, 1088
  %v8822 = vld [vmem:[%s8821] sm:$0x2]
  %vm8823 = vcmask 1041409
  %v8824 = vsel %vm8823, %v8822, %v8820
  %s8825 = scalar_lea.vmem %s0, 1151
  %v8826 = vld [vmem:[%s8825] sm:$0x4]
  %vm8827 = vcmask 1042434
  %v8828 = vsel %vm8827, %v8826, %v8824
  %s8829 = scalar_lea.vmem %s0, 1214
  %v8830 = vld [vmem:[%s8829] sm:$0x8]
  %vm8831 = vcmask 1043459
  %v8832 = vsel %vm8831, %v8830, %v8828
  %s8833 = scalar_lea.vmem %s0, 1277
  %v8834 = vld [vmem:[%s8833] sm:$0x10]
  %vm8835 = vcmask 1044484
  %v8836 = vsel %vm8835, %v8834, %v8832
  %s8837 = scalar_lea.vmem %s0, 1340
  %v8838 = vld [vmem:[%s8837] sm:$0x20]
  %vm8839 = vcmask 1045509
  %v8840 = vsel %vm8839, %v8838, %v8836
  %s8841 = scalar_lea.vmem %s0, 1403
  %v8842 = vld [vmem:[%s8841] sm:$0x40]
  %vm8843 = vcmask 1046534
  %v8844 = vsel %vm8843, %v8842, %v8840
  %s8845 = scalar_lea.vmem %s0, 1466
  %v8846 = vld [vmem:[%s8845] sm:$0x80]
  %vm8847 = vcmask 1047559
  %v8848 = vsel %vm8847, %v8846, %v8844
  %8849 = vrot.lane.b32.xlu0 %v8848, 2
  %v8850 = vpop.permute.xlu0 %8849
  %vm8851 = vcmask 31760
  %s8852 = scalar_lea.vmem %s1, 16
  %8853 = vst.msk [vmem:[%s8852] sm:$0xff] %vm8851, %v8850
  %s8854 = scalar_lea.vmem %s0, 1537
  %v8855 = vld [vmem:[%s8854] sm:$0x1]
  %s8856 = scalar_lea.vmem %s0, 1600
  %v8857 = vld [vmem:[%s8856] sm:$0x2]
  %vm8858 = vcmask 1041409
  %v8859 = vsel %vm8858, %v8857, %v8855
  %s8860 = scalar_lea.vmem %s0, 1663
  %v8861 = vld [vmem:[%s8860] sm:$0x4]
  %vm8862 = vcmask 1042434
  %v8863 = vsel %vm8862, %v8861, %v8859
  %s8864 = scalar_lea.vmem %s0, 1726
  %v8865 = vld [vmem:[%s8864] sm:$0x8]
  %vm8866 = vcmask 1043459
  %v8867 = vsel %vm8866, %v8865, %v8863
  %s8868 = scalar_lea.vmem %s0, 1789
  %v8869 = vld [vmem:[%s8868] sm:$0x10]
  %vm8870 = vcmask 1044484
  %v8871 = vsel %vm8870, %v8869, %v8867
  %s8872 = scalar_lea.vmem %s0, 1852
  %v8873 = vld [vmem:[%s8872] sm:$0x20]
  %vm8874 = vcmask 1045509
  %v8875 = vsel %vm8874, %v8873, %v8871
  %s8876 = scalar_lea.vmem %s0, 1915
  %v8877 = vld [vmem:[%s8876] sm:$0x40]
  %vm8878 = vcmask 1046534
  %v8879 = vsel %vm8878, %v8877, %v8875
  %s8880 = scalar_lea.vmem %s0, 1978
  %v8881 = vld [vmem:[%s8880] sm:$0x80]
  %vm8882 = vcmask 1047559
  %v8883 = vsel %vm8882, %v8881, %v8879
  %8884 = vrot.lane.b32.xlu0 %v8883, 2
  %v8885 = vpop.permute.xlu0 %8884
  %vm8886 = vcmask 31760
  %s8887 = scalar_lea.vmem %s1, 24
  %8888 = vst.msk [vmem:[%s8887] sm:$0xff] %vm8886, %v8885

// kernel: rpn_cls_loss.1
$region0: #{rpn_cls_loss.1}
  #allocation0 [shape = 'u32[]', space=smem, size = 0x4, offset = 0x4, fixed_abs, tag = 'smem constant byte address 0x4 - core index']
  #allocation1 [shape = 'u32[72,128]{1,0:T(1,128)}', space=vmem, size = 0x9000, scoped, tag = 'internal scratch']
  #allocation2 [shape = 'f32[2]{0:T(128)}', space=smem, size = 0x200, scoped, tag = 'scratch operand']
  %s0 = inlined_call_operand.vmem [shape: f32[32,128], index: 0, kind: input, shape index: {}]
  %s1 = inlined_call_operand.vmem [shape: s8[32,128], index: 1, kind: input, shape index: {}]
  %s2 = inlined_call_operand.hbm [shape: f32[1], index: 2, kind: output, shape index: {}]
  %s3 = sld [smem:[#allocation0]]
  $region26: #{rpn_cls_loss.1} parent=0
    _
  %s5 = ssub.s32 1, %s3
  %s6 = scalar_select 0, %s5, %s3
  $region1: #{rpn_cls_loss.1} parent=0
    #allocation3 [shape = 'u8[512]{0}', space=smem, size = 0x200, scoped, tag = 'output window, operand 0, single buffered']
    #allocation4 [shape = 's32[1]{0}', space=sflag, size = 0x4, scoped, tag = 'scoped memory for rpn_cls_loss.1']
    %7 = vsyncpa [#allocation4], 0
    // Predicated region
    $region2: #{rpn_cls_loss.1} parent=1 // pred_check
      _
    $region3: #{rpn_cls_loss.1} parent=1 // pred_check_branch
      %9 = sbr.rel (0) target = $region5
    $region4: #{rpn_cls_loss.1} parent=1 // pred_region
      _
    $region5: #{rpn_cls_loss.1} parent=1 // pred_fallthru
      _
    // Predicated region
    $region6: #{rpn_cls_loss.1} parent=1 // pred_check
      _
    $region7: #{rpn_cls_loss.1} parent=1 // pred_check_branch
      %11 = sbr.rel (0) target = $region9
    $region8: #{rpn_cls_loss.1} parent=1 // pred_region
      _
    $region9: #{rpn_cls_loss.1} parent=1 // pred_fallthru
      _
    %p12 = scmp.eq.s32.totalorder 0, 0
    // Predicated region
    $region10: #{rpn_cls_loss.1} parent=1 // pred_check
      %p13 = pneg %p12
    $region11: #{rpn_cls_loss.1} parent=1 // pred_check_branch
      %15 = sbr.rel (%p13) target = $region13
    $region12: #{rpn_cls_loss.1} parent=1 // pred_region
      %s16 = scalar_lea.smem [#allocation2], 0
      %17 = sst [smem:[%s16]] 0.0
      %s18 = scalar_lea.smem [#allocation2], 1
      %19 = sst [smem:[%s18]] 0.0
    $region13: #{rpn_cls_loss.1} parent=1 // pred_fallthru
      _
    %v20 = vld [vmem:[%s0] sm:$0xff]
    %v21 = vld [vmem:[%s0 + $0x8] sm:$0xff]
    %v22 = vld [vmem:[%s0 + $0x10] sm:$0xff]
    %v23 = vld [vmem:[%s0 + $0x18] sm:$0xff]
    %v24 = vld [vmem:[%s1] sm:$0xff]
    %v25 = vunpack.c.0.s8 %v24
    %v26 = vunpack.c.1.s8 %v24
    %v27 = vunpack.c.2.s8 %v24
    %v28 = vunpack.c.3.s8 %v24
    %v29 = vlaneseq
    %v30 = vand.u32 %v29, 127
    %v31 = vand.u32 %v30, 1
    %32 = vrot.lane.b32.xlu0 %v30, 1
    %v33 = vpop.permute.xlu0 %32
    %34 = vrot.lane.b32.xlu0 %v20, 1
    %v35 = vpop.permute.xlu0 %34
    %36 = vrot.lane.b32.xlu0 %v21, 1
    %v37 = vpop.permute.xlu0 %36
    %38 = vrot.lane.b32.xlu0 %v22, 1
    %v39 = vpop.permute.xlu0 %38
    %40 = vrot.lane.b32.xlu0 %v23, 1
    %v41 = vpop.permute.xlu0 %40
    %42 = vrot.lane.b32.xlu0 %v20, 127
    %v43 = vpop.permute.xlu0 %42
    %44 = vrot.lane.b32.xlu0 %v21, 127
    %v45 = vpop.permute.xlu0 %44
    %46 = vrot.lane.b32.xlu0 %v22, 127
    %v47 = vpop.permute.xlu0 %46
    %48 = vrot.lane.b32.xlu0 %v23, 127
    %v49 = vpop.permute.xlu0 %48
    %v50 = vxor.u32 %v30, 1
    %vm51 = vcmp.eq.s32.totalorder %v33, %v50
    %v52 = vsel %vm51, %v35, %v43
    %v53 = vsel %vm51, %v37, %v45
    %v54 = vsel %vm51, %v39, %v47
    %v55 = vsel %vm51, %v41, %v49
    %v56 = vsub.f32 %v52, %v20
    %v57 = vsub.f32 %v53, %v21
    %v58 = vsub.f32 %v54, %v22
    %v59 = vsub.f32 %v55, %v23
    %v60 = vmax.f32 %v56, 0.0
    %v61 = vmax.f32 %v57, 0.0
    %v62 = vmax.f32 %v58, 0.0
    %v63 = vmax.f32 %v59, 0.0
    %v64 = vand.u32 2147483647, %v56
    %v65 = vand.u32 2147483647, %v57
    %v66 = vand.u32 2147483647, %v58
    %v67 = vand.u32 2147483647, %v59
    %v68 = vsub.f32 0.0, %v64
    %v69 = vsub.f32 0.0, %v65
    %v70 = vsub.f32 0.0, %v66
    %v71 = vsub.f32 0.0, %v67
    %v72 = vmul.f32 %v68, 1.442695
    %v73 = vpow.pop %v72
    %v74 = vmul.f32 %v69, 1.442695
    %v75 = vpow.pop %v74
    %v76 = vmul.f32 %v70, 1.442695
    %v77 = vpow.pop %v76
    %v78 = vmul.f32 %v71, 1.442695
    %v79 = vpow.pop %v78
    %v80 = vadd.f32 %v73, 1.0
    %v81 = vlog2.pop %v80
    %v82 = vmul.f32 %v81, 0.6931472
    %v83 = vmul.f32 -0.5, %v73
    %v84 = vadd.f32 %v83, 1.0
    %v85 = vmul.f32 %v84, %v73
    %v86 = vand.u32 2147483647, %v73
    %vm87 = vcmp.lt.f32.partialorder %v86, 0.0004427343
    %v88 = vsel %vm87, %v85, %v82
    %v89 = vadd.f32 %v75, 1.0
    %v90 = vlog2.pop %v89
    %v91 = vmul.f32 %v90, 0.6931472
    %v92 = vmul.f32 -0.5, %v75
    %v93 = vadd.f32 %v92, 1.0
    %v94 = vmul.f32 %v93, %v75
    %v95 = vand.u32 2147483647, %v75
    %vm96 = vcmp.lt.f32.partialorder %v95, 0.0004427343
    %v97 = vsel %vm96, %v94, %v91
    %v98 = vadd.f32 %v77, 1.0
    %v99 = vlog2.pop %v98
    %v100 = vmul.f32 %v99, 0.6931472
    %v101 = vmul.f32 -0.5, %v77
    %v102 = vadd.f32 %v101, 1.0
    %v103 = vmul.f32 %v102, %v77
    %v104 = vand.u32 2147483647, %v77
    %vm105 = vcmp.lt.f32.partialorder %v104, 0.0004427343
    %v106 = vsel %vm105, %v103, %v100
    %v107 = vadd.f32 %v79, 1.0
    %v108 = vlog2.pop %v107
    %v109 = vmul.f32 %v108, 0.6931472
    %v110 = vmul.f32 -0.5, %v79
    %v111 = vadd.f32 %v110, 1.0
    %v112 = vmul.f32 %v111, %v79
    %v113 = vand.u32 2147483647, %v79
    %vm114 = vcmp.lt.f32.partialorder %v113, 0.0004427343
    %v115 = vsel %vm114, %v112, %v109
    %v116 = vadd.f32 %v60, %v88
    %v117 = vadd.f32 %v61, %v97
    %v118 = vadd.f32 %v62, %v106
    %v119 = vadd.f32 %v63, %v115
    %vm120 = vcmp.eq.s32.totalorder %v25, %v31
    %vm121 = vcmp.eq.s32.totalorder %v26, %v31
    %vm122 = vcmp.eq.s32.totalorder %v27, %v31
    %vm123 = vcmp.eq.s32.totalorder %v28, %v31
    %s124 = sld [smem:[#allocation2]]
    %v125 = vsel %vm120, %v116, 0.0
    %v126 = vsel %vm121, %v117, 0.0
    %v127 = vsel %vm122, %v118, 0.0
    %v128 = vsel %vm123, %v119, 0.0
    %v129 = vadd.f32 %v125, %v126
    %v130 = vadd.f32 %v129, %v127
    %v131 = vadd.f32 %v130, %v128
    %132 = vadd.xlane.f32.xlu0 %v131
    %v133 = vpop.xlane.xlu0 %132
    %v134 = vrot.slane %v133, 4
    %v135 = vadd.f32 %v133, %v134
    %v136 = vrot.slane %v135, 2
    %v137 = vadd.f32 %v135, %v136
    %v138 = vrot.slane %v137, 1
    %v139 = vadd.f32 %v137, %v138
    %s140 = vtos %v139
    %s141 = sadd.f32 %s124, %s140
    %s142 = scalar_lea.smem [#allocation2], 0
    %143 = sst [smem:[%s142]] %s141
    %s144 = sld [smem:[#allocation2 + $0x1]]
    %v145 = vsel %vm120, 1, 0
    %v146 = vsel %vm121, 1, 0
    %v147 = vsel %vm122, 1, 0
    %v148 = vsel %vm123, 1, 0
    %v149 = vcvt.s32.f32 %v145
    %v150 = vcvt.s32.f32 %v146
    %v151 = vcvt.s32.f32 %v147
    %v152 = vcvt.s32.f32 %v148
    %v153 = vadd.f32 %v149, %v150
    %v154 = vadd.f32 %v153, %v151
    %v155 = vadd.f32 %v154, %v152
    %156 = vadd.xlane.f32.xlu0 %v155
    %v157 = vpop.xlane.xlu0 %156
    %v158 = vrot.slane %v157, 4
    %v159 = vadd.f32 %v157, %v158
    %v160 = vrot.slane %v159, 2
    %v161 = vadd.f32 %v159, %v160
    %v162 = vrot.slane %v161, 1
    %v163 = vadd.f32 %v161, %v162
    %s164 = vtos %v163
    %s165 = sadd.f32 %s144, %s164
    %s166 = scalar_lea.smem [#allocation2], 1
    %167 = sst [smem:[%s166]] %s165
    // Predicated region
    $region14: #{rpn_cls_loss.1} parent=1 // pred_check
      %p168 = pneg %p12
    $region15: #{rpn_cls_loss.1} parent=1 // pred_check_branch
      %170 = sbr.rel (%p168) target = $region17
    $region16: #{rpn_cls_loss.1} parent=1 // pred_region
      %s171 = sld [smem:[#allocation2]]
      %s172 = sld [smem:[#allocation2 + $0x1]]
      %p173 = scmp.gt.f32.partialorder %s172, 0.0
      %s174 = smax.f32 %s172, 1.0
      %v175 = vstv %s174
      %v176 = vrcp.pop %v175
      %v177 = vmul.f32 %v175, %v176
      %v178 = vsub.f32 1.0, %v177
      %v179 = vmul.f32 %v176, %v178
      %v180 = vadd.f32 %v176, %v179
      %vm181 = vweird.f32 %v175
      %vm182 = vweird.f32 %v176
      %vm183 = vmor %vm181, %vm182
      %v184 = vsel %vm183, %v176, %v180
      %v185 = vand.u32 2147483647, %v175
      %vm186 = vcmp.eq.f32.partialorder %v185, 8.507059e+37
      %v187 = vand.u32 %v175, 2147483648
      %v188 = vor.u32 1.1754944e-38, %v187
      %v189 = vsel %vm186, %v188, %v184
      %s190 = vtos %v189
      %s191 = smul.f32 %s171, %s190
      %s192 = scalar_select %p173, %s191, 0.0
      %s193 = smax.f32 %s192, 0.0
      %s194 = smin.f32 %s193, 10.0
      %s195 = scalar_lea.smem [#allocation3], 0
      %196 = sst [smem:[%s195]] %s194
    $region17: #{rpn_cls_loss.1} parent=1 // pred_fallthru
      _
    // Predicated region
    $region18: #{rpn_cls_loss.1} parent=1 // pred_check
      _
    $region19: #{rpn_cls_loss.1} parent=1 // pred_check_branch
      %198 = sbr.rel (0) target = $region21
    $region20: #{rpn_cls_loss.1} parent=1 // pred_region
      %200 = vsyncadd [#allocation4], 0
      %s202 = sshll.u32 %s2, 4
      %s203 = int_to_ptr.hbm [resolvable:$true] %s202
      %205 = dma.smem_to_hbm [#allocation3], 16, %s203, [#allocation4]
    $region21: #{rpn_cls_loss.1} parent=1 // pred_fallthru
      _
    // Predicated region
    $region22: #{rpn_cls_loss.1} parent=1 // pred_check
      _
    $region23: #{rpn_cls_loss.1} parent=1 // pred_check_branch
      %207 = sbr.rel (0) target = $region25
    $region24: #{rpn_cls_loss.1} parent=1 // pred_region
      %209 = dma.done [#allocation4], 16
    $region25: #{rpn_cls_loss.1} parent=1 // pred_fallthru
      _
    %210 = sfence
    %211 = vsyncpa [#allocation4], 1

</llo_original>
